<compile_context>
chip_gen: v6e
topology: v6e:2x2x1
jax: 0.10.0
libtpu: 0.0.40
codegen_flags: <defaults>
</compile_context>

<pallas_src>
import jax
import jax.numpy as jnp
from jax import lax
from jax.experimental import pallas as pl
from jax.experimental.pallas import tpu as pltpu


def node_rk4_kernel(dt_ref, hdt_ref, dt6_ref, z0_ref, w1_ref, b1_ref,
                    w2_ref, b2_ref, out_ref):
    """One batch block: z0 (bm, D) -> trajectory out (T, bm, D)."""
    T = out_ref.shape[0]
    bm, D = z0_ref.shape
    H = w1_ref.shape[1]

    # Hoist bias broadcasts out of the time loop (JAX does not CSE broadcasts).
    b1 = jnp.broadcast_to(b1_ref[...].astype(jnp.float32), (bm, H))
    b2 = jnp.broadcast_to(b2_ref[...].astype(jnp.float32), (bm, D))

    def field(z):
        # Weights are read from their (bf16) VMEM refs here rather than held live
        # across the unrolled loop; MXU pushes read from VMEM-backed loads anyway.
        h = jnp.tanh(jnp.dot(z.astype(jnp.bfloat16), w1_ref[...],
                             preferred_element_type=jnp.float32) + b1)
        return jnp.dot(h.astype(jnp.bfloat16), w2_ref[...],
                       preferred_element_type=jnp.float32) + b2

    z0 = z0_ref[...].astype(jnp.float32)
    out_ref[0] = z0.astype(out_ref.dtype)

    def step(i, z):
        # Per-step scalars precomputed on the host; two cheap SMEM reads each.
        dt = dt_ref[i - 1]
        hdt = hdt_ref[i - 1]
        dt6 = dt6_ref[i - 1]
        k1 = field(z)
        k2 = field(z + hdt * k1)
        k3 = field(z + hdt * k2)
        k4 = field(z + dt * k3)
        z_new = z + dt6 * (k1 + 2.0 * k2 + 2.0 * k3 + k4)
        out_ref[i] = z_new.astype(out_ref.dtype)
        return z_new

    # Full unroll only for short horizons; the body is a pure serial data-dependent
    # chain so deeper unrolling adds no ILP, only instruction-memory bloat.
    unroll = True if T <= 16 else 4
    lax.fori_loop(1, T, step, z0, unroll=unroll)


def neural_ode_forward(z0, t, w1, b1, w2, b2, *, bm=128):
    """Pallas NeuralODE forward: returns z_states of shape (T, B, D)."""
    T = t.shape[0]
    B, D = z0.shape
    H = w1.shape[1]
    bm = min(bm, B)
    assert B % bm == 0, (B, bm)

    # Host-side precompute of per-step scalars (SMEM-resident inside the kernel).
    dt = (t[1:] - t[:-1]).astype(jnp.float32)
    hdt = 0.5 * dt
    dt6 = dt / 6.0

    # Pass weights pre-cast to bf16: halves the weight DMA and removes in-kernel
    # cast passes. Accumulation inside the kernel is f32.
    w1b = w1.astype(jnp.bfloat16)
    w2b = w2.astype(jnp.bfloat16)

    grid = (B // bm,)
    return pl.pallas_call(
        node_rk4_kernel,
        out_shape=jax.ShapeDtypeStruct((T, B, D), z0.dtype),
        grid_spec=pltpu.PrefetchScalarGridSpec(
            num_scalar_prefetch=0,
            grid=grid,
            in_specs=[
                pl.BlockSpec(memory_space=pltpu.MemorySpace.SMEM),   # dt    (T-1,)
                pl.BlockSpec(memory_space=pltpu.MemorySpace.SMEM),   # dt/2  (T-1,)
                pl.BlockSpec(memory_space=pltpu.MemorySpace.SMEM),   # dt/6  (T-1,)
                pl.BlockSpec((bm, D), lambda i: (i, 0)),             # z0 batch block
                pl.BlockSpec((D, H), lambda i: (0, 0)),              # W1 (bf16)
                pl.BlockSpec((1, H), lambda i: (0, 0)),              # b1
                pl.BlockSpec((H, D), lambda i: (0, 0)),              # W2 (bf16)
                pl.BlockSpec((1, D), lambda i: (0, 0)),              # b2
            ],
            out_specs=pl.BlockSpec((T, bm, D), lambda i: (0, i, 0)),
        ),
        compiler_params=pltpu.CompilerParams(
            dimension_semantics=("parallel",),        # batch blocks -> both v7x TCs
            vmem_limit_bytes=64 * 1024 * 1024,
        ),
    )(dt, hdt, dt6, z0, w1b, b1, w2b, b2)


def rk4_reference(z0, t, w1, b1, w2, b2):
    """Pure-JAX reference (mirrors torch RK4 integrator.solve semantics and the
    kernel's bf16-weight / f32-accumulation mixed precision)."""
    w1b = w1.astype(jnp.bfloat16)
    w2b = w2.astype(jnp.bfloat16)

    def f(z):
        h = jnp.tanh(jnp.dot(z.astype(jnp.bfloat16), w1b,
                             preferred_element_type=jnp.float32) + b1)
        return jnp.dot(h.astype(jnp.bfloat16), w2b,
                       preferred_element_type=jnp.float32) + b2

    def step(z, th):
        t0, t1 = th
        dt = t1 - t0
        k1 = f(z)
        k2 = f(z + 0.5 * dt * k1)
        k3 = f(z + 0.5 * dt * k2)
        k4 = f(z + dt * k3)
        z_new = z + (dt / 6.0) * (k1 + 2.0 * k2 + 2.0 * k3 + k4)
        return z_new, z_new

    _, zs = jax.lax.scan(step, z0, (t[:-1], t[1:]))
    return jnp.concatenate([z0[None], zs], axis=0)


# TODO(synk): the AdjointODE.backward (adjoint sensitivity) path is a custom
# autograd rule, not part of the forward pass; only the forward RK4 solve is
# implemented here.

if __name__ == "__main__":
    # Batch tiled into bm=128 blocks (MXU-M-filling, two grid steps for v7x's two
    # TensorCores); state/hidden lane-aligned at 128.
    B, D, H, T = 256, 128, 128, 8

    key = jax.random.PRNGKey(0)
    k1, k2, k3, k4, k5 = jax.random.split(key, 5)
    z0 = jax.random.normal(k1, (B, D), jnp.float32)
    w1 = jax.random.normal(k2, (D, H), jnp.float32) * (1.0 / jnp.sqrt(D))
    b1 = jax.random.normal(k3, (1, H), jnp.float32) * 0.1
    w2 = jax.random.normal(k4, (H, D), jnp.float32) * (1.0 / jnp.sqrt(H))
    b2 = jax.random.normal(k5, (1, D), jnp.float32) * 0.1
    t = jnp.linspace(0.0, 1.0, T).astype(jnp.float32)

    z_states = neural_ode_forward(z0, t, w1, b1, w2, b2, bm=128)
    z_states = jax.block_until_ready(z_states)

    ref = rk4_reference(z0, t, w1, b1, w2, b2)
    assert z_states.shape == (T, B, D), z_states.shape
    assert jnp.allclose(z_states, ref, atol=2e-3, rtol=2e-3), (
        float(jnp.max(jnp.abs(z_states - ref))))

    print("KERNEL_OK")
</pallas_src>

<mosaic_0001>
module attributes {stable_mosaic.version = 11 : i64} {
  func.func @node_rk4_kernel(%arg0: i32, %arg1: memref<7xf32, #tpu.memory_space<smem>>, %arg2: memref<7xf32, #tpu.memory_space<smem>>, %arg3: memref<7xf32, #tpu.memory_space<smem>>, %arg4: memref<128x128xf32, #tpu.memory_space<vmem>>, %arg5: memref<128x128xbf16, #tpu.memory_space<vmem>>, %arg6: memref<1x128xf32, #tpu.memory_space<vmem>>, %arg7: memref<128x128xbf16, #tpu.memory_space<vmem>>, %arg8: memref<1x128xf32, #tpu.memory_space<vmem>>, %arg9: memref<8x128x128xf32, #tpu.memory_space<vmem>>) attributes {dimension_semantics = [#tpu.dimension_semantics<parallel>], iteration_bounds = array<i64: 2>, scalar_prefetch = 0 : i64, scratch_operands = 0 : i64, tpu.core_type = #tpu.core_type<tc>, window_params = [{transform_indices = @transform_0, window_bounds = array<i64: 7>}, {transform_indices = @transform_1, window_bounds = array<i64: 7>}, {transform_indices = @transform_2, window_bounds = array<i64: 7>}, {transform_indices = @transform_3, window_bounds = array<i64: 128, 128>}, {pipeline_mode = #tpu.pipeline_mode<synchronous>, transform_indices = @transform_4, window_bounds = array<i64: 128, 128>}, {pipeline_mode = #tpu.pipeline_mode<synchronous>, transform_indices = @transform_5, window_bounds = array<i64: 1, 128>}, {pipeline_mode = #tpu.pipeline_mode<synchronous>, transform_indices = @transform_6, window_bounds = array<i64: 128, 128>}, {pipeline_mode = #tpu.pipeline_mode<synchronous>, transform_indices = @transform_7, window_bounds = array<i64: 1, 128>}, {transform_indices = @transform_8, window_bounds = array<i64: 8, 128, 128>}]} {
    %c0 = arith.constant 0 : index
    %c0_0 = arith.constant 0 : index
    %0 = vector.load %arg6[%c0, %c0_0] : memref<1x128xf32, #tpu.memory_space<vmem>>, vector<1x128xf32>
    %1 = vector.shape_cast %0 : vector<1x128xf32> to vector<1x128xf32>
    %2 = vector.broadcast %1 : vector<1x128xf32> to vector<128x128xf32>
    %c0_1 = arith.constant 0 : index
    %c0_2 = arith.constant 0 : index
    %3 = vector.load %arg8[%c0_1, %c0_2] : memref<1x128xf32, #tpu.memory_space<vmem>>, vector<1x128xf32>
    %4 = vector.shape_cast %3 : vector<1x128xf32> to vector<1x128xf32>
    %5 = vector.broadcast %4 : vector<1x128xf32> to vector<128x128xf32>
    %c0_3 = arith.constant 0 : index
    %c0_4 = arith.constant 0 : index
    %6 = vector.load %arg4[%c0_3, %c0_4] : memref<128x128xf32, #tpu.memory_space<vmem>>, vector<128x128xf32>
    %c0_5 = arith.constant 0 : index
    %c0_6 = arith.constant 0 : index
    %c0_7 = arith.constant 0 : index
    %7 = vector.load %arg9[%c0_5, %c0_6, %c0_7] : memref<8x128x128xf32, #tpu.memory_space<vmem>>, vector<1x128x128xf32>
    %8 = vector.shape_cast %7 : vector<1x128x128xf32> to vector<128x128xf32>
    %9 = vector.shape_cast %6 : vector<128x128xf32> to vector<1x128x128xf32>
    tpu.vector_store %arg9[%c0_5, %c0_6, %c0_7], %9 {strides = array<i32>} : memref<8x128x128xf32, #tpu.memory_space<vmem>>, vector<1x128x128xf32>,
    %c1_i32 = arith.constant 1 : i32
    %c1_i32_8 = arith.constant 1 : i32
    %10 = arith.subi %c1_i32, %c1_i32_8 : i32
    %11 = arith.index_cast %10 : i32 to index
    %12 = memref.load %arg1[%11] : memref<7xf32, #tpu.memory_space<smem>>
    %c1_i32_9 = arith.constant 1 : i32
    %13 = arith.subi %c1_i32, %c1_i32_9 : i32
    %14 = arith.index_cast %13 : i32 to index
    %15 = memref.load %arg2[%14] : memref<7xf32, #tpu.memory_space<smem>>
    %c1_i32_10 = arith.constant 1 : i32
    %16 = arith.subi %c1_i32, %c1_i32_10 : i32
    %17 = arith.index_cast %16 : i32 to index
    %18 = memref.load %arg3[%17] : memref<7xf32, #tpu.memory_space<smem>>
    %19 = arith.truncf %6 : vector<128x128xf32> to vector<128x128xbf16>
    %c0_11 = arith.constant 0 : index
    %c0_12 = arith.constant 0 : index
    %20 = vector.load %arg5[%c0_11, %c0_12] : memref<128x128xbf16, #tpu.memory_space<vmem>>, vector<128x128xbf16>
    %cst = arith.constant dense<0.000000e+00> : vector<128x128xf32>
    %21 = tpu.matmul %19, %20, %cst {dimension_numbers = #tpu.dot_dimension_numbers<[1], [0], [0], [1], [0, 0, 1, 1], [], []>} : vector<128x128xbf16>, vector<128x128xbf16>, vector<128x128xf32> -> vector<128x128xf32>
    %22 = arith.addf %21, %2 : vector<128x128xf32>
    %23 = math.tanh %22 : vector<128x128xf32>
    %24 = arith.truncf %23 : vector<128x128xf32> to vector<128x128xbf16>
    %c0_13 = arith.constant 0 : index
    %c0_14 = arith.constant 0 : index
    %25 = vector.load %arg7[%c0_13, %c0_14] : memref<128x128xbf16, #tpu.memory_space<vmem>>, vector<128x128xbf16>
    %cst_15 = arith.constant dense<0.000000e+00> : vector<128x128xf32>
    %26 = tpu.matmul %24, %25, %cst_15 {dimension_numbers = #tpu.dot_dimension_numbers<[1], [0], [0], [1], [0, 0, 1, 1], [], []>} : vector<128x128xbf16>, vector<128x128xbf16>, vector<128x128xf32> -> vector<128x128xf32>
    %27 = arith.addf %26, %5 : vector<128x128xf32>
    %28 = vector.broadcast %15 : f32 to vector<128x128xf32>
    %29 = arith.mulf %28, %27 : vector<128x128xf32>
    %30 = arith.addf %6, %29 : vector<128x128xf32>
    %31 = arith.truncf %30 : vector<128x128xf32> to vector<128x128xbf16>
    %c0_16 = arith.constant 0 : index
    %c0_17 = arith.constant 0 : index
    %32 = vector.load %arg5[%c0_16, %c0_17] : memref<128x128xbf16, #tpu.memory_space<vmem>>, vector<128x128xbf16>
    %cst_18 = arith.constant dense<0.000000e+00> : vector<128x128xf32>
    %33 = tpu.matmul %31, %32, %cst_18 {dimension_numbers = #tpu.dot_dimension_numbers<[1], [0], [0], [1], [0, 0, 1, 1], [], []>} : vector<128x128xbf16>, vector<128x128xbf16>, vector<128x128xf32> -> vector<128x128xf32>
    %34 = arith.addf %33, %2 : vector<128x128xf32>
    %35 = math.tanh %34 : vector<128x128xf32>
    %36 = arith.truncf %35 : vector<128x128xf32> to vector<128x128xbf16>
    %c0_19 = arith.constant 0 : index
    %c0_20 = arith.constant 0 : index
    %37 = vector.load %arg7[%c0_19, %c0_20] : memref<128x128xbf16, #tpu.memory_space<vmem>>, vector<128x128xbf16>
    %cst_21 = arith.constant dense<0.000000e+00> : vector<128x128xf32>
    %38 = tpu.matmul %36, %37, %cst_21 {dimension_numbers = #tpu.dot_dimension_numbers<[1], [0], [0], [1], [0, 0, 1, 1], [], []>} : vector<128x128xbf16>, vector<128x128xbf16>, vector<128x128xf32> -> vector<128x128xf32>
    %39 = arith.addf %38, %5 : vector<128x128xf32>
    %40 = vector.broadcast %15 : f32 to vector<128x128xf32>
    %41 = arith.mulf %40, %39 : vector<128x128xf32>
    %42 = arith.addf %6, %41 : vector<128x128xf32>
    %43 = arith.truncf %42 : vector<128x128xf32> to vector<128x128xbf16>
    %c0_22 = arith.constant 0 : index
    %c0_23 = arith.constant 0 : index
    %44 = vector.load %arg5[%c0_22, %c0_23] : memref<128x128xbf16, #tpu.memory_space<vmem>>, vector<128x128xbf16>
    %cst_24 = arith.constant dense<0.000000e+00> : vector<128x128xf32>
    %45 = tpu.matmul %43, %44, %cst_24 {dimension_numbers = #tpu.dot_dimension_numbers<[1], [0], [0], [1], [0, 0, 1, 1], [], []>} : vector<128x128xbf16>, vector<128x128xbf16>, vector<128x128xf32> -> vector<128x128xf32>
    %46 = arith.addf %45, %2 : vector<128x128xf32>
    %47 = math.tanh %46 : vector<128x128xf32>
    %48 = arith.truncf %47 : vector<128x128xf32> to vector<128x128xbf16>
    %c0_25 = arith.constant 0 : index
    %c0_26 = arith.constant 0 : index
    %49 = vector.load %arg7[%c0_25, %c0_26] : memref<128x128xbf16, #tpu.memory_space<vmem>>, vector<128x128xbf16>
    %cst_27 = arith.constant dense<0.000000e+00> : vector<128x128xf32>
    %50 = tpu.matmul %48, %49, %cst_27 {dimension_numbers = #tpu.dot_dimension_numbers<[1], [0], [0], [1], [0, 0, 1, 1], [], []>} : vector<128x128xbf16>, vector<128x128xbf16>, vector<128x128xf32> -> vector<128x128xf32>
    %51 = arith.addf %50, %5 : vector<128x128xf32>
    %52 = vector.broadcast %12 : f32 to vector<128x128xf32>
    %53 = arith.mulf %52, %51 : vector<128x128xf32>
    %54 = arith.addf %6, %53 : vector<128x128xf32>
    %55 = arith.truncf %54 : vector<128x128xf32> to vector<128x128xbf16>
    %c0_28 = arith.constant 0 : index
    %c0_29 = arith.constant 0 : index
    %56 = vector.load %arg5[%c0_28, %c0_29] : memref<128x128xbf16, #tpu.memory_space<vmem>>, vector<128x128xbf16>
    %cst_30 = arith.constant dense<0.000000e+00> : vector<128x128xf32>
    %57 = tpu.matmul %55, %56, %cst_30 {dimension_numbers = #tpu.dot_dimension_numbers<[1], [0], [0], [1], [0, 0, 1, 1], [], []>} : vector<128x128xbf16>, vector<128x128xbf16>, vector<128x128xf32> -> vector<128x128xf32>
    %58 = arith.addf %57, %2 : vector<128x128xf32>
    %59 = math.tanh %58 : vector<128x128xf32>
    %60 = arith.truncf %59 : vector<128x128xf32> to vector<128x128xbf16>
    %c0_31 = arith.constant 0 : index
    %c0_32 = arith.constant 0 : index
    %61 = vector.load %arg7[%c0_31, %c0_32] : memref<128x128xbf16, #tpu.memory_space<vmem>>, vector<128x128xbf16>
    %cst_33 = arith.constant dense<0.000000e+00> : vector<128x128xf32>
    %62 = tpu.matmul %60, %61, %cst_33 {dimension_numbers = #tpu.dot_dimension_numbers<[1], [0], [0], [1], [0, 0, 1, 1], [], []>} : vector<128x128xbf16>, vector<128x128xbf16>, vector<128x128xf32> -> vector<128x128xf32>
    %63 = arith.addf %62, %5 : vector<128x128xf32>
    %cst_34 = arith.constant 2.000000e+00 : f32
    %64 = vector.broadcast %cst_34 : f32 to vector<128x128xf32>
    %65 = arith.mulf %64, %39 : vector<128x128xf32>
    %66 = arith.addf %27, %65 : vector<128x128xf32>
    %cst_35 = arith.constant 2.000000e+00 : f32
    %67 = vector.broadcast %cst_35 : f32 to vector<128x128xf32>
    %68 = arith.mulf %67, %51 : vector<128x128xf32>
    %69 = arith.addf %66, %68 : vector<128x128xf32>
    %70 = arith.addf %69, %63 : vector<128x128xf32>
    %71 = vector.broadcast %18 : f32 to vector<128x128xf32>
    %72 = arith.mulf %71, %70 : vector<128x128xf32>
    %73 = arith.addf %6, %72 : vector<128x128xf32>
    %74 = arith.index_cast %c1_i32 : i32 to index
    %c0_36 = arith.constant 0 : index
    %c0_37 = arith.constant 0 : index
    %75 = vector.load %arg9[%74, %c0_36, %c0_37] : memref<8x128x128xf32, #tpu.memory_space<vmem>>, vector<1x128x128xf32>
    %76 = vector.shape_cast %75 : vector<1x128x128xf32> to vector<128x128xf32>
    %77 = vector.shape_cast %73 : vector<128x128xf32> to vector<1x128x128xf32>
    tpu.vector_store %arg9[%74, %c0_36, %c0_37], %77 {strides = array<i32>} : memref<8x128x128xf32, #tpu.memory_space<vmem>>, vector<1x128x128xf32>,
    %c2_i32 = arith.constant 2 : i32
    %c1_i32_38 = arith.constant 1 : i32
    %78 = arith.subi %c2_i32, %c1_i32_38 : i32
    %79 = arith.index_cast %78 : i32 to index
    %80 = memref.load %arg1[%79] : memref<7xf32, #tpu.memory_space<smem>>
    %c1_i32_39 = arith.constant 1 : i32
    %81 = arith.subi %c2_i32, %c1_i32_39 : i32
    %82 = arith.index_cast %81 : i32 to index
    %83 = memref.load %arg2[%82] : memref<7xf32, #tpu.memory_space<smem>>
    %c1_i32_40 = arith.constant 1 : i32
    %84 = arith.subi %c2_i32, %c1_i32_40 : i32
    %85 = arith.index_cast %84 : i32 to index
    %86 = memref.load %arg3[%85] : memref<7xf32, #tpu.memory_space<smem>>
    %87 = arith.truncf %73 : vector<128x128xf32> to vector<128x128xbf16>
    %c0_41 = arith.constant 0 : index
    %c0_42 = arith.constant 0 : index
    %88 = vector.load %arg5[%c0_41, %c0_42] : memref<128x128xbf16, #tpu.memory_space<vmem>>, vector<128x128xbf16>
    %cst_43 = arith.constant dense<0.000000e+00> : vector<128x128xf32>
    %89 = tpu.matmul %87, %88, %cst_43 {dimension_numbers = #tpu.dot_dimension_numbers<[1], [0], [0], [1], [0, 0, 1, 1], [], []>} : vector<128x128xbf16>, vector<128x128xbf16>, vector<128x128xf32> -> vector<128x128xf32>
    %90 = arith.addf %89, %2 : vector<128x128xf32>
    %91 = math.tanh %90 : vector<128x128xf32>
    %92 = arith.truncf %91 : vector<128x128xf32> to vector<128x128xbf16>
    %c0_44 = arith.constant 0 : index
    %c0_45 = arith.constant 0 : index
    %93 = vector.load %arg7[%c0_44, %c0_45] : memref<128x128xbf16, #tpu.memory_space<vmem>>, vector<128x128xbf16>
    %cst_46 = arith.constant dense<0.000000e+00> : vector<128x128xf32>
    %94 = tpu.matmul %92, %93, %cst_46 {dimension_numbers = #tpu.dot_dimension_numbers<[1], [0], [0], [1], [0, 0, 1, 1], [], []>} : vector<128x128xbf16>, vector<128x128xbf16>, vector<128x128xf32> -> vector<128x128xf32>
    %95 = arith.addf %94, %5 : vector<128x128xf32>
    %96 = vector.broadcast %83 : f32 to vector<128x128xf32>
    %97 = arith.mulf %96, %95 : vector<128x128xf32>
    %98 = arith.addf %73, %97 : vector<128x128xf32>
    %99 = arith.truncf %98 : vector<128x128xf32> to vector<128x128xbf16>
    %c0_47 = arith.constant 0 : index
    %c0_48 = arith.constant 0 : index
    %100 = vector.load %arg5[%c0_47, %c0_48] : memref<128x128xbf16, #tpu.memory_space<vmem>>, vector<128x128xbf16>
    %cst_49 = arith.constant dense<0.000000e+00> : vector<128x128xf32>
    %101 = tpu.matmul %99, %100, %cst_49 {dimension_numbers = #tpu.dot_dimension_numbers<[1], [0], [0], [1], [0, 0, 1, 1], [], []>} : vector<128x128xbf16>, vector<128x128xbf16>, vector<128x128xf32> -> vector<128x128xf32>
    %102 = arith.addf %101, %2 : vector<128x128xf32>
    %103 = math.tanh %102 : vector<128x128xf32>
    %104 = arith.truncf %103 : vector<128x128xf32> to vector<128x128xbf16>
    %c0_50 = arith.constant 0 : index
    %c0_51 = arith.constant 0 : index
    %105 = vector.load %arg7[%c0_50, %c0_51] : memref<128x128xbf16, #tpu.memory_space<vmem>>, vector<128x128xbf16>
    %cst_52 = arith.constant dense<0.000000e+00> : vector<128x128xf32>
    %106 = tpu.matmul %104, %105, %cst_52 {dimension_numbers = #tpu.dot_dimension_numbers<[1], [0], [0], [1], [0, 0, 1, 1], [], []>} : vector<128x128xbf16>, vector<128x128xbf16>, vector<128x128xf32> -> vector<128x128xf32>
    %107 = arith.addf %106, %5 : vector<128x128xf32>
    %108 = vector.broadcast %83 : f32 to vector<128x128xf32>
    %109 = arith.mulf %108, %107 : vector<128x128xf32>
    %110 = arith.addf %73, %109 : vector<128x128xf32>
    %111 = arith.truncf %110 : vector<128x128xf32> to vector<128x128xbf16>
    %c0_53 = arith.constant 0 : index
    %c0_54 = arith.constant 0 : index
    %112 = vector.load %arg5[%c0_53, %c0_54] : memref<128x128xbf16, #tpu.memory_space<vmem>>, vector<128x128xbf16>
    %cst_55 = arith.constant dense<0.000000e+00> : vector<128x128xf32>
    %113 = tpu.matmul %111, %112, %cst_55 {dimension_numbers = #tpu.dot_dimension_numbers<[1], [0], [0], [1], [0, 0, 1, 1], [], []>} : vector<128x128xbf16>, vector<128x128xbf16>, vector<128x128xf32> -> vector<128x128xf32>
    %114 = arith.addf %113, %2 : vector<128x128xf32>
    %115 = math.tanh %114 : vector<128x128xf32>
    %116 = arith.truncf %115 : vector<128x128xf32> to vector<128x128xbf16>
    %c0_56 = arith.constant 0 : index
    %c0_57 = arith.constant 0 : index
    %117 = vector.load %arg7[%c0_56, %c0_57] : memref<128x128xbf16, #tpu.memory_space<vmem>>, vector<128x128xbf16>
    %cst_58 = arith.constant dense<0.000000e+00> : vector<128x128xf32>
    %118 = tpu.matmul %116, %117, %cst_58 {dimension_numbers = #tpu.dot_dimension_numbers<[1], [0], [0], [1], [0, 0, 1, 1], [], []>} : vector<128x128xbf16>, vector<128x128xbf16>, vector<128x128xf32> -> vector<128x128xf32>
    %119 = arith.addf %118, %5 : vector<128x128xf32>
    %120 = vector.broadcast %80 : f32 to vector<128x128xf32>
    %121 = arith.mulf %120, %119 : vector<128x128xf32>
    %122 = arith.addf %73, %121 : vector<128x128xf32>
    %123 = arith.truncf %122 : vector<128x128xf32> to vector<128x128xbf16>
    %c0_59 = arith.constant 0 : index
    %c0_60 = arith.constant 0 : index
    %124 = vector.load %arg5[%c0_59, %c0_60] : memref<128x128xbf16, #tpu.memory_space<vmem>>, vector<128x128xbf16>
    %cst_61 = arith.constant dense<0.000000e+00> : vector<128x128xf32>
    %125 = tpu.matmul %123, %124, %cst_61 {dimension_numbers = #tpu.dot_dimension_numbers<[1], [0], [0], [1], [0, 0, 1, 1], [], []>} : vector<128x128xbf16>, vector<128x128xbf16>, vector<128x128xf32> -> vector<128x128xf32>
    %126 = arith.addf %125, %2 : vector<128x128xf32>
    %127 = math.tanh %126 : vector<128x128xf32>
    %128 = arith.truncf %127 : vector<128x128xf32> to vector<128x128xbf16>
    %c0_62 = arith.constant 0 : index
    %c0_63 = arith.constant 0 : index
    %129 = vector.load %arg7[%c0_62, %c0_63] : memref<128x128xbf16, #tpu.memory_space<vmem>>, vector<128x128xbf16>
    %cst_64 = arith.constant dense<0.000000e+00> : vector<128x128xf32>
    %130 = tpu.matmul %128, %129, %cst_64 {dimension_numbers = #tpu.dot_dimension_numbers<[1], [0], [0], [1], [0, 0, 1, 1], [], []>} : vector<128x128xbf16>, vector<128x128xbf16>, vector<128x128xf32> -> vector<128x128xf32>
    %131 = arith.addf %130, %5 : vector<128x128xf32>
    %cst_65 = arith.constant 2.000000e+00 : f32
    %132 = vector.broadcast %cst_65 : f32 to vector<128x128xf32>
    %133 = arith.mulf %132, %107 : vector<128x128xf32>
    %134 = arith.addf %95, %133 : vector<128x128xf32>
    %cst_66 = arith.constant 2.000000e+00 : f32
    %135 = vector.broadcast %cst_66 : f32 to vector<128x128xf32>
    %136 = arith.mulf %135, %119 : vector<128x128xf32>
    %137 = arith.addf %134, %136 : vector<128x128xf32>
    %138 = arith.addf %137, %131 : vector<128x128xf32>
    %139 = vector.broadcast %86 : f32 to vector<128x128xf32>
    %140 = arith.mulf %139, %138 : vector<128x128xf32>
    %141 = arith.addf %73, %140 : vector<128x128xf32>
    %142 = arith.index_cast %c2_i32 : i32 to index
    %c0_67 = arith.constant 0 : index
    %c0_68 = arith.constant 0 : index
    %143 = vector.load %arg9[%142, %c0_67, %c0_68] : memref<8x128x128xf32, #tpu.memory_space<vmem>>, vector<1x128x128xf32>
    %144 = vector.shape_cast %143 : vector<1x128x128xf32> to vector<128x128xf32>
    %145 = vector.shape_cast %141 : vector<128x128xf32> to vector<1x128x128xf32>
    tpu.vector_store %arg9[%142, %c0_67, %c0_68], %145 {strides = array<i32>} : memref<8x128x128xf32, #tpu.memory_space<vmem>>, vector<1x128x128xf32>,
    %c3_i32 = arith.constant 3 : i32
    %c1_i32_69 = arith.constant 1 : i32
    %146 = arith.subi %c3_i32, %c1_i32_69 : i32
    %147 = arith.index_cast %146 : i32 to index
    %148 = memref.load %arg1[%147] : memref<7xf32, #tpu.memory_space<smem>>
    %c1_i32_70 = arith.constant 1 : i32
    %149 = arith.subi %c3_i32, %c1_i32_70 : i32
    %150 = arith.index_cast %149 : i32 to index
    %151 = memref.load %arg2[%150] : memref<7xf32, #tpu.memory_space<smem>>
    %c1_i32_71 = arith.constant 1 : i32
    %152 = arith.subi %c3_i32, %c1_i32_71 : i32
    %153 = arith.index_cast %152 : i32 to index
    %154 = memref.load %arg3[%153] : memref<7xf32, #tpu.memory_space<smem>>
    %155 = arith.truncf %141 : vector<128x128xf32> to vector<128x128xbf16>
    %c0_72 = arith.constant 0 : index
    %c0_73 = arith.constant 0 : index
    %156 = vector.load %arg5[%c0_72, %c0_73] : memref<128x128xbf16, #tpu.memory_space<vmem>>, vector<128x128xbf16>
    %cst_74 = arith.constant dense<0.000000e+00> : vector<128x128xf32>
    %157 = tpu.matmul %155, %156, %cst_74 {dimension_numbers = #tpu.dot_dimension_numbers<[1], [0], [0], [1], [0, 0, 1, 1], [], []>} : vector<128x128xbf16>, vector<128x128xbf16>, vector<128x128xf32> -> vector<128x128xf32>
    %158 = arith.addf %157, %2 : vector<128x128xf32>
    %159 = math.tanh %158 : vector<128x128xf32>
    %160 = arith.truncf %159 : vector<128x128xf32> to vector<128x128xbf16>
    %c0_75 = arith.constant 0 : index
    %c0_76 = arith.constant 0 : index
    %161 = vector.load %arg7[%c0_75, %c0_76] : memref<128x128xbf16, #tpu.memory_space<vmem>>, vector<128x128xbf16>
    %cst_77 = arith.constant dense<0.000000e+00> : vector<128x128xf32>
    %162 = tpu.matmul %160, %161, %cst_77 {dimension_numbers = #tpu.dot_dimension_numbers<[1], [0], [0], [1], [0, 0, 1, 1], [], []>} : vector<128x128xbf16>, vector<128x128xbf16>, vector<128x128xf32> -> vector<128x128xf32>
    %163 = arith.addf %162, %5 : vector<128x128xf32>
    %164 = vector.broadcast %151 : f32 to vector<128x128xf32>
    %165 = arith.mulf %164, %163 : vector<128x128xf32>
    %166 = arith.addf %141, %165 : vector<128x128xf32>
    %167 = arith.truncf %166 : vector<128x128xf32> to vector<128x128xbf16>
    %c0_78 = arith.constant 0 : index
    %c0_79 = arith.constant 0 : index
    %168 = vector.load %arg5[%c0_78, %c0_79] : memref<128x128xbf16, #tpu.memory_space<vmem>>, vector<128x128xbf16>
    %cst_80 = arith.constant dense<0.000000e+00> : vector<128x128xf32>
    %169 = tpu.matmul %167, %168, %cst_80 {dimension_numbers = #tpu.dot_dimension_numbers<[1], [0], [0], [1], [0, 0, 1, 1], [], []>} : vector<128x128xbf16>, vector<128x128xbf16>, vector<128x128xf32> -> vector<128x128xf32>
    %170 = arith.addf %169, %2 : vector<128x128xf32>
    %171 = math.tanh %170 : vector<128x128xf32>
    %172 = arith.truncf %171 : vector<128x128xf32> to vector<128x128xbf16>
    %c0_81 = arith.constant 0 : index
    %c0_82 = arith.constant 0 : index
    %173 = vector.load %arg7[%c0_81, %c0_82] : memref<128x128xbf16, #tpu.memory_space<vmem>>, vector<128x128xbf16>
    %cst_83 = arith.constant dense<0.000000e+00> : vector<128x128xf32>
    %174 = tpu.matmul %172, %173, %cst_83 {dimension_numbers = #tpu.dot_dimension_numbers<[1], [0], [0], [1], [0, 0, 1, 1], [], []>} : vector<128x128xbf16>, vector<128x128xbf16>, vector<128x128xf32> -> vector<128x128xf32>
    %175 = arith.addf %174, %5 : vector<128x128xf32>
    %176 = vector.broadcast %151 : f32 to vector<128x128xf32>
    %177 = arith.mulf %176, %175 : vector<128x128xf32>
    %178 = arith.addf %141, %177 : vector<128x128xf32>
    %179 = arith.truncf %178 : vector<128x128xf32> to vector<128x128xbf16>
    %c0_84 = arith.constant 0 : index
    %c0_85 = arith.constant 0 : index
    %180 = vector.load %arg5[%c0_84, %c0_85] : memref<128x128xbf16, #tpu.memory_space<vmem>>, vector<128x128xbf16>
    %cst_86 = arith.constant dense<0.000000e+00> : vector<128x128xf32>
    %181 = tpu.matmul %179, %180, %cst_86 {dimension_numbers = #tpu.dot_dimension_numbers<[1], [0], [0], [1], [0, 0, 1, 1], [], []>} : vector<128x128xbf16>, vector<128x128xbf16>, vector<128x128xf32> -> vector<128x128xf32>
    %182 = arith.addf %181, %2 : vector<128x128xf32>
    %183 = math.tanh %182 : vector<128x128xf32>
    %184 = arith.truncf %183 : vector<128x128xf32> to vector<128x128xbf16>
    %c0_87 = arith.constant 0 : index
    %c0_88 = arith.constant 0 : index
    %185 = vector.load %arg7[%c0_87, %c0_88] : memref<128x128xbf16, #tpu.memory_space<vmem>>, vector<128x128xbf16>
    %cst_89 = arith.constant dense<0.000000e+00> : vector<128x128xf32>
    %186 = tpu.matmul %184, %185, %cst_89 {dimension_numbers = #tpu.dot_dimension_numbers<[1], [0], [0], [1], [0, 0, 1, 1], [], []>} : vector<128x128xbf16>, vector<128x128xbf16>, vector<128x128xf32> -> vector<128x128xf32>
    %187 = arith.addf %186, %5 : vector<128x128xf32>
    %188 = vector.broadcast %148 : f32 to vector<128x128xf32>
    %189 = arith.mulf %188, %187 : vector<128x128xf32>
    %190 = arith.addf %141, %189 : vector<128x128xf32>
    %191 = arith.truncf %190 : vector<128x128xf32> to vector<128x128xbf16>
    %c0_90 = arith.constant 0 : index
    %c0_91 = arith.constant 0 : index
    %192 = vector.load %arg5[%c0_90, %c0_91] : memref<128x128xbf16, #tpu.memory_space<vmem>>, vector<128x128xbf16>
    %cst_92 = arith.constant dense<0.000000e+00> : vector<128x128xf32>
    %193 = tpu.matmul %191, %192, %cst_92 {dimension_numbers = #tpu.dot_dimension_numbers<[1], [0], [0], [1], [0, 0, 1, 1], [], []>} : vector<128x128xbf16>, vector<128x128xbf16>, vector<128x128xf32> -> vector<128x128xf32>
    %194 = arith.addf %193, %2 : vector<128x128xf32>
    %195 = math.tanh %194 : vector<128x128xf32>
    %196 = arith.truncf %195 : vector<128x128xf32> to vector<128x128xbf16>
    %c0_93 = arith.constant 0 : index
    %c0_94 = arith.constant 0 : index
    %197 = vector.load %arg7[%c0_93, %c0_94] : memref<128x128xbf16, #tpu.memory_space<vmem>>, vector<128x128xbf16>
    %cst_95 = arith.constant dense<0.000000e+00> : vector<128x128xf32>
    %198 = tpu.matmul %196, %197, %cst_95 {dimension_numbers = #tpu.dot_dimension_numbers<[1], [0], [0], [1], [0, 0, 1, 1], [], []>} : vector<128x128xbf16>, vector<128x128xbf16>, vector<128x128xf32> -> vector<128x128xf32>
    %199 = arith.addf %198, %5 : vector<128x128xf32>
    %cst_96 = arith.constant 2.000000e+00 : f32
    %200 = vector.broadcast %cst_96 : f32 to vector<128x128xf32>
    %201 = arith.mulf %200, %175 : vector<128x128xf32>
    %202 = arith.addf %163, %201 : vector<128x128xf32>
    %cst_97 = arith.constant 2.000000e+00 : f32
    %203 = vector.broadcast %cst_97 : f32 to vector<128x128xf32>
    %204 = arith.mulf %203, %187 : vector<128x128xf32>
    %205 = arith.addf %202, %204 : vector<128x128xf32>
    %206 = arith.addf %205, %199 : vector<128x128xf32>
    %207 = vector.broadcast %154 : f32 to vector<128x128xf32>
    %208 = arith.mulf %207, %206 : vector<128x128xf32>
    %209 = arith.addf %141, %208 : vector<128x128xf32>
    %210 = arith.index_cast %c3_i32 : i32 to index
    %c0_98 = arith.constant 0 : index
    %c0_99 = arith.constant 0 : index
    %211 = vector.load %arg9[%210, %c0_98, %c0_99] : memref<8x128x128xf32, #tpu.memory_space<vmem>>, vector<1x128x128xf32>
    %212 = vector.shape_cast %211 : vector<1x128x128xf32> to vector<128x128xf32>
    %213 = vector.shape_cast %209 : vector<128x128xf32> to vector<1x128x128xf32>
    tpu.vector_store %arg9[%210, %c0_98, %c0_99], %213 {strides = array<i32>} : memref<8x128x128xf32, #tpu.memory_space<vmem>>, vector<1x128x128xf32>,
    %c4_i32 = arith.constant 4 : i32
    %c1_i32_100 = arith.constant 1 : i32
    %214 = arith.subi %c4_i32, %c1_i32_100 : i32
    %215 = arith.index_cast %214 : i32 to index
    %216 = memref.load %arg1[%215] : memref<7xf32, #tpu.memory_space<smem>>
    %c1_i32_101 = arith.constant 1 : i32
    %217 = arith.subi %c4_i32, %c1_i32_101 : i32
    %218 = arith.index_cast %217 : i32 to index
    %219 = memref.load %arg2[%218] : memref<7xf32, #tpu.memory_space<smem>>
    %c1_i32_102 = arith.constant 1 : i32
    %220 = arith.subi %c4_i32, %c1_i32_102 : i32
    %221 = arith.index_cast %220 : i32 to index
    %222 = memref.load %arg3[%221] : memref<7xf32, #tpu.memory_space<smem>>
    %223 = arith.truncf %209 : vector<128x128xf32> to vector<128x128xbf16>
    %c0_103 = arith.constant 0 : index
    %c0_104 = arith.constant 0 : index
    %224 = vector.load %arg5[%c0_103, %c0_104] : memref<128x128xbf16, #tpu.memory_space<vmem>>, vector<128x128xbf16>
    %cst_105 = arith.constant dense<0.000000e+00> : vector<128x128xf32>
    %225 = tpu.matmul %223, %224, %cst_105 {dimension_numbers = #tpu.dot_dimension_numbers<[1], [0], [0], [1], [0, 0, 1, 1], [], []>} : vector<128x128xbf16>, vector<128x128xbf16>, vector<128x128xf32> -> vector<128x128xf32>
    %226 = arith.addf %225, %2 : vector<128x128xf32>
    %227 = math.tanh %226 : vector<128x128xf32>
    %228 = arith.truncf %227 : vector<128x128xf32> to vector<128x128xbf16>
    %c0_106 = arith.constant 0 : index
    %c0_107 = arith.constant 0 : index
    %229 = vector.load %arg7[%c0_106, %c0_107] : memref<128x128xbf16, #tpu.memory_space<vmem>>, vector<128x128xbf16>
    %cst_108 = arith.constant dense<0.000000e+00> : vector<128x128xf32>
    %230 = tpu.matmul %228, %229, %cst_108 {dimension_numbers = #tpu.dot_dimension_numbers<[1], [0], [0], [1], [0, 0, 1, 1], [], []>} : vector<128x128xbf16>, vector<128x128xbf16>, vector<128x128xf32> -> vector<128x128xf32>
    %231 = arith.addf %230, %5 : vector<128x128xf32>
    %232 = vector.broadcast %219 : f32 to vector<128x128xf32>
    %233 = arith.mulf %232, %231 : vector<128x128xf32>
    %234 = arith.addf %209, %233 : vector<128x128xf32>
    %235 = arith.truncf %234 : vector<128x128xf32> to vector<128x128xbf16>
    %c0_109 = arith.constant 0 : index
    %c0_110 = arith.constant 0 : index
    %236 = vector.load %arg5[%c0_109, %c0_110] : memref<128x128xbf16, #tpu.memory_space<vmem>>, vector<128x128xbf16>
    %cst_111 = arith.constant dense<0.000000e+00> : vector<128x128xf32>
    %237 = tpu.matmul %235, %236, %cst_111 {dimension_numbers = #tpu.dot_dimension_numbers<[1], [0], [0], [1], [0, 0, 1, 1], [], []>} : vector<128x128xbf16>, vector<128x128xbf16>, vector<128x128xf32> -> vector<128x128xf32>
    %238 = arith.addf %237, %2 : vector<128x128xf32>
    %239 = math.tanh %238 : vector<128x128xf32>
    %240 = arith.truncf %239 : vector<128x128xf32> to vector<128x128xbf16>
    %c0_112 = arith.constant 0 : index
    %c0_113 = arith.constant 0 : index
    %241 = vector.load %arg7[%c0_112, %c0_113] : memref<128x128xbf16, #tpu.memory_space<vmem>>, vector<128x128xbf16>
    %cst_114 = arith.constant dense<0.000000e+00> : vector<128x128xf32>
    %242 = tpu.matmul %240, %241, %cst_114 {dimension_numbers = #tpu.dot_dimension_numbers<[1], [0], [0], [1], [0, 0, 1, 1], [], []>} : vector<128x128xbf16>, vector<128x128xbf16>, vector<128x128xf32> -> vector<128x128xf32>
    %243 = arith.addf %242, %5 : vector<128x128xf32>
    %244 = vector.broadcast %219 : f32 to vector<128x128xf32>
    %245 = arith.mulf %244, %243 : vector<128x128xf32>
    %246 = arith.addf %209, %245 : vector<128x128xf32>
    %247 = arith.truncf %246 : vector<128x128xf32> to vector<128x128xbf16>
    %c0_115 = arith.constant 0 : index
    %c0_116 = arith.constant 0 : index
    %248 = vector.load %arg5[%c0_115, %c0_116] : memref<128x128xbf16, #tpu.memory_space<vmem>>, vector<128x128xbf16>
    %cst_117 = arith.constant dense<0.000000e+00> : vector<128x128xf32>
    %249 = tpu.matmul %247, %248, %cst_117 {dimension_numbers = #tpu.dot_dimension_numbers<[1], [0], [0], [1], [0, 0, 1, 1], [], []>} : vector<128x128xbf16>, vector<128x128xbf16>, vector<128x128xf32> -> vector<128x128xf32>
    %250 = arith.addf %249, %2 : vector<128x128xf32>
    %251 = math.tanh %250 : vector<128x128xf32>
    %252 = arith.truncf %251 : vector<128x128xf32> to vector<128x128xbf16>
    %c0_118 = arith.constant 0 : index
    %c0_119 = arith.constant 0 : index
    %253 = vector.load %arg7[%c0_118, %c0_119] : memref<128x128xbf16, #tpu.memory_space<vmem>>, vector<128x128xbf16>
    %cst_120 = arith.constant dense<0.000000e+00> : vector<128x128xf32>
    %254 = tpu.matmul %252, %253, %cst_120 {dimension_numbers = #tpu.dot_dimension_numbers<[1], [0], [0], [1], [0, 0, 1, 1], [], []>} : vector<128x128xbf16>, vector<128x128xbf16>, vector<128x128xf32> -> vector<128x128xf32>
    %255 = arith.addf %254, %5 : vector<128x128xf32>
    %256 = vector.broadcast %216 : f32 to vector<128x128xf32>
    %257 = arith.mulf %256, %255 : vector<128x128xf32>
    %258 = arith.addf %209, %257 : vector<128x128xf32>
    %259 = arith.truncf %258 : vector<128x128xf32> to vector<128x128xbf16>
    %c0_121 = arith.constant 0 : index
    %c0_122 = arith.constant 0 : index
    %260 = vector.load %arg5[%c0_121, %c0_122] : memref<128x128xbf16, #tpu.memory_space<vmem>>, vector<128x128xbf16>
    %cst_123 = arith.constant dense<0.000000e+00> : vector<128x128xf32>
    %261 = tpu.matmul %259, %260, %cst_123 {dimension_numbers = #tpu.dot_dimension_numbers<[1], [0], [0], [1], [0, 0, 1, 1], [], []>} : vector<128x128xbf16>, vector<128x128xbf16>, vector<128x128xf32> -> vector<128x128xf32>
    %262 = arith.addf %261, %2 : vector<128x128xf32>
    %263 = math.tanh %262 : vector<128x128xf32>
    %264 = arith.truncf %263 : vector<128x128xf32> to vector<128x128xbf16>
    %c0_124 = arith.constant 0 : index
    %c0_125 = arith.constant 0 : index
    %265 = vector.load %arg7[%c0_124, %c0_125] : memref<128x128xbf16, #tpu.memory_space<vmem>>, vector<128x128xbf16>
    %cst_126 = arith.constant dense<0.000000e+00> : vector<128x128xf32>
    %266 = tpu.matmul %264, %265, %cst_126 {dimension_numbers = #tpu.dot_dimension_numbers<[1], [0], [0], [1], [0, 0, 1, 1], [], []>} : vector<128x128xbf16>, vector<128x128xbf16>, vector<128x128xf32> -> vector<128x128xf32>
    %267 = arith.addf %266, %5 : vector<128x128xf32>
    %cst_127 = arith.constant 2.000000e+00 : f32
    %268 = vector.broadcast %cst_127 : f32 to vector<128x128xf32>
    %269 = arith.mulf %268, %243 : vector<128x128xf32>
    %270 = arith.addf %231, %269 : vector<128x128xf32>
    %cst_128 = arith.constant 2.000000e+00 : f32
    %271 = vector.broadcast %cst_128 : f32 to vector<128x128xf32>
    %272 = arith.mulf %271, %255 : vector<128x128xf32>
    %273 = arith.addf %270, %272 : vector<128x128xf32>
    %274 = arith.addf %273, %267 : vector<128x128xf32>
    %275 = vector.broadcast %222 : f32 to vector<128x128xf32>
    %276 = arith.mulf %275, %274 : vector<128x128xf32>
    %277 = arith.addf %209, %276 : vector<128x128xf32>
    %278 = arith.index_cast %c4_i32 : i32 to index
    %c0_129 = arith.constant 0 : index
    %c0_130 = arith.constant 0 : index
    %279 = vector.load %arg9[%278, %c0_129, %c0_130] : memref<8x128x128xf32, #tpu.memory_space<vmem>>, vector<1x128x128xf32>
    %280 = vector.shape_cast %279 : vector<1x128x128xf32> to vector<128x128xf32>
    %281 = vector.shape_cast %277 : vector<128x128xf32> to vector<1x128x128xf32>
    tpu.vector_store %arg9[%278, %c0_129, %c0_130], %281 {strides = array<i32>} : memref<8x128x128xf32, #tpu.memory_space<vmem>>, vector<1x128x128xf32>,
    %c5_i32 = arith.constant 5 : i32
    %c1_i32_131 = arith.constant 1 : i32
    %282 = arith.subi %c5_i32, %c1_i32_131 : i32
    %283 = arith.index_cast %282 : i32 to index
    %284 = memref.load %arg1[%283] : memref<7xf32, #tpu.memory_space<smem>>
    %c1_i32_132 = arith.constant 1 : i32
    %285 = arith.subi %c5_i32, %c1_i32_132 : i32
    %286 = arith.index_cast %285 : i32 to index
    %287 = memref.load %arg2[%286] : memref<7xf32, #tpu.memory_space<smem>>
    %c1_i32_133 = arith.constant 1 : i32
    %288 = arith.subi %c5_i32, %c1_i32_133 : i32
    %289 = arith.index_cast %288 : i32 to index
    %290 = memref.load %arg3[%289] : memref<7xf32, #tpu.memory_space<smem>>
    %291 = arith.truncf %277 : vector<128x128xf32> to vector<128x128xbf16>
    %c0_134 = arith.constant 0 : index
    %c0_135 = arith.constant 0 : index
    %292 = vector.load %arg5[%c0_134, %c0_135] : memref<128x128xbf16, #tpu.memory_space<vmem>>, vector<128x128xbf16>
    %cst_136 = arith.constant dense<0.000000e+00> : vector<128x128xf32>
    %293 = tpu.matmul %291, %292, %cst_136 {dimension_numbers = #tpu.dot_dimension_numbers<[1], [0], [0], [1], [0, 0, 1, 1], [], []>} : vector<128x128xbf16>, vector<128x128xbf16>, vector<128x128xf32> -> vector<128x128xf32>
    %294 = arith.addf %293, %2 : vector<128x128xf32>
    %295 = math.tanh %294 : vector<128x128xf32>
    %296 = arith.truncf %295 : vector<128x128xf32> to vector<128x128xbf16>
    %c0_137 = arith.constant 0 : index
    %c0_138 = arith.constant 0 : index
    %297 = vector.load %arg7[%c0_137, %c0_138] : memref<128x128xbf16, #tpu.memory_space<vmem>>, vector<128x128xbf16>
    %cst_139 = arith.constant dense<0.000000e+00> : vector<128x128xf32>
    %298 = tpu.matmul %296, %297, %cst_139 {dimension_numbers = #tpu.dot_dimension_numbers<[1], [0], [0], [1], [0, 0, 1, 1], [], []>} : vector<128x128xbf16>, vector<128x128xbf16>, vector<128x128xf32> -> vector<128x128xf32>
    %299 = arith.addf %298, %5 : vector<128x128xf32>
    %300 = vector.broadcast %287 : f32 to vector<128x128xf32>
    %301 = arith.mulf %300, %299 : vector<128x128xf32>
    %302 = arith.addf %277, %301 : vector<128x128xf32>
    %303 = arith.truncf %302 : vector<128x128xf32> to vector<128x128xbf16>
    %c0_140 = arith.constant 0 : index
    %c0_141 = arith.constant 0 : index
    %304 = vector.load %arg5[%c0_140, %c0_141] : memref<128x128xbf16, #tpu.memory_space<vmem>>, vector<128x128xbf16>
    %cst_142 = arith.constant dense<0.000000e+00> : vector<128x128xf32>
    %305 = tpu.matmul %303, %304, %cst_142 {dimension_numbers = #tpu.dot_dimension_numbers<[1], [0], [0], [1], [0, 0, 1, 1], [], []>} : vector<128x128xbf16>, vector<128x128xbf16>, vector<128x128xf32> -> vector<128x128xf32>
    %306 = arith.addf %305, %2 : vector<128x128xf32>
    %307 = math.tanh %306 : vector<128x128xf32>
    %308 = arith.truncf %307 : vector<128x128xf32> to vector<128x128xbf16>
    %c0_143 = arith.constant 0 : index
    %c0_144 = arith.constant 0 : index
    %309 = vector.load %arg7[%c0_143, %c0_144] : memref<128x128xbf16, #tpu.memory_space<vmem>>, vector<128x128xbf16>
    %cst_145 = arith.constant dense<0.000000e+00> : vector<128x128xf32>
    %310 = tpu.matmul %308, %309, %cst_145 {dimension_numbers = #tpu.dot_dimension_numbers<[1], [0], [0], [1], [0, 0, 1, 1], [], []>} : vector<128x128xbf16>, vector<128x128xbf16>, vector<128x128xf32> -> vector<128x128xf32>
    %311 = arith.addf %310, %5 : vector<128x128xf32>
    %312 = vector.broadcast %287 : f32 to vector<128x128xf32>
    %313 = arith.mulf %312, %311 : vector<128x128xf32>
    %314 = arith.addf %277, %313 : vector<128x128xf32>
    %315 = arith.truncf %314 : vector<128x128xf32> to vector<128x128xbf16>
    %c0_146 = arith.constant 0 : index
    %c0_147 = arith.constant 0 : index
    %316 = vector.load %arg5[%c0_146, %c0_147] : memref<128x128xbf16, #tpu.memory_space<vmem>>, vector<128x128xbf16>
    %cst_148 = arith.constant dense<0.000000e+00> : vector<128x128xf32>
    %317 = tpu.matmul %315, %316, %cst_148 {dimension_numbers = #tpu.dot_dimension_numbers<[1], [0], [0], [1], [0, 0, 1, 1], [], []>} : vector<128x128xbf16>, vector<128x128xbf16>, vector<128x128xf32> -> vector<128x128xf32>
    %318 = arith.addf %317, %2 : vector<128x128xf32>
    %319 = math.tanh %318 : vector<128x128xf32>
    %320 = arith.truncf %319 : vector<128x128xf32> to vector<128x128xbf16>
    %c0_149 = arith.constant 0 : index
    %c0_150 = arith.constant 0 : index
    %321 = vector.load %arg7[%c0_149, %c0_150] : memref<128x128xbf16, #tpu.memory_space<vmem>>, vector<128x128xbf16>
    %cst_151 = arith.constant dense<0.000000e+00> : vector<128x128xf32>
    %322 = tpu.matmul %320, %321, %cst_151 {dimension_numbers = #tpu.dot_dimension_numbers<[1], [0], [0], [1], [0, 0, 1, 1], [], []>} : vector<128x128xbf16>, vector<128x128xbf16>, vector<128x128xf32> -> vector<128x128xf32>
    %323 = arith.addf %322, %5 : vector<128x128xf32>
    %324 = vector.broadcast %284 : f32 to vector<128x128xf32>
    %325 = arith.mulf %324, %323 : vector<128x128xf32>
    %326 = arith.addf %277, %325 : vector<128x128xf32>
    %327 = arith.truncf %326 : vector<128x128xf32> to vector<128x128xbf16>
    %c0_152 = arith.constant 0 : index
    %c0_153 = arith.constant 0 : index
    %328 = vector.load %arg5[%c0_152, %c0_153] : memref<128x128xbf16, #tpu.memory_space<vmem>>, vector<128x128xbf16>
    %cst_154 = arith.constant dense<0.000000e+00> : vector<128x128xf32>
    %329 = tpu.matmul %327, %328, %cst_154 {dimension_numbers = #tpu.dot_dimension_numbers<[1], [0], [0], [1], [0, 0, 1, 1], [], []>} : vector<128x128xbf16>, vector<128x128xbf16>, vector<128x128xf32> -> vector<128x128xf32>
    %330 = arith.addf %329, %2 : vector<128x128xf32>
    %331 = math.tanh %330 : vector<128x128xf32>
    %332 = arith.truncf %331 : vector<128x128xf32> to vector<128x128xbf16>
    %c0_155 = arith.constant 0 : index
    %c0_156 = arith.constant 0 : index
    %333 = vector.load %arg7[%c0_155, %c0_156] : memref<128x128xbf16, #tpu.memory_space<vmem>>, vector<128x128xbf16>
    %cst_157 = arith.constant dense<0.000000e+00> : vector<128x128xf32>
    %334 = tpu.matmul %332, %333, %cst_157 {dimension_numbers = #tpu.dot_dimension_numbers<[1], [0], [0], [1], [0, 0, 1, 1], [], []>} : vector<128x128xbf16>, vector<128x128xbf16>, vector<128x128xf32> -> vector<128x128xf32>
    %335 = arith.addf %334, %5 : vector<128x128xf32>
    %cst_158 = arith.constant 2.000000e+00 : f32
    %336 = vector.broadcast %cst_158 : f32 to vector<128x128xf32>
    %337 = arith.mulf %336, %311 : vector<128x128xf32>
    %338 = arith.addf %299, %337 : vector<128x128xf32>
    %cst_159 = arith.constant 2.000000e+00 : f32
    %339 = vector.broadcast %cst_159 : f32 to vector<128x128xf32>
    %340 = arith.mulf %339, %323 : vector<128x128xf32>
    %341 = arith.addf %338, %340 : vector<128x128xf32>
    %342 = arith.addf %341, %335 : vector<128x128xf32>
    %343 = vector.broadcast %290 : f32 to vector<128x128xf32>
    %344 = arith.mulf %343, %342 : vector<128x128xf32>
    %345 = arith.addf %277, %344 : vector<128x128xf32>
    %346 = arith.index_cast %c5_i32 : i32 to index
    %c0_160 = arith.constant 0 : index
    %c0_161 = arith.constant 0 : index
    %347 = vector.load %arg9[%346, %c0_160, %c0_161] : memref<8x128x128xf32, #tpu.memory_space<vmem>>, vector<1x128x128xf32>
    %348 = vector.shape_cast %347 : vector<1x128x128xf32> to vector<128x128xf32>
    %349 = vector.shape_cast %345 : vector<128x128xf32> to vector<1x128x128xf32>
    tpu.vector_store %arg9[%346, %c0_160, %c0_161], %349 {strides = array<i32>} : memref<8x128x128xf32, #tpu.memory_space<vmem>>, vector<1x128x128xf32>,
    %c6_i32 = arith.constant 6 : i32
    %c1_i32_162 = arith.constant 1 : i32
    %350 = arith.subi %c6_i32, %c1_i32_162 : i32
    %351 = arith.index_cast %350 : i32 to index
    %352 = memref.load %arg1[%351] : memref<7xf32, #tpu.memory_space<smem>>
    %c1_i32_163 = arith.constant 1 : i32
    %353 = arith.subi %c6_i32, %c1_i32_163 : i32
    %354 = arith.index_cast %353 : i32 to index
    %355 = memref.load %arg2[%354] : memref<7xf32, #tpu.memory_space<smem>>
    %c1_i32_164 = arith.constant 1 : i32
    %356 = arith.subi %c6_i32, %c1_i32_164 : i32
    %357 = arith.index_cast %356 : i32 to index
    %358 = memref.load %arg3[%357] : memref<7xf32, #tpu.memory_space<smem>>
    %359 = arith.truncf %345 : vector<128x128xf32> to vector<128x128xbf16>
    %c0_165 = arith.constant 0 : index
    %c0_166 = arith.constant 0 : index
    %360 = vector.load %arg5[%c0_165, %c0_166] : memref<128x128xbf16, #tpu.memory_space<vmem>>, vector<128x128xbf16>
    %cst_167 = arith.constant dense<0.000000e+00> : vector<128x128xf32>
    %361 = tpu.matmul %359, %360, %cst_167 {dimension_numbers = #tpu.dot_dimension_numbers<[1], [0], [0], [1], [0, 0, 1, 1], [], []>} : vector<128x128xbf16>, vector<128x128xbf16>, vector<128x128xf32> -> vector<128x128xf32>
    %362 = arith.addf %361, %2 : vector<128x128xf32>
    %363 = math.tanh %362 : vector<128x128xf32>
    %364 = arith.truncf %363 : vector<128x128xf32> to vector<128x128xbf16>
    %c0_168 = arith.constant 0 : index
    %c0_169 = arith.constant 0 : index
    %365 = vector.load %arg7[%c0_168, %c0_169] : memref<128x128xbf16, #tpu.memory_space<vmem>>, vector<128x128xbf16>
    %cst_170 = arith.constant dense<0.000000e+00> : vector<128x128xf32>
    %366 = tpu.matmul %364, %365, %cst_170 {dimension_numbers = #tpu.dot_dimension_numbers<[1], [0], [0], [1], [0, 0, 1, 1], [], []>} : vector<128x128xbf16>, vector<128x128xbf16>, vector<128x128xf32> -> vector<128x128xf32>
    %367 = arith.addf %366, %5 : vector<128x128xf32>
    %368 = vector.broadcast %355 : f32 to vector<128x128xf32>
    %369 = arith.mulf %368, %367 : vector<128x128xf32>
    %370 = arith.addf %345, %369 : vector<128x128xf32>
    %371 = arith.truncf %370 : vector<128x128xf32> to vector<128x128xbf16>
    %c0_171 = arith.constant 0 : index
    %c0_172 = arith.constant 0 : index
    %372 = vector.load %arg5[%c0_171, %c0_172] : memref<128x128xbf16, #tpu.memory_space<vmem>>, vector<128x128xbf16>
    %cst_173 = arith.constant dense<0.000000e+00> : vector<128x128xf32>
    %373 = tpu.matmul %371, %372, %cst_173 {dimension_numbers = #tpu.dot_dimension_numbers<[1], [0], [0], [1], [0, 0, 1, 1], [], []>} : vector<128x128xbf16>, vector<128x128xbf16>, vector<128x128xf32> -> vector<128x128xf32>
    %374 = arith.addf %373, %2 : vector<128x128xf32>
    %375 = math.tanh %374 : vector<128x128xf32>
    %376 = arith.truncf %375 : vector<128x128xf32> to vector<128x128xbf16>
    %c0_174 = arith.constant 0 : index
    %c0_175 = arith.constant 0 : index
    %377 = vector.load %arg7[%c0_174, %c0_175] : memref<128x128xbf16, #tpu.memory_space<vmem>>, vector<128x128xbf16>
    %cst_176 = arith.constant dense<0.000000e+00> : vector<128x128xf32>
    %378 = tpu.matmul %376, %377, %cst_176 {dimension_numbers = #tpu.dot_dimension_numbers<[1], [0], [0], [1], [0, 0, 1, 1], [], []>} : vector<128x128xbf16>, vector<128x128xbf16>, vector<128x128xf32> -> vector<128x128xf32>
    %379 = arith.addf %378, %5 : vector<128x128xf32>
    %380 = vector.broadcast %355 : f32 to vector<128x128xf32>
    %381 = arith.mulf %380, %379 : vector<128x128xf32>
    %382 = arith.addf %345, %381 : vector<128x128xf32>
    %383 = arith.truncf %382 : vector<128x128xf32> to vector<128x128xbf16>
    %c0_177 = arith.constant 0 : index
    %c0_178 = arith.constant 0 : index
    %384 = vector.load %arg5[%c0_177, %c0_178] : memref<128x128xbf16, #tpu.memory_space<vmem>>, vector<128x128xbf16>
    %cst_179 = arith.constant dense<0.000000e+00> : vector<128x128xf32>
    %385 = tpu.matmul %383, %384, %cst_179 {dimension_numbers = #tpu.dot_dimension_numbers<[1], [0], [0], [1], [0, 0, 1, 1], [], []>} : vector<128x128xbf16>, vector<128x128xbf16>, vector<128x128xf32> -> vector<128x128xf32>
    %386 = arith.addf %385, %2 : vector<128x128xf32>
    %387 = math.tanh %386 : vector<128x128xf32>
    %388 = arith.truncf %387 : vector<128x128xf32> to vector<128x128xbf16>
    %c0_180 = arith.constant 0 : index
    %c0_181 = arith.constant 0 : index
    %389 = vector.load %arg7[%c0_180, %c0_181] : memref<128x128xbf16, #tpu.memory_space<vmem>>, vector<128x128xbf16>
    %cst_182 = arith.constant dense<0.000000e+00> : vector<128x128xf32>
    %390 = tpu.matmul %388, %389, %cst_182 {dimension_numbers = #tpu.dot_dimension_numbers<[1], [0], [0], [1], [0, 0, 1, 1], [], []>} : vector<128x128xbf16>, vector<128x128xbf16>, vector<128x128xf32> -> vector<128x128xf32>
    %391 = arith.addf %390, %5 : vector<128x128xf32>
    %392 = vector.broadcast %352 : f32 to vector<128x128xf32>
    %393 = arith.mulf %392, %391 : vector<128x128xf32>
    %394 = arith.addf %345, %393 : vector<128x128xf32>
    %395 = arith.truncf %394 : vector<128x128xf32> to vector<128x128xbf16>
    %c0_183 = arith.constant 0 : index
    %c0_184 = arith.constant 0 : index
    %396 = vector.load %arg5[%c0_183, %c0_184] : memref<128x128xbf16, #tpu.memory_space<vmem>>, vector<128x128xbf16>
    %cst_185 = arith.constant dense<0.000000e+00> : vector<128x128xf32>
    %397 = tpu.matmul %395, %396, %cst_185 {dimension_numbers = #tpu.dot_dimension_numbers<[1], [0], [0], [1], [0, 0, 1, 1], [], []>} : vector<128x128xbf16>, vector<128x128xbf16>, vector<128x128xf32> -> vector<128x128xf32>
    %398 = arith.addf %397, %2 : vector<128x128xf32>
    %399 = math.tanh %398 : vector<128x128xf32>
    %400 = arith.truncf %399 : vector<128x128xf32> to vector<128x128xbf16>
    %c0_186 = arith.constant 0 : index
    %c0_187 = arith.constant 0 : index
    %401 = vector.load %arg7[%c0_186, %c0_187] : memref<128x128xbf16, #tpu.memory_space<vmem>>, vector<128x128xbf16>
    %cst_188 = arith.constant dense<0.000000e+00> : vector<128x128xf32>
    %402 = tpu.matmul %400, %401, %cst_188 {dimension_numbers = #tpu.dot_dimension_numbers<[1], [0], [0], [1], [0, 0, 1, 1], [], []>} : vector<128x128xbf16>, vector<128x128xbf16>, vector<128x128xf32> -> vector<128x128xf32>
    %403 = arith.addf %402, %5 : vector<128x128xf32>
    %cst_189 = arith.constant 2.000000e+00 : f32
    %404 = vector.broadcast %cst_189 : f32 to vector<128x128xf32>
    %405 = arith.mulf %404, %379 : vector<128x128xf32>
    %406 = arith.addf %367, %405 : vector<128x128xf32>
    %cst_190 = arith.constant 2.000000e+00 : f32
    %407 = vector.broadcast %cst_190 : f32 to vector<128x128xf32>
    %408 = arith.mulf %407, %391 : vector<128x128xf32>
    %409 = arith.addf %406, %408 : vector<128x128xf32>
    %410 = arith.addf %409, %403 : vector<128x128xf32>
    %411 = vector.broadcast %358 : f32 to vector<128x128xf32>
    %412 = arith.mulf %411, %410 : vector<128x128xf32>
    %413 = arith.addf %345, %412 : vector<128x128xf32>
    %414 = arith.index_cast %c6_i32 : i32 to index
    %c0_191 = arith.constant 0 : index
    %c0_192 = arith.constant 0 : index
    %415 = vector.load %arg9[%414, %c0_191, %c0_192] : memref<8x128x128xf32, #tpu.memory_space<vmem>>, vector<1x128x128xf32>
    %416 = vector.shape_cast %415 : vector<1x128x128xf32> to vector<128x128xf32>
    %417 = vector.shape_cast %413 : vector<128x128xf32> to vector<1x128x128xf32>
    tpu.vector_store %arg9[%414, %c0_191, %c0_192], %417 {strides = array<i32>} : memref<8x128x128xf32, #tpu.memory_space<vmem>>, vector<1x128x128xf32>,
    %c7_i32 = arith.constant 7 : i32
    %c1_i32_193 = arith.constant 1 : i32
    %418 = arith.subi %c7_i32, %c1_i32_193 : i32
    %419 = arith.index_cast %418 : i32 to index
    %420 = memref.load %arg1[%419] : memref<7xf32, #tpu.memory_space<smem>>
    %c1_i32_194 = arith.constant 1 : i32
    %421 = arith.subi %c7_i32, %c1_i32_194 : i32
    %422 = arith.index_cast %421 : i32 to index
    %423 = memref.load %arg2[%422] : memref<7xf32, #tpu.memory_space<smem>>
    %c1_i32_195 = arith.constant 1 : i32
    %424 = arith.subi %c7_i32, %c1_i32_195 : i32
    %425 = arith.index_cast %424 : i32 to index
    %426 = memref.load %arg3[%425] : memref<7xf32, #tpu.memory_space<smem>>
    %427 = arith.truncf %413 : vector<128x128xf32> to vector<128x128xbf16>
    %c0_196 = arith.constant 0 : index
    %c0_197 = arith.constant 0 : index
    %428 = vector.load %arg5[%c0_196, %c0_197] : memref<128x128xbf16, #tpu.memory_space<vmem>>, vector<128x128xbf16>
    %cst_198 = arith.constant dense<0.000000e+00> : vector<128x128xf32>
    %429 = tpu.matmul %427, %428, %cst_198 {dimension_numbers = #tpu.dot_dimension_numbers<[1], [0], [0], [1], [0, 0, 1, 1], [], []>} : vector<128x128xbf16>, vector<128x128xbf16>, vector<128x128xf32> -> vector<128x128xf32>
    %430 = arith.addf %429, %2 : vector<128x128xf32>
    %431 = math.tanh %430 : vector<128x128xf32>
    %432 = arith.truncf %431 : vector<128x128xf32> to vector<128x128xbf16>
    %c0_199 = arith.constant 0 : index
    %c0_200 = arith.constant 0 : index
    %433 = vector.load %arg7[%c0_199, %c0_200] : memref<128x128xbf16, #tpu.memory_space<vmem>>, vector<128x128xbf16>
    %cst_201 = arith.constant dense<0.000000e+00> : vector<128x128xf32>
    %434 = tpu.matmul %432, %433, %cst_201 {dimension_numbers = #tpu.dot_dimension_numbers<[1], [0], [0], [1], [0, 0, 1, 1], [], []>} : vector<128x128xbf16>, vector<128x128xbf16>, vector<128x128xf32> -> vector<128x128xf32>
    %435 = arith.addf %434, %5 : vector<128x128xf32>
    %436 = vector.broadcast %423 : f32 to vector<128x128xf32>
    %437 = arith.mulf %436, %435 : vector<128x128xf32>
    %438 = arith.addf %413, %437 : vector<128x128xf32>
    %439 = arith.truncf %438 : vector<128x128xf32> to vector<128x128xbf16>
    %c0_202 = arith.constant 0 : index
    %c0_203 = arith.constant 0 : index
    %440 = vector.load %arg5[%c0_202, %c0_203] : memref<128x128xbf16, #tpu.memory_space<vmem>>, vector<128x128xbf16>
    %cst_204 = arith.constant dense<0.000000e+00> : vector<128x128xf32>
    %441 = tpu.matmul %439, %440, %cst_204 {dimension_numbers = #tpu.dot_dimension_numbers<[1], [0], [0], [1], [0, 0, 1, 1], [], []>} : vector<128x128xbf16>, vector<128x128xbf16>, vector<128x128xf32> -> vector<128x128xf32>
    %442 = arith.addf %441, %2 : vector<128x128xf32>
    %443 = math.tanh %442 : vector<128x128xf32>
    %444 = arith.truncf %443 : vector<128x128xf32> to vector<128x128xbf16>
    %c0_205 = arith.constant 0 : index
    %c0_206 = arith.constant 0 : index
    %445 = vector.load %arg7[%c0_205, %c0_206] : memref<128x128xbf16, #tpu.memory_space<vmem>>, vector<128x128xbf16>
    %cst_207 = arith.constant dense<0.000000e+00> : vector<128x128xf32>
    %446 = tpu.matmul %444, %445, %cst_207 {dimension_numbers = #tpu.dot_dimension_numbers<[1], [0], [0], [1], [0, 0, 1, 1], [], []>} : vector<128x128xbf16>, vector<128x128xbf16>, vector<128x128xf32> -> vector<128x128xf32>
    %447 = arith.addf %446, %5 : vector<128x128xf32>
    %448 = vector.broadcast %423 : f32 to vector<128x128xf32>
    %449 = arith.mulf %448, %447 : vector<128x128xf32>
    %450 = arith.addf %413, %449 : vector<128x128xf32>
    %451 = arith.truncf %450 : vector<128x128xf32> to vector<128x128xbf16>
    %c0_208 = arith.constant 0 : index
    %c0_209 = arith.constant 0 : index
    %452 = vector.load %arg5[%c0_208, %c0_209] : memref<128x128xbf16, #tpu.memory_space<vmem>>, vector<128x128xbf16>
    %cst_210 = arith.constant dense<0.000000e+00> : vector<128x128xf32>
    %453 = tpu.matmul %451, %452, %cst_210 {dimension_numbers = #tpu.dot_dimension_numbers<[1], [0], [0], [1], [0, 0, 1, 1], [], []>} : vector<128x128xbf16>, vector<128x128xbf16>, vector<128x128xf32> -> vector<128x128xf32>
    %454 = arith.addf %453, %2 : vector<128x128xf32>
    %455 = math.tanh %454 : vector<128x128xf32>
    %456 = arith.truncf %455 : vector<128x128xf32> to vector<128x128xbf16>
    %c0_211 = arith.constant 0 : index
    %c0_212 = arith.constant 0 : index
    %457 = vector.load %arg7[%c0_211, %c0_212] : memref<128x128xbf16, #tpu.memory_space<vmem>>, vector<128x128xbf16>
    %cst_213 = arith.constant dense<0.000000e+00> : vector<128x128xf32>
    %458 = tpu.matmul %456, %457, %cst_213 {dimension_numbers = #tpu.dot_dimension_numbers<[1], [0], [0], [1], [0, 0, 1, 1], [], []>} : vector<128x128xbf16>, vector<128x128xbf16>, vector<128x128xf32> -> vector<128x128xf32>
    %459 = arith.addf %458, %5 : vector<128x128xf32>
    %460 = vector.broadcast %420 : f32 to vector<128x128xf32>
    %461 = arith.mulf %460, %459 : vector<128x128xf32>
    %462 = arith.addf %413, %461 : vector<128x128xf32>
    %463 = arith.truncf %462 : vector<128x128xf32> to vector<128x128xbf16>
    %c0_214 = arith.constant 0 : index
    %c0_215 = arith.constant 0 : index
    %464 = vector.load %arg5[%c0_214, %c0_215] : memref<128x128xbf16, #tpu.memory_space<vmem>>, vector<128x128xbf16>
    %cst_216 = arith.constant dense<0.000000e+00> : vector<128x128xf32>
    %465 = tpu.matmul %463, %464, %cst_216 {dimension_numbers = #tpu.dot_dimension_numbers<[1], [0], [0], [1], [0, 0, 1, 1], [], []>} : vector<128x128xbf16>, vector<128x128xbf16>, vector<128x128xf32> -> vector<128x128xf32>
    %466 = arith.addf %465, %2 : vector<128x128xf32>
    %467 = math.tanh %466 : vector<128x128xf32>
    %468 = arith.truncf %467 : vector<128x128xf32> to vector<128x128xbf16>
    %c0_217 = arith.constant 0 : index
    %c0_218 = arith.constant 0 : index
    %469 = vector.load %arg7[%c0_217, %c0_218] : memref<128x128xbf16, #tpu.memory_space<vmem>>, vector<128x128xbf16>
    %cst_219 = arith.constant dense<0.000000e+00> : vector<128x128xf32>
    %470 = tpu.matmul %468, %469, %cst_219 {dimension_numbers = #tpu.dot_dimension_numbers<[1], [0], [0], [1], [0, 0, 1, 1], [], []>} : vector<128x128xbf16>, vector<128x128xbf16>, vector<128x128xf32> -> vector<128x128xf32>
    %471 = arith.addf %470, %5 : vector<128x128xf32>
    %cst_220 = arith.constant 2.000000e+00 : f32
    %472 = vector.broadcast %cst_220 : f32 to vector<128x128xf32>
    %473 = arith.mulf %472, %447 : vector<128x128xf32>
    %474 = arith.addf %435, %473 : vector<128x128xf32>
    %cst_221 = arith.constant 2.000000e+00 : f32
    %475 = vector.broadcast %cst_221 : f32 to vector<128x128xf32>
    %476 = arith.mulf %475, %459 : vector<128x128xf32>
    %477 = arith.addf %474, %476 : vector<128x128xf32>
    %478 = arith.addf %477, %471 : vector<128x128xf32>
    %479 = vector.broadcast %426 : f32 to vector<128x128xf32>
    %480 = arith.mulf %479, %478 : vector<128x128xf32>
    %481 = arith.addf %413, %480 : vector<128x128xf32>
    %482 = arith.index_cast %c7_i32 : i32 to index
    %c0_222 = arith.constant 0 : index
    %c0_223 = arith.constant 0 : index
    %483 = vector.load %arg9[%482, %c0_222, %c0_223] : memref<8x128x128xf32, #tpu.memory_space<vmem>>, vector<1x128x128xf32>
    %484 = vector.shape_cast %483 : vector<1x128x128xf32> to vector<128x128xf32>
    %485 = vector.shape_cast %481 : vector<128x128xf32> to vector<1x128x128xf32>
    tpu.vector_store %arg9[%482, %c0_222, %c0_223], %485 {strides = array<i32>} : memref<8x128x128xf32, #tpu.memory_space<vmem>>, vector<1x128x128xf32>,
    %c7_i32_224 = arith.constant 7 : i32
    return
  }
  func.func @transform_0(%arg0: i32) -> i32 {
    %c0_i32 = arith.constant 0 : i32
    %c0_i32_0 = arith.constant 0 : i32
    return %c0_i32 : i32
  }
  func.func @transform_1(%arg0: i32) -> i32 {
    %c0_i32 = arith.constant 0 : i32
    %c0_i32_0 = arith.constant 0 : i32
    return %c0_i32 : i32
  }
  func.func @transform_2(%arg0: i32) -> i32 {
    %c0_i32 = arith.constant 0 : i32
    %c0_i32_0 = arith.constant 0 : i32
    return %c0_i32 : i32
  }
  func.func @transform_3(%arg0: i32) -> (i32, i32) {
    %c0_i32 = arith.constant 0 : i32
    %c0_i32_0 = arith.constant 0 : i32
    return %arg0, %c0_i32 : i32, i32
  }
  func.func @transform_4(%arg0: i32) -> (i32, i32) {
    %c0_i32 = arith.constant 0 : i32
    %c0_i32_0 = arith.constant 0 : i32
    %c0_i32_1 = arith.constant 0 : i32
    return %c0_i32, %c0_i32_0 : i32, i32
  }
  func.func @transform_5(%arg0: i32) -> (i32, i32) {
    %c0_i32 = arith.constant 0 : i32
    %c0_i32_0 = arith.constant 0 : i32
    %c0_i32_1 = arith.constant 0 : i32
    return %c0_i32, %c0_i32_0 : i32, i32
  }
  func.func @transform_6(%arg0: i32) -> (i32, i32) {
    %c0_i32 = arith.constant 0 : i32
    %c0_i32_0 = arith.constant 0 : i32
    %c0_i32_1 = arith.constant 0 : i32
    return %c0_i32, %c0_i32_0 : i32, i32
  }
  func.func @transform_7(%arg0: i32) -> (i32, i32) {
    %c0_i32 = arith.constant 0 : i32
    %c0_i32_0 = arith.constant 0 : i32
    %c0_i32_1 = arith.constant 0 : i32
    return %c0_i32, %c0_i32_0 : i32, i32
  }
  func.func @transform_8(%arg0: i32) -> (i32, i32, i32) {
    %c0_i32 = arith.constant 0 : i32
    %c0_i32_0 = arith.constant 0 : i32
    %c0_i32_1 = arith.constant 0 : i32
    return %c0_i32, %arg0, %c0_i32_0 : i32, i32, i32
  }
}

</mosaic_0001>

<llo_original>
// kernel: tpu_custom_call.1
$region0: #{tpu_custom_call.1}
  #allocation0 [shape = 'u32[]', space=smem, size = 0x4, offset = 0x4, fixed_abs, tag = 'smem constant byte address 0x4 - core index']
  #allocation1 [shape = 'u32[144,128]{1,0:T(1,128)}', space=vmem, size = 0x12000, scoped, tag = 'internal scratch']
  #allocation15 [shape = 's32[]', space=sflag, size = 0x4, offset = 0, fixed_abs, tag = 'sflag constant byte address 0x0 - dummy sync flag']
  %s0 = inlined_call_operand.hbm [shape: f32[7], index: 0, kind: input, shape index: {}]
  %s1 = inlined_call_operand.vmem [shape: f32[7], index: 1, kind: input, shape index: {}]
  %s2 = inlined_call_operand.vmem [shape: f32[7], index: 2, kind: input, shape index: {}]
  %s3 = inlined_call_operand.hbm [shape: f32[256,128], index: 3, kind: input, shape index: {}]
  %s4 = inlined_call_operand.hbm [shape: bf16[128,128], index: 4, kind: input, shape index: {}]
  %s5 = inlined_call_operand.vmem [shape: f32[1,128], index: 5, kind: input, shape index: {}]
  %s6 = inlined_call_operand.hbm [shape: bf16[128,128], index: 6, kind: input, shape index: {}]
  %s7 = inlined_call_operand.vmem [shape: f32[1,128], index: 7, kind: input, shape index: {}]
  %s8 = inlined_call_operand.hbm [shape: f32[8,256,128], index: 8, kind: output, shape index: {}]
  %s9 = sld [smem:[#allocation0]]
  $region89: #{tpu_custom_call.1} parent=0
    _
  %s11 = ssub.s32 1, %s9
  %s12 = scalar_select 0, %s11, %s9
  $region1: #{tpu_custom_call.1} parent=0
    #allocation2 [shape = 'u8[512]{0}', space=smem, size = 0x200, scoped, tag = 'input window, operand 0, single buffered']
    #allocation3 [shape = 's32[2]{0}', space=sflag, size = 0x8, scoped, tag = 'scoped memory for tpu_custom_call.1']
    #allocation4 [shape = 's32[2]{0}', space=sflag, size = 0x8, scoped, tag = 'scoped memory for tpu_custom_call.1']
    #allocation5 [shape = 's32[2]{0}', space=sflag, size = 0x8, scoped, tag = 'scoped memory for tpu_custom_call.1']
    #allocation6 [shape = 's32[2]{0}', space=sflag, size = 0x8, scoped, tag = 'scoped memory for tpu_custom_call.1']
    #allocation7 [shape = 'u8[512]{0}', space=smem, size = 0x200, scoped, tag = 'input window, operand 1, single buffered']
    #allocation8 [shape = 'u8[512]{0}', space=smem, size = 0x200, scoped, tag = 'input window, operand 2, single buffered']
    #allocation9 [shape = 's32[1]{0}', space=sflag, size = 0x4, scoped, tag = 'scoped memory for tpu_custom_call.1']
    #allocation10 [shape = 'u8[131072]{0}', space=vmem, size = 0x20000, scoped, tag = 'input window, operand 3']
    #allocation11 [shape = 'u8[32768]{0}', space=vmem, size = 0x8000, scoped, tag = 'input window, operand 4, single buffered']
    #allocation12 [shape = 's32[1]{0}', space=sflag, size = 0x4, scoped, tag = 'scoped memory for tpu_custom_call.1']
    #allocation13 [shape = 'u8[32768]{0}', space=vmem, size = 0x8000, scoped, tag = 'input window, operand 6, single buffered']
    #allocation14 [shape = 'u8[1048576]{0}', space=vmem, size = 0x100000, scoped, tag = 'output window, operand 0']
    %13 = vsyncpa [#allocation5], 0
    %14 = vsyncpa [#allocation6], 0
    %15 = vsyncpa [#allocation9], 0
    %16 = vsyncpa [#allocation3], 0
    %s17 = scalar_lea.sflag [#allocation3], 1
    %18 = vsyncpa %s17, 0
    %19 = vsyncpa [#allocation12], 0
    %20 = vsyncpa [#allocation4], 0
    %s21 = scalar_lea.sflag [#allocation4], 1
    %22 = vsyncpa %s21, 0
    loop: start=0, step=1, limit=4
    $region2: #{tpu_custom_call.1} parent=1 // loop_pre_header
      _
    $region3: #{tpu_custom_call.1} parent=1 // loop_header
      %s24 = sphi 0, %s28
      %p25 = scmp.ge.s32.totalorder %s24, 4
      %s32 = sphi 0, %s32
      %s34 = sphi 0, %s32
      %s35 = sphi 0, %s34
      %s49 = sphi 0, %s35
      %s53 = sphi 0, %s53
      %s55 = sphi 0, %s53
      %s56 = sphi 0, %s55
      %s70 = sphi 0, %s56
      %s74 = sphi 0, %s74
      %s76 = sphi 0, %s74
      %s77 = sphi 0, %s76
      %s91 = sphi 0, %s77
      %s97 = sphi 0, %s99
      %s100 = sphi 0, %s97
      %s101 = sphi 0, %s100
      %s117 = sphi 0, %s101
      %s121 = sphi 0, %s121
      %s123 = sphi 0, %s121
      %s124 = sphi 0, %s123
      %s138 = sphi 0, %s124
      %s142 = sphi 0, %s142
      %s144 = sphi 0, %s142
      %s145 = sphi 0, %s144
      %s159 = sphi 0, %s145
      %s163 = sphi 0, %s163
      %s165 = sphi 0, %s163
      %s166 = sphi 0, %s165
      %s180 = sphi 0, %s166
      %s184 = sphi 0, %s184
      %s186 = sphi 0, %s184
      %s187 = sphi 0, %s186
      %s201 = sphi 0, %s187
      %s207 = sphi 0, %s209
      %s210 = sphi 0, %s207
      %s211 = sphi 0, %s210
      %s227 = sphi 0, %s211
    $region4: #{tpu_custom_call.1} parent=1 // loop_header_branch
      %27 = sbr.rel (%p25) target = $region8
    $region5: #{tpu_custom_call.1} parent=1 // loop_body
      %s29 = ssub.s32 %s24, 1
      %s30 = ssub.s32 %s24, 2
      %s31 = sadd.s32 %s24, 1
      %s33 = sadd.s32 %s32, 1
      %p36 = scmp.eq.s32.totalorder %s24, 1
      %p37 = scmp.ne.s32.totalorder %s32, %s34
      %p38 = scmp.eq.s32.totalorder %s24, 0
      %p39 = por %p37, %p38
      %p40 = scmp.ne.s32.totalorder %s32, %s34
      %p41 = scmp.eq.s32.totalorder %s29, 1
      %p42 = por %p40, %p41
      %p43 = scmp.ne.s32.totalorder %s34, %s35
      %p44 = scmp.eq.s32.totalorder %s29, 0
      %p45 = por %p43, %p44
      %p46 = scmp.ne.s32.totalorder %s34, %s35
      %p47 = scmp.eq.s32.totalorder %s30, 1
      %p48 = por %p46, %p47
      %p50 = scmp.ne.s32.totalorder %s35, %s49
      %p51 = scmp.eq.s32.totalorder %s30, 0
      %p52 = por %p50, %p51
      %s54 = sadd.s32 %s53, 1
      %p57 = scmp.eq.s32.totalorder %s24, 1
      %p58 = scmp.ne.s32.totalorder %s53, %s55
      %p59 = scmp.eq.s32.totalorder %s24, 0
      %p60 = por %p58, %p59
      %p61 = scmp.ne.s32.totalorder %s53, %s55
      %p62 = scmp.eq.s32.totalorder %s29, 1
      %p63 = por %p61, %p62
      %p64 = scmp.ne.s32.totalorder %s55, %s56
      %p65 = scmp.eq.s32.totalorder %s29, 0
      %p66 = por %p64, %p65
      %p67 = scmp.ne.s32.totalorder %s55, %s56
      %p68 = scmp.eq.s32.totalorder %s30, 1
      %p69 = por %p67, %p68
      %p71 = scmp.ne.s32.totalorder %s56, %s70
      %p72 = scmp.eq.s32.totalorder %s30, 0
      %p73 = por %p71, %p72
      %s75 = sadd.s32 %s74, 1
      %p78 = scmp.eq.s32.totalorder %s24, 1
      %p79 = scmp.ne.s32.totalorder %s74, %s76
      %p80 = scmp.eq.s32.totalorder %s24, 0
      %p81 = por %p79, %p80
      %p82 = scmp.ne.s32.totalorder %s74, %s76
      %p83 = scmp.eq.s32.totalorder %s29, 1
      %p84 = por %p82, %p83
      %p85 = scmp.ne.s32.totalorder %s76, %s77
      %p86 = scmp.eq.s32.totalorder %s29, 0
      %p87 = por %p85, %p86
      %p88 = scmp.ne.s32.totalorder %s76, %s77
      %p89 = scmp.eq.s32.totalorder %s30, 1
      %p90 = por %p88, %p89
      %p92 = scmp.ne.s32.totalorder %s77, %s91
      %p93 = scmp.eq.s32.totalorder %s30, 0
      %p94 = por %p92, %p93
      %s95 = ssub.s32 %s24, %s31
      %p96 = scmp.eq.s32.totalorder %s95, 0
      %s98 = sadd.s32 %s97, 1
      %s99 = scalar_select %p96, %s97, %s98
      %p102 = pneg %p96
      %p103 = scmp.eq.s32.totalorder %s24, 1
      %p104 = por %p102, %p103
      %p105 = scmp.ne.s32.totalorder %s97, %s100
      %p106 = scmp.eq.s32.totalorder %s24, 0
      %p107 = por %p105, %p106
      %p108 = scmp.ne.s32.totalorder %s97, %s100
      %p109 = scmp.eq.s32.totalorder %s29, 1
      %p110 = por %p108, %p109
      %p111 = scmp.ne.s32.totalorder %s100, %s101
      %p112 = scmp.eq.s32.totalorder %s29, 0
      %p113 = por %p111, %p112
      %p114 = scmp.ne.s32.totalorder %s100, %s101
      %p115 = scmp.eq.s32.totalorder %s30, 1
      %p116 = por %p114, %p115
      %p118 = scmp.ne.s32.totalorder %s101, %s117
      %p119 = scmp.eq.s32.totalorder %s30, 0
      %p120 = por %p118, %p119
      %s122 = sadd.s32 %s121, 1
      %p125 = scmp.eq.s32.totalorder %s24, 1
      %p126 = scmp.ne.s32.totalorder %s121, %s123
      %p127 = scmp.eq.s32.totalorder %s24, 0
      %p128 = por %p126, %p127
      %p129 = scmp.ne.s32.totalorder %s121, %s123
      %p130 = scmp.eq.s32.totalorder %s29, 1
      %p131 = por %p129, %p130
      %p132 = scmp.ne.s32.totalorder %s123, %s124
      %p133 = scmp.eq.s32.totalorder %s29, 0
      %p134 = por %p132, %p133
      %p135 = scmp.ne.s32.totalorder %s123, %s124
      %p136 = scmp.eq.s32.totalorder %s30, 1
      %p137 = por %p135, %p136
      %p139 = scmp.ne.s32.totalorder %s124, %s138
      %p140 = scmp.eq.s32.totalorder %s30, 0
      %p141 = por %p139, %p140
      %s143 = sadd.s32 %s142, 1
      %p146 = scmp.eq.s32.totalorder %s24, 1
      %p147 = scmp.ne.s32.totalorder %s142, %s144
      %p148 = scmp.eq.s32.totalorder %s24, 0
      %p149 = por %p147, %p148
      %p150 = scmp.ne.s32.totalorder %s142, %s144
      %p151 = scmp.eq.s32.totalorder %s29, 1
      %p152 = por %p150, %p151
      %p153 = scmp.ne.s32.totalorder %s144, %s145
      %p154 = scmp.eq.s32.totalorder %s29, 0
      %p155 = por %p153, %p154
      %p156 = scmp.ne.s32.totalorder %s144, %s145
      %p157 = scmp.eq.s32.totalorder %s30, 1
      %p158 = por %p156, %p157
      %p160 = scmp.ne.s32.totalorder %s145, %s159
      %p161 = scmp.eq.s32.totalorder %s30, 0
      %p162 = por %p160, %p161
      %s164 = sadd.s32 %s163, 1
      %p167 = scmp.eq.s32.totalorder %s24, 1
      %p168 = scmp.ne.s32.totalorder %s163, %s165
      %p169 = scmp.eq.s32.totalorder %s24, 0
      %p170 = por %p168, %p169
      %p171 = scmp.ne.s32.totalorder %s163, %s165
      %p172 = scmp.eq.s32.totalorder %s29, 1
      %p173 = por %p171, %p172
      %p174 = scmp.ne.s32.totalorder %s165, %s166
      %p175 = scmp.eq.s32.totalorder %s29, 0
      %p176 = por %p174, %p175
      %p177 = scmp.ne.s32.totalorder %s165, %s166
      %p178 = scmp.eq.s32.totalorder %s30, 1
      %p179 = por %p177, %p178
      %p181 = scmp.ne.s32.totalorder %s166, %s180
      %p182 = scmp.eq.s32.totalorder %s30, 0
      %p183 = por %p181, %p182
      %s185 = sadd.s32 %s184, 1
      %p188 = scmp.eq.s32.totalorder %s24, 1
      %p189 = scmp.ne.s32.totalorder %s184, %s186
      %p190 = scmp.eq.s32.totalorder %s24, 0
      %p191 = por %p189, %p190
      %p192 = scmp.ne.s32.totalorder %s184, %s186
      %p193 = scmp.eq.s32.totalorder %s29, 1
      %p194 = por %p192, %p193
      %p195 = scmp.ne.s32.totalorder %s186, %s187
      %p196 = scmp.eq.s32.totalorder %s29, 0
      %p197 = por %p195, %p196
      %p198 = scmp.ne.s32.totalorder %s186, %s187
      %p199 = scmp.eq.s32.totalorder %s30, 1
      %p200 = por %p198, %p199
      %p202 = scmp.ne.s32.totalorder %s187, %s201
      %p203 = scmp.eq.s32.totalorder %s30, 0
      %p204 = por %p202, %p203
      %s205 = ssub.s32 %s24, %s31
      %p206 = scmp.eq.s32.totalorder %s205, 0
      %s208 = sadd.s32 %s207, 1
      %s209 = scalar_select %p206, %s207, %s208
      %p212 = pneg %p206
      %p213 = scmp.eq.s32.totalorder %s24, 1
      %p214 = por %p212, %p213
      %p215 = scmp.ne.s32.totalorder %s207, %s210
      %p216 = scmp.eq.s32.totalorder %s24, 0
      %p217 = por %p215, %p216
      %p218 = scmp.ne.s32.totalorder %s207, %s210
      %p219 = scmp.eq.s32.totalorder %s29, 1
      %p220 = por %p218, %p219
      %p221 = scmp.ne.s32.totalorder %s210, %s211
      %p222 = scmp.eq.s32.totalorder %s29, 0
      %p223 = por %p221, %p222
      %p224 = scmp.ne.s32.totalorder %s210, %s211
      %p225 = scmp.eq.s32.totalorder %s30, 1
      %p226 = por %p224, %p225
      %p228 = scmp.ne.s32.totalorder %s211, %s227
      %p229 = scmp.eq.s32.totalorder %s30, 0
      %p230 = por %p228, %p229
      %p231 = scmp.le.s32.totalorder 1, %s24
      %p232 = scmp.lt.s32.totalorder %s24, 3
      %p233 = pnand %p231, %p232
      %p234 = pneg %p233
      // Predicated region
      $region9: #{tpu_custom_call.1} parent=5 // pred_check
        _
      $region10: #{tpu_custom_call.1} parent=5 // pred_check_branch
        %236 = sbr.rel (%p233) target = $region12
      $region11: #{tpu_custom_call.1} parent=5 // pred_region
        %s237 = ssub.s32 %s24, 1
        // Predicated region
        $region13: #{tpu_custom_call.1} parent=11 // pred_check
          %p238 = pneg %p45
        $region14: #{tpu_custom_call.1} parent=11 // pred_check_branch
          %240 = sbr.rel (%p238) target = $region16
        $region15: #{tpu_custom_call.1} parent=11 // pred_region
          %s242 = ssub.s32 16, 16
          %243 = vsyncadd [#allocation5], %s242
          %246 = dma.hbm_to_smem %s0, 16, [#allocation2], [#allocation5]
        $region16: #{tpu_custom_call.1} parent=11 // pred_fallthru
          _
        // Predicated region
        $region17: #{tpu_custom_call.1} parent=11 // pred_check
          %p247 = pneg %p66
        $region18: #{tpu_custom_call.1} parent=11 // pred_check_branch
          %249 = sbr.rel (%p247) target = $region20
        $region19: #{tpu_custom_call.1} parent=11 // pred_region
          %s251 = ssub.s32 16, 16
          %252 = vsyncadd [#allocation6], %s251
          %s254 = sshll.u32 %s1, 4
          %s255 = int_to_ptr.vmem [resolvable:$true] %s254
          %257 = dma.vmem_to_smem %s255, 16, [#allocation7], [#allocation6]
        $region20: #{tpu_custom_call.1} parent=11 // pred_fallthru
          _
        // Predicated region
        $region21: #{tpu_custom_call.1} parent=11 // pred_check
          %p258 = pneg %p87
        $region22: #{tpu_custom_call.1} parent=11 // pred_check_branch
          %260 = sbr.rel (%p258) target = $region24
        $region23: #{tpu_custom_call.1} parent=11 // pred_region
          %s262 = ssub.s32 16, 16
          %263 = vsyncadd [#allocation9], %s262
          %s265 = sshll.u32 %s2, 4
          %s266 = int_to_ptr.vmem [resolvable:$true] %s265
          %268 = dma.vmem_to_smem %s266, 16, [#allocation8], [#allocation9]
        $region24: #{tpu_custom_call.1} parent=11 // pred_fallthru
          _
        // Predicated region
        $region25: #{tpu_custom_call.1} parent=11 // pred_check
          %p269 = pneg %p134
        $region26: #{tpu_custom_call.1} parent=11 // pred_check_branch
          %271 = sbr.rel (%p269) target = $region28
        $region27: #{tpu_custom_call.1} parent=11 // pred_region
          %s273 = ssub.s32 1024, 1024
          %274 = vsyncadd [#allocation12], %s273
          %s275 = sshll.u32 [#allocation11], 4
          %s276 = int_to_ptr.vmem [resolvable:$true] %s275
          %281 = dma.hbm_to_vmem [thread:$0]  %s4, 1024, %s276, [#allocation12], 64, 64, 4
        $region28: #{tpu_custom_call.1} parent=11 // pred_fallthru
          _
        // Predicated region
        $region29: #{tpu_custom_call.1} parent=11 // pred_check
          %p282 = pneg %p155
        $region30: #{tpu_custom_call.1} parent=11 // pred_check_branch
          %284 = sbr.rel (%p282) target = $region32
        $region31: #{tpu_custom_call.1} parent=11 // pred_region
          _
        $region32: #{tpu_custom_call.1} parent=11 // pred_fallthru
          _
        // Predicated region
        $region33: #{tpu_custom_call.1} parent=11 // pred_check
          %p285 = pneg %p176
        $region34: #{tpu_custom_call.1} parent=11 // pred_check_branch
          %287 = sbr.rel (%p285) target = $region36
        $region35: #{tpu_custom_call.1} parent=11 // pred_region
          %s289 = ssub.s32 1024, 1024
          %290 = vsyncadd [#allocation12], %s289
          %s291 = sshll.u32 [#allocation13], 4
          %s292 = int_to_ptr.vmem [resolvable:$true] %s291
          %297 = dma.hbm_to_vmem [thread:$0]  %s6, 1024, %s292, [#allocation12], 64, 64, 4
        $region36: #{tpu_custom_call.1} parent=11 // pred_fallthru
          _
        // Predicated region
        $region37: #{tpu_custom_call.1} parent=11 // pred_check
          %p298 = pneg %p197
        $region38: #{tpu_custom_call.1} parent=11 // pred_check_branch
          %300 = sbr.rel (%p298) target = $region40
        $region39: #{tpu_custom_call.1} parent=11 // pred_region
          _
        $region40: #{tpu_custom_call.1} parent=11 // pred_fallthru
          _
      $region12: #{tpu_custom_call.1} parent=5 // pred_fallthru
        _
      %p301 = scmp.lt.s32.totalorder %s24, 2
      // Predicated region
      $region41: #{tpu_custom_call.1} parent=5 // pred_check
        %p302 = pneg %p301
      $region42: #{tpu_custom_call.1} parent=5 // pred_check_branch
        %304 = sbr.rel (%p302) target = $region44
      $region43: #{tpu_custom_call.1} parent=5 // pred_region
        // Predicated region
        $region45: #{tpu_custom_call.1} parent=43 // pred_check
          %p305 = pneg %p107
        $region46: #{tpu_custom_call.1} parent=43 // pred_check_branch
          %307 = sbr.rel (%p305) target = $region48
        $region47: #{tpu_custom_call.1} parent=43 // pred_region
          %s308 = sand.u32 %s97, 1
          %s309 = scalar_lea.sflag [#allocation3], %s308
          %s310 = sand.u32 %s97, 1
          %s311 = smul.addr %s310, 128
          %s312 = scalar_lea.vmem [#allocation10], %s311
          %s313 = smul.u32 16, %s24
          %s315 = ssub.s32 2048, 2048
          %316 = vsyncadd %s309, %s315
          %s317 = smul.addr %s313, 128
          %s318 = scalar_lea.hbm %s3, %s317
          %s319 = sshll.u32 %s312, 4
          %s320 = int_to_ptr.vmem [resolvable:$true] %s319
          %325 = dma.hbm_to_vmem [thread:$0]  %s318, 2048, %s320, %s309, 128, 128, 8
        $region48: #{tpu_custom_call.1} parent=43 // pred_fallthru
          _
      $region44: #{tpu_custom_call.1} parent=5 // pred_fallthru
        _
      %p326 = scmp.le.s32.totalorder 1, %s24
      %p327 = scmp.lt.s32.totalorder %s24, 3
      %p328 = pnand %p326, %p327
      %p329 = pneg %p328
      // Predicated region
      $region49: #{tpu_custom_call.1} parent=5 // pred_check
        _
      $region50: #{tpu_custom_call.1} parent=5 // pred_check_branch
        %331 = sbr.rel (%p328) target = $region52
      $region51: #{tpu_custom_call.1} parent=5 // pred_region
        %s332 = ssub.s32 %s24, 1
        // Predicated region
        $region53: #{tpu_custom_call.1} parent=51 // pred_check
          %p333 = pneg %p45
        $region54: #{tpu_custom_call.1} parent=51 // pred_check_branch
          %335 = sbr.rel (%p333) target = $region56
        $region55: #{tpu_custom_call.1} parent=51 // pred_region
          %336 = dma.done [#allocation5], 16
        $region56: #{tpu_custom_call.1} parent=51 // pred_fallthru
          _
        // Predicated region
        $region57: #{tpu_custom_call.1} parent=51 // pred_check
          %p337 = pneg %p66
        $region58: #{tpu_custom_call.1} parent=51 // pred_check_branch
          %339 = sbr.rel (%p337) target = $region60
        $region59: #{tpu_custom_call.1} parent=51 // pred_region
          %340 = dma.done [#allocation6], 16
        $region60: #{tpu_custom_call.1} parent=51 // pred_fallthru
          _
        // Predicated region
        $region61: #{tpu_custom_call.1} parent=51 // pred_check
          %p341 = pneg %p87
        $region62: #{tpu_custom_call.1} parent=51 // pred_check_branch
          %343 = sbr.rel (%p341) target = $region64
        $region63: #{tpu_custom_call.1} parent=51 // pred_region
          %344 = dma.done [#allocation9], 16
        $region64: #{tpu_custom_call.1} parent=51 // pred_fallthru
          _
        %s345 = sand.u32 %s100, 1
        %s346 = scalar_lea.sflag [#allocation3], %s345
        %s347 = sand.u32 %s100, 1
        %s348 = smul.addr %s347, 128
        %s349 = scalar_lea.vmem [#allocation10], %s348
        // Predicated region
        $region65: #{tpu_custom_call.1} parent=51 // pred_check
          %p350 = pneg %p113
        $region66: #{tpu_custom_call.1} parent=51 // pred_check_branch
          %352 = sbr.rel (%p350) target = $region68
        $region67: #{tpu_custom_call.1} parent=51 // pred_region
          %353 = dma.done %s346, 2048
        $region68: #{tpu_custom_call.1} parent=51 // pred_fallthru
          _
        // Predicated region
        $region69: #{tpu_custom_call.1} parent=51 // pred_check
          %p354 = pneg %p134
        $region70: #{tpu_custom_call.1} parent=51 // pred_check_branch
          %356 = sbr.rel (%p354) target = $region72
        $region71: #{tpu_custom_call.1} parent=51 // pred_region
          %357 = dma.done [#allocation12], 1024
        $region72: #{tpu_custom_call.1} parent=51 // pred_fallthru
          _
        // Predicated region
        $region73: #{tpu_custom_call.1} parent=51 // pred_check
          %p358 = pneg %p176
        $region74: #{tpu_custom_call.1} parent=51 // pred_check_branch
          %360 = sbr.rel (%p358) target = $region76
        $region75: #{tpu_custom_call.1} parent=51 // pred_region
          %361 = dma.done [#allocation12], 1024
        $region76: #{tpu_custom_call.1} parent=51 // pred_fallthru
          _
        %362 = sfence
        %p363 = pneg %p45
        %p364 = pneg %p42
        %p365 = pneg %p66
        %p366 = pneg %p63
        %p367 = pneg %p87
        %p368 = pneg %p84
        %s369 = sand.u32 %s100, 1
        %s370 = scalar_lea.sflag [#allocation3], %s369
        %s371 = sand.u32 %s100, 1
        %s372 = smul.addr %s371, 128
        %s373 = scalar_lea.vmem [#allocation10], %s372
        %p374 = pneg %p113
        %p375 = pneg %p110
        %p376 = pneg %p134
        %p377 = pneg %p131
        %p378 = pneg %p155
        %p379 = pneg %p152
        %p380 = pneg %p176
        %p381 = pneg %p173
        %p382 = pneg %p197
        %p383 = pneg %p194
        %p384 = pneg %p223
        %p385 = pneg %p220
        %s386 = sand.u32 %s210, 1
        %s387 = scalar_lea.sflag [#allocation4], %s386
        %s388 = sand.u32 %s210, 1
        %s389 = smul.addr %s388, 1024
        %s390 = scalar_lea.vmem [#allocation14], %s389
        %s391 = smul.u32 16, %s29
        %s392 = smul.u32 16, %s29
        %v394 = vld [vmem:[%s5] sm:$0x1]
        %v396 = vlaneseq
        %v397 = vshrl.u32 %v396, 7
        %v398 = vsub.s32 0, %v397
        %v399 = vrot.slane %v394, %v398
        %v401 = vld [vmem:[%s7] sm:$0x1]
        %v403 = vlaneseq
        %v404 = vshrl.u32 %v403, 7
        %v405 = vsub.s32 0, %v404
        %v406 = vrot.slane %v401, %v405
        %v408 = vld [vmem:[%s349] sm:$0xff]
        %v409 = vld [vmem:[%s349 + $0x8] sm:$0xff]
        %v410 = vld [vmem:[%s349 + $0x10] sm:$0xff]
        %v411 = vld [vmem:[%s349 + $0x18] sm:$0xff]
        %v412 = vld [vmem:[%s349 + $0x20] sm:$0xff]
        %v413 = vld [vmem:[%s349 + $0x28] sm:$0xff]
        %v414 = vld [vmem:[%s349 + $0x30] sm:$0xff]
        %v415 = vld [vmem:[%s349 + $0x38] sm:$0xff]
        %v416 = vld [vmem:[%s349 + $0x40] sm:$0xff]
        %v417 = vld [vmem:[%s349 + $0x48] sm:$0xff]
        %v418 = vld [vmem:[%s349 + $0x50] sm:$0xff]
        %v419 = vld [vmem:[%s349 + $0x58] sm:$0xff]
        %v420 = vld [vmem:[%s349 + $0x60] sm:$0xff]
        %v421 = vld [vmem:[%s349 + $0x68] sm:$0xff]
        %v422 = vld [vmem:[%s349 + $0x70] sm:$0xff]
        %v423 = vld [vmem:[%s349 + $0x78] sm:$0xff]
        %424 = vst [vmem:[%s390] sm:$0xff] %v408
        %425 = vst [vmem:[%s390 + $0x8] sm:$0xff] %v409
        %426 = vst [vmem:[%s390 + $0x10] sm:$0xff] %v410
        %427 = vst [vmem:[%s390 + $0x18] sm:$0xff] %v411
        %428 = vst [vmem:[%s390 + $0x20] sm:$0xff] %v412
        %429 = vst [vmem:[%s390 + $0x28] sm:$0xff] %v413
        %430 = vst [vmem:[%s390 + $0x30] sm:$0xff] %v414
        %431 = vst [vmem:[%s390 + $0x38] sm:$0xff] %v415
        %432 = vst [vmem:[%s390 + $0x40] sm:$0xff] %v416
        %433 = vst [vmem:[%s390 + $0x48] sm:$0xff] %v417
        %434 = vst [vmem:[%s390 + $0x50] sm:$0xff] %v418
        %435 = vst [vmem:[%s390 + $0x58] sm:$0xff] %v419
        %436 = vst [vmem:[%s390 + $0x60] sm:$0xff] %v420
        %437 = vst [vmem:[%s390 + $0x68] sm:$0xff] %v421
        %438 = vst [vmem:[%s390 + $0x70] sm:$0xff] %v422
        %439 = vst [vmem:[%s390 + $0x78] sm:$0xff] %v423
        %s440 = sld [smem:[#allocation2]]
        %s441 = sld [smem:[#allocation7]]
        %s442 = sld [smem:[#allocation8]]
        %v443 = vpack.c.bf16 %v409, %v408
        %v444 = vpack.c.bf16 %v411, %v410
        %v445 = vpack.c.bf16 %v413, %v412
        %v446 = vpack.c.bf16 %v415, %v414
        %v447 = vpack.c.bf16 %v417, %v416
        %v448 = vpack.c.bf16 %v419, %v418
        %v449 = vpack.c.bf16 %v421, %v420
        %v450 = vpack.c.bf16 %v423, %v422
        %v451 = vld [vmem:[#allocation11] sm:$0xf]
        %v452 = vld [vmem:[#allocation11 + $0x4] sm:$0xf]
        %v453 = vld [vmem:[#allocation11 + $0x8] sm:$0xf]
        %v454 = vld [vmem:[#allocation11 + $0xc] sm:$0xf]
        %v455 = vld [vmem:[#allocation11 + $0x10] sm:$0xf]
        %v456 = vld [vmem:[#allocation11 + $0x14] sm:$0xf]
        %v457 = vld [vmem:[#allocation11 + $0x18] sm:$0xf]
        %v458 = vld [vmem:[#allocation11 + $0x1c] sm:$0xf]
        %v459 = vld [vmem:[#allocation11 + $0x20] sm:$0xf]
        %v460 = vld [vmem:[#allocation11 + $0x24] sm:$0xf]
        %v461 = vld [vmem:[#allocation11 + $0x28] sm:$0xf]
        %v462 = vld [vmem:[#allocation11 + $0x2c] sm:$0xf]
        %v463 = vld [vmem:[#allocation11 + $0x30] sm:$0xf]
        %v464 = vld [vmem:[#allocation11 + $0x34] sm:$0xf]
        %v465 = vld [vmem:[#allocation11 + $0x38] sm:$0xf]
        %v466 = vld [vmem:[#allocation11 + $0x3c] sm:$0xf]
        %v483 = vunpack.c.l.b16 %v451
        %v484 = vunpack.c.l.b16 %v452
        %v485 = vunpack.c.l.b16 %v453
        %v486 = vunpack.c.l.b16 %v454
        %v487 = vunpack.c.l.b16 %v455
        %v488 = vunpack.c.l.b16 %v456
        %v489 = vunpack.c.l.b16 %v457
        %v490 = vunpack.c.l.b16 %v458
        %v491 = vunpack.c.l.b16 %v459
        %v492 = vunpack.c.l.b16 %v460
        %v493 = vunpack.c.l.b16 %v461
        %v494 = vunpack.c.l.b16 %v462
        %v495 = vunpack.c.l.b16 %v463
        %v496 = vunpack.c.l.b16 %v464
        %v497 = vunpack.c.l.b16 %v465
        %v498 = vunpack.c.l.b16 %v466
        %v499 = vpack.c.b16 %v484, %v483
        %v500 = vpack.c.b16 %v486, %v485
        %v501 = vpack.c.b16 %v488, %v487
        %v502 = vpack.c.b16 %v490, %v489
        %v503 = vpack.c.b16 %v492, %v491
        %v504 = vpack.c.b16 %v494, %v493
        %v505 = vpack.c.b16 %v496, %v495
        %v506 = vpack.c.b16 %v498, %v497
        %515 = vmatprep.subr.bf16.mxu0 0
        %516 = vmatpush1.bf16.msra.mxu0 %v506
        %517 = vmatprep.subr.bf16.mxu0 0
        %518 = vmatpush1.bf16.msra.mxu0 %v505
        %519 = vmatprep.subr.bf16.mxu0 0
        %520 = vmatpush1.bf16.msra.mxu0 %v504
        %521 = vmatprep.subr.bf16.mxu0 0
        %522 = vmatpush1.bf16.msra.mxu0 %v503
        %523 = vmatprep.subr.bf16.mxu0 0
        %524 = vmatpush1.bf16.msra.mxu0 %v502
        %525 = vmatprep.subr.bf16.mxu0 0
        %526 = vmatpush1.bf16.msra.mxu0 %v501
        %527 = vmatprep.subr.bf16.mxu0 0
        %528 = vmatpush1.bf16.msra.mxu0 %v500
        %529 = vmatprep.subr.bf16.mxu0 0
        %530 = vmatpush1.bf16.msra.mxu0 %v499
        %531 = vmatprep.subr.bf16.mxu0 0
        %532 = vmatpush2.bf16.msra.mxu0 0
        %533 = vmatprep.subr.bf16.mxu0 0
        %534 = vmatpush2.bf16.msra.mxu0 0
        %535 = vmatprep.subr.bf16.mxu0 0
        %536 = vmatpush2.bf16.msra.mxu0 0
        %537 = vmatprep.subr.bf16.mxu0 0
        %538 = vmatpush2.bf16.msra.mxu0 0
        %539 = vmatprep.subr.bf16.mxu0 0
        %540 = vmatpush2.bf16.msra.mxu0 0
        %541 = vmatprep.subr.bf16.mxu0 0
        %542 = vmatpush2.bf16.msra.mxu0 0
        %543 = vmatprep.subr.bf16.mxu0 0
        %544 = vmatpush2.bf16.msra.mxu0 0
        %545 = vmatprep.subr.bf16.mxu0 0
        %546 = vmatpush2.bf16.msra.mxu0 0
        %547 = vmatprep.mubr.bf16.mxu0 0
        %548 = vmatmul.mubr.bf16.gmra.mxu0 %v443
        %v549 = vpop.f32.mrf.mxu0
        %v550 = vadd.f32 %v399, %v549
        %v551 = vpop.f32.mrf.mxu0
        %v552 = vpop.f32.mrf.mxu0
        %v553 = vadd.f32 %v399, %v552
        %v554 = vpop.f32.mrf.mxu0
        %555 = vmatprep.mubr.bf16.mxu0 0
        %556 = vmatmul.mubr.bf16.gmra.mxu0 %v444
        %v557 = vpop.f32.mrf.mxu0
        %v558 = vadd.f32 %v399, %v557
        %v559 = vpop.f32.mrf.mxu0
        %v560 = vpop.f32.mrf.mxu0
        %v561 = vadd.f32 %v399, %v560
        %v562 = vpop.f32.mrf.mxu0
        %563 = vmatprep.mubr.bf16.mxu0 0
        %564 = vmatmul.mubr.bf16.gmra.mxu0 %v445
        %v565 = vpop.f32.mrf.mxu0
        %v566 = vadd.f32 %v399, %v565
        %v567 = vpop.f32.mrf.mxu0
        %v568 = vpop.f32.mrf.mxu0
        %v569 = vadd.f32 %v399, %v568
        %v570 = vpop.f32.mrf.mxu0
        %571 = vmatprep.mubr.bf16.mxu0 0
        %572 = vmatmul.mubr.bf16.gmra.mxu0 %v446
        %v573 = vpop.f32.mrf.mxu0
        %v574 = vadd.f32 %v399, %v573
        %v575 = vpop.f32.mrf.mxu0
        %v576 = vpop.f32.mrf.mxu0
        %v577 = vadd.f32 %v399, %v576
        %v578 = vpop.f32.mrf.mxu0
        %579 = vmatprep.mubr.bf16.mxu0 0
        %580 = vmatmul.mubr.bf16.gmra.mxu0 %v447
        %v581 = vpop.f32.mrf.mxu0
        %v582 = vadd.f32 %v399, %v581
        %v583 = vpop.f32.mrf.mxu0
        %v584 = vpop.f32.mrf.mxu0
        %v585 = vadd.f32 %v399, %v584
        %v586 = vpop.f32.mrf.mxu0
        %587 = vmatprep.mubr.bf16.mxu0 0
        %588 = vmatmul.mubr.bf16.gmra.mxu0 %v448
        %v589 = vpop.f32.mrf.mxu0
        %v590 = vadd.f32 %v399, %v589
        %v591 = vpop.f32.mrf.mxu0
        %v592 = vpop.f32.mrf.mxu0
        %v593 = vadd.f32 %v399, %v592
        %v594 = vpop.f32.mrf.mxu0
        %595 = vmatprep.mubr.bf16.mxu0 0
        %596 = vmatmul.mubr.bf16.gmra.mxu0 %v449
        %v597 = vpop.f32.mrf.mxu0
        %v598 = vadd.f32 %v399, %v597
        %v599 = vpop.f32.mrf.mxu0
        %v600 = vpop.f32.mrf.mxu0
        %v601 = vadd.f32 %v399, %v600
        %v602 = vpop.f32.mrf.mxu0
        %603 = vmatprep.mubr.bf16.mxu0 0
        %604 = vmatmul.mubr.bf16.gmra.mxu0 %v450
        %v605 = vpop.f32.mrf.mxu0
        %v606 = vadd.f32 %v399, %v605
        %v607 = vpop.f32.mrf.mxu0
        %v608 = vpop.f32.mrf.mxu0
        %v609 = vadd.f32 %v399, %v608
        %v610 = vpop.f32.mrf.mxu0
        %611 = vdwg.mxu0
        %v612 = vtanh.pop %v550
        %v613 = vtanh.pop %v553
        %v614 = vtanh.pop %v558
        %v615 = vtanh.pop %v561
        %v616 = vtanh.pop %v566
        %v617 = vtanh.pop %v569
        %v618 = vtanh.pop %v574
        %v619 = vtanh.pop %v577
        %v620 = vtanh.pop %v582
        %v621 = vtanh.pop %v585
        %v622 = vtanh.pop %v590
        %v623 = vtanh.pop %v593
        %v624 = vtanh.pop %v598
        %v625 = vtanh.pop %v601
        %v626 = vtanh.pop %v606
        %v627 = vtanh.pop %v609
        %v628 = vpack.c.bf16 %v613, %v612
        %v629 = vpack.c.bf16 %v615, %v614
        %v630 = vpack.c.bf16 %v617, %v616
        %v631 = vpack.c.bf16 %v619, %v618
        %v632 = vpack.c.bf16 %v621, %v620
        %v633 = vpack.c.bf16 %v623, %v622
        %v634 = vpack.c.bf16 %v625, %v624
        %v635 = vpack.c.bf16 %v627, %v626
        %v636 = vld [vmem:[#allocation13] sm:$0xf]
        %v637 = vld [vmem:[#allocation13 + $0x4] sm:$0xf]
        %v638 = vld [vmem:[#allocation13 + $0x8] sm:$0xf]
        %v639 = vld [vmem:[#allocation13 + $0xc] sm:$0xf]
        %v640 = vld [vmem:[#allocation13 + $0x10] sm:$0xf]
        %v641 = vld [vmem:[#allocation13 + $0x14] sm:$0xf]
        %v642 = vld [vmem:[#allocation13 + $0x18] sm:$0xf]
        %v643 = vld [vmem:[#allocation13 + $0x1c] sm:$0xf]
        %v644 = vld [vmem:[#allocation13 + $0x20] sm:$0xf]
        %v645 = vld [vmem:[#allocation13 + $0x24] sm:$0xf]
        %v646 = vld [vmem:[#allocation13 + $0x28] sm:$0xf]
        %v647 = vld [vmem:[#allocation13 + $0x2c] sm:$0xf]
        %v648 = vld [vmem:[#allocation13 + $0x30] sm:$0xf]
        %v649 = vld [vmem:[#allocation13 + $0x34] sm:$0xf]
        %v650 = vld [vmem:[#allocation13 + $0x38] sm:$0xf]
        %v651 = vld [vmem:[#allocation13 + $0x3c] sm:$0xf]
        %v668 = vunpack.c.l.b16 %v636
        %v669 = vunpack.c.l.b16 %v637
        %v670 = vunpack.c.l.b16 %v638
        %v671 = vunpack.c.l.b16 %v639
        %v672 = vunpack.c.l.b16 %v640
        %v673 = vunpack.c.l.b16 %v641
        %v674 = vunpack.c.l.b16 %v642
        %v675 = vunpack.c.l.b16 %v643
        %v676 = vunpack.c.l.b16 %v644
        %v677 = vunpack.c.l.b16 %v645
        %v678 = vunpack.c.l.b16 %v646
        %v679 = vunpack.c.l.b16 %v647
        %v680 = vunpack.c.l.b16 %v648
        %v681 = vunpack.c.l.b16 %v649
        %v682 = vunpack.c.l.b16 %v650
        %v683 = vunpack.c.l.b16 %v651
        %v684 = vpack.c.b16 %v669, %v668
        %v685 = vpack.c.b16 %v671, %v670
        %v686 = vpack.c.b16 %v673, %v672
        %v687 = vpack.c.b16 %v675, %v674
        %v688 = vpack.c.b16 %v677, %v676
        %v689 = vpack.c.b16 %v679, %v678
        %v690 = vpack.c.b16 %v681, %v680
        %v691 = vpack.c.b16 %v683, %v682
        %700 = vmatprep.subr.bf16.mxu0 0
        %701 = vmatpush1.bf16.msra.mxu0 %v691
        %702 = vmatprep.subr.bf16.mxu0 0
        %703 = vmatpush1.bf16.msra.mxu0 %v690
        %704 = vmatprep.subr.bf16.mxu0 0
        %705 = vmatpush1.bf16.msra.mxu0 %v689
        %706 = vmatprep.subr.bf16.mxu0 0
        %707 = vmatpush1.bf16.msra.mxu0 %v688
        %708 = vmatprep.subr.bf16.mxu0 0
        %709 = vmatpush1.bf16.msra.mxu0 %v687
        %710 = vmatprep.subr.bf16.mxu0 0
        %711 = vmatpush1.bf16.msra.mxu0 %v686
        %712 = vmatprep.subr.bf16.mxu0 0
        %713 = vmatpush1.bf16.msra.mxu0 %v685
        %714 = vmatprep.subr.bf16.mxu0 0
        %715 = vmatpush1.bf16.msra.mxu0 %v684
        %716 = vmatprep.subr.bf16.mxu0 0
        %717 = vmatpush2.bf16.msra.mxu0 0
        %718 = vmatprep.subr.bf16.mxu0 0
        %719 = vmatpush2.bf16.msra.mxu0 0
        %720 = vmatprep.subr.bf16.mxu0 0
        %721 = vmatpush2.bf16.msra.mxu0 0
        %722 = vmatprep.subr.bf16.mxu0 0
        %723 = vmatpush2.bf16.msra.mxu0 0
        %724 = vmatprep.subr.bf16.mxu0 0
        %725 = vmatpush2.bf16.msra.mxu0 0
        %726 = vmatprep.subr.bf16.mxu0 0
        %727 = vmatpush2.bf16.msra.mxu0 0
        %728 = vmatprep.subr.bf16.mxu0 0
        %729 = vmatpush2.bf16.msra.mxu0 0
        %730 = vmatprep.subr.bf16.mxu0 0
        %731 = vmatpush2.bf16.msra.mxu0 0
        %732 = vmatprep.mubr.bf16.mxu0 0
        %733 = vmatmul.mubr.bf16.gmra.mxu0 %v628
        %v734 = vpop.f32.mrf.mxu0
        %v735 = vadd.f32 %v406, %v734
        %v736 = vpop.f32.mrf.mxu0
        %v737 = vpop.f32.mrf.mxu0
        %v738 = vadd.f32 %v406, %v737
        %v739 = vpop.f32.mrf.mxu0
        %740 = vmatprep.mubr.bf16.mxu0 0
        %741 = vmatmul.mubr.bf16.gmra.mxu0 %v629
        %v742 = vpop.f32.mrf.mxu0
        %v743 = vadd.f32 %v406, %v742
        %v744 = vpop.f32.mrf.mxu0
        %v745 = vpop.f32.mrf.mxu0
        %v746 = vadd.f32 %v406, %v745
        %v747 = vpop.f32.mrf.mxu0
        %748 = vmatprep.mubr.bf16.mxu0 0
        %749 = vmatmul.mubr.bf16.gmra.mxu0 %v630
        %v750 = vpop.f32.mrf.mxu0
        %v751 = vadd.f32 %v406, %v750
        %v752 = vpop.f32.mrf.mxu0
        %v753 = vpop.f32.mrf.mxu0
        %v754 = vadd.f32 %v406, %v753
        %v755 = vpop.f32.mrf.mxu0
        %756 = vmatprep.mubr.bf16.mxu0 0
        %757 = vmatmul.mubr.bf16.gmra.mxu0 %v631
        %v758 = vpop.f32.mrf.mxu0
        %v759 = vadd.f32 %v406, %v758
        %v760 = vpop.f32.mrf.mxu0
        %v761 = vpop.f32.mrf.mxu0
        %v762 = vadd.f32 %v406, %v761
        %v763 = vpop.f32.mrf.mxu0
        %764 = vmatprep.mubr.bf16.mxu0 0
        %765 = vmatmul.mubr.bf16.gmra.mxu0 %v632
        %v766 = vpop.f32.mrf.mxu0
        %v767 = vadd.f32 %v406, %v766
        %v768 = vpop.f32.mrf.mxu0
        %v769 = vpop.f32.mrf.mxu0
        %v770 = vadd.f32 %v406, %v769
        %v771 = vpop.f32.mrf.mxu0
        %772 = vmatprep.mubr.bf16.mxu0 0
        %773 = vmatmul.mubr.bf16.gmra.mxu0 %v633
        %v774 = vpop.f32.mrf.mxu0
        %v775 = vadd.f32 %v406, %v774
        %v776 = vpop.f32.mrf.mxu0
        %v777 = vpop.f32.mrf.mxu0
        %v778 = vadd.f32 %v406, %v777
        %v779 = vpop.f32.mrf.mxu0
        %780 = vmatprep.mubr.bf16.mxu0 0
        %781 = vmatmul.mubr.bf16.gmra.mxu0 %v634
        %v782 = vpop.f32.mrf.mxu0
        %v783 = vadd.f32 %v406, %v782
        %v784 = vpop.f32.mrf.mxu0
        %v785 = vpop.f32.mrf.mxu0
        %v786 = vadd.f32 %v406, %v785
        %v787 = vpop.f32.mrf.mxu0
        %788 = vmatprep.mubr.bf16.mxu0 0
        %789 = vmatmul.mubr.bf16.gmra.mxu0 %v635
        %v790 = vpop.f32.mrf.mxu0
        %v791 = vadd.f32 %v406, %v790
        %v792 = vpop.f32.mrf.mxu0
        %v793 = vpop.f32.mrf.mxu0
        %v794 = vadd.f32 %v406, %v793
        %v795 = vpop.f32.mrf.mxu0
        %796 = vdwg.mxu0
        %v797 = vstv %s441
        %v798 = vmul.f32 %v797, %v735
        %v799 = vmul.f32 %v797, %v738
        %v800 = vmul.f32 %v797, %v743
        %v801 = vmul.f32 %v797, %v746
        %v802 = vmul.f32 %v797, %v751
        %v803 = vmul.f32 %v797, %v754
        %v804 = vmul.f32 %v797, %v759
        %v805 = vmul.f32 %v797, %v762
        %v806 = vmul.f32 %v797, %v767
        %v807 = vmul.f32 %v797, %v770
        %v808 = vmul.f32 %v797, %v775
        %v809 = vmul.f32 %v797, %v778
        %v810 = vmul.f32 %v797, %v783
        %v811 = vmul.f32 %v797, %v786
        %v812 = vmul.f32 %v797, %v791
        %v813 = vmul.f32 %v797, %v794
        %v814 = vadd.f32 %v408, %v798
        %v815 = vadd.f32 %v409, %v799
        %v816 = vadd.f32 %v410, %v800
        %v817 = vadd.f32 %v411, %v801
        %v818 = vadd.f32 %v412, %v802
        %v819 = vadd.f32 %v413, %v803
        %v820 = vadd.f32 %v414, %v804
        %v821 = vadd.f32 %v415, %v805
        %v822 = vadd.f32 %v416, %v806
        %v823 = vadd.f32 %v417, %v807
        %v824 = vadd.f32 %v418, %v808
        %v825 = vadd.f32 %v419, %v809
        %v826 = vadd.f32 %v420, %v810
        %v827 = vadd.f32 %v421, %v811
        %v828 = vadd.f32 %v422, %v812
        %v829 = vadd.f32 %v423, %v813
        %v830 = vpack.c.bf16 %v815, %v814
        %v831 = vpack.c.bf16 %v817, %v816
        %v832 = vpack.c.bf16 %v819, %v818
        %v833 = vpack.c.bf16 %v821, %v820
        %v834 = vpack.c.bf16 %v823, %v822
        %v835 = vpack.c.bf16 %v825, %v824
        %v836 = vpack.c.bf16 %v827, %v826
        %v837 = vpack.c.bf16 %v829, %v828
        %838 = vmatprep.subr.bf16.mxu0 0
        %839 = vmatpush1.bf16.msra.mxu0 %v506
        %840 = vmatprep.subr.bf16.mxu0 0
        %841 = vmatpush1.bf16.msra.mxu0 %v505
        %842 = vmatprep.subr.bf16.mxu0 0
        %843 = vmatpush1.bf16.msra.mxu0 %v504
        %844 = vmatprep.subr.bf16.mxu0 0
        %845 = vmatpush1.bf16.msra.mxu0 %v503
        %846 = vmatprep.subr.bf16.mxu0 0
        %847 = vmatpush1.bf16.msra.mxu0 %v502
        %848 = vmatprep.subr.bf16.mxu0 0
        %849 = vmatpush1.bf16.msra.mxu0 %v501
        %850 = vmatprep.subr.bf16.mxu0 0
        %851 = vmatpush1.bf16.msra.mxu0 %v500
        %852 = vmatprep.subr.bf16.mxu0 0
        %853 = vmatpush1.bf16.msra.mxu0 %v499
        %854 = vmatprep.subr.bf16.mxu0 0
        %855 = vmatpush2.bf16.msra.mxu0 0
        %856 = vmatprep.subr.bf16.mxu0 0
        %857 = vmatpush2.bf16.msra.mxu0 0
        %858 = vmatprep.subr.bf16.mxu0 0
        %859 = vmatpush2.bf16.msra.mxu0 0
        %860 = vmatprep.subr.bf16.mxu0 0
        %861 = vmatpush2.bf16.msra.mxu0 0
        %862 = vmatprep.subr.bf16.mxu0 0
        %863 = vmatpush2.bf16.msra.mxu0 0
        %864 = vmatprep.subr.bf16.mxu0 0
        %865 = vmatpush2.bf16.msra.mxu0 0
        %866 = vmatprep.subr.bf16.mxu0 0
        %867 = vmatpush2.bf16.msra.mxu0 0
        %868 = vmatprep.subr.bf16.mxu0 0
        %869 = vmatpush2.bf16.msra.mxu0 0
        %870 = vmatprep.mubr.bf16.mxu0 0
        %871 = vmatmul.mubr.bf16.gmra.mxu0 %v830
        %v872 = vpop.f32.mrf.mxu0
        %v873 = vadd.f32 %v399, %v872
        %v874 = vpop.f32.mrf.mxu0
        %v875 = vpop.f32.mrf.mxu0
        %v876 = vadd.f32 %v399, %v875
        %v877 = vpop.f32.mrf.mxu0
        %878 = vmatprep.mubr.bf16.mxu0 0
        %879 = vmatmul.mubr.bf16.gmra.mxu0 %v831
        %v880 = vpop.f32.mrf.mxu0
        %v881 = vadd.f32 %v399, %v880
        %v882 = vpop.f32.mrf.mxu0
        %v883 = vpop.f32.mrf.mxu0
        %v884 = vadd.f32 %v399, %v883
        %v885 = vpop.f32.mrf.mxu0
        %886 = vmatprep.mubr.bf16.mxu0 0
        %887 = vmatmul.mubr.bf16.gmra.mxu0 %v832
        %v888 = vpop.f32.mrf.mxu0
        %v889 = vadd.f32 %v399, %v888
        %v890 = vpop.f32.mrf.mxu0
        %v891 = vpop.f32.mrf.mxu0
        %v892 = vadd.f32 %v399, %v891
        %v893 = vpop.f32.mrf.mxu0
        %894 = vmatprep.mubr.bf16.mxu0 0
        %895 = vmatmul.mubr.bf16.gmra.mxu0 %v833
        %v896 = vpop.f32.mrf.mxu0
        %v897 = vadd.f32 %v399, %v896
        %v898 = vpop.f32.mrf.mxu0
        %v899 = vpop.f32.mrf.mxu0
        %v900 = vadd.f32 %v399, %v899
        %v901 = vpop.f32.mrf.mxu0
        %902 = vmatprep.mubr.bf16.mxu0 0
        %903 = vmatmul.mubr.bf16.gmra.mxu0 %v834
        %v904 = vpop.f32.mrf.mxu0
        %v905 = vadd.f32 %v399, %v904
        %v906 = vpop.f32.mrf.mxu0
        %v907 = vpop.f32.mrf.mxu0
        %v908 = vadd.f32 %v399, %v907
        %v909 = vpop.f32.mrf.mxu0
        %910 = vmatprep.mubr.bf16.mxu0 0
        %911 = vmatmul.mubr.bf16.gmra.mxu0 %v835
        %v912 = vpop.f32.mrf.mxu0
        %v913 = vadd.f32 %v399, %v912
        %v914 = vpop.f32.mrf.mxu0
        %v915 = vpop.f32.mrf.mxu0
        %v916 = vadd.f32 %v399, %v915
        %v917 = vpop.f32.mrf.mxu0
        %918 = vmatprep.mubr.bf16.mxu0 0
        %919 = vmatmul.mubr.bf16.gmra.mxu0 %v836
        %v920 = vpop.f32.mrf.mxu0
        %v921 = vadd.f32 %v399, %v920
        %v922 = vpop.f32.mrf.mxu0
        %v923 = vpop.f32.mrf.mxu0
        %v924 = vadd.f32 %v399, %v923
        %v925 = vpop.f32.mrf.mxu0
        %926 = vmatprep.mubr.bf16.mxu0 0
        %927 = vmatmul.mubr.bf16.gmra.mxu0 %v837
        %v928 = vpop.f32.mrf.mxu0
        %v929 = vadd.f32 %v399, %v928
        %v930 = vpop.f32.mrf.mxu0
        %v931 = vpop.f32.mrf.mxu0
        %v932 = vadd.f32 %v399, %v931
        %v933 = vpop.f32.mrf.mxu0
        %934 = vdwg.mxu0
        %v935 = vtanh.pop %v873
        %v936 = vtanh.pop %v876
        %v937 = vtanh.pop %v881
        %v938 = vtanh.pop %v884
        %v939 = vtanh.pop %v889
        %v940 = vtanh.pop %v892
        %v941 = vtanh.pop %v897
        %v942 = vtanh.pop %v900
        %v943 = vtanh.pop %v905
        %v944 = vtanh.pop %v908
        %v945 = vtanh.pop %v913
        %v946 = vtanh.pop %v916
        %v947 = vtanh.pop %v921
        %v948 = vtanh.pop %v924
        %v949 = vtanh.pop %v929
        %v950 = vtanh.pop %v932
        %v951 = vpack.c.bf16 %v936, %v935
        %v952 = vpack.c.bf16 %v938, %v937
        %v953 = vpack.c.bf16 %v940, %v939
        %v954 = vpack.c.bf16 %v942, %v941
        %v955 = vpack.c.bf16 %v944, %v943
        %v956 = vpack.c.bf16 %v946, %v945
        %v957 = vpack.c.bf16 %v948, %v947
        %v958 = vpack.c.bf16 %v950, %v949
        %959 = vmatprep.subr.bf16.mxu0 0
        %960 = vmatpush1.bf16.msra.mxu0 %v691
        %961 = vmatprep.subr.bf16.mxu0 0
        %962 = vmatpush1.bf16.msra.mxu0 %v690
        %963 = vmatprep.subr.bf16.mxu0 0
        %964 = vmatpush1.bf16.msra.mxu0 %v689
        %965 = vmatprep.subr.bf16.mxu0 0
        %966 = vmatpush1.bf16.msra.mxu0 %v688
        %967 = vmatprep.subr.bf16.mxu0 0
        %968 = vmatpush1.bf16.msra.mxu0 %v687
        %969 = vmatprep.subr.bf16.mxu0 0
        %970 = vmatpush1.bf16.msra.mxu0 %v686
        %971 = vmatprep.subr.bf16.mxu0 0
        %972 = vmatpush1.bf16.msra.mxu0 %v685
        %973 = vmatprep.subr.bf16.mxu0 0
        %974 = vmatpush1.bf16.msra.mxu0 %v684
        %975 = vmatprep.subr.bf16.mxu0 0
        %976 = vmatpush2.bf16.msra.mxu0 0
        %977 = vmatprep.subr.bf16.mxu0 0
        %978 = vmatpush2.bf16.msra.mxu0 0
        %979 = vmatprep.subr.bf16.mxu0 0
        %980 = vmatpush2.bf16.msra.mxu0 0
        %981 = vmatprep.subr.bf16.mxu0 0
        %982 = vmatpush2.bf16.msra.mxu0 0
        %983 = vmatprep.subr.bf16.mxu0 0
        %984 = vmatpush2.bf16.msra.mxu0 0
        %985 = vmatprep.subr.bf16.mxu0 0
        %986 = vmatpush2.bf16.msra.mxu0 0
        %987 = vmatprep.subr.bf16.mxu0 0
        %988 = vmatpush2.bf16.msra.mxu0 0
        %989 = vmatprep.subr.bf16.mxu0 0
        %990 = vmatpush2.bf16.msra.mxu0 0
        %991 = vmatprep.mubr.bf16.mxu0 0
        %992 = vmatmul.mubr.bf16.gmra.mxu0 %v951
        %v993 = vpop.f32.mrf.mxu0
        %v994 = vadd.f32 %v406, %v993
        %v995 = vpop.f32.mrf.mxu0
        %v996 = vpop.f32.mrf.mxu0
        %v997 = vadd.f32 %v406, %v996
        %v998 = vpop.f32.mrf.mxu0
        %999 = vmatprep.mubr.bf16.mxu0 0
        %1000 = vmatmul.mubr.bf16.gmra.mxu0 %v952
        %v1001 = vpop.f32.mrf.mxu0
        %v1002 = vadd.f32 %v406, %v1001
        %v1003 = vpop.f32.mrf.mxu0
        %v1004 = vpop.f32.mrf.mxu0
        %v1005 = vadd.f32 %v406, %v1004
        %v1006 = vpop.f32.mrf.mxu0
        %1007 = vmatprep.mubr.bf16.mxu0 0
        %1008 = vmatmul.mubr.bf16.gmra.mxu0 %v953
        %v1009 = vpop.f32.mrf.mxu0
        %v1010 = vadd.f32 %v406, %v1009
        %v1011 = vpop.f32.mrf.mxu0
        %v1012 = vpop.f32.mrf.mxu0
        %v1013 = vadd.f32 %v406, %v1012
        %v1014 = vpop.f32.mrf.mxu0
        %1015 = vmatprep.mubr.bf16.mxu0 0
        %1016 = vmatmul.mubr.bf16.gmra.mxu0 %v954
        %v1017 = vpop.f32.mrf.mxu0
        %v1018 = vadd.f32 %v406, %v1017
        %v1019 = vpop.f32.mrf.mxu0
        %v1020 = vpop.f32.mrf.mxu0
        %v1021 = vadd.f32 %v406, %v1020
        %v1022 = vpop.f32.mrf.mxu0
        %1023 = vmatprep.mubr.bf16.mxu0 0
        %1024 = vmatmul.mubr.bf16.gmra.mxu0 %v955
        %v1025 = vpop.f32.mrf.mxu0
        %v1026 = vadd.f32 %v406, %v1025
        %v1027 = vpop.f32.mrf.mxu0
        %v1028 = vpop.f32.mrf.mxu0
        %v1029 = vadd.f32 %v406, %v1028
        %v1030 = vpop.f32.mrf.mxu0
        %1031 = vmatprep.mubr.bf16.mxu0 0
        %1032 = vmatmul.mubr.bf16.gmra.mxu0 %v956
        %v1033 = vpop.f32.mrf.mxu0
        %v1034 = vadd.f32 %v406, %v1033
        %v1035 = vpop.f32.mrf.mxu0
        %v1036 = vpop.f32.mrf.mxu0
        %v1037 = vadd.f32 %v406, %v1036
        %v1038 = vpop.f32.mrf.mxu0
        %1039 = vmatprep.mubr.bf16.mxu0 0
        %1040 = vmatmul.mubr.bf16.gmra.mxu0 %v957
        %v1041 = vpop.f32.mrf.mxu0
        %v1042 = vadd.f32 %v406, %v1041
        %v1043 = vpop.f32.mrf.mxu0
        %v1044 = vpop.f32.mrf.mxu0
        %v1045 = vadd.f32 %v406, %v1044
        %v1046 = vpop.f32.mrf.mxu0
        %1047 = vmatprep.mubr.bf16.mxu0 0
        %1048 = vmatmul.mubr.bf16.gmra.mxu0 %v958
        %v1049 = vpop.f32.mrf.mxu0
        %v1050 = vadd.f32 %v406, %v1049
        %v1051 = vpop.f32.mrf.mxu0
        %v1052 = vpop.f32.mrf.mxu0
        %v1053 = vadd.f32 %v406, %v1052
        %v1054 = vpop.f32.mrf.mxu0
        %1055 = vdwg.mxu0
        %v1056 = vmul.f32 %v797, %v994
        %v1057 = vmul.f32 %v797, %v997
        %v1058 = vmul.f32 %v797, %v1002
        %v1059 = vmul.f32 %v797, %v1005
        %v1060 = vmul.f32 %v797, %v1010
        %v1061 = vmul.f32 %v797, %v1013
        %v1062 = vmul.f32 %v797, %v1018
        %v1063 = vmul.f32 %v797, %v1021
        %v1064 = vmul.f32 %v797, %v1026
        %v1065 = vmul.f32 %v797, %v1029
        %v1066 = vmul.f32 %v797, %v1034
        %v1067 = vmul.f32 %v797, %v1037
        %v1068 = vmul.f32 %v797, %v1042
        %v1069 = vmul.f32 %v797, %v1045
        %v1070 = vmul.f32 %v797, %v1050
        %v1071 = vmul.f32 %v797, %v1053
        %v1072 = vadd.f32 %v408, %v1056
        %v1073 = vadd.f32 %v409, %v1057
        %v1074 = vadd.f32 %v410, %v1058
        %v1075 = vadd.f32 %v411, %v1059
        %v1076 = vadd.f32 %v412, %v1060
        %v1077 = vadd.f32 %v413, %v1061
        %v1078 = vadd.f32 %v414, %v1062
        %v1079 = vadd.f32 %v415, %v1063
        %v1080 = vadd.f32 %v416, %v1064
        %v1081 = vadd.f32 %v417, %v1065
        %v1082 = vadd.f32 %v418, %v1066
        %v1083 = vadd.f32 %v419, %v1067
        %v1084 = vadd.f32 %v420, %v1068
        %v1085 = vadd.f32 %v421, %v1069
        %v1086 = vadd.f32 %v422, %v1070
        %v1087 = vadd.f32 %v423, %v1071
        %v1088 = vpack.c.bf16 %v1073, %v1072
        %v1089 = vpack.c.bf16 %v1075, %v1074
        %v1090 = vpack.c.bf16 %v1077, %v1076
        %v1091 = vpack.c.bf16 %v1079, %v1078
        %v1092 = vpack.c.bf16 %v1081, %v1080
        %v1093 = vpack.c.bf16 %v1083, %v1082
        %v1094 = vpack.c.bf16 %v1085, %v1084
        %v1095 = vpack.c.bf16 %v1087, %v1086
        %1096 = vmatprep.subr.bf16.mxu0 0
        %1097 = vmatpush1.bf16.msra.mxu0 %v506
        %1098 = vmatprep.subr.bf16.mxu0 0
        %1099 = vmatpush1.bf16.msra.mxu0 %v505
        %1100 = vmatprep.subr.bf16.mxu0 0
        %1101 = vmatpush1.bf16.msra.mxu0 %v504
        %1102 = vmatprep.subr.bf16.mxu0 0
        %1103 = vmatpush1.bf16.msra.mxu0 %v503
        %1104 = vmatprep.subr.bf16.mxu0 0
        %1105 = vmatpush1.bf16.msra.mxu0 %v502
        %1106 = vmatprep.subr.bf16.mxu0 0
        %1107 = vmatpush1.bf16.msra.mxu0 %v501
        %1108 = vmatprep.subr.bf16.mxu0 0
        %1109 = vmatpush1.bf16.msra.mxu0 %v500
        %1110 = vmatprep.subr.bf16.mxu0 0
        %1111 = vmatpush1.bf16.msra.mxu0 %v499
        %1112 = vmatprep.subr.bf16.mxu0 0
        %1113 = vmatpush2.bf16.msra.mxu0 0
        %1114 = vmatprep.subr.bf16.mxu0 0
        %1115 = vmatpush2.bf16.msra.mxu0 0
        %1116 = vmatprep.subr.bf16.mxu0 0
        %1117 = vmatpush2.bf16.msra.mxu0 0
        %1118 = vmatprep.subr.bf16.mxu0 0
        %1119 = vmatpush2.bf16.msra.mxu0 0
        %1120 = vmatprep.subr.bf16.mxu0 0
        %1121 = vmatpush2.bf16.msra.mxu0 0
        %1122 = vmatprep.subr.bf16.mxu0 0
        %1123 = vmatpush2.bf16.msra.mxu0 0
        %1124 = vmatprep.subr.bf16.mxu0 0
        %1125 = vmatpush2.bf16.msra.mxu0 0
        %1126 = vmatprep.subr.bf16.mxu0 0
        %1127 = vmatpush2.bf16.msra.mxu0 0
        %1128 = vmatprep.mubr.bf16.mxu0 0
        %1129 = vmatmul.mubr.bf16.gmra.mxu0 %v1088
        %v1130 = vpop.f32.mrf.mxu0
        %v1131 = vadd.f32 %v399, %v1130
        %v1132 = vpop.f32.mrf.mxu0
        %v1133 = vpop.f32.mrf.mxu0
        %v1134 = vadd.f32 %v399, %v1133
        %v1135 = vpop.f32.mrf.mxu0
        %1136 = vmatprep.mubr.bf16.mxu0 0
        %1137 = vmatmul.mubr.bf16.gmra.mxu0 %v1089
        %v1138 = vpop.f32.mrf.mxu0
        %v1139 = vadd.f32 %v399, %v1138
        %v1140 = vpop.f32.mrf.mxu0
        %v1141 = vpop.f32.mrf.mxu0
        %v1142 = vadd.f32 %v399, %v1141
        %v1143 = vpop.f32.mrf.mxu0
        %1144 = vmatprep.mubr.bf16.mxu0 0
        %1145 = vmatmul.mubr.bf16.gmra.mxu0 %v1090
        %v1146 = vpop.f32.mrf.mxu0
        %v1147 = vadd.f32 %v399, %v1146
        %v1148 = vpop.f32.mrf.mxu0
        %v1149 = vpop.f32.mrf.mxu0
        %v1150 = vadd.f32 %v399, %v1149
        %v1151 = vpop.f32.mrf.mxu0
        %1152 = vmatprep.mubr.bf16.mxu0 0
        %1153 = vmatmul.mubr.bf16.gmra.mxu0 %v1091
        %v1154 = vpop.f32.mrf.mxu0
        %v1155 = vadd.f32 %v399, %v1154
        %v1156 = vpop.f32.mrf.mxu0
        %v1157 = vpop.f32.mrf.mxu0
        %v1158 = vadd.f32 %v399, %v1157
        %v1159 = vpop.f32.mrf.mxu0
        %1160 = vmatprep.mubr.bf16.mxu0 0
        %1161 = vmatmul.mubr.bf16.gmra.mxu0 %v1092
        %v1162 = vpop.f32.mrf.mxu0
        %v1163 = vadd.f32 %v399, %v1162
        %v1164 = vpop.f32.mrf.mxu0
        %v1165 = vpop.f32.mrf.mxu0
        %v1166 = vadd.f32 %v399, %v1165
        %v1167 = vpop.f32.mrf.mxu0
        %1168 = vmatprep.mubr.bf16.mxu0 0
        %1169 = vmatmul.mubr.bf16.gmra.mxu0 %v1093
        %v1170 = vpop.f32.mrf.mxu0
        %v1171 = vadd.f32 %v399, %v1170
        %v1172 = vpop.f32.mrf.mxu0
        %v1173 = vpop.f32.mrf.mxu0
        %v1174 = vadd.f32 %v399, %v1173
        %v1175 = vpop.f32.mrf.mxu0
        %1176 = vmatprep.mubr.bf16.mxu0 0
        %1177 = vmatmul.mubr.bf16.gmra.mxu0 %v1094
        %v1178 = vpop.f32.mrf.mxu0
        %v1179 = vadd.f32 %v399, %v1178
        %v1180 = vpop.f32.mrf.mxu0
        %v1181 = vpop.f32.mrf.mxu0
        %v1182 = vadd.f32 %v399, %v1181
        %v1183 = vpop.f32.mrf.mxu0
        %1184 = vmatprep.mubr.bf16.mxu0 0
        %1185 = vmatmul.mubr.bf16.gmra.mxu0 %v1095
        %v1186 = vpop.f32.mrf.mxu0
        %v1187 = vadd.f32 %v399, %v1186
        %v1188 = vpop.f32.mrf.mxu0
        %v1189 = vpop.f32.mrf.mxu0
        %v1190 = vadd.f32 %v399, %v1189
        %v1191 = vpop.f32.mrf.mxu0
        %1192 = vdwg.mxu0
        %v1193 = vtanh.pop %v1131
        %v1194 = vtanh.pop %v1134
        %v1195 = vtanh.pop %v1139
        %v1196 = vtanh.pop %v1142
        %v1197 = vtanh.pop %v1147
        %v1198 = vtanh.pop %v1150
        %v1199 = vtanh.pop %v1155
        %v1200 = vtanh.pop %v1158
        %v1201 = vtanh.pop %v1163
        %v1202 = vtanh.pop %v1166
        %v1203 = vtanh.pop %v1171
        %v1204 = vtanh.pop %v1174
        %v1205 = vtanh.pop %v1179
        %v1206 = vtanh.pop %v1182
        %v1207 = vtanh.pop %v1187
        %v1208 = vtanh.pop %v1190
        %v1209 = vpack.c.bf16 %v1194, %v1193
        %v1210 = vpack.c.bf16 %v1196, %v1195
        %v1211 = vpack.c.bf16 %v1198, %v1197
        %v1212 = vpack.c.bf16 %v1200, %v1199
        %v1213 = vpack.c.bf16 %v1202, %v1201
        %v1214 = vpack.c.bf16 %v1204, %v1203
        %v1215 = vpack.c.bf16 %v1206, %v1205
        %v1216 = vpack.c.bf16 %v1208, %v1207
        %1217 = vmatprep.subr.bf16.mxu0 0
        %1218 = vmatpush1.bf16.msra.mxu0 %v691
        %1219 = vmatprep.subr.bf16.mxu0 0
        %1220 = vmatpush1.bf16.msra.mxu0 %v690
        %1221 = vmatprep.subr.bf16.mxu0 0
        %1222 = vmatpush1.bf16.msra.mxu0 %v689
        %1223 = vmatprep.subr.bf16.mxu0 0
        %1224 = vmatpush1.bf16.msra.mxu0 %v688
        %1225 = vmatprep.subr.bf16.mxu0 0
        %1226 = vmatpush1.bf16.msra.mxu0 %v687
        %1227 = vmatprep.subr.bf16.mxu0 0
        %1228 = vmatpush1.bf16.msra.mxu0 %v686
        %1229 = vmatprep.subr.bf16.mxu0 0
        %1230 = vmatpush1.bf16.msra.mxu0 %v685
        %1231 = vmatprep.subr.bf16.mxu0 0
        %1232 = vmatpush1.bf16.msra.mxu0 %v684
        %1233 = vmatprep.subr.bf16.mxu0 0
        %1234 = vmatpush2.bf16.msra.mxu0 0
        %1235 = vmatprep.subr.bf16.mxu0 0
        %1236 = vmatpush2.bf16.msra.mxu0 0
        %1237 = vmatprep.subr.bf16.mxu0 0
        %1238 = vmatpush2.bf16.msra.mxu0 0
        %1239 = vmatprep.subr.bf16.mxu0 0
        %1240 = vmatpush2.bf16.msra.mxu0 0
        %1241 = vmatprep.subr.bf16.mxu0 0
        %1242 = vmatpush2.bf16.msra.mxu0 0
        %1243 = vmatprep.subr.bf16.mxu0 0
        %1244 = vmatpush2.bf16.msra.mxu0 0
        %1245 = vmatprep.subr.bf16.mxu0 0
        %1246 = vmatpush2.bf16.msra.mxu0 0
        %1247 = vmatprep.subr.bf16.mxu0 0
        %1248 = vmatpush2.bf16.msra.mxu0 0
        %1249 = vmatprep.mubr.bf16.mxu0 0
        %1250 = vmatmul.mubr.bf16.gmra.mxu0 %v1209
        %v1251 = vpop.f32.mrf.mxu0
        %v1252 = vadd.f32 %v406, %v1251
        %v1253 = vpop.f32.mrf.mxu0
        %v1254 = vpop.f32.mrf.mxu0
        %v1255 = vadd.f32 %v406, %v1254
        %v1256 = vpop.f32.mrf.mxu0
        %1257 = vmatprep.mubr.bf16.mxu0 0
        %1258 = vmatmul.mubr.bf16.gmra.mxu0 %v1210
        %v1259 = vpop.f32.mrf.mxu0
        %v1260 = vadd.f32 %v406, %v1259
        %v1261 = vpop.f32.mrf.mxu0
        %v1262 = vpop.f32.mrf.mxu0
        %v1263 = vadd.f32 %v406, %v1262
        %v1264 = vpop.f32.mrf.mxu0
        %1265 = vmatprep.mubr.bf16.mxu0 0
        %1266 = vmatmul.mubr.bf16.gmra.mxu0 %v1211
        %v1267 = vpop.f32.mrf.mxu0
        %v1268 = vadd.f32 %v406, %v1267
        %v1269 = vpop.f32.mrf.mxu0
        %v1270 = vpop.f32.mrf.mxu0
        %v1271 = vadd.f32 %v406, %v1270
        %v1272 = vpop.f32.mrf.mxu0
        %1273 = vmatprep.mubr.bf16.mxu0 0
        %1274 = vmatmul.mubr.bf16.gmra.mxu0 %v1212
        %v1275 = vpop.f32.mrf.mxu0
        %v1276 = vadd.f32 %v406, %v1275
        %v1277 = vpop.f32.mrf.mxu0
        %v1278 = vpop.f32.mrf.mxu0
        %v1279 = vadd.f32 %v406, %v1278
        %v1280 = vpop.f32.mrf.mxu0
        %1281 = vmatprep.mubr.bf16.mxu0 0
        %1282 = vmatmul.mubr.bf16.gmra.mxu0 %v1213
        %v1283 = vpop.f32.mrf.mxu0
        %v1284 = vadd.f32 %v406, %v1283
        %v1285 = vpop.f32.mrf.mxu0
        %v1286 = vpop.f32.mrf.mxu0
        %v1287 = vadd.f32 %v406, %v1286
        %v1288 = vpop.f32.mrf.mxu0
        %1289 = vmatprep.mubr.bf16.mxu0 0
        %1290 = vmatmul.mubr.bf16.gmra.mxu0 %v1214
        %v1291 = vpop.f32.mrf.mxu0
        %v1292 = vadd.f32 %v406, %v1291
        %v1293 = vpop.f32.mrf.mxu0
        %v1294 = vpop.f32.mrf.mxu0
        %v1295 = vadd.f32 %v406, %v1294
        %v1296 = vpop.f32.mrf.mxu0
        %1297 = vmatprep.mubr.bf16.mxu0 0
        %1298 = vmatmul.mubr.bf16.gmra.mxu0 %v1215
        %v1299 = vpop.f32.mrf.mxu0
        %v1300 = vadd.f32 %v406, %v1299
        %v1301 = vpop.f32.mrf.mxu0
        %v1302 = vpop.f32.mrf.mxu0
        %v1303 = vadd.f32 %v406, %v1302
        %v1304 = vpop.f32.mrf.mxu0
        %1305 = vmatprep.mubr.bf16.mxu0 0
        %1306 = vmatmul.mubr.bf16.gmra.mxu0 %v1216
        %v1307 = vpop.f32.mrf.mxu0
        %v1308 = vadd.f32 %v406, %v1307
        %v1309 = vpop.f32.mrf.mxu0
        %v1310 = vpop.f32.mrf.mxu0
        %v1311 = vadd.f32 %v406, %v1310
        %v1312 = vpop.f32.mrf.mxu0
        %1313 = vdwg.mxu0
        %v1314 = vstv %s440
        %v1315 = vmul.f32 %v1314, %v1252
        %v1316 = vmul.f32 %v1314, %v1255
        %v1317 = vmul.f32 %v1314, %v1260
        %v1318 = vmul.f32 %v1314, %v1263
        %v1319 = vmul.f32 %v1314, %v1268
        %v1320 = vmul.f32 %v1314, %v1271
        %v1321 = vmul.f32 %v1314, %v1276
        %v1322 = vmul.f32 %v1314, %v1279
        %v1323 = vmul.f32 %v1314, %v1284
        %v1324 = vmul.f32 %v1314, %v1287
        %v1325 = vmul.f32 %v1314, %v1292
        %v1326 = vmul.f32 %v1314, %v1295
        %v1327 = vmul.f32 %v1314, %v1300
        %v1328 = vmul.f32 %v1314, %v1303
        %v1329 = vmul.f32 %v1314, %v1308
        %v1330 = vmul.f32 %v1314, %v1311
        %v1331 = vadd.f32 %v408, %v1315
        %v1332 = vadd.f32 %v409, %v1316
        %v1333 = vadd.f32 %v410, %v1317
        %v1334 = vadd.f32 %v411, %v1318
        %v1335 = vadd.f32 %v412, %v1319
        %v1336 = vadd.f32 %v413, %v1320
        %v1337 = vadd.f32 %v414, %v1321
        %v1338 = vadd.f32 %v415, %v1322
        %v1339 = vadd.f32 %v416, %v1323
        %v1340 = vadd.f32 %v417, %v1324
        %v1341 = vadd.f32 %v418, %v1325
        %v1342 = vadd.f32 %v419, %v1326
        %v1343 = vadd.f32 %v420, %v1327
        %v1344 = vadd.f32 %v421, %v1328
        %v1345 = vadd.f32 %v422, %v1329
        %v1346 = vadd.f32 %v423, %v1330
        %v1347 = vpack.c.bf16 %v1332, %v1331
        %v1348 = vpack.c.bf16 %v1334, %v1333
        %v1349 = vpack.c.bf16 %v1336, %v1335
        %v1350 = vpack.c.bf16 %v1338, %v1337
        %v1351 = vpack.c.bf16 %v1340, %v1339
        %v1352 = vpack.c.bf16 %v1342, %v1341
        %v1353 = vpack.c.bf16 %v1344, %v1343
        %v1354 = vpack.c.bf16 %v1346, %v1345
        %1355 = vmatprep.subr.bf16.mxu0 0
        %1356 = vmatpush1.bf16.msra.mxu0 %v506
        %1357 = vmatprep.subr.bf16.mxu0 0
        %1358 = vmatpush1.bf16.msra.mxu0 %v505
        %1359 = vmatprep.subr.bf16.mxu0 0
        %1360 = vmatpush1.bf16.msra.mxu0 %v504
        %1361 = vmatprep.subr.bf16.mxu0 0
        %1362 = vmatpush1.bf16.msra.mxu0 %v503
        %1363 = vmatprep.subr.bf16.mxu0 0
        %1364 = vmatpush1.bf16.msra.mxu0 %v502
        %1365 = vmatprep.subr.bf16.mxu0 0
        %1366 = vmatpush1.bf16.msra.mxu0 %v501
        %1367 = vmatprep.subr.bf16.mxu0 0
        %1368 = vmatpush1.bf16.msra.mxu0 %v500
        %1369 = vmatprep.subr.bf16.mxu0 0
        %1370 = vmatpush1.bf16.msra.mxu0 %v499
        %1371 = vmatprep.subr.bf16.mxu0 0
        %1372 = vmatpush2.bf16.msra.mxu0 0
        %1373 = vmatprep.subr.bf16.mxu0 0
        %1374 = vmatpush2.bf16.msra.mxu0 0
        %1375 = vmatprep.subr.bf16.mxu0 0
        %1376 = vmatpush2.bf16.msra.mxu0 0
        %1377 = vmatprep.subr.bf16.mxu0 0
        %1378 = vmatpush2.bf16.msra.mxu0 0
        %1379 = vmatprep.subr.bf16.mxu0 0
        %1380 = vmatpush2.bf16.msra.mxu0 0
        %1381 = vmatprep.subr.bf16.mxu0 0
        %1382 = vmatpush2.bf16.msra.mxu0 0
        %1383 = vmatprep.subr.bf16.mxu0 0
        %1384 = vmatpush2.bf16.msra.mxu0 0
        %1385 = vmatprep.subr.bf16.mxu0 0
        %1386 = vmatpush2.bf16.msra.mxu0 0
        %1387 = vmatprep.mubr.bf16.mxu0 0
        %1388 = vmatmul.mubr.bf16.gmra.mxu0 %v1347
        %v1389 = vpop.f32.mrf.mxu0
        %v1390 = vadd.f32 %v399, %v1389
        %v1391 = vpop.f32.mrf.mxu0
        %v1392 = vpop.f32.mrf.mxu0
        %v1393 = vadd.f32 %v399, %v1392
        %v1394 = vpop.f32.mrf.mxu0
        %1395 = vmatprep.mubr.bf16.mxu0 0
        %1396 = vmatmul.mubr.bf16.gmra.mxu0 %v1348
        %v1397 = vpop.f32.mrf.mxu0
        %v1398 = vadd.f32 %v399, %v1397
        %v1399 = vpop.f32.mrf.mxu0
        %v1400 = vpop.f32.mrf.mxu0
        %v1401 = vadd.f32 %v399, %v1400
        %v1402 = vpop.f32.mrf.mxu0
        %1403 = vmatprep.mubr.bf16.mxu0 0
        %1404 = vmatmul.mubr.bf16.gmra.mxu0 %v1349
        %v1405 = vpop.f32.mrf.mxu0
        %v1406 = vadd.f32 %v399, %v1405
        %v1407 = vpop.f32.mrf.mxu0
        %v1408 = vpop.f32.mrf.mxu0
        %v1409 = vadd.f32 %v399, %v1408
        %v1410 = vpop.f32.mrf.mxu0
        %1411 = vmatprep.mubr.bf16.mxu0 0
        %1412 = vmatmul.mubr.bf16.gmra.mxu0 %v1350
        %v1413 = vpop.f32.mrf.mxu0
        %v1414 = vadd.f32 %v399, %v1413
        %v1415 = vpop.f32.mrf.mxu0
        %v1416 = vpop.f32.mrf.mxu0
        %v1417 = vadd.f32 %v399, %v1416
        %v1418 = vpop.f32.mrf.mxu0
        %1419 = vmatprep.mubr.bf16.mxu0 0
        %1420 = vmatmul.mubr.bf16.gmra.mxu0 %v1351
        %v1421 = vpop.f32.mrf.mxu0
        %v1422 = vadd.f32 %v399, %v1421
        %v1423 = vpop.f32.mrf.mxu0
        %v1424 = vpop.f32.mrf.mxu0
        %v1425 = vadd.f32 %v399, %v1424
        %v1426 = vpop.f32.mrf.mxu0
        %1427 = vmatprep.mubr.bf16.mxu0 0
        %1428 = vmatmul.mubr.bf16.gmra.mxu0 %v1352
        %v1429 = vpop.f32.mrf.mxu0
        %v1430 = vadd.f32 %v399, %v1429
        %v1431 = vpop.f32.mrf.mxu0
        %v1432 = vpop.f32.mrf.mxu0
        %v1433 = vadd.f32 %v399, %v1432
        %v1434 = vpop.f32.mrf.mxu0
        %1435 = vmatprep.mubr.bf16.mxu0 0
        %1436 = vmatmul.mubr.bf16.gmra.mxu0 %v1353
        %v1437 = vpop.f32.mrf.mxu0
        %v1438 = vadd.f32 %v399, %v1437
        %v1439 = vpop.f32.mrf.mxu0
        %v1440 = vpop.f32.mrf.mxu0
        %v1441 = vadd.f32 %v399, %v1440
        %v1442 = vpop.f32.mrf.mxu0
        %1443 = vmatprep.mubr.bf16.mxu0 0
        %1444 = vmatmul.mubr.bf16.gmra.mxu0 %v1354
        %v1445 = vpop.f32.mrf.mxu0
        %v1446 = vadd.f32 %v399, %v1445
        %v1447 = vpop.f32.mrf.mxu0
        %v1448 = vpop.f32.mrf.mxu0
        %v1449 = vadd.f32 %v399, %v1448
        %v1450 = vpop.f32.mrf.mxu0
        %1451 = vdwg.mxu0
        %v1452 = vtanh.pop %v1390
        %v1453 = vtanh.pop %v1393
        %v1454 = vtanh.pop %v1398
        %v1455 = vtanh.pop %v1401
        %v1456 = vtanh.pop %v1406
        %v1457 = vtanh.pop %v1409
        %v1458 = vtanh.pop %v1414
        %v1459 = vtanh.pop %v1417
        %v1460 = vtanh.pop %v1422
        %v1461 = vtanh.pop %v1425
        %v1462 = vtanh.pop %v1430
        %v1463 = vtanh.pop %v1433
        %v1464 = vtanh.pop %v1438
        %v1465 = vtanh.pop %v1441
        %v1466 = vtanh.pop %v1446
        %v1467 = vtanh.pop %v1449
        %v1468 = vpack.c.bf16 %v1453, %v1452
        %v1469 = vpack.c.bf16 %v1455, %v1454
        %v1470 = vpack.c.bf16 %v1457, %v1456
        %v1471 = vpack.c.bf16 %v1459, %v1458
        %v1472 = vpack.c.bf16 %v1461, %v1460
        %v1473 = vpack.c.bf16 %v1463, %v1462
        %v1474 = vpack.c.bf16 %v1465, %v1464
        %v1475 = vpack.c.bf16 %v1467, %v1466
        %1476 = vmatprep.subr.bf16.mxu0 0
        %1477 = vmatpush1.bf16.msra.mxu0 %v691
        %1478 = vmatprep.subr.bf16.mxu0 0
        %1479 = vmatpush1.bf16.msra.mxu0 %v690
        %1480 = vmatprep.subr.bf16.mxu0 0
        %1481 = vmatpush1.bf16.msra.mxu0 %v689
        %1482 = vmatprep.subr.bf16.mxu0 0
        %1483 = vmatpush1.bf16.msra.mxu0 %v688
        %1484 = vmatprep.subr.bf16.mxu0 0
        %1485 = vmatpush1.bf16.msra.mxu0 %v687
        %1486 = vmatprep.subr.bf16.mxu0 0
        %1487 = vmatpush1.bf16.msra.mxu0 %v686
        %1488 = vmatprep.subr.bf16.mxu0 0
        %1489 = vmatpush1.bf16.msra.mxu0 %v685
        %1490 = vmatprep.subr.bf16.mxu0 0
        %1491 = vmatpush1.bf16.msra.mxu0 %v684
        %1492 = vmatprep.subr.bf16.mxu0 0
        %1493 = vmatpush2.bf16.msra.mxu0 0
        %1494 = vmatprep.subr.bf16.mxu0 0
        %1495 = vmatpush2.bf16.msra.mxu0 0
        %1496 = vmatprep.subr.bf16.mxu0 0
        %1497 = vmatpush2.bf16.msra.mxu0 0
        %1498 = vmatprep.subr.bf16.mxu0 0
        %1499 = vmatpush2.bf16.msra.mxu0 0
        %1500 = vmatprep.subr.bf16.mxu0 0
        %1501 = vmatpush2.bf16.msra.mxu0 0
        %1502 = vmatprep.subr.bf16.mxu0 0
        %1503 = vmatpush2.bf16.msra.mxu0 0
        %1504 = vmatprep.subr.bf16.mxu0 0
        %1505 = vmatpush2.bf16.msra.mxu0 0
        %1506 = vmatprep.subr.bf16.mxu0 0
        %1507 = vmatpush2.bf16.msra.mxu0 0
        %1508 = vmatprep.mubr.bf16.mxu0 0
        %1509 = vmatmul.mubr.bf16.gmra.mxu0 %v1468
        %v1510 = vpop.f32.mrf.mxu0
        %v1511 = vadd.f32 %v406, %v1510
        %v1512 = vpop.f32.mrf.mxu0
        %v1513 = vpop.f32.mrf.mxu0
        %v1514 = vadd.f32 %v406, %v1513
        %v1515 = vpop.f32.mrf.mxu0
        %1516 = vmatprep.mubr.bf16.mxu0 0
        %1517 = vmatmul.mubr.bf16.gmra.mxu0 %v1469
        %v1518 = vpop.f32.mrf.mxu0
        %v1519 = vadd.f32 %v406, %v1518
        %v1520 = vpop.f32.mrf.mxu0
        %v1521 = vpop.f32.mrf.mxu0
        %v1522 = vadd.f32 %v406, %v1521
        %v1523 = vpop.f32.mrf.mxu0
        %1524 = vmatprep.mubr.bf16.mxu0 0
        %1525 = vmatmul.mubr.bf16.gmra.mxu0 %v1470
        %v1526 = vpop.f32.mrf.mxu0
        %v1527 = vadd.f32 %v406, %v1526
        %v1528 = vpop.f32.mrf.mxu0
        %v1529 = vpop.f32.mrf.mxu0
        %v1530 = vadd.f32 %v406, %v1529
        %v1531 = vpop.f32.mrf.mxu0
        %1532 = vmatprep.mubr.bf16.mxu0 0
        %1533 = vmatmul.mubr.bf16.gmra.mxu0 %v1471
        %v1534 = vpop.f32.mrf.mxu0
        %v1535 = vadd.f32 %v406, %v1534
        %v1536 = vpop.f32.mrf.mxu0
        %v1537 = vpop.f32.mrf.mxu0
        %v1538 = vadd.f32 %v406, %v1537
        %v1539 = vpop.f32.mrf.mxu0
        %1540 = vmatprep.mubr.bf16.mxu0 0
        %1541 = vmatmul.mubr.bf16.gmra.mxu0 %v1472
        %v1542 = vpop.f32.mrf.mxu0
        %v1543 = vadd.f32 %v406, %v1542
        %v1544 = vpop.f32.mrf.mxu0
        %v1545 = vpop.f32.mrf.mxu0
        %v1546 = vadd.f32 %v406, %v1545
        %v1547 = vpop.f32.mrf.mxu0
        %1548 = vmatprep.mubr.bf16.mxu0 0
        %1549 = vmatmul.mubr.bf16.gmra.mxu0 %v1473
        %v1550 = vpop.f32.mrf.mxu0
        %v1551 = vadd.f32 %v406, %v1550
        %v1552 = vpop.f32.mrf.mxu0
        %v1553 = vpop.f32.mrf.mxu0
        %v1554 = vadd.f32 %v406, %v1553
        %v1555 = vpop.f32.mrf.mxu0
        %1556 = vmatprep.mubr.bf16.mxu0 0
        %1557 = vmatmul.mubr.bf16.gmra.mxu0 %v1474
        %v1558 = vpop.f32.mrf.mxu0
        %v1559 = vadd.f32 %v406, %v1558
        %v1560 = vpop.f32.mrf.mxu0
        %v1561 = vpop.f32.mrf.mxu0
        %v1562 = vadd.f32 %v406, %v1561
        %v1563 = vpop.f32.mrf.mxu0
        %1564 = vmatprep.mubr.bf16.mxu0 0
        %1565 = vmatmul.mubr.bf16.gmra.mxu0 %v1475
        %v1566 = vpop.f32.mrf.mxu0
        %v1567 = vadd.f32 %v406, %v1566
        %v1568 = vpop.f32.mrf.mxu0
        %v1569 = vpop.f32.mrf.mxu0
        %v1570 = vadd.f32 %v406, %v1569
        %v1571 = vpop.f32.mrf.mxu0
        %1572 = vdwg.mxu0
        %v1573 = vmul.f32 %v994, 2.0
        %v1574 = vmul.f32 %v997, 2.0
        %v1575 = vmul.f32 %v1002, 2.0
        %v1576 = vmul.f32 %v1005, 2.0
        %v1577 = vmul.f32 %v1010, 2.0
        %v1578 = vmul.f32 %v1013, 2.0
        %v1579 = vmul.f32 %v1018, 2.0
        %v1580 = vmul.f32 %v1021, 2.0
        %v1581 = vmul.f32 %v1026, 2.0
        %v1582 = vmul.f32 %v1029, 2.0
        %v1583 = vmul.f32 %v1034, 2.0
        %v1584 = vmul.f32 %v1037, 2.0
        %v1585 = vmul.f32 %v1042, 2.0
        %v1586 = vmul.f32 %v1045, 2.0
        %v1587 = vmul.f32 %v1050, 2.0
        %v1588 = vmul.f32 %v1053, 2.0
        %v1589 = vadd.f32 %v735, %v1573
        %v1590 = vadd.f32 %v738, %v1574
        %v1591 = vadd.f32 %v743, %v1575
        %v1592 = vadd.f32 %v746, %v1576
        %v1593 = vadd.f32 %v751, %v1577
        %v1594 = vadd.f32 %v754, %v1578
        %v1595 = vadd.f32 %v759, %v1579
        %v1596 = vadd.f32 %v762, %v1580
        %v1597 = vadd.f32 %v767, %v1581
        %v1598 = vadd.f32 %v770, %v1582
        %v1599 = vadd.f32 %v775, %v1583
        %v1600 = vadd.f32 %v778, %v1584
        %v1601 = vadd.f32 %v783, %v1585
        %v1602 = vadd.f32 %v786, %v1586
        %v1603 = vadd.f32 %v791, %v1587
        %v1604 = vadd.f32 %v794, %v1588
        %v1605 = vmul.f32 %v1252, 2.0
        %v1606 = vmul.f32 %v1255, 2.0
        %v1607 = vmul.f32 %v1260, 2.0
        %v1608 = vmul.f32 %v1263, 2.0
        %v1609 = vmul.f32 %v1268, 2.0
        %v1610 = vmul.f32 %v1271, 2.0
        %v1611 = vmul.f32 %v1276, 2.0
        %v1612 = vmul.f32 %v1279, 2.0
        %v1613 = vmul.f32 %v1284, 2.0
        %v1614 = vmul.f32 %v1287, 2.0
        %v1615 = vmul.f32 %v1292, 2.0
        %v1616 = vmul.f32 %v1295, 2.0
        %v1617 = vmul.f32 %v1300, 2.0
        %v1618 = vmul.f32 %v1303, 2.0
        %v1619 = vmul.f32 %v1308, 2.0
        %v1620 = vmul.f32 %v1311, 2.0
        %v1621 = vadd.f32 %v1589, %v1605
        %v1622 = vadd.f32 %v1590, %v1606
        %v1623 = vadd.f32 %v1591, %v1607
        %v1624 = vadd.f32 %v1592, %v1608
        %v1625 = vadd.f32 %v1593, %v1609
        %v1626 = vadd.f32 %v1594, %v1610
        %v1627 = vadd.f32 %v1595, %v1611
        %v1628 = vadd.f32 %v1596, %v1612
        %v1629 = vadd.f32 %v1597, %v1613
        %v1630 = vadd.f32 %v1598, %v1614
        %v1631 = vadd.f32 %v1599, %v1615
        %v1632 = vadd.f32 %v1600, %v1616
        %v1633 = vadd.f32 %v1601, %v1617
        %v1634 = vadd.f32 %v1602, %v1618
        %v1635 = vadd.f32 %v1603, %v1619
        %v1636 = vadd.f32 %v1604, %v1620
        %v1637 = vadd.f32 %v1621, %v1511
        %v1638 = vadd.f32 %v1622, %v1514
        %v1639 = vadd.f32 %v1623, %v1519
        %v1640 = vadd.f32 %v1624, %v1522
        %v1641 = vadd.f32 %v1625, %v1527
        %v1642 = vadd.f32 %v1626, %v1530
        %v1643 = vadd.f32 %v1627, %v1535
        %v1644 = vadd.f32 %v1628, %v1538
        %v1645 = vadd.f32 %v1629, %v1543
        %v1646 = vadd.f32 %v1630, %v1546
        %v1647 = vadd.f32 %v1631, %v1551
        %v1648 = vadd.f32 %v1632, %v1554
        %v1649 = vadd.f32 %v1633, %v1559
        %v1650 = vadd.f32 %v1634, %v1562
        %v1651 = vadd.f32 %v1635, %v1567
        %v1652 = vadd.f32 %v1636, %v1570
        %v1653 = vstv %s442
        %v1654 = vmul.f32 %v1653, %v1637
        %v1655 = vmul.f32 %v1653, %v1638
        %v1656 = vmul.f32 %v1653, %v1639
        %v1657 = vmul.f32 %v1653, %v1640
        %v1658 = vmul.f32 %v1653, %v1641
        %v1659 = vmul.f32 %v1653, %v1642
        %v1660 = vmul.f32 %v1653, %v1643
        %v1661 = vmul.f32 %v1653, %v1644
        %v1662 = vmul.f32 %v1653, %v1645
        %v1663 = vmul.f32 %v1653, %v1646
        %v1664 = vmul.f32 %v1653, %v1647
        %v1665 = vmul.f32 %v1653, %v1648
        %v1666 = vmul.f32 %v1653, %v1649
        %v1667 = vmul.f32 %v1653, %v1650
        %v1668 = vmul.f32 %v1653, %v1651
        %v1669 = vmul.f32 %v1653, %v1652
        %v1670 = vadd.f32 %v408, %v1654
        %v1671 = vadd.f32 %v409, %v1655
        %v1672 = vadd.f32 %v410, %v1656
        %v1673 = vadd.f32 %v411, %v1657
        %v1674 = vadd.f32 %v412, %v1658
        %v1675 = vadd.f32 %v413, %v1659
        %v1676 = vadd.f32 %v414, %v1660
        %v1677 = vadd.f32 %v415, %v1661
        %v1678 = vadd.f32 %v416, %v1662
        %v1679 = vadd.f32 %v417, %v1663
        %v1680 = vadd.f32 %v418, %v1664
        %v1681 = vadd.f32 %v419, %v1665
        %v1682 = vadd.f32 %v420, %v1666
        %v1683 = vadd.f32 %v421, %v1667
        %v1684 = vadd.f32 %v422, %v1668
        %v1685 = vadd.f32 %v423, %v1669
        %s1686 = scalar_lea.vmem %s390, 128 [#allocation14]
        %1687 = vst [vmem:[%s1686] sm:$0xff] %v1670
        %1688 = vst [vmem:[%s1686 + $0x8] sm:$0xff] %v1671
        %1689 = vst [vmem:[%s1686 + $0x10] sm:$0xff] %v1672
        %1690 = vst [vmem:[%s1686 + $0x18] sm:$0xff] %v1673
        %1691 = vst [vmem:[%s1686 + $0x20] sm:$0xff] %v1674
        %1692 = vst [vmem:[%s1686 + $0x28] sm:$0xff] %v1675
        %1693 = vst [vmem:[%s1686 + $0x30] sm:$0xff] %v1676
        %1694 = vst [vmem:[%s1686 + $0x38] sm:$0xff] %v1677
        %1695 = vst [vmem:[%s1686 + $0x40] sm:$0xff] %v1678
        %1696 = vst [vmem:[%s1686 + $0x48] sm:$0xff] %v1679
        %1697 = vst [vmem:[%s1686 + $0x50] sm:$0xff] %v1680
        %1698 = vst [vmem:[%s1686 + $0x58] sm:$0xff] %v1681
        %1699 = vst [vmem:[%s1686 + $0x60] sm:$0xff] %v1682
        %1700 = vst [vmem:[%s1686 + $0x68] sm:$0xff] %v1683
        %1701 = vst [vmem:[%s1686 + $0x70] sm:$0xff] %v1684
        %1702 = vst [vmem:[%s1686 + $0x78] sm:$0xff] %v1685
        %s1703 = sld [smem:[#allocation2 + $0x1]]
        %s1704 = sld [smem:[#allocation7 + $0x1]]
        %s1705 = sld [smem:[#allocation8 + $0x1]]
        %v1706 = vpack.c.bf16 %v1671, %v1670
        %v1707 = vpack.c.bf16 %v1673, %v1672
        %v1708 = vpack.c.bf16 %v1675, %v1674
        %v1709 = vpack.c.bf16 %v1677, %v1676
        %v1710 = vpack.c.bf16 %v1679, %v1678
        %v1711 = vpack.c.bf16 %v1681, %v1680
        %v1712 = vpack.c.bf16 %v1683, %v1682
        %v1713 = vpack.c.bf16 %v1685, %v1684
        %v1714 = vld [vmem:[#allocation11] sm:$0xf]
        %v1715 = vld [vmem:[#allocation11 + $0x4] sm:$0xf]
        %v1716 = vld [vmem:[#allocation11 + $0x8] sm:$0xf]
        %v1717 = vld [vmem:[#allocation11 + $0xc] sm:$0xf]
        %v1718 = vld [vmem:[#allocation11 + $0x10] sm:$0xf]
        %v1719 = vld [vmem:[#allocation11 + $0x14] sm:$0xf]
        %v1720 = vld [vmem:[#allocation11 + $0x18] sm:$0xf]
        %v1721 = vld [vmem:[#allocation11 + $0x1c] sm:$0xf]
        %v1722 = vld [vmem:[#allocation11 + $0x20] sm:$0xf]
        %v1723 = vld [vmem:[#allocation11 + $0x24] sm:$0xf]
        %v1724 = vld [vmem:[#allocation11 + $0x28] sm:$0xf]
        %v1725 = vld [vmem:[#allocation11 + $0x2c] sm:$0xf]
        %v1726 = vld [vmem:[#allocation11 + $0x30] sm:$0xf]
        %v1727 = vld [vmem:[#allocation11 + $0x34] sm:$0xf]
        %v1728 = vld [vmem:[#allocation11 + $0x38] sm:$0xf]
        %v1729 = vld [vmem:[#allocation11 + $0x3c] sm:$0xf]
        %v1746 = vunpack.c.l.b16 %v1714
        %v1747 = vunpack.c.l.b16 %v1715
        %v1748 = vunpack.c.l.b16 %v1716
        %v1749 = vunpack.c.l.b16 %v1717
        %v1750 = vunpack.c.l.b16 %v1718
        %v1751 = vunpack.c.l.b16 %v1719
        %v1752 = vunpack.c.l.b16 %v1720
        %v1753 = vunpack.c.l.b16 %v1721
        %v1754 = vunpack.c.l.b16 %v1722
        %v1755 = vunpack.c.l.b16 %v1723
        %v1756 = vunpack.c.l.b16 %v1724
        %v1757 = vunpack.c.l.b16 %v1725
        %v1758 = vunpack.c.l.b16 %v1726
        %v1759 = vunpack.c.l.b16 %v1727
        %v1760 = vunpack.c.l.b16 %v1728
        %v1761 = vunpack.c.l.b16 %v1729
        %v1762 = vpack.c.b16 %v1747, %v1746
        %v1763 = vpack.c.b16 %v1749, %v1748
        %v1764 = vpack.c.b16 %v1751, %v1750
        %v1765 = vpack.c.b16 %v1753, %v1752
        %v1766 = vpack.c.b16 %v1755, %v1754
        %v1767 = vpack.c.b16 %v1757, %v1756
        %v1768 = vpack.c.b16 %v1759, %v1758
        %v1769 = vpack.c.b16 %v1761, %v1760
        %1778 = vmatprep.subr.bf16.mxu0 0
        %1779 = vmatpush1.bf16.msra.mxu0 %v1769
        %1780 = vmatprep.subr.bf16.mxu0 0
        %1781 = vmatpush1.bf16.msra.mxu0 %v1768
        %1782 = vmatprep.subr.bf16.mxu0 0
        %1783 = vmatpush1.bf16.msra.mxu0 %v1767
        %1784 = vmatprep.subr.bf16.mxu0 0
        %1785 = vmatpush1.bf16.msra.mxu0 %v1766
        %1786 = vmatprep.subr.bf16.mxu0 0
        %1787 = vmatpush1.bf16.msra.mxu0 %v1765
        %1788 = vmatprep.subr.bf16.mxu0 0
        %1789 = vmatpush1.bf16.msra.mxu0 %v1764
        %1790 = vmatprep.subr.bf16.mxu0 0
        %1791 = vmatpush1.bf16.msra.mxu0 %v1763
        %1792 = vmatprep.subr.bf16.mxu0 0
        %1793 = vmatpush1.bf16.msra.mxu0 %v1762
        %1794 = vmatprep.subr.bf16.mxu0 0
        %1795 = vmatpush2.bf16.msra.mxu0 0
        %1796 = vmatprep.subr.bf16.mxu0 0
        %1797 = vmatpush2.bf16.msra.mxu0 0
        %1798 = vmatprep.subr.bf16.mxu0 0
        %1799 = vmatpush2.bf16.msra.mxu0 0
        %1800 = vmatprep.subr.bf16.mxu0 0
        %1801 = vmatpush2.bf16.msra.mxu0 0
        %1802 = vmatprep.subr.bf16.mxu0 0
        %1803 = vmatpush2.bf16.msra.mxu0 0
        %1804 = vmatprep.subr.bf16.mxu0 0
        %1805 = vmatpush2.bf16.msra.mxu0 0
        %1806 = vmatprep.subr.bf16.mxu0 0
        %1807 = vmatpush2.bf16.msra.mxu0 0
        %1808 = vmatprep.subr.bf16.mxu0 0
        %1809 = vmatpush2.bf16.msra.mxu0 0
        %1810 = vmatprep.mubr.bf16.mxu0 0
        %1811 = vmatmul.mubr.bf16.gmra.mxu0 %v1706
        %v1812 = vpop.f32.mrf.mxu0
        %v1813 = vadd.f32 %v399, %v1812
        %v1814 = vpop.f32.mrf.mxu0
        %v1815 = vpop.f32.mrf.mxu0
        %v1816 = vadd.f32 %v399, %v1815
        %v1817 = vpop.f32.mrf.mxu0
        %1818 = vmatprep.mubr.bf16.mxu0 0
        %1819 = vmatmul.mubr.bf16.gmra.mxu0 %v1707
        %v1820 = vpop.f32.mrf.mxu0
        %v1821 = vadd.f32 %v399, %v1820
        %v1822 = vpop.f32.mrf.mxu0
        %v1823 = vpop.f32.mrf.mxu0
        %v1824 = vadd.f32 %v399, %v1823
        %v1825 = vpop.f32.mrf.mxu0
        %1826 = vmatprep.mubr.bf16.mxu0 0
        %1827 = vmatmul.mubr.bf16.gmra.mxu0 %v1708
        %v1828 = vpop.f32.mrf.mxu0
        %v1829 = vadd.f32 %v399, %v1828
        %v1830 = vpop.f32.mrf.mxu0
        %v1831 = vpop.f32.mrf.mxu0
        %v1832 = vadd.f32 %v399, %v1831
        %v1833 = vpop.f32.mrf.mxu0
        %1834 = vmatprep.mubr.bf16.mxu0 0
        %1835 = vmatmul.mubr.bf16.gmra.mxu0 %v1709
        %v1836 = vpop.f32.mrf.mxu0
        %v1837 = vadd.f32 %v399, %v1836
        %v1838 = vpop.f32.mrf.mxu0
        %v1839 = vpop.f32.mrf.mxu0
        %v1840 = vadd.f32 %v399, %v1839
        %v1841 = vpop.f32.mrf.mxu0
        %1842 = vmatprep.mubr.bf16.mxu0 0
        %1843 = vmatmul.mubr.bf16.gmra.mxu0 %v1710
        %v1844 = vpop.f32.mrf.mxu0
        %v1845 = vadd.f32 %v399, %v1844
        %v1846 = vpop.f32.mrf.mxu0
        %v1847 = vpop.f32.mrf.mxu0
        %v1848 = vadd.f32 %v399, %v1847
        %v1849 = vpop.f32.mrf.mxu0
        %1850 = vmatprep.mubr.bf16.mxu0 0
        %1851 = vmatmul.mubr.bf16.gmra.mxu0 %v1711
        %v1852 = vpop.f32.mrf.mxu0
        %v1853 = vadd.f32 %v399, %v1852
        %v1854 = vpop.f32.mrf.mxu0
        %v1855 = vpop.f32.mrf.mxu0
        %v1856 = vadd.f32 %v399, %v1855
        %v1857 = vpop.f32.mrf.mxu0
        %1858 = vmatprep.mubr.bf16.mxu0 0
        %1859 = vmatmul.mubr.bf16.gmra.mxu0 %v1712
        %v1860 = vpop.f32.mrf.mxu0
        %v1861 = vadd.f32 %v399, %v1860
        %v1862 = vpop.f32.mrf.mxu0
        %v1863 = vpop.f32.mrf.mxu0
        %v1864 = vadd.f32 %v399, %v1863
        %v1865 = vpop.f32.mrf.mxu0
        %1866 = vmatprep.mubr.bf16.mxu0 0
        %1867 = vmatmul.mubr.bf16.gmra.mxu0 %v1713
        %v1868 = vpop.f32.mrf.mxu0
        %v1869 = vadd.f32 %v399, %v1868
        %v1870 = vpop.f32.mrf.mxu0
        %v1871 = vpop.f32.mrf.mxu0
        %v1872 = vadd.f32 %v399, %v1871
        %v1873 = vpop.f32.mrf.mxu0
        %1874 = vdwg.mxu0
        %v1875 = vtanh.pop %v1813
        %v1876 = vtanh.pop %v1816
        %v1877 = vtanh.pop %v1821
        %v1878 = vtanh.pop %v1824
        %v1879 = vtanh.pop %v1829
        %v1880 = vtanh.pop %v1832
        %v1881 = vtanh.pop %v1837
        %v1882 = vtanh.pop %v1840
        %v1883 = vtanh.pop %v1845
        %v1884 = vtanh.pop %v1848
        %v1885 = vtanh.pop %v1853
        %v1886 = vtanh.pop %v1856
        %v1887 = vtanh.pop %v1861
        %v1888 = vtanh.pop %v1864
        %v1889 = vtanh.pop %v1869
        %v1890 = vtanh.pop %v1872
        %v1891 = vpack.c.bf16 %v1876, %v1875
        %v1892 = vpack.c.bf16 %v1878, %v1877
        %v1893 = vpack.c.bf16 %v1880, %v1879
        %v1894 = vpack.c.bf16 %v1882, %v1881
        %v1895 = vpack.c.bf16 %v1884, %v1883
        %v1896 = vpack.c.bf16 %v1886, %v1885
        %v1897 = vpack.c.bf16 %v1888, %v1887
        %v1898 = vpack.c.bf16 %v1890, %v1889
        %v1899 = vld [vmem:[#allocation13] sm:$0xf]
        %v1900 = vld [vmem:[#allocation13 + $0x4] sm:$0xf]
        %v1901 = vld [vmem:[#allocation13 + $0x8] sm:$0xf]
        %v1902 = vld [vmem:[#allocation13 + $0xc] sm:$0xf]
        %v1903 = vld [vmem:[#allocation13 + $0x10] sm:$0xf]
        %v1904 = vld [vmem:[#allocation13 + $0x14] sm:$0xf]
        %v1905 = vld [vmem:[#allocation13 + $0x18] sm:$0xf]
        %v1906 = vld [vmem:[#allocation13 + $0x1c] sm:$0xf]
        %v1907 = vld [vmem:[#allocation13 + $0x20] sm:$0xf]
        %v1908 = vld [vmem:[#allocation13 + $0x24] sm:$0xf]
        %v1909 = vld [vmem:[#allocation13 + $0x28] sm:$0xf]
        %v1910 = vld [vmem:[#allocation13 + $0x2c] sm:$0xf]
        %v1911 = vld [vmem:[#allocation13 + $0x30] sm:$0xf]
        %v1912 = vld [vmem:[#allocation13 + $0x34] sm:$0xf]
        %v1913 = vld [vmem:[#allocation13 + $0x38] sm:$0xf]
        %v1914 = vld [vmem:[#allocation13 + $0x3c] sm:$0xf]
        %v1931 = vunpack.c.l.b16 %v1899
        %v1932 = vunpack.c.l.b16 %v1900
        %v1933 = vunpack.c.l.b16 %v1901
        %v1934 = vunpack.c.l.b16 %v1902
        %v1935 = vunpack.c.l.b16 %v1903
        %v1936 = vunpack.c.l.b16 %v1904
        %v1937 = vunpack.c.l.b16 %v1905
        %v1938 = vunpack.c.l.b16 %v1906
        %v1939 = vunpack.c.l.b16 %v1907
        %v1940 = vunpack.c.l.b16 %v1908
        %v1941 = vunpack.c.l.b16 %v1909
        %v1942 = vunpack.c.l.b16 %v1910
        %v1943 = vunpack.c.l.b16 %v1911
        %v1944 = vunpack.c.l.b16 %v1912
        %v1945 = vunpack.c.l.b16 %v1913
        %v1946 = vunpack.c.l.b16 %v1914
        %v1947 = vpack.c.b16 %v1932, %v1931
        %v1948 = vpack.c.b16 %v1934, %v1933
        %v1949 = vpack.c.b16 %v1936, %v1935
        %v1950 = vpack.c.b16 %v1938, %v1937
        %v1951 = vpack.c.b16 %v1940, %v1939
        %v1952 = vpack.c.b16 %v1942, %v1941
        %v1953 = vpack.c.b16 %v1944, %v1943
        %v1954 = vpack.c.b16 %v1946, %v1945
        %1963 = vmatprep.subr.bf16.mxu0 0
        %1964 = vmatpush1.bf16.msra.mxu0 %v1954
        %1965 = vmatprep.subr.bf16.mxu0 0
        %1966 = vmatpush1.bf16.msra.mxu0 %v1953
        %1967 = vmatprep.subr.bf16.mxu0 0
        %1968 = vmatpush1.bf16.msra.mxu0 %v1952
        %1969 = vmatprep.subr.bf16.mxu0 0
        %1970 = vmatpush1.bf16.msra.mxu0 %v1951
        %1971 = vmatprep.subr.bf16.mxu0 0
        %1972 = vmatpush1.bf16.msra.mxu0 %v1950
        %1973 = vmatprep.subr.bf16.mxu0 0
        %1974 = vmatpush1.bf16.msra.mxu0 %v1949
        %1975 = vmatprep.subr.bf16.mxu0 0
        %1976 = vmatpush1.bf16.msra.mxu0 %v1948
        %1977 = vmatprep.subr.bf16.mxu0 0
        %1978 = vmatpush1.bf16.msra.mxu0 %v1947
        %1979 = vmatprep.subr.bf16.mxu0 0
        %1980 = vmatpush2.bf16.msra.mxu0 0
        %1981 = vmatprep.subr.bf16.mxu0 0
        %1982 = vmatpush2.bf16.msra.mxu0 0
        %1983 = vmatprep.subr.bf16.mxu0 0
        %1984 = vmatpush2.bf16.msra.mxu0 0
        %1985 = vmatprep.subr.bf16.mxu0 0
        %1986 = vmatpush2.bf16.msra.mxu0 0
        %1987 = vmatprep.subr.bf16.mxu0 0
        %1988 = vmatpush2.bf16.msra.mxu0 0
        %1989 = vmatprep.subr.bf16.mxu0 0
        %1990 = vmatpush2.bf16.msra.mxu0 0
        %1991 = vmatprep.subr.bf16.mxu0 0
        %1992 = vmatpush2.bf16.msra.mxu0 0
        %1993 = vmatprep.subr.bf16.mxu0 0
        %1994 = vmatpush2.bf16.msra.mxu0 0
        %1995 = vmatprep.mubr.bf16.mxu0 0
        %1996 = vmatmul.mubr.bf16.gmra.mxu0 %v1891
        %v1997 = vpop.f32.mrf.mxu0
        %v1998 = vadd.f32 %v406, %v1997
        %v1999 = vpop.f32.mrf.mxu0
        %v2000 = vpop.f32.mrf.mxu0
        %v2001 = vadd.f32 %v406, %v2000
        %v2002 = vpop.f32.mrf.mxu0
        %2003 = vmatprep.mubr.bf16.mxu0 0
        %2004 = vmatmul.mubr.bf16.gmra.mxu0 %v1892
        %v2005 = vpop.f32.mrf.mxu0
        %v2006 = vadd.f32 %v406, %v2005
        %v2007 = vpop.f32.mrf.mxu0
        %v2008 = vpop.f32.mrf.mxu0
        %v2009 = vadd.f32 %v406, %v2008
        %v2010 = vpop.f32.mrf.mxu0
        %2011 = vmatprep.mubr.bf16.mxu0 0
        %2012 = vmatmul.mubr.bf16.gmra.mxu0 %v1893
        %v2013 = vpop.f32.mrf.mxu0
        %v2014 = vadd.f32 %v406, %v2013
        %v2015 = vpop.f32.mrf.mxu0
        %v2016 = vpop.f32.mrf.mxu0
        %v2017 = vadd.f32 %v406, %v2016
        %v2018 = vpop.f32.mrf.mxu0
        %2019 = vmatprep.mubr.bf16.mxu0 0
        %2020 = vmatmul.mubr.bf16.gmra.mxu0 %v1894
        %v2021 = vpop.f32.mrf.mxu0
        %v2022 = vadd.f32 %v406, %v2021
        %v2023 = vpop.f32.mrf.mxu0
        %v2024 = vpop.f32.mrf.mxu0
        %v2025 = vadd.f32 %v406, %v2024
        %v2026 = vpop.f32.mrf.mxu0
        %2027 = vmatprep.mubr.bf16.mxu0 0
        %2028 = vmatmul.mubr.bf16.gmra.mxu0 %v1895
        %v2029 = vpop.f32.mrf.mxu0
        %v2030 = vadd.f32 %v406, %v2029
        %v2031 = vpop.f32.mrf.mxu0
        %v2032 = vpop.f32.mrf.mxu0
        %v2033 = vadd.f32 %v406, %v2032
        %v2034 = vpop.f32.mrf.mxu0
        %2035 = vmatprep.mubr.bf16.mxu0 0
        %2036 = vmatmul.mubr.bf16.gmra.mxu0 %v1896
        %v2037 = vpop.f32.mrf.mxu0
        %v2038 = vadd.f32 %v406, %v2037
        %v2039 = vpop.f32.mrf.mxu0
        %v2040 = vpop.f32.mrf.mxu0
        %v2041 = vadd.f32 %v406, %v2040
        %v2042 = vpop.f32.mrf.mxu0
        %2043 = vmatprep.mubr.bf16.mxu0 0
        %2044 = vmatmul.mubr.bf16.gmra.mxu0 %v1897
        %v2045 = vpop.f32.mrf.mxu0
        %v2046 = vadd.f32 %v406, %v2045
        %v2047 = vpop.f32.mrf.mxu0
        %v2048 = vpop.f32.mrf.mxu0
        %v2049 = vadd.f32 %v406, %v2048
        %v2050 = vpop.f32.mrf.mxu0
        %2051 = vmatprep.mubr.bf16.mxu0 0
        %2052 = vmatmul.mubr.bf16.gmra.mxu0 %v1898
        %v2053 = vpop.f32.mrf.mxu0
        %v2054 = vadd.f32 %v406, %v2053
        %v2055 = vpop.f32.mrf.mxu0
        %v2056 = vpop.f32.mrf.mxu0
        %v2057 = vadd.f32 %v406, %v2056
        %v2058 = vpop.f32.mrf.mxu0
        %2059 = vdwg.mxu0
        %v2060 = vstv %s1704
        %v2061 = vmul.f32 %v2060, %v1998
        %v2062 = vmul.f32 %v2060, %v2001
        %v2063 = vmul.f32 %v2060, %v2006
        %v2064 = vmul.f32 %v2060, %v2009
        %v2065 = vmul.f32 %v2060, %v2014
        %v2066 = vmul.f32 %v2060, %v2017
        %v2067 = vmul.f32 %v2060, %v2022
        %v2068 = vmul.f32 %v2060, %v2025
        %v2069 = vmul.f32 %v2060, %v2030
        %v2070 = vmul.f32 %v2060, %v2033
        %v2071 = vmul.f32 %v2060, %v2038
        %v2072 = vmul.f32 %v2060, %v2041
        %v2073 = vmul.f32 %v2060, %v2046
        %v2074 = vmul.f32 %v2060, %v2049
        %v2075 = vmul.f32 %v2060, %v2054
        %v2076 = vmul.f32 %v2060, %v2057
        %v2077 = vadd.f32 %v1670, %v2061
        %v2078 = vadd.f32 %v1671, %v2062
        %v2079 = vadd.f32 %v1672, %v2063
        %v2080 = vadd.f32 %v1673, %v2064
        %v2081 = vadd.f32 %v1674, %v2065
        %v2082 = vadd.f32 %v1675, %v2066
        %v2083 = vadd.f32 %v1676, %v2067
        %v2084 = vadd.f32 %v1677, %v2068
        %v2085 = vadd.f32 %v1678, %v2069
        %v2086 = vadd.f32 %v1679, %v2070
        %v2087 = vadd.f32 %v1680, %v2071
        %v2088 = vadd.f32 %v1681, %v2072
        %v2089 = vadd.f32 %v1682, %v2073
        %v2090 = vadd.f32 %v1683, %v2074
        %v2091 = vadd.f32 %v1684, %v2075
        %v2092 = vadd.f32 %v1685, %v2076
        %v2093 = vpack.c.bf16 %v2078, %v2077
        %v2094 = vpack.c.bf16 %v2080, %v2079
        %v2095 = vpack.c.bf16 %v2082, %v2081
        %v2096 = vpack.c.bf16 %v2084, %v2083
        %v2097 = vpack.c.bf16 %v2086, %v2085
        %v2098 = vpack.c.bf16 %v2088, %v2087
        %v2099 = vpack.c.bf16 %v2090, %v2089
        %v2100 = vpack.c.bf16 %v2092, %v2091
        %2101 = vmatprep.subr.bf16.mxu0 0
        %2102 = vmatpush1.bf16.msra.mxu0 %v1769
        %2103 = vmatprep.subr.bf16.mxu0 0
        %2104 = vmatpush1.bf16.msra.mxu0 %v1768
        %2105 = vmatprep.subr.bf16.mxu0 0
        %2106 = vmatpush1.bf16.msra.mxu0 %v1767
        %2107 = vmatprep.subr.bf16.mxu0 0
        %2108 = vmatpush1.bf16.msra.mxu0 %v1766
        %2109 = vmatprep.subr.bf16.mxu0 0
        %2110 = vmatpush1.bf16.msra.mxu0 %v1765
        %2111 = vmatprep.subr.bf16.mxu0 0
        %2112 = vmatpush1.bf16.msra.mxu0 %v1764
        %2113 = vmatprep.subr.bf16.mxu0 0
        %2114 = vmatpush1.bf16.msra.mxu0 %v1763
        %2115 = vmatprep.subr.bf16.mxu0 0
        %2116 = vmatpush1.bf16.msra.mxu0 %v1762
        %2117 = vmatprep.subr.bf16.mxu0 0
        %2118 = vmatpush2.bf16.msra.mxu0 0
        %2119 = vmatprep.subr.bf16.mxu0 0
        %2120 = vmatpush2.bf16.msra.mxu0 0
        %2121 = vmatprep.subr.bf16.mxu0 0
        %2122 = vmatpush2.bf16.msra.mxu0 0
        %2123 = vmatprep.subr.bf16.mxu0 0
        %2124 = vmatpush2.bf16.msra.mxu0 0
        %2125 = vmatprep.subr.bf16.mxu0 0
        %2126 = vmatpush2.bf16.msra.mxu0 0
        %2127 = vmatprep.subr.bf16.mxu0 0
        %2128 = vmatpush2.bf16.msra.mxu0 0
        %2129 = vmatprep.subr.bf16.mxu0 0
        %2130 = vmatpush2.bf16.msra.mxu0 0
        %2131 = vmatprep.subr.bf16.mxu0 0
        %2132 = vmatpush2.bf16.msra.mxu0 0
        %2133 = vmatprep.mubr.bf16.mxu0 0
        %2134 = vmatmul.mubr.bf16.gmra.mxu0 %v2093
        %v2135 = vpop.f32.mrf.mxu0
        %v2136 = vadd.f32 %v399, %v2135
        %v2137 = vpop.f32.mrf.mxu0
        %v2138 = vpop.f32.mrf.mxu0
        %v2139 = vadd.f32 %v399, %v2138
        %v2140 = vpop.f32.mrf.mxu0
        %2141 = vmatprep.mubr.bf16.mxu0 0
        %2142 = vmatmul.mubr.bf16.gmra.mxu0 %v2094
        %v2143 = vpop.f32.mrf.mxu0
        %v2144 = vadd.f32 %v399, %v2143
        %v2145 = vpop.f32.mrf.mxu0
        %v2146 = vpop.f32.mrf.mxu0
        %v2147 = vadd.f32 %v399, %v2146
        %v2148 = vpop.f32.mrf.mxu0
        %2149 = vmatprep.mubr.bf16.mxu0 0
        %2150 = vmatmul.mubr.bf16.gmra.mxu0 %v2095
        %v2151 = vpop.f32.mrf.mxu0
        %v2152 = vadd.f32 %v399, %v2151
        %v2153 = vpop.f32.mrf.mxu0
        %v2154 = vpop.f32.mrf.mxu0
        %v2155 = vadd.f32 %v399, %v2154
        %v2156 = vpop.f32.mrf.mxu0
        %2157 = vmatprep.mubr.bf16.mxu0 0
        %2158 = vmatmul.mubr.bf16.gmra.mxu0 %v2096
        %v2159 = vpop.f32.mrf.mxu0
        %v2160 = vadd.f32 %v399, %v2159
        %v2161 = vpop.f32.mrf.mxu0
        %v2162 = vpop.f32.mrf.mxu0
        %v2163 = vadd.f32 %v399, %v2162
        %v2164 = vpop.f32.mrf.mxu0
        %2165 = vmatprep.mubr.bf16.mxu0 0
        %2166 = vmatmul.mubr.bf16.gmra.mxu0 %v2097
        %v2167 = vpop.f32.mrf.mxu0
        %v2168 = vadd.f32 %v399, %v2167
        %v2169 = vpop.f32.mrf.mxu0
        %v2170 = vpop.f32.mrf.mxu0
        %v2171 = vadd.f32 %v399, %v2170
        %v2172 = vpop.f32.mrf.mxu0
        %2173 = vmatprep.mubr.bf16.mxu0 0
        %2174 = vmatmul.mubr.bf16.gmra.mxu0 %v2098
        %v2175 = vpop.f32.mrf.mxu0
        %v2176 = vadd.f32 %v399, %v2175
        %v2177 = vpop.f32.mrf.mxu0
        %v2178 = vpop.f32.mrf.mxu0
        %v2179 = vadd.f32 %v399, %v2178
        %v2180 = vpop.f32.mrf.mxu0
        %2181 = vmatprep.mubr.bf16.mxu0 0
        %2182 = vmatmul.mubr.bf16.gmra.mxu0 %v2099
        %v2183 = vpop.f32.mrf.mxu0
        %v2184 = vadd.f32 %v399, %v2183
        %v2185 = vpop.f32.mrf.mxu0
        %v2186 = vpop.f32.mrf.mxu0
        %v2187 = vadd.f32 %v399, %v2186
        %v2188 = vpop.f32.mrf.mxu0
        %2189 = vmatprep.mubr.bf16.mxu0 0
        %2190 = vmatmul.mubr.bf16.gmra.mxu0 %v2100
        %v2191 = vpop.f32.mrf.mxu0
        %v2192 = vadd.f32 %v399, %v2191
        %v2193 = vpop.f32.mrf.mxu0
        %v2194 = vpop.f32.mrf.mxu0
        %v2195 = vadd.f32 %v399, %v2194
        %v2196 = vpop.f32.mrf.mxu0
        %2197 = vdwg.mxu0
        %v2198 = vtanh.pop %v2136
        %v2199 = vtanh.pop %v2139
        %v2200 = vtanh.pop %v2144
        %v2201 = vtanh.pop %v2147
        %v2202 = vtanh.pop %v2152
        %v2203 = vtanh.pop %v2155
        %v2204 = vtanh.pop %v2160
        %v2205 = vtanh.pop %v2163
        %v2206 = vtanh.pop %v2168
        %v2207 = vtanh.pop %v2171
        %v2208 = vtanh.pop %v2176
        %v2209 = vtanh.pop %v2179
        %v2210 = vtanh.pop %v2184
        %v2211 = vtanh.pop %v2187
        %v2212 = vtanh.pop %v2192
        %v2213 = vtanh.pop %v2195
        %v2214 = vpack.c.bf16 %v2199, %v2198
        %v2215 = vpack.c.bf16 %v2201, %v2200
        %v2216 = vpack.c.bf16 %v2203, %v2202
        %v2217 = vpack.c.bf16 %v2205, %v2204
        %v2218 = vpack.c.bf16 %v2207, %v2206
        %v2219 = vpack.c.bf16 %v2209, %v2208
        %v2220 = vpack.c.bf16 %v2211, %v2210
        %v2221 = vpack.c.bf16 %v2213, %v2212
        %2222 = vmatprep.subr.bf16.mxu0 0
        %2223 = vmatpush1.bf16.msra.mxu0 %v1954
        %2224 = vmatprep.subr.bf16.mxu0 0
        %2225 = vmatpush1.bf16.msra.mxu0 %v1953
        %2226 = vmatprep.subr.bf16.mxu0 0
        %2227 = vmatpush1.bf16.msra.mxu0 %v1952
        %2228 = vmatprep.subr.bf16.mxu0 0
        %2229 = vmatpush1.bf16.msra.mxu0 %v1951
        %2230 = vmatprep.subr.bf16.mxu0 0
        %2231 = vmatpush1.bf16.msra.mxu0 %v1950
        %2232 = vmatprep.subr.bf16.mxu0 0
        %2233 = vmatpush1.bf16.msra.mxu0 %v1949
        %2234 = vmatprep.subr.bf16.mxu0 0
        %2235 = vmatpush1.bf16.msra.mxu0 %v1948
        %2236 = vmatprep.subr.bf16.mxu0 0
        %2237 = vmatpush1.bf16.msra.mxu0 %v1947
        %2238 = vmatprep.subr.bf16.mxu0 0
        %2239 = vmatpush2.bf16.msra.mxu0 0
        %2240 = vmatprep.subr.bf16.mxu0 0
        %2241 = vmatpush2.bf16.msra.mxu0 0
        %2242 = vmatprep.subr.bf16.mxu0 0
        %2243 = vmatpush2.bf16.msra.mxu0 0
        %2244 = vmatprep.subr.bf16.mxu0 0
        %2245 = vmatpush2.bf16.msra.mxu0 0
        %2246 = vmatprep.subr.bf16.mxu0 0
        %2247 = vmatpush2.bf16.msra.mxu0 0
        %2248 = vmatprep.subr.bf16.mxu0 0
        %2249 = vmatpush2.bf16.msra.mxu0 0
        %2250 = vmatprep.subr.bf16.mxu0 0
        %2251 = vmatpush2.bf16.msra.mxu0 0
        %2252 = vmatprep.subr.bf16.mxu0 0
        %2253 = vmatpush2.bf16.msra.mxu0 0
        %2254 = vmatprep.mubr.bf16.mxu0 0
        %2255 = vmatmul.mubr.bf16.gmra.mxu0 %v2214
        %v2256 = vpop.f32.mrf.mxu0
        %v2257 = vadd.f32 %v406, %v2256
        %v2258 = vpop.f32.mrf.mxu0
        %v2259 = vpop.f32.mrf.mxu0
        %v2260 = vadd.f32 %v406, %v2259
        %v2261 = vpop.f32.mrf.mxu0
        %2262 = vmatprep.mubr.bf16.mxu0 0
        %2263 = vmatmul.mubr.bf16.gmra.mxu0 %v2215
        %v2264 = vpop.f32.mrf.mxu0
        %v2265 = vadd.f32 %v406, %v2264
        %v2266 = vpop.f32.mrf.mxu0
        %v2267 = vpop.f32.mrf.mxu0
        %v2268 = vadd.f32 %v406, %v2267
        %v2269 = vpop.f32.mrf.mxu0
        %2270 = vmatprep.mubr.bf16.mxu0 0
        %2271 = vmatmul.mubr.bf16.gmra.mxu0 %v2216
        %v2272 = vpop.f32.mrf.mxu0
        %v2273 = vadd.f32 %v406, %v2272
        %v2274 = vpop.f32.mrf.mxu0
        %v2275 = vpop.f32.mrf.mxu0
        %v2276 = vadd.f32 %v406, %v2275
        %v2277 = vpop.f32.mrf.mxu0
        %2278 = vmatprep.mubr.bf16.mxu0 0
        %2279 = vmatmul.mubr.bf16.gmra.mxu0 %v2217
        %v2280 = vpop.f32.mrf.mxu0
        %v2281 = vadd.f32 %v406, %v2280
        %v2282 = vpop.f32.mrf.mxu0
        %v2283 = vpop.f32.mrf.mxu0
        %v2284 = vadd.f32 %v406, %v2283
        %v2285 = vpop.f32.mrf.mxu0
        %2286 = vmatprep.mubr.bf16.mxu0 0
        %2287 = vmatmul.mubr.bf16.gmra.mxu0 %v2218
        %v2288 = vpop.f32.mrf.mxu0
        %v2289 = vadd.f32 %v406, %v2288
        %v2290 = vpop.f32.mrf.mxu0
        %v2291 = vpop.f32.mrf.mxu0
        %v2292 = vadd.f32 %v406, %v2291
        %v2293 = vpop.f32.mrf.mxu0
        %2294 = vmatprep.mubr.bf16.mxu0 0
        %2295 = vmatmul.mubr.bf16.gmra.mxu0 %v2219
        %v2296 = vpop.f32.mrf.mxu0
        %v2297 = vadd.f32 %v406, %v2296
        %v2298 = vpop.f32.mrf.mxu0
        %v2299 = vpop.f32.mrf.mxu0
        %v2300 = vadd.f32 %v406, %v2299
        %v2301 = vpop.f32.mrf.mxu0
        %2302 = vmatprep.mubr.bf16.mxu0 0
        %2303 = vmatmul.mubr.bf16.gmra.mxu0 %v2220
        %v2304 = vpop.f32.mrf.mxu0
        %v2305 = vadd.f32 %v406, %v2304
        %v2306 = vpop.f32.mrf.mxu0
        %v2307 = vpop.f32.mrf.mxu0
        %v2308 = vadd.f32 %v406, %v2307
        %v2309 = vpop.f32.mrf.mxu0
        %2310 = vmatprep.mubr.bf16.mxu0 0
        %2311 = vmatmul.mubr.bf16.gmra.mxu0 %v2221
        %v2312 = vpop.f32.mrf.mxu0
        %v2313 = vadd.f32 %v406, %v2312
        %v2314 = vpop.f32.mrf.mxu0
        %v2315 = vpop.f32.mrf.mxu0
        %v2316 = vadd.f32 %v406, %v2315
        %v2317 = vpop.f32.mrf.mxu0
        %2318 = vdwg.mxu0
        %v2319 = vmul.f32 %v2060, %v2257
        %v2320 = vmul.f32 %v2060, %v2260
        %v2321 = vmul.f32 %v2060, %v2265
        %v2322 = vmul.f32 %v2060, %v2268
        %v2323 = vmul.f32 %v2060, %v2273
        %v2324 = vmul.f32 %v2060, %v2276
        %v2325 = vmul.f32 %v2060, %v2281
        %v2326 = vmul.f32 %v2060, %v2284
        %v2327 = vmul.f32 %v2060, %v2289
        %v2328 = vmul.f32 %v2060, %v2292
        %v2329 = vmul.f32 %v2060, %v2297
        %v2330 = vmul.f32 %v2060, %v2300
        %v2331 = vmul.f32 %v2060, %v2305
        %v2332 = vmul.f32 %v2060, %v2308
        %v2333 = vmul.f32 %v2060, %v2313
        %v2334 = vmul.f32 %v2060, %v2316
        %v2335 = vadd.f32 %v1670, %v2319
        %v2336 = vadd.f32 %v1671, %v2320
        %v2337 = vadd.f32 %v1672, %v2321
        %v2338 = vadd.f32 %v1673, %v2322
        %v2339 = vadd.f32 %v1674, %v2323
        %v2340 = vadd.f32 %v1675, %v2324
        %v2341 = vadd.f32 %v1676, %v2325
        %v2342 = vadd.f32 %v1677, %v2326
        %v2343 = vadd.f32 %v1678, %v2327
        %v2344 = vadd.f32 %v1679, %v2328
        %v2345 = vadd.f32 %v1680, %v2329
        %v2346 = vadd.f32 %v1681, %v2330
        %v2347 = vadd.f32 %v1682, %v2331
        %v2348 = vadd.f32 %v1683, %v2332
        %v2349 = vadd.f32 %v1684, %v2333
        %v2350 = vadd.f32 %v1685, %v2334
        %v2351 = vpack.c.bf16 %v2336, %v2335
        %v2352 = vpack.c.bf16 %v2338, %v2337
        %v2353 = vpack.c.bf16 %v2340, %v2339
        %v2354 = vpack.c.bf16 %v2342, %v2341
        %v2355 = vpack.c.bf16 %v2344, %v2343
        %v2356 = vpack.c.bf16 %v2346, %v2345
        %v2357 = vpack.c.bf16 %v2348, %v2347
        %v2358 = vpack.c.bf16 %v2350, %v2349
        %2359 = vmatprep.subr.bf16.mxu0 0
        %2360 = vmatpush1.bf16.msra.mxu0 %v1769
        %2361 = vmatprep.subr.bf16.mxu0 0
        %2362 = vmatpush1.bf16.msra.mxu0 %v1768
        %2363 = vmatprep.subr.bf16.mxu0 0
        %2364 = vmatpush1.bf16.msra.mxu0 %v1767
        %2365 = vmatprep.subr.bf16.mxu0 0
        %2366 = vmatpush1.bf16.msra.mxu0 %v1766
        %2367 = vmatprep.subr.bf16.mxu0 0
        %2368 = vmatpush1.bf16.msra.mxu0 %v1765
        %2369 = vmatprep.subr.bf16.mxu0 0
        %2370 = vmatpush1.bf16.msra.mxu0 %v1764
        %2371 = vmatprep.subr.bf16.mxu0 0
        %2372 = vmatpush1.bf16.msra.mxu0 %v1763
        %2373 = vmatprep.subr.bf16.mxu0 0
        %2374 = vmatpush1.bf16.msra.mxu0 %v1762
        %2375 = vmatprep.subr.bf16.mxu0 0
        %2376 = vmatpush2.bf16.msra.mxu0 0
        %2377 = vmatprep.subr.bf16.mxu0 0
        %2378 = vmatpush2.bf16.msra.mxu0 0
        %2379 = vmatprep.subr.bf16.mxu0 0
        %2380 = vmatpush2.bf16.msra.mxu0 0
        %2381 = vmatprep.subr.bf16.mxu0 0
        %2382 = vmatpush2.bf16.msra.mxu0 0
        %2383 = vmatprep.subr.bf16.mxu0 0
        %2384 = vmatpush2.bf16.msra.mxu0 0
        %2385 = vmatprep.subr.bf16.mxu0 0
        %2386 = vmatpush2.bf16.msra.mxu0 0
        %2387 = vmatprep.subr.bf16.mxu0 0
        %2388 = vmatpush2.bf16.msra.mxu0 0
        %2389 = vmatprep.subr.bf16.mxu0 0
        %2390 = vmatpush2.bf16.msra.mxu0 0
        %2391 = vmatprep.mubr.bf16.mxu0 0
        %2392 = vmatmul.mubr.bf16.gmra.mxu0 %v2351
        %v2393 = vpop.f32.mrf.mxu0
        %v2394 = vadd.f32 %v399, %v2393
        %v2395 = vpop.f32.mrf.mxu0
        %v2396 = vpop.f32.mrf.mxu0
        %v2397 = vadd.f32 %v399, %v2396
        %v2398 = vpop.f32.mrf.mxu0
        %2399 = vmatprep.mubr.bf16.mxu0 0
        %2400 = vmatmul.mubr.bf16.gmra.mxu0 %v2352
        %v2401 = vpop.f32.mrf.mxu0
        %v2402 = vadd.f32 %v399, %v2401
        %v2403 = vpop.f32.mrf.mxu0
        %v2404 = vpop.f32.mrf.mxu0
        %v2405 = vadd.f32 %v399, %v2404
        %v2406 = vpop.f32.mrf.mxu0
        %2407 = vmatprep.mubr.bf16.mxu0 0
        %2408 = vmatmul.mubr.bf16.gmra.mxu0 %v2353
        %v2409 = vpop.f32.mrf.mxu0
        %v2410 = vadd.f32 %v399, %v2409
        %v2411 = vpop.f32.mrf.mxu0
        %v2412 = vpop.f32.mrf.mxu0
        %v2413 = vadd.f32 %v399, %v2412
        %v2414 = vpop.f32.mrf.mxu0
        %2415 = vmatprep.mubr.bf16.mxu0 0
        %2416 = vmatmul.mubr.bf16.gmra.mxu0 %v2354
        %v2417 = vpop.f32.mrf.mxu0
        %v2418 = vadd.f32 %v399, %v2417
        %v2419 = vpop.f32.mrf.mxu0
        %v2420 = vpop.f32.mrf.mxu0
        %v2421 = vadd.f32 %v399, %v2420
        %v2422 = vpop.f32.mrf.mxu0
        %2423 = vmatprep.mubr.bf16.mxu0 0
        %2424 = vmatmul.mubr.bf16.gmra.mxu0 %v2355
        %v2425 = vpop.f32.mrf.mxu0
        %v2426 = vadd.f32 %v399, %v2425
        %v2427 = vpop.f32.mrf.mxu0
        %v2428 = vpop.f32.mrf.mxu0
        %v2429 = vadd.f32 %v399, %v2428
        %v2430 = vpop.f32.mrf.mxu0
        %2431 = vmatprep.mubr.bf16.mxu0 0
        %2432 = vmatmul.mubr.bf16.gmra.mxu0 %v2356
        %v2433 = vpop.f32.mrf.mxu0
        %v2434 = vadd.f32 %v399, %v2433
        %v2435 = vpop.f32.mrf.mxu0
        %v2436 = vpop.f32.mrf.mxu0
        %v2437 = vadd.f32 %v399, %v2436
        %v2438 = vpop.f32.mrf.mxu0
        %2439 = vmatprep.mubr.bf16.mxu0 0
        %2440 = vmatmul.mubr.bf16.gmra.mxu0 %v2357
        %v2441 = vpop.f32.mrf.mxu0
        %v2442 = vadd.f32 %v399, %v2441
        %v2443 = vpop.f32.mrf.mxu0
        %v2444 = vpop.f32.mrf.mxu0
        %v2445 = vadd.f32 %v399, %v2444
        %v2446 = vpop.f32.mrf.mxu0
        %2447 = vmatprep.mubr.bf16.mxu0 0
        %2448 = vmatmul.mubr.bf16.gmra.mxu0 %v2358
        %v2449 = vpop.f32.mrf.mxu0
        %v2450 = vadd.f32 %v399, %v2449
        %v2451 = vpop.f32.mrf.mxu0
        %v2452 = vpop.f32.mrf.mxu0
        %v2453 = vadd.f32 %v399, %v2452
        %v2454 = vpop.f32.mrf.mxu0
        %2455 = vdwg.mxu0
        %v2456 = vtanh.pop %v2394
        %v2457 = vtanh.pop %v2397
        %v2458 = vtanh.pop %v2402
        %v2459 = vtanh.pop %v2405
        %v2460 = vtanh.pop %v2410
        %v2461 = vtanh.pop %v2413
        %v2462 = vtanh.pop %v2418
        %v2463 = vtanh.pop %v2421
        %v2464 = vtanh.pop %v2426
        %v2465 = vtanh.pop %v2429
        %v2466 = vtanh.pop %v2434
        %v2467 = vtanh.pop %v2437
        %v2468 = vtanh.pop %v2442
        %v2469 = vtanh.pop %v2445
        %v2470 = vtanh.pop %v2450
        %v2471 = vtanh.pop %v2453
        %v2472 = vpack.c.bf16 %v2457, %v2456
        %v2473 = vpack.c.bf16 %v2459, %v2458
        %v2474 = vpack.c.bf16 %v2461, %v2460
        %v2475 = vpack.c.bf16 %v2463, %v2462
        %v2476 = vpack.c.bf16 %v2465, %v2464
        %v2477 = vpack.c.bf16 %v2467, %v2466
        %v2478 = vpack.c.bf16 %v2469, %v2468
        %v2479 = vpack.c.bf16 %v2471, %v2470
        %2480 = vmatprep.subr.bf16.mxu0 0
        %2481 = vmatpush1.bf16.msra.mxu0 %v1954
        %2482 = vmatprep.subr.bf16.mxu0 0
        %2483 = vmatpush1.bf16.msra.mxu0 %v1953
        %2484 = vmatprep.subr.bf16.mxu0 0
        %2485 = vmatpush1.bf16.msra.mxu0 %v1952
        %2486 = vmatprep.subr.bf16.mxu0 0
        %2487 = vmatpush1.bf16.msra.mxu0 %v1951
        %2488 = vmatprep.subr.bf16.mxu0 0
        %2489 = vmatpush1.bf16.msra.mxu0 %v1950
        %2490 = vmatprep.subr.bf16.mxu0 0
        %2491 = vmatpush1.bf16.msra.mxu0 %v1949
        %2492 = vmatprep.subr.bf16.mxu0 0
        %2493 = vmatpush1.bf16.msra.mxu0 %v1948
        %2494 = vmatprep.subr.bf16.mxu0 0
        %2495 = vmatpush1.bf16.msra.mxu0 %v1947
        %2496 = vmatprep.subr.bf16.mxu0 0
        %2497 = vmatpush2.bf16.msra.mxu0 0
        %2498 = vmatprep.subr.bf16.mxu0 0
        %2499 = vmatpush2.bf16.msra.mxu0 0
        %2500 = vmatprep.subr.bf16.mxu0 0
        %2501 = vmatpush2.bf16.msra.mxu0 0
        %2502 = vmatprep.subr.bf16.mxu0 0
        %2503 = vmatpush2.bf16.msra.mxu0 0
        %2504 = vmatprep.subr.bf16.mxu0 0
        %2505 = vmatpush2.bf16.msra.mxu0 0
        %2506 = vmatprep.subr.bf16.mxu0 0
        %2507 = vmatpush2.bf16.msra.mxu0 0
        %2508 = vmatprep.subr.bf16.mxu0 0
        %2509 = vmatpush2.bf16.msra.mxu0 0
        %2510 = vmatprep.subr.bf16.mxu0 0
        %2511 = vmatpush2.bf16.msra.mxu0 0
        %2512 = vmatprep.mubr.bf16.mxu0 0
        %2513 = vmatmul.mubr.bf16.gmra.mxu0 %v2472
        %v2514 = vpop.f32.mrf.mxu0
        %v2515 = vadd.f32 %v406, %v2514
        %v2516 = vpop.f32.mrf.mxu0
        %v2517 = vpop.f32.mrf.mxu0
        %v2518 = vadd.f32 %v406, %v2517
        %v2519 = vpop.f32.mrf.mxu0
        %2520 = vmatprep.mubr.bf16.mxu0 0
        %2521 = vmatmul.mubr.bf16.gmra.mxu0 %v2473
        %v2522 = vpop.f32.mrf.mxu0
        %v2523 = vadd.f32 %v406, %v2522
        %v2524 = vpop.f32.mrf.mxu0
        %v2525 = vpop.f32.mrf.mxu0
        %v2526 = vadd.f32 %v406, %v2525
        %v2527 = vpop.f32.mrf.mxu0
        %2528 = vmatprep.mubr.bf16.mxu0 0
        %2529 = vmatmul.mubr.bf16.gmra.mxu0 %v2474
        %v2530 = vpop.f32.mrf.mxu0
        %v2531 = vadd.f32 %v406, %v2530
        %v2532 = vpop.f32.mrf.mxu0
        %v2533 = vpop.f32.mrf.mxu0
        %v2534 = vadd.f32 %v406, %v2533
        %v2535 = vpop.f32.mrf.mxu0
        %2536 = vmatprep.mubr.bf16.mxu0 0
        %2537 = vmatmul.mubr.bf16.gmra.mxu0 %v2475
        %v2538 = vpop.f32.mrf.mxu0
        %v2539 = vadd.f32 %v406, %v2538
        %v2540 = vpop.f32.mrf.mxu0
        %v2541 = vpop.f32.mrf.mxu0
        %v2542 = vadd.f32 %v406, %v2541
        %v2543 = vpop.f32.mrf.mxu0
        %2544 = vmatprep.mubr.bf16.mxu0 0
        %2545 = vmatmul.mubr.bf16.gmra.mxu0 %v2476
        %v2546 = vpop.f32.mrf.mxu0
        %v2547 = vadd.f32 %v406, %v2546
        %v2548 = vpop.f32.mrf.mxu0
        %v2549 = vpop.f32.mrf.mxu0
        %v2550 = vadd.f32 %v406, %v2549
        %v2551 = vpop.f32.mrf.mxu0
        %2552 = vmatprep.mubr.bf16.mxu0 0
        %2553 = vmatmul.mubr.bf16.gmra.mxu0 %v2477
        %v2554 = vpop.f32.mrf.mxu0
        %v2555 = vadd.f32 %v406, %v2554
        %v2556 = vpop.f32.mrf.mxu0
        %v2557 = vpop.f32.mrf.mxu0
        %v2558 = vadd.f32 %v406, %v2557
        %v2559 = vpop.f32.mrf.mxu0
        %2560 = vmatprep.mubr.bf16.mxu0 0
        %2561 = vmatmul.mubr.bf16.gmra.mxu0 %v2478
        %v2562 = vpop.f32.mrf.mxu0
        %v2563 = vadd.f32 %v406, %v2562
        %v2564 = vpop.f32.mrf.mxu0
        %v2565 = vpop.f32.mrf.mxu0
        %v2566 = vadd.f32 %v406, %v2565
        %v2567 = vpop.f32.mrf.mxu0
        %2568 = vmatprep.mubr.bf16.mxu0 0
        %2569 = vmatmul.mubr.bf16.gmra.mxu0 %v2479
        %v2570 = vpop.f32.mrf.mxu0
        %v2571 = vadd.f32 %v406, %v2570
        %v2572 = vpop.f32.mrf.mxu0
        %v2573 = vpop.f32.mrf.mxu0
        %v2574 = vadd.f32 %v406, %v2573
        %v2575 = vpop.f32.mrf.mxu0
        %2576 = vdwg.mxu0
        %v2577 = vstv %s1703
        %v2578 = vmul.f32 %v2577, %v2515
        %v2579 = vmul.f32 %v2577, %v2518
        %v2580 = vmul.f32 %v2577, %v2523
        %v2581 = vmul.f32 %v2577, %v2526
        %v2582 = vmul.f32 %v2577, %v2531
        %v2583 = vmul.f32 %v2577, %v2534
        %v2584 = vmul.f32 %v2577, %v2539
        %v2585 = vmul.f32 %v2577, %v2542
        %v2586 = vmul.f32 %v2577, %v2547
        %v2587 = vmul.f32 %v2577, %v2550
        %v2588 = vmul.f32 %v2577, %v2555
        %v2589 = vmul.f32 %v2577, %v2558
        %v2590 = vmul.f32 %v2577, %v2563
        %v2591 = vmul.f32 %v2577, %v2566
        %v2592 = vmul.f32 %v2577, %v2571
        %v2593 = vmul.f32 %v2577, %v2574
        %v2594 = vadd.f32 %v1670, %v2578
        %v2595 = vadd.f32 %v1671, %v2579
        %v2596 = vadd.f32 %v1672, %v2580
        %v2597 = vadd.f32 %v1673, %v2581
        %v2598 = vadd.f32 %v1674, %v2582
        %v2599 = vadd.f32 %v1675, %v2583
        %v2600 = vadd.f32 %v1676, %v2584
        %v2601 = vadd.f32 %v1677, %v2585
        %v2602 = vadd.f32 %v1678, %v2586
        %v2603 = vadd.f32 %v1679, %v2587
        %v2604 = vadd.f32 %v1680, %v2588
        %v2605 = vadd.f32 %v1681, %v2589
        %v2606 = vadd.f32 %v1682, %v2590
        %v2607 = vadd.f32 %v1683, %v2591
        %v2608 = vadd.f32 %v1684, %v2592
        %v2609 = vadd.f32 %v1685, %v2593
        %v2610 = vpack.c.bf16 %v2595, %v2594
        %v2611 = vpack.c.bf16 %v2597, %v2596
        %v2612 = vpack.c.bf16 %v2599, %v2598
        %v2613 = vpack.c.bf16 %v2601, %v2600
        %v2614 = vpack.c.bf16 %v2603, %v2602
        %v2615 = vpack.c.bf16 %v2605, %v2604
        %v2616 = vpack.c.bf16 %v2607, %v2606
        %v2617 = vpack.c.bf16 %v2609, %v2608
        %2618 = vmatprep.subr.bf16.mxu0 0
        %2619 = vmatpush1.bf16.msra.mxu0 %v1769
        %2620 = vmatprep.subr.bf16.mxu0 0
        %2621 = vmatpush1.bf16.msra.mxu0 %v1768
        %2622 = vmatprep.subr.bf16.mxu0 0
        %2623 = vmatpush1.bf16.msra.mxu0 %v1767
        %2624 = vmatprep.subr.bf16.mxu0 0
        %2625 = vmatpush1.bf16.msra.mxu0 %v1766
        %2626 = vmatprep.subr.bf16.mxu0 0
        %2627 = vmatpush1.bf16.msra.mxu0 %v1765
        %2628 = vmatprep.subr.bf16.mxu0 0
        %2629 = vmatpush1.bf16.msra.mxu0 %v1764
        %2630 = vmatprep.subr.bf16.mxu0 0
        %2631 = vmatpush1.bf16.msra.mxu0 %v1763
        %2632 = vmatprep.subr.bf16.mxu0 0
        %2633 = vmatpush1.bf16.msra.mxu0 %v1762
        %2634 = vmatprep.subr.bf16.mxu0 0
        %2635 = vmatpush2.bf16.msra.mxu0 0
        %2636 = vmatprep.subr.bf16.mxu0 0
        %2637 = vmatpush2.bf16.msra.mxu0 0
        %2638 = vmatprep.subr.bf16.mxu0 0
        %2639 = vmatpush2.bf16.msra.mxu0 0
        %2640 = vmatprep.subr.bf16.mxu0 0
        %2641 = vmatpush2.bf16.msra.mxu0 0
        %2642 = vmatprep.subr.bf16.mxu0 0
        %2643 = vmatpush2.bf16.msra.mxu0 0
        %2644 = vmatprep.subr.bf16.mxu0 0
        %2645 = vmatpush2.bf16.msra.mxu0 0
        %2646 = vmatprep.subr.bf16.mxu0 0
        %2647 = vmatpush2.bf16.msra.mxu0 0
        %2648 = vmatprep.subr.bf16.mxu0 0
        %2649 = vmatpush2.bf16.msra.mxu0 0
        %2650 = vmatprep.mubr.bf16.mxu0 0
        %2651 = vmatmul.mubr.bf16.gmra.mxu0 %v2610
        %v2652 = vpop.f32.mrf.mxu0
        %v2653 = vadd.f32 %v399, %v2652
        %v2654 = vpop.f32.mrf.mxu0
        %v2655 = vpop.f32.mrf.mxu0
        %v2656 = vadd.f32 %v399, %v2655
        %v2657 = vpop.f32.mrf.mxu0
        %2658 = vmatprep.mubr.bf16.mxu0 0
        %2659 = vmatmul.mubr.bf16.gmra.mxu0 %v2611
        %v2660 = vpop.f32.mrf.mxu0
        %v2661 = vadd.f32 %v399, %v2660
        %v2662 = vpop.f32.mrf.mxu0
        %v2663 = vpop.f32.mrf.mxu0
        %v2664 = vadd.f32 %v399, %v2663
        %v2665 = vpop.f32.mrf.mxu0
        %2666 = vmatprep.mubr.bf16.mxu0 0
        %2667 = vmatmul.mubr.bf16.gmra.mxu0 %v2612
        %v2668 = vpop.f32.mrf.mxu0
        %v2669 = vadd.f32 %v399, %v2668
        %v2670 = vpop.f32.mrf.mxu0
        %v2671 = vpop.f32.mrf.mxu0
        %v2672 = vadd.f32 %v399, %v2671
        %v2673 = vpop.f32.mrf.mxu0
        %2674 = vmatprep.mubr.bf16.mxu0 0
        %2675 = vmatmul.mubr.bf16.gmra.mxu0 %v2613
        %v2676 = vpop.f32.mrf.mxu0
        %v2677 = vadd.f32 %v399, %v2676
        %v2678 = vpop.f32.mrf.mxu0
        %v2679 = vpop.f32.mrf.mxu0
        %v2680 = vadd.f32 %v399, %v2679
        %v2681 = vpop.f32.mrf.mxu0
        %2682 = vmatprep.mubr.bf16.mxu0 0
        %2683 = vmatmul.mubr.bf16.gmra.mxu0 %v2614
        %v2684 = vpop.f32.mrf.mxu0
        %v2685 = vadd.f32 %v399, %v2684
        %v2686 = vpop.f32.mrf.mxu0
        %v2687 = vpop.f32.mrf.mxu0
        %v2688 = vadd.f32 %v399, %v2687
        %v2689 = vpop.f32.mrf.mxu0
        %2690 = vmatprep.mubr.bf16.mxu0 0
        %2691 = vmatmul.mubr.bf16.gmra.mxu0 %v2615
        %v2692 = vpop.f32.mrf.mxu0
        %v2693 = vadd.f32 %v399, %v2692
        %v2694 = vpop.f32.mrf.mxu0
        %v2695 = vpop.f32.mrf.mxu0
        %v2696 = vadd.f32 %v399, %v2695
        %v2697 = vpop.f32.mrf.mxu0
        %2698 = vmatprep.mubr.bf16.mxu0 0
        %2699 = vmatmul.mubr.bf16.gmra.mxu0 %v2616
        %v2700 = vpop.f32.mrf.mxu0
        %v2701 = vadd.f32 %v399, %v2700
        %v2702 = vpop.f32.mrf.mxu0
        %v2703 = vpop.f32.mrf.mxu0
        %v2704 = vadd.f32 %v399, %v2703
        %v2705 = vpop.f32.mrf.mxu0
        %2706 = vmatprep.mubr.bf16.mxu0 0
        %2707 = vmatmul.mubr.bf16.gmra.mxu0 %v2617
        %v2708 = vpop.f32.mrf.mxu0
        %v2709 = vadd.f32 %v399, %v2708
        %v2710 = vpop.f32.mrf.mxu0
        %v2711 = vpop.f32.mrf.mxu0
        %v2712 = vadd.f32 %v399, %v2711
        %v2713 = vpop.f32.mrf.mxu0
        %2714 = vdwg.mxu0
        %v2715 = vtanh.pop %v2653
        %v2716 = vtanh.pop %v2656
        %v2717 = vtanh.pop %v2661
        %v2718 = vtanh.pop %v2664
        %v2719 = vtanh.pop %v2669
        %v2720 = vtanh.pop %v2672
        %v2721 = vtanh.pop %v2677
        %v2722 = vtanh.pop %v2680
        %v2723 = vtanh.pop %v2685
        %v2724 = vtanh.pop %v2688
        %v2725 = vtanh.pop %v2693
        %v2726 = vtanh.pop %v2696
        %v2727 = vtanh.pop %v2701
        %v2728 = vtanh.pop %v2704
        %v2729 = vtanh.pop %v2709
        %v2730 = vtanh.pop %v2712
        %v2731 = vpack.c.bf16 %v2716, %v2715
        %v2732 = vpack.c.bf16 %v2718, %v2717
        %v2733 = vpack.c.bf16 %v2720, %v2719
        %v2734 = vpack.c.bf16 %v2722, %v2721
        %v2735 = vpack.c.bf16 %v2724, %v2723
        %v2736 = vpack.c.bf16 %v2726, %v2725
        %v2737 = vpack.c.bf16 %v2728, %v2727
        %v2738 = vpack.c.bf16 %v2730, %v2729
        %2739 = vmatprep.subr.bf16.mxu0 0
        %2740 = vmatpush1.bf16.msra.mxu0 %v1954
        %2741 = vmatprep.subr.bf16.mxu0 0
        %2742 = vmatpush1.bf16.msra.mxu0 %v1953
        %2743 = vmatprep.subr.bf16.mxu0 0
        %2744 = vmatpush1.bf16.msra.mxu0 %v1952
        %2745 = vmatprep.subr.bf16.mxu0 0
        %2746 = vmatpush1.bf16.msra.mxu0 %v1951
        %2747 = vmatprep.subr.bf16.mxu0 0
        %2748 = vmatpush1.bf16.msra.mxu0 %v1950
        %2749 = vmatprep.subr.bf16.mxu0 0
        %2750 = vmatpush1.bf16.msra.mxu0 %v1949
        %2751 = vmatprep.subr.bf16.mxu0 0
        %2752 = vmatpush1.bf16.msra.mxu0 %v1948
        %2753 = vmatprep.subr.bf16.mxu0 0
        %2754 = vmatpush1.bf16.msra.mxu0 %v1947
        %2755 = vmatprep.subr.bf16.mxu0 0
        %2756 = vmatpush2.bf16.msra.mxu0 0
        %2757 = vmatprep.subr.bf16.mxu0 0
        %2758 = vmatpush2.bf16.msra.mxu0 0
        %2759 = vmatprep.subr.bf16.mxu0 0
        %2760 = vmatpush2.bf16.msra.mxu0 0
        %2761 = vmatprep.subr.bf16.mxu0 0
        %2762 = vmatpush2.bf16.msra.mxu0 0
        %2763 = vmatprep.subr.bf16.mxu0 0
        %2764 = vmatpush2.bf16.msra.mxu0 0
        %2765 = vmatprep.subr.bf16.mxu0 0
        %2766 = vmatpush2.bf16.msra.mxu0 0
        %2767 = vmatprep.subr.bf16.mxu0 0
        %2768 = vmatpush2.bf16.msra.mxu0 0
        %2769 = vmatprep.subr.bf16.mxu0 0
        %2770 = vmatpush2.bf16.msra.mxu0 0
        %2771 = vmatprep.mubr.bf16.mxu0 0
        %2772 = vmatmul.mubr.bf16.gmra.mxu0 %v2731
        %v2773 = vpop.f32.mrf.mxu0
        %v2774 = vadd.f32 %v406, %v2773
        %v2775 = vpop.f32.mrf.mxu0
        %v2776 = vpop.f32.mrf.mxu0
        %v2777 = vadd.f32 %v406, %v2776
        %v2778 = vpop.f32.mrf.mxu0
        %2779 = vmatprep.mubr.bf16.mxu0 0
        %2780 = vmatmul.mubr.bf16.gmra.mxu0 %v2732
        %v2781 = vpop.f32.mrf.mxu0
        %v2782 = vadd.f32 %v406, %v2781
        %v2783 = vpop.f32.mrf.mxu0
        %v2784 = vpop.f32.mrf.mxu0
        %v2785 = vadd.f32 %v406, %v2784
        %v2786 = vpop.f32.mrf.mxu0
        %2787 = vmatprep.mubr.bf16.mxu0 0
        %2788 = vmatmul.mubr.bf16.gmra.mxu0 %v2733
        %v2789 = vpop.f32.mrf.mxu0
        %v2790 = vadd.f32 %v406, %v2789
        %v2791 = vpop.f32.mrf.mxu0
        %v2792 = vpop.f32.mrf.mxu0
        %v2793 = vadd.f32 %v406, %v2792
        %v2794 = vpop.f32.mrf.mxu0
        %2795 = vmatprep.mubr.bf16.mxu0 0
        %2796 = vmatmul.mubr.bf16.gmra.mxu0 %v2734
        %v2797 = vpop.f32.mrf.mxu0
        %v2798 = vadd.f32 %v406, %v2797
        %v2799 = vpop.f32.mrf.mxu0
        %v2800 = vpop.f32.mrf.mxu0
        %v2801 = vadd.f32 %v406, %v2800
        %v2802 = vpop.f32.mrf.mxu0
        %2803 = vmatprep.mubr.bf16.mxu0 0
        %2804 = vmatmul.mubr.bf16.gmra.mxu0 %v2735
        %v2805 = vpop.f32.mrf.mxu0
        %v2806 = vadd.f32 %v406, %v2805
        %v2807 = vpop.f32.mrf.mxu0
        %v2808 = vpop.f32.mrf.mxu0
        %v2809 = vadd.f32 %v406, %v2808
        %v2810 = vpop.f32.mrf.mxu0
        %2811 = vmatprep.mubr.bf16.mxu0 0
        %2812 = vmatmul.mubr.bf16.gmra.mxu0 %v2736
        %v2813 = vpop.f32.mrf.mxu0
        %v2814 = vadd.f32 %v406, %v2813
        %v2815 = vpop.f32.mrf.mxu0
        %v2816 = vpop.f32.mrf.mxu0
        %v2817 = vadd.f32 %v406, %v2816
        %v2818 = vpop.f32.mrf.mxu0
        %2819 = vmatprep.mubr.bf16.mxu0 0
        %2820 = vmatmul.mubr.bf16.gmra.mxu0 %v2737
        %v2821 = vpop.f32.mrf.mxu0
        %v2822 = vadd.f32 %v406, %v2821
        %v2823 = vpop.f32.mrf.mxu0
        %v2824 = vpop.f32.mrf.mxu0
        %v2825 = vadd.f32 %v406, %v2824
        %v2826 = vpop.f32.mrf.mxu0
        %2827 = vmatprep.mubr.bf16.mxu0 0
        %2828 = vmatmul.mubr.bf16.gmra.mxu0 %v2738
        %v2829 = vpop.f32.mrf.mxu0
        %v2830 = vadd.f32 %v406, %v2829
        %v2831 = vpop.f32.mrf.mxu0
        %v2832 = vpop.f32.mrf.mxu0
        %v2833 = vadd.f32 %v406, %v2832
        %v2834 = vpop.f32.mrf.mxu0
        %2835 = vdwg.mxu0
        %v2836 = vmul.f32 %v2257, 2.0
        %v2837 = vmul.f32 %v2260, 2.0
        %v2838 = vmul.f32 %v2265, 2.0
        %v2839 = vmul.f32 %v2268, 2.0
        %v2840 = vmul.f32 %v2273, 2.0
        %v2841 = vmul.f32 %v2276, 2.0
        %v2842 = vmul.f32 %v2281, 2.0
        %v2843 = vmul.f32 %v2284, 2.0
        %v2844 = vmul.f32 %v2289, 2.0
        %v2845 = vmul.f32 %v2292, 2.0
        %v2846 = vmul.f32 %v2297, 2.0
        %v2847 = vmul.f32 %v2300, 2.0
        %v2848 = vmul.f32 %v2305, 2.0
        %v2849 = vmul.f32 %v2308, 2.0
        %v2850 = vmul.f32 %v2313, 2.0
        %v2851 = vmul.f32 %v2316, 2.0
        %v2852 = vadd.f32 %v1998, %v2836
        %v2853 = vadd.f32 %v2001, %v2837
        %v2854 = vadd.f32 %v2006, %v2838
        %v2855 = vadd.f32 %v2009, %v2839
        %v2856 = vadd.f32 %v2014, %v2840
        %v2857 = vadd.f32 %v2017, %v2841
        %v2858 = vadd.f32 %v2022, %v2842
        %v2859 = vadd.f32 %v2025, %v2843
        %v2860 = vadd.f32 %v2030, %v2844
        %v2861 = vadd.f32 %v2033, %v2845
        %v2862 = vadd.f32 %v2038, %v2846
        %v2863 = vadd.f32 %v2041, %v2847
        %v2864 = vadd.f32 %v2046, %v2848
        %v2865 = vadd.f32 %v2049, %v2849
        %v2866 = vadd.f32 %v2054, %v2850
        %v2867 = vadd.f32 %v2057, %v2851
        %v2868 = vmul.f32 %v2515, 2.0
        %v2869 = vmul.f32 %v2518, 2.0
        %v2870 = vmul.f32 %v2523, 2.0
        %v2871 = vmul.f32 %v2526, 2.0
        %v2872 = vmul.f32 %v2531, 2.0
        %v2873 = vmul.f32 %v2534, 2.0
        %v2874 = vmul.f32 %v2539, 2.0
        %v2875 = vmul.f32 %v2542, 2.0
        %v2876 = vmul.f32 %v2547, 2.0
        %v2877 = vmul.f32 %v2550, 2.0
        %v2878 = vmul.f32 %v2555, 2.0
        %v2879 = vmul.f32 %v2558, 2.0
        %v2880 = vmul.f32 %v2563, 2.0
        %v2881 = vmul.f32 %v2566, 2.0
        %v2882 = vmul.f32 %v2571, 2.0
        %v2883 = vmul.f32 %v2574, 2.0
        %v2884 = vadd.f32 %v2852, %v2868
        %v2885 = vadd.f32 %v2853, %v2869
        %v2886 = vadd.f32 %v2854, %v2870
        %v2887 = vadd.f32 %v2855, %v2871
        %v2888 = vadd.f32 %v2856, %v2872
        %v2889 = vadd.f32 %v2857, %v2873
        %v2890 = vadd.f32 %v2858, %v2874
        %v2891 = vadd.f32 %v2859, %v2875
        %v2892 = vadd.f32 %v2860, %v2876
        %v2893 = vadd.f32 %v2861, %v2877
        %v2894 = vadd.f32 %v2862, %v2878
        %v2895 = vadd.f32 %v2863, %v2879
        %v2896 = vadd.f32 %v2864, %v2880
        %v2897 = vadd.f32 %v2865, %v2881
        %v2898 = vadd.f32 %v2866, %v2882
        %v2899 = vadd.f32 %v2867, %v2883
        %v2900 = vadd.f32 %v2884, %v2774
        %v2901 = vadd.f32 %v2885, %v2777
        %v2902 = vadd.f32 %v2886, %v2782
        %v2903 = vadd.f32 %v2887, %v2785
        %v2904 = vadd.f32 %v2888, %v2790
        %v2905 = vadd.f32 %v2889, %v2793
        %v2906 = vadd.f32 %v2890, %v2798
        %v2907 = vadd.f32 %v2891, %v2801
        %v2908 = vadd.f32 %v2892, %v2806
        %v2909 = vadd.f32 %v2893, %v2809
        %v2910 = vadd.f32 %v2894, %v2814
        %v2911 = vadd.f32 %v2895, %v2817
        %v2912 = vadd.f32 %v2896, %v2822
        %v2913 = vadd.f32 %v2897, %v2825
        %v2914 = vadd.f32 %v2898, %v2830
        %v2915 = vadd.f32 %v2899, %v2833
        %v2916 = vstv %s1705
        %v2917 = vmul.f32 %v2916, %v2900
        %v2918 = vmul.f32 %v2916, %v2901
        %v2919 = vmul.f32 %v2916, %v2902
        %v2920 = vmul.f32 %v2916, %v2903
        %v2921 = vmul.f32 %v2916, %v2904
        %v2922 = vmul.f32 %v2916, %v2905
        %v2923 = vmul.f32 %v2916, %v2906
        %v2924 = vmul.f32 %v2916, %v2907
        %v2925 = vmul.f32 %v2916, %v2908
        %v2926 = vmul.f32 %v2916, %v2909
        %v2927 = vmul.f32 %v2916, %v2910
        %v2928 = vmul.f32 %v2916, %v2911
        %v2929 = vmul.f32 %v2916, %v2912
        %v2930 = vmul.f32 %v2916, %v2913
        %v2931 = vmul.f32 %v2916, %v2914
        %v2932 = vmul.f32 %v2916, %v2915
        %v2933 = vadd.f32 %v1670, %v2917
        %v2934 = vadd.f32 %v1671, %v2918
        %v2935 = vadd.f32 %v1672, %v2919
        %v2936 = vadd.f32 %v1673, %v2920
        %v2937 = vadd.f32 %v1674, %v2921
        %v2938 = vadd.f32 %v1675, %v2922
        %v2939 = vadd.f32 %v1676, %v2923
        %v2940 = vadd.f32 %v1677, %v2924
        %v2941 = vadd.f32 %v1678, %v2925
        %v2942 = vadd.f32 %v1679, %v2926
        %v2943 = vadd.f32 %v1680, %v2927
        %v2944 = vadd.f32 %v1681, %v2928
        %v2945 = vadd.f32 %v1682, %v2929
        %v2946 = vadd.f32 %v1683, %v2930
        %v2947 = vadd.f32 %v1684, %v2931
        %v2948 = vadd.f32 %v1685, %v2932
        %s2949 = scalar_lea.vmem %s390, 256 [#allocation14]
        %2950 = vst [vmem:[%s2949] sm:$0xff] %v2933
        %2951 = vst [vmem:[%s2949 + $0x8] sm:$0xff] %v2934
        %2952 = vst [vmem:[%s2949 + $0x10] sm:$0xff] %v2935
        %2953 = vst [vmem:[%s2949 + $0x18] sm:$0xff] %v2936
        %2954 = vst [vmem:[%s2949 + $0x20] sm:$0xff] %v2937
        %2955 = vst [vmem:[%s2949 + $0x28] sm:$0xff] %v2938
        %2956 = vst [vmem:[%s2949 + $0x30] sm:$0xff] %v2939
        %2957 = vst [vmem:[%s2949 + $0x38] sm:$0xff] %v2940
        %2958 = vst [vmem:[%s2949 + $0x40] sm:$0xff] %v2941
        %2959 = vst [vmem:[%s2949 + $0x48] sm:$0xff] %v2942
        %2960 = vst [vmem:[%s2949 + $0x50] sm:$0xff] %v2943
        %2961 = vst [vmem:[%s2949 + $0x58] sm:$0xff] %v2944
        %2962 = vst [vmem:[%s2949 + $0x60] sm:$0xff] %v2945
        %2963 = vst [vmem:[%s2949 + $0x68] sm:$0xff] %v2946
        %2964 = vst [vmem:[%s2949 + $0x70] sm:$0xff] %v2947
        %2965 = vst [vmem:[%s2949 + $0x78] sm:$0xff] %v2948
        %s2966 = sld [smem:[#allocation2 + $0x2]]
        %s2967 = sld [smem:[#allocation7 + $0x2]]
        %s2968 = sld [smem:[#allocation8 + $0x2]]
        %v2969 = vpack.c.bf16 %v2934, %v2933
        %v2970 = vpack.c.bf16 %v2936, %v2935
        %v2971 = vpack.c.bf16 %v2938, %v2937
        %v2972 = vpack.c.bf16 %v2940, %v2939
        %v2973 = vpack.c.bf16 %v2942, %v2941
        %v2974 = vpack.c.bf16 %v2944, %v2943
        %v2975 = vpack.c.bf16 %v2946, %v2945
        %v2976 = vpack.c.bf16 %v2948, %v2947
        %v2977 = vld [vmem:[#allocation11] sm:$0xf]
        %v2978 = vld [vmem:[#allocation11 + $0x4] sm:$0xf]
        %v2979 = vld [vmem:[#allocation11 + $0x8] sm:$0xf]
        %v2980 = vld [vmem:[#allocation11 + $0xc] sm:$0xf]
        %v2981 = vld [vmem:[#allocation11 + $0x10] sm:$0xf]
        %v2982 = vld [vmem:[#allocation11 + $0x14] sm:$0xf]
        %v2983 = vld [vmem:[#allocation11 + $0x18] sm:$0xf]
        %v2984 = vld [vmem:[#allocation11 + $0x1c] sm:$0xf]
        %v2985 = vld [vmem:[#allocation11 + $0x20] sm:$0xf]
        %v2986 = vld [vmem:[#allocation11 + $0x24] sm:$0xf]
        %v2987 = vld [vmem:[#allocation11 + $0x28] sm:$0xf]
        %v2988 = vld [vmem:[#allocation11 + $0x2c] sm:$0xf]
        %v2989 = vld [vmem:[#allocation11 + $0x30] sm:$0xf]
        %v2990 = vld [vmem:[#allocation11 + $0x34] sm:$0xf]
        %v2991 = vld [vmem:[#allocation11 + $0x38] sm:$0xf]
        %v2992 = vld [vmem:[#allocation11 + $0x3c] sm:$0xf]
        %v3009 = vunpack.c.l.b16 %v2977
        %v3010 = vunpack.c.l.b16 %v2978
        %v3011 = vunpack.c.l.b16 %v2979
        %v3012 = vunpack.c.l.b16 %v2980
        %v3013 = vunpack.c.l.b16 %v2981
        %v3014 = vunpack.c.l.b16 %v2982
        %v3015 = vunpack.c.l.b16 %v2983
        %v3016 = vunpack.c.l.b16 %v2984
        %v3017 = vunpack.c.l.b16 %v2985
        %v3018 = vunpack.c.l.b16 %v2986
        %v3019 = vunpack.c.l.b16 %v2987
        %v3020 = vunpack.c.l.b16 %v2988
        %v3021 = vunpack.c.l.b16 %v2989
        %v3022 = vunpack.c.l.b16 %v2990
        %v3023 = vunpack.c.l.b16 %v2991
        %v3024 = vunpack.c.l.b16 %v2992
        %v3025 = vpack.c.b16 %v3010, %v3009
        %v3026 = vpack.c.b16 %v3012, %v3011
        %v3027 = vpack.c.b16 %v3014, %v3013
        %v3028 = vpack.c.b16 %v3016, %v3015
        %v3029 = vpack.c.b16 %v3018, %v3017
        %v3030 = vpack.c.b16 %v3020, %v3019
        %v3031 = vpack.c.b16 %v3022, %v3021
        %v3032 = vpack.c.b16 %v3024, %v3023
        %3041 = vmatprep.subr.bf16.mxu0 0
        %3042 = vmatpush1.bf16.msra.mxu0 %v3032
        %3043 = vmatprep.subr.bf16.mxu0 0
        %3044 = vmatpush1.bf16.msra.mxu0 %v3031
        %3045 = vmatprep.subr.bf16.mxu0 0
        %3046 = vmatpush1.bf16.msra.mxu0 %v3030
        %3047 = vmatprep.subr.bf16.mxu0 0
        %3048 = vmatpush1.bf16.msra.mxu0 %v3029
        %3049 = vmatprep.subr.bf16.mxu0 0
        %3050 = vmatpush1.bf16.msra.mxu0 %v3028
        %3051 = vmatprep.subr.bf16.mxu0 0
        %3052 = vmatpush1.bf16.msra.mxu0 %v3027
        %3053 = vmatprep.subr.bf16.mxu0 0
        %3054 = vmatpush1.bf16.msra.mxu0 %v3026
        %3055 = vmatprep.subr.bf16.mxu0 0
        %3056 = vmatpush1.bf16.msra.mxu0 %v3025
        %3057 = vmatprep.subr.bf16.mxu0 0
        %3058 = vmatpush2.bf16.msra.mxu0 0
        %3059 = vmatprep.subr.bf16.mxu0 0
        %3060 = vmatpush2.bf16.msra.mxu0 0
        %3061 = vmatprep.subr.bf16.mxu0 0
        %3062 = vmatpush2.bf16.msra.mxu0 0
        %3063 = vmatprep.subr.bf16.mxu0 0
        %3064 = vmatpush2.bf16.msra.mxu0 0
        %3065 = vmatprep.subr.bf16.mxu0 0
        %3066 = vmatpush2.bf16.msra.mxu0 0
        %3067 = vmatprep.subr.bf16.mxu0 0
        %3068 = vmatpush2.bf16.msra.mxu0 0
        %3069 = vmatprep.subr.bf16.mxu0 0
        %3070 = vmatpush2.bf16.msra.mxu0 0
        %3071 = vmatprep.subr.bf16.mxu0 0
        %3072 = vmatpush2.bf16.msra.mxu0 0
        %3073 = vmatprep.mubr.bf16.mxu0 0
        %3074 = vmatmul.mubr.bf16.gmra.mxu0 %v2969
        %v3075 = vpop.f32.mrf.mxu0
        %v3076 = vadd.f32 %v399, %v3075
        %v3077 = vpop.f32.mrf.mxu0
        %v3078 = vpop.f32.mrf.mxu0
        %v3079 = vadd.f32 %v399, %v3078
        %v3080 = vpop.f32.mrf.mxu0
        %3081 = vmatprep.mubr.bf16.mxu0 0
        %3082 = vmatmul.mubr.bf16.gmra.mxu0 %v2970
        %v3083 = vpop.f32.mrf.mxu0
        %v3084 = vadd.f32 %v399, %v3083
        %v3085 = vpop.f32.mrf.mxu0
        %v3086 = vpop.f32.mrf.mxu0
        %v3087 = vadd.f32 %v399, %v3086
        %v3088 = vpop.f32.mrf.mxu0
        %3089 = vmatprep.mubr.bf16.mxu0 0
        %3090 = vmatmul.mubr.bf16.gmra.mxu0 %v2971
        %v3091 = vpop.f32.mrf.mxu0
        %v3092 = vadd.f32 %v399, %v3091
        %v3093 = vpop.f32.mrf.mxu0
        %v3094 = vpop.f32.mrf.mxu0
        %v3095 = vadd.f32 %v399, %v3094
        %v3096 = vpop.f32.mrf.mxu0
        %3097 = vmatprep.mubr.bf16.mxu0 0
        %3098 = vmatmul.mubr.bf16.gmra.mxu0 %v2972
        %v3099 = vpop.f32.mrf.mxu0
        %v3100 = vadd.f32 %v399, %v3099
        %v3101 = vpop.f32.mrf.mxu0
        %v3102 = vpop.f32.mrf.mxu0
        %v3103 = vadd.f32 %v399, %v3102
        %v3104 = vpop.f32.mrf.mxu0
        %3105 = vmatprep.mubr.bf16.mxu0 0
        %3106 = vmatmul.mubr.bf16.gmra.mxu0 %v2973
        %v3107 = vpop.f32.mrf.mxu0
        %v3108 = vadd.f32 %v399, %v3107
        %v3109 = vpop.f32.mrf.mxu0
        %v3110 = vpop.f32.mrf.mxu0
        %v3111 = vadd.f32 %v399, %v3110
        %v3112 = vpop.f32.mrf.mxu0
        %3113 = vmatprep.mubr.bf16.mxu0 0
        %3114 = vmatmul.mubr.bf16.gmra.mxu0 %v2974
        %v3115 = vpop.f32.mrf.mxu0
        %v3116 = vadd.f32 %v399, %v3115
        %v3117 = vpop.f32.mrf.mxu0
        %v3118 = vpop.f32.mrf.mxu0
        %v3119 = vadd.f32 %v399, %v3118
        %v3120 = vpop.f32.mrf.mxu0
        %3121 = vmatprep.mubr.bf16.mxu0 0
        %3122 = vmatmul.mubr.bf16.gmra.mxu0 %v2975
        %v3123 = vpop.f32.mrf.mxu0
        %v3124 = vadd.f32 %v399, %v3123
        %v3125 = vpop.f32.mrf.mxu0
        %v3126 = vpop.f32.mrf.mxu0
        %v3127 = vadd.f32 %v399, %v3126
        %v3128 = vpop.f32.mrf.mxu0
        %3129 = vmatprep.mubr.bf16.mxu0 0
        %3130 = vmatmul.mubr.bf16.gmra.mxu0 %v2976
        %v3131 = vpop.f32.mrf.mxu0
        %v3132 = vadd.f32 %v399, %v3131
        %v3133 = vpop.f32.mrf.mxu0
        %v3134 = vpop.f32.mrf.mxu0
        %v3135 = vadd.f32 %v399, %v3134
        %v3136 = vpop.f32.mrf.mxu0
        %3137 = vdwg.mxu0
        %v3138 = vtanh.pop %v3076
        %v3139 = vtanh.pop %v3079
        %v3140 = vtanh.pop %v3084
        %v3141 = vtanh.pop %v3087
        %v3142 = vtanh.pop %v3092
        %v3143 = vtanh.pop %v3095
        %v3144 = vtanh.pop %v3100
        %v3145 = vtanh.pop %v3103
        %v3146 = vtanh.pop %v3108
        %v3147 = vtanh.pop %v3111
        %v3148 = vtanh.pop %v3116
        %v3149 = vtanh.pop %v3119
        %v3150 = vtanh.pop %v3124
        %v3151 = vtanh.pop %v3127
        %v3152 = vtanh.pop %v3132
        %v3153 = vtanh.pop %v3135
        %v3154 = vpack.c.bf16 %v3139, %v3138
        %v3155 = vpack.c.bf16 %v3141, %v3140
        %v3156 = vpack.c.bf16 %v3143, %v3142
        %v3157 = vpack.c.bf16 %v3145, %v3144
        %v3158 = vpack.c.bf16 %v3147, %v3146
        %v3159 = vpack.c.bf16 %v3149, %v3148
        %v3160 = vpack.c.bf16 %v3151, %v3150
        %v3161 = vpack.c.bf16 %v3153, %v3152
        %v3162 = vld [vmem:[#allocation13] sm:$0xf]
        %v3163 = vld [vmem:[#allocation13 + $0x4] sm:$0xf]
        %v3164 = vld [vmem:[#allocation13 + $0x8] sm:$0xf]
        %v3165 = vld [vmem:[#allocation13 + $0xc] sm:$0xf]
        %v3166 = vld [vmem:[#allocation13 + $0x10] sm:$0xf]
        %v3167 = vld [vmem:[#allocation13 + $0x14] sm:$0xf]
        %v3168 = vld [vmem:[#allocation13 + $0x18] sm:$0xf]
        %v3169 = vld [vmem:[#allocation13 + $0x1c] sm:$0xf]
        %v3170 = vld [vmem:[#allocation13 + $0x20] sm:$0xf]
        %v3171 = vld [vmem:[#allocation13 + $0x24] sm:$0xf]
        %v3172 = vld [vmem:[#allocation13 + $0x28] sm:$0xf]
        %v3173 = vld [vmem:[#allocation13 + $0x2c] sm:$0xf]
        %v3174 = vld [vmem:[#allocation13 + $0x30] sm:$0xf]
        %v3175 = vld [vmem:[#allocation13 + $0x34] sm:$0xf]
        %v3176 = vld [vmem:[#allocation13 + $0x38] sm:$0xf]
        %v3177 = vld [vmem:[#allocation13 + $0x3c] sm:$0xf]
        %v3194 = vunpack.c.l.b16 %v3162
        %v3195 = vunpack.c.l.b16 %v3163
        %v3196 = vunpack.c.l.b16 %v3164
        %v3197 = vunpack.c.l.b16 %v3165
        %v3198 = vunpack.c.l.b16 %v3166
        %v3199 = vunpack.c.l.b16 %v3167
        %v3200 = vunpack.c.l.b16 %v3168
        %v3201 = vunpack.c.l.b16 %v3169
        %v3202 = vunpack.c.l.b16 %v3170
        %v3203 = vunpack.c.l.b16 %v3171
        %v3204 = vunpack.c.l.b16 %v3172
        %v3205 = vunpack.c.l.b16 %v3173
        %v3206 = vunpack.c.l.b16 %v3174
        %v3207 = vunpack.c.l.b16 %v3175
        %v3208 = vunpack.c.l.b16 %v3176
        %v3209 = vunpack.c.l.b16 %v3177
        %v3210 = vpack.c.b16 %v3195, %v3194
        %v3211 = vpack.c.b16 %v3197, %v3196
        %v3212 = vpack.c.b16 %v3199, %v3198
        %v3213 = vpack.c.b16 %v3201, %v3200
        %v3214 = vpack.c.b16 %v3203, %v3202
        %v3215 = vpack.c.b16 %v3205, %v3204
        %v3216 = vpack.c.b16 %v3207, %v3206
        %v3217 = vpack.c.b16 %v3209, %v3208
        %3226 = vmatprep.subr.bf16.mxu0 0
        %3227 = vmatpush1.bf16.msra.mxu0 %v3217
        %3228 = vmatprep.subr.bf16.mxu0 0
        %3229 = vmatpush1.bf16.msra.mxu0 %v3216
        %3230 = vmatprep.subr.bf16.mxu0 0
        %3231 = vmatpush1.bf16.msra.mxu0 %v3215
        %3232 = vmatprep.subr.bf16.mxu0 0
        %3233 = vmatpush1.bf16.msra.mxu0 %v3214
        %3234 = vmatprep.subr.bf16.mxu0 0
        %3235 = vmatpush1.bf16.msra.mxu0 %v3213
        %3236 = vmatprep.subr.bf16.mxu0 0
        %3237 = vmatpush1.bf16.msra.mxu0 %v3212
        %3238 = vmatprep.subr.bf16.mxu0 0
        %3239 = vmatpush1.bf16.msra.mxu0 %v3211
        %3240 = vmatprep.subr.bf16.mxu0 0
        %3241 = vmatpush1.bf16.msra.mxu0 %v3210
        %3242 = vmatprep.subr.bf16.mxu0 0
        %3243 = vmatpush2.bf16.msra.mxu0 0
        %3244 = vmatprep.subr.bf16.mxu0 0
        %3245 = vmatpush2.bf16.msra.mxu0 0
        %3246 = vmatprep.subr.bf16.mxu0 0
        %3247 = vmatpush2.bf16.msra.mxu0 0
        %3248 = vmatprep.subr.bf16.mxu0 0
        %3249 = vmatpush2.bf16.msra.mxu0 0
        %3250 = vmatprep.subr.bf16.mxu0 0
        %3251 = vmatpush2.bf16.msra.mxu0 0
        %3252 = vmatprep.subr.bf16.mxu0 0
        %3253 = vmatpush2.bf16.msra.mxu0 0
        %3254 = vmatprep.subr.bf16.mxu0 0
        %3255 = vmatpush2.bf16.msra.mxu0 0
        %3256 = vmatprep.subr.bf16.mxu0 0
        %3257 = vmatpush2.bf16.msra.mxu0 0
        %3258 = vmatprep.mubr.bf16.mxu0 0
        %3259 = vmatmul.mubr.bf16.gmra.mxu0 %v3154
        %v3260 = vpop.f32.mrf.mxu0
        %v3261 = vadd.f32 %v406, %v3260
        %v3262 = vpop.f32.mrf.mxu0
        %v3263 = vpop.f32.mrf.mxu0
        %v3264 = vadd.f32 %v406, %v3263
        %v3265 = vpop.f32.mrf.mxu0
        %3266 = vmatprep.mubr.bf16.mxu0 0
        %3267 = vmatmul.mubr.bf16.gmra.mxu0 %v3155
        %v3268 = vpop.f32.mrf.mxu0
        %v3269 = vadd.f32 %v406, %v3268
        %v3270 = vpop.f32.mrf.mxu0
        %v3271 = vpop.f32.mrf.mxu0
        %v3272 = vadd.f32 %v406, %v3271
        %v3273 = vpop.f32.mrf.mxu0
        %3274 = vmatprep.mubr.bf16.mxu0 0
        %3275 = vmatmul.mubr.bf16.gmra.mxu0 %v3156
        %v3276 = vpop.f32.mrf.mxu0
        %v3277 = vadd.f32 %v406, %v3276
        %v3278 = vpop.f32.mrf.mxu0
        %v3279 = vpop.f32.mrf.mxu0
        %v3280 = vadd.f32 %v406, %v3279
        %v3281 = vpop.f32.mrf.mxu0
        %3282 = vmatprep.mubr.bf16.mxu0 0
        %3283 = vmatmul.mubr.bf16.gmra.mxu0 %v3157
        %v3284 = vpop.f32.mrf.mxu0
        %v3285 = vadd.f32 %v406, %v3284
        %v3286 = vpop.f32.mrf.mxu0
        %v3287 = vpop.f32.mrf.mxu0
        %v3288 = vadd.f32 %v406, %v3287
        %v3289 = vpop.f32.mrf.mxu0
        %3290 = vmatprep.mubr.bf16.mxu0 0
        %3291 = vmatmul.mubr.bf16.gmra.mxu0 %v3158
        %v3292 = vpop.f32.mrf.mxu0
        %v3293 = vadd.f32 %v406, %v3292
        %v3294 = vpop.f32.mrf.mxu0
        %v3295 = vpop.f32.mrf.mxu0
        %v3296 = vadd.f32 %v406, %v3295
        %v3297 = vpop.f32.mrf.mxu0
        %3298 = vmatprep.mubr.bf16.mxu0 0
        %3299 = vmatmul.mubr.bf16.gmra.mxu0 %v3159
        %v3300 = vpop.f32.mrf.mxu0
        %v3301 = vadd.f32 %v406, %v3300
        %v3302 = vpop.f32.mrf.mxu0
        %v3303 = vpop.f32.mrf.mxu0
        %v3304 = vadd.f32 %v406, %v3303
        %v3305 = vpop.f32.mrf.mxu0
        %3306 = vmatprep.mubr.bf16.mxu0 0
        %3307 = vmatmul.mubr.bf16.gmra.mxu0 %v3160
        %v3308 = vpop.f32.mrf.mxu0
        %v3309 = vadd.f32 %v406, %v3308
        %v3310 = vpop.f32.mrf.mxu0
        %v3311 = vpop.f32.mrf.mxu0
        %v3312 = vadd.f32 %v406, %v3311
        %v3313 = vpop.f32.mrf.mxu0
        %3314 = vmatprep.mubr.bf16.mxu0 0
        %3315 = vmatmul.mubr.bf16.gmra.mxu0 %v3161
        %v3316 = vpop.f32.mrf.mxu0
        %v3317 = vadd.f32 %v406, %v3316
        %v3318 = vpop.f32.mrf.mxu0
        %v3319 = vpop.f32.mrf.mxu0
        %v3320 = vadd.f32 %v406, %v3319
        %v3321 = vpop.f32.mrf.mxu0
        %3322 = vdwg.mxu0
        %v3323 = vstv %s2967
        %v3324 = vmul.f32 %v3323, %v3261
        %v3325 = vmul.f32 %v3323, %v3264
        %v3326 = vmul.f32 %v3323, %v3269
        %v3327 = vmul.f32 %v3323, %v3272
        %v3328 = vmul.f32 %v3323, %v3277
        %v3329 = vmul.f32 %v3323, %v3280
        %v3330 = vmul.f32 %v3323, %v3285
        %v3331 = vmul.f32 %v3323, %v3288
        %v3332 = vmul.f32 %v3323, %v3293
        %v3333 = vmul.f32 %v3323, %v3296
        %v3334 = vmul.f32 %v3323, %v3301
        %v3335 = vmul.f32 %v3323, %v3304
        %v3336 = vmul.f32 %v3323, %v3309
        %v3337 = vmul.f32 %v3323, %v3312
        %v3338 = vmul.f32 %v3323, %v3317
        %v3339 = vmul.f32 %v3323, %v3320
        %v3340 = vadd.f32 %v2933, %v3324
        %v3341 = vadd.f32 %v2934, %v3325
        %v3342 = vadd.f32 %v2935, %v3326
        %v3343 = vadd.f32 %v2936, %v3327
        %v3344 = vadd.f32 %v2937, %v3328
        %v3345 = vadd.f32 %v2938, %v3329
        %v3346 = vadd.f32 %v2939, %v3330
        %v3347 = vadd.f32 %v2940, %v3331
        %v3348 = vadd.f32 %v2941, %v3332
        %v3349 = vadd.f32 %v2942, %v3333
        %v3350 = vadd.f32 %v2943, %v3334
        %v3351 = vadd.f32 %v2944, %v3335
        %v3352 = vadd.f32 %v2945, %v3336
        %v3353 = vadd.f32 %v2946, %v3337
        %v3354 = vadd.f32 %v2947, %v3338
        %v3355 = vadd.f32 %v2948, %v3339
        %v3356 = vpack.c.bf16 %v3341, %v3340
        %v3357 = vpack.c.bf16 %v3343, %v3342
        %v3358 = vpack.c.bf16 %v3345, %v3344
        %v3359 = vpack.c.bf16 %v3347, %v3346
        %v3360 = vpack.c.bf16 %v3349, %v3348
        %v3361 = vpack.c.bf16 %v3351, %v3350
        %v3362 = vpack.c.bf16 %v3353, %v3352
        %v3363 = vpack.c.bf16 %v3355, %v3354
        %3364 = vmatprep.subr.bf16.mxu0 0
        %3365 = vmatpush1.bf16.msra.mxu0 %v3032
        %3366 = vmatprep.subr.bf16.mxu0 0
        %3367 = vmatpush1.bf16.msra.mxu0 %v3031
        %3368 = vmatprep.subr.bf16.mxu0 0
        %3369 = vmatpush1.bf16.msra.mxu0 %v3030
        %3370 = vmatprep.subr.bf16.mxu0 0
        %3371 = vmatpush1.bf16.msra.mxu0 %v3029
        %3372 = vmatprep.subr.bf16.mxu0 0
        %3373 = vmatpush1.bf16.msra.mxu0 %v3028
        %3374 = vmatprep.subr.bf16.mxu0 0
        %3375 = vmatpush1.bf16.msra.mxu0 %v3027
        %3376 = vmatprep.subr.bf16.mxu0 0
        %3377 = vmatpush1.bf16.msra.mxu0 %v3026
        %3378 = vmatprep.subr.bf16.mxu0 0
        %3379 = vmatpush1.bf16.msra.mxu0 %v3025
        %3380 = vmatprep.subr.bf16.mxu0 0
        %3381 = vmatpush2.bf16.msra.mxu0 0
        %3382 = vmatprep.subr.bf16.mxu0 0
        %3383 = vmatpush2.bf16.msra.mxu0 0
        %3384 = vmatprep.subr.bf16.mxu0 0
        %3385 = vmatpush2.bf16.msra.mxu0 0
        %3386 = vmatprep.subr.bf16.mxu0 0
        %3387 = vmatpush2.bf16.msra.mxu0 0
        %3388 = vmatprep.subr.bf16.mxu0 0
        %3389 = vmatpush2.bf16.msra.mxu0 0
        %3390 = vmatprep.subr.bf16.mxu0 0
        %3391 = vmatpush2.bf16.msra.mxu0 0
        %3392 = vmatprep.subr.bf16.mxu0 0
        %3393 = vmatpush2.bf16.msra.mxu0 0
        %3394 = vmatprep.subr.bf16.mxu0 0
        %3395 = vmatpush2.bf16.msra.mxu0 0
        %3396 = vmatprep.mubr.bf16.mxu0 0
        %3397 = vmatmul.mubr.bf16.gmra.mxu0 %v3356
        %v3398 = vpop.f32.mrf.mxu0
        %v3399 = vadd.f32 %v399, %v3398
        %v3400 = vpop.f32.mrf.mxu0
        %v3401 = vpop.f32.mrf.mxu0
        %v3402 = vadd.f32 %v399, %v3401
        %v3403 = vpop.f32.mrf.mxu0
        %3404 = vmatprep.mubr.bf16.mxu0 0
        %3405 = vmatmul.mubr.bf16.gmra.mxu0 %v3357
        %v3406 = vpop.f32.mrf.mxu0
        %v3407 = vadd.f32 %v399, %v3406
        %v3408 = vpop.f32.mrf.mxu0
        %v3409 = vpop.f32.mrf.mxu0
        %v3410 = vadd.f32 %v399, %v3409
        %v3411 = vpop.f32.mrf.mxu0
        %3412 = vmatprep.mubr.bf16.mxu0 0
        %3413 = vmatmul.mubr.bf16.gmra.mxu0 %v3358
        %v3414 = vpop.f32.mrf.mxu0
        %v3415 = vadd.f32 %v399, %v3414
        %v3416 = vpop.f32.mrf.mxu0
        %v3417 = vpop.f32.mrf.mxu0
        %v3418 = vadd.f32 %v399, %v3417
        %v3419 = vpop.f32.mrf.mxu0
        %3420 = vmatprep.mubr.bf16.mxu0 0
        %3421 = vmatmul.mubr.bf16.gmra.mxu0 %v3359
        %v3422 = vpop.f32.mrf.mxu0
        %v3423 = vadd.f32 %v399, %v3422
        %v3424 = vpop.f32.mrf.mxu0
        %v3425 = vpop.f32.mrf.mxu0
        %v3426 = vadd.f32 %v399, %v3425
        %v3427 = vpop.f32.mrf.mxu0
        %3428 = vmatprep.mubr.bf16.mxu0 0
        %3429 = vmatmul.mubr.bf16.gmra.mxu0 %v3360
        %v3430 = vpop.f32.mrf.mxu0
        %v3431 = vadd.f32 %v399, %v3430
        %v3432 = vpop.f32.mrf.mxu0
        %v3433 = vpop.f32.mrf.mxu0
        %v3434 = vadd.f32 %v399, %v3433
        %v3435 = vpop.f32.mrf.mxu0
        %3436 = vmatprep.mubr.bf16.mxu0 0
        %3437 = vmatmul.mubr.bf16.gmra.mxu0 %v3361
        %v3438 = vpop.f32.mrf.mxu0
        %v3439 = vadd.f32 %v399, %v3438
        %v3440 = vpop.f32.mrf.mxu0
        %v3441 = vpop.f32.mrf.mxu0
        %v3442 = vadd.f32 %v399, %v3441
        %v3443 = vpop.f32.mrf.mxu0
        %3444 = vmatprep.mubr.bf16.mxu0 0
        %3445 = vmatmul.mubr.bf16.gmra.mxu0 %v3362
        %v3446 = vpop.f32.mrf.mxu0
        %v3447 = vadd.f32 %v399, %v3446
        %v3448 = vpop.f32.mrf.mxu0
        %v3449 = vpop.f32.mrf.mxu0
        %v3450 = vadd.f32 %v399, %v3449
        %v3451 = vpop.f32.mrf.mxu0
        %3452 = vmatprep.mubr.bf16.mxu0 0
        %3453 = vmatmul.mubr.bf16.gmra.mxu0 %v3363
        %v3454 = vpop.f32.mrf.mxu0
        %v3455 = vadd.f32 %v399, %v3454
        %v3456 = vpop.f32.mrf.mxu0
        %v3457 = vpop.f32.mrf.mxu0
        %v3458 = vadd.f32 %v399, %v3457
        %v3459 = vpop.f32.mrf.mxu0
        %3460 = vdwg.mxu0
        %v3461 = vtanh.pop %v3399
        %v3462 = vtanh.pop %v3402
        %v3463 = vtanh.pop %v3407
        %v3464 = vtanh.pop %v3410
        %v3465 = vtanh.pop %v3415
        %v3466 = vtanh.pop %v3418
        %v3467 = vtanh.pop %v3423
        %v3468 = vtanh.pop %v3426
        %v3469 = vtanh.pop %v3431
        %v3470 = vtanh.pop %v3434
        %v3471 = vtanh.pop %v3439
        %v3472 = vtanh.pop %v3442
        %v3473 = vtanh.pop %v3447
        %v3474 = vtanh.pop %v3450
        %v3475 = vtanh.pop %v3455
        %v3476 = vtanh.pop %v3458
        %v3477 = vpack.c.bf16 %v3462, %v3461
        %v3478 = vpack.c.bf16 %v3464, %v3463
        %v3479 = vpack.c.bf16 %v3466, %v3465
        %v3480 = vpack.c.bf16 %v3468, %v3467
        %v3481 = vpack.c.bf16 %v3470, %v3469
        %v3482 = vpack.c.bf16 %v3472, %v3471
        %v3483 = vpack.c.bf16 %v3474, %v3473
        %v3484 = vpack.c.bf16 %v3476, %v3475
        %3485 = vmatprep.subr.bf16.mxu0 0
        %3486 = vmatpush1.bf16.msra.mxu0 %v3217
        %3487 = vmatprep.subr.bf16.mxu0 0
        %3488 = vmatpush1.bf16.msra.mxu0 %v3216
        %3489 = vmatprep.subr.bf16.mxu0 0
        %3490 = vmatpush1.bf16.msra.mxu0 %v3215
        %3491 = vmatprep.subr.bf16.mxu0 0
        %3492 = vmatpush1.bf16.msra.mxu0 %v3214
        %3493 = vmatprep.subr.bf16.mxu0 0
        %3494 = vmatpush1.bf16.msra.mxu0 %v3213
        %3495 = vmatprep.subr.bf16.mxu0 0
        %3496 = vmatpush1.bf16.msra.mxu0 %v3212
        %3497 = vmatprep.subr.bf16.mxu0 0
        %3498 = vmatpush1.bf16.msra.mxu0 %v3211
        %3499 = vmatprep.subr.bf16.mxu0 0
        %3500 = vmatpush1.bf16.msra.mxu0 %v3210
        %3501 = vmatprep.subr.bf16.mxu0 0
        %3502 = vmatpush2.bf16.msra.mxu0 0
        %3503 = vmatprep.subr.bf16.mxu0 0
        %3504 = vmatpush2.bf16.msra.mxu0 0
        %3505 = vmatprep.subr.bf16.mxu0 0
        %3506 = vmatpush2.bf16.msra.mxu0 0
        %3507 = vmatprep.subr.bf16.mxu0 0
        %3508 = vmatpush2.bf16.msra.mxu0 0
        %3509 = vmatprep.subr.bf16.mxu0 0
        %3510 = vmatpush2.bf16.msra.mxu0 0
        %3511 = vmatprep.subr.bf16.mxu0 0
        %3512 = vmatpush2.bf16.msra.mxu0 0
        %3513 = vmatprep.subr.bf16.mxu0 0
        %3514 = vmatpush2.bf16.msra.mxu0 0
        %3515 = vmatprep.subr.bf16.mxu0 0
        %3516 = vmatpush2.bf16.msra.mxu0 0
        %3517 = vmatprep.mubr.bf16.mxu0 0
        %3518 = vmatmul.mubr.bf16.gmra.mxu0 %v3477
        %v3519 = vpop.f32.mrf.mxu0
        %v3520 = vadd.f32 %v406, %v3519
        %v3521 = vpop.f32.mrf.mxu0
        %v3522 = vpop.f32.mrf.mxu0
        %v3523 = vadd.f32 %v406, %v3522
        %v3524 = vpop.f32.mrf.mxu0
        %3525 = vmatprep.mubr.bf16.mxu0 0
        %3526 = vmatmul.mubr.bf16.gmra.mxu0 %v3478
        %v3527 = vpop.f32.mrf.mxu0
        %v3528 = vadd.f32 %v406, %v3527
        %v3529 = vpop.f32.mrf.mxu0
        %v3530 = vpop.f32.mrf.mxu0
        %v3531 = vadd.f32 %v406, %v3530
        %v3532 = vpop.f32.mrf.mxu0
        %3533 = vmatprep.mubr.bf16.mxu0 0
        %3534 = vmatmul.mubr.bf16.gmra.mxu0 %v3479
        %v3535 = vpop.f32.mrf.mxu0
        %v3536 = vadd.f32 %v406, %v3535
        %v3537 = vpop.f32.mrf.mxu0
        %v3538 = vpop.f32.mrf.mxu0
        %v3539 = vadd.f32 %v406, %v3538
        %v3540 = vpop.f32.mrf.mxu0
        %3541 = vmatprep.mubr.bf16.mxu0 0
        %3542 = vmatmul.mubr.bf16.gmra.mxu0 %v3480
        %v3543 = vpop.f32.mrf.mxu0
        %v3544 = vadd.f32 %v406, %v3543
        %v3545 = vpop.f32.mrf.mxu0
        %v3546 = vpop.f32.mrf.mxu0
        %v3547 = vadd.f32 %v406, %v3546
        %v3548 = vpop.f32.mrf.mxu0
        %3549 = vmatprep.mubr.bf16.mxu0 0
        %3550 = vmatmul.mubr.bf16.gmra.mxu0 %v3481
        %v3551 = vpop.f32.mrf.mxu0
        %v3552 = vadd.f32 %v406, %v3551
        %v3553 = vpop.f32.mrf.mxu0
        %v3554 = vpop.f32.mrf.mxu0
        %v3555 = vadd.f32 %v406, %v3554
        %v3556 = vpop.f32.mrf.mxu0
        %3557 = vmatprep.mubr.bf16.mxu0 0
        %3558 = vmatmul.mubr.bf16.gmra.mxu0 %v3482
        %v3559 = vpop.f32.mrf.mxu0
        %v3560 = vadd.f32 %v406, %v3559
        %v3561 = vpop.f32.mrf.mxu0
        %v3562 = vpop.f32.mrf.mxu0
        %v3563 = vadd.f32 %v406, %v3562
        %v3564 = vpop.f32.mrf.mxu0
        %3565 = vmatprep.mubr.bf16.mxu0 0
        %3566 = vmatmul.mubr.bf16.gmra.mxu0 %v3483
        %v3567 = vpop.f32.mrf.mxu0
        %v3568 = vadd.f32 %v406, %v3567
        %v3569 = vpop.f32.mrf.mxu0
        %v3570 = vpop.f32.mrf.mxu0
        %v3571 = vadd.f32 %v406, %v3570
        %v3572 = vpop.f32.mrf.mxu0
        %3573 = vmatprep.mubr.bf16.mxu0 0
        %3574 = vmatmul.mubr.bf16.gmra.mxu0 %v3484
        %v3575 = vpop.f32.mrf.mxu0
        %v3576 = vadd.f32 %v406, %v3575
        %v3577 = vpop.f32.mrf.mxu0
        %v3578 = vpop.f32.mrf.mxu0
        %v3579 = vadd.f32 %v406, %v3578
        %v3580 = vpop.f32.mrf.mxu0
        %3581 = vdwg.mxu0
        %v3582 = vmul.f32 %v3323, %v3520
        %v3583 = vmul.f32 %v3323, %v3523
        %v3584 = vmul.f32 %v3323, %v3528
        %v3585 = vmul.f32 %v3323, %v3531
        %v3586 = vmul.f32 %v3323, %v3536
        %v3587 = vmul.f32 %v3323, %v3539
        %v3588 = vmul.f32 %v3323, %v3544
        %v3589 = vmul.f32 %v3323, %v3547
        %v3590 = vmul.f32 %v3323, %v3552
        %v3591 = vmul.f32 %v3323, %v3555
        %v3592 = vmul.f32 %v3323, %v3560
        %v3593 = vmul.f32 %v3323, %v3563
        %v3594 = vmul.f32 %v3323, %v3568
        %v3595 = vmul.f32 %v3323, %v3571
        %v3596 = vmul.f32 %v3323, %v3576
        %v3597 = vmul.f32 %v3323, %v3579
        %v3598 = vadd.f32 %v2933, %v3582
        %v3599 = vadd.f32 %v2934, %v3583
        %v3600 = vadd.f32 %v2935, %v3584
        %v3601 = vadd.f32 %v2936, %v3585
        %v3602 = vadd.f32 %v2937, %v3586
        %v3603 = vadd.f32 %v2938, %v3587
        %v3604 = vadd.f32 %v2939, %v3588
        %v3605 = vadd.f32 %v2940, %v3589
        %v3606 = vadd.f32 %v2941, %v3590
        %v3607 = vadd.f32 %v2942, %v3591
        %v3608 = vadd.f32 %v2943, %v3592
        %v3609 = vadd.f32 %v2944, %v3593
        %v3610 = vadd.f32 %v2945, %v3594
        %v3611 = vadd.f32 %v2946, %v3595
        %v3612 = vadd.f32 %v2947, %v3596
        %v3613 = vadd.f32 %v2948, %v3597
        %v3614 = vpack.c.bf16 %v3599, %v3598
        %v3615 = vpack.c.bf16 %v3601, %v3600
        %v3616 = vpack.c.bf16 %v3603, %v3602
        %v3617 = vpack.c.bf16 %v3605, %v3604
        %v3618 = vpack.c.bf16 %v3607, %v3606
        %v3619 = vpack.c.bf16 %v3609, %v3608
        %v3620 = vpack.c.bf16 %v3611, %v3610
        %v3621 = vpack.c.bf16 %v3613, %v3612
        %3622 = vmatprep.subr.bf16.mxu0 0
        %3623 = vmatpush1.bf16.msra.mxu0 %v3032
        %3624 = vmatprep.subr.bf16.mxu0 0
        %3625 = vmatpush1.bf16.msra.mxu0 %v3031
        %3626 = vmatprep.subr.bf16.mxu0 0
        %3627 = vmatpush1.bf16.msra.mxu0 %v3030
        %3628 = vmatprep.subr.bf16.mxu0 0
        %3629 = vmatpush1.bf16.msra.mxu0 %v3029
        %3630 = vmatprep.subr.bf16.mxu0 0
        %3631 = vmatpush1.bf16.msra.mxu0 %v3028
        %3632 = vmatprep.subr.bf16.mxu0 0
        %3633 = vmatpush1.bf16.msra.mxu0 %v3027
        %3634 = vmatprep.subr.bf16.mxu0 0
        %3635 = vmatpush1.bf16.msra.mxu0 %v3026
        %3636 = vmatprep.subr.bf16.mxu0 0
        %3637 = vmatpush1.bf16.msra.mxu0 %v3025
        %3638 = vmatprep.subr.bf16.mxu0 0
        %3639 = vmatpush2.bf16.msra.mxu0 0
        %3640 = vmatprep.subr.bf16.mxu0 0
        %3641 = vmatpush2.bf16.msra.mxu0 0
        %3642 = vmatprep.subr.bf16.mxu0 0
        %3643 = vmatpush2.bf16.msra.mxu0 0
        %3644 = vmatprep.subr.bf16.mxu0 0
        %3645 = vmatpush2.bf16.msra.mxu0 0
        %3646 = vmatprep.subr.bf16.mxu0 0
        %3647 = vmatpush2.bf16.msra.mxu0 0
        %3648 = vmatprep.subr.bf16.mxu0 0
        %3649 = vmatpush2.bf16.msra.mxu0 0
        %3650 = vmatprep.subr.bf16.mxu0 0
        %3651 = vmatpush2.bf16.msra.mxu0 0
        %3652 = vmatprep.subr.bf16.mxu0 0
        %3653 = vmatpush2.bf16.msra.mxu0 0
        %3654 = vmatprep.mubr.bf16.mxu0 0
        %3655 = vmatmul.mubr.bf16.gmra.mxu0 %v3614
        %v3656 = vpop.f32.mrf.mxu0
        %v3657 = vadd.f32 %v399, %v3656
        %v3658 = vpop.f32.mrf.mxu0
        %v3659 = vpop.f32.mrf.mxu0
        %v3660 = vadd.f32 %v399, %v3659
        %v3661 = vpop.f32.mrf.mxu0
        %3662 = vmatprep.mubr.bf16.mxu0 0
        %3663 = vmatmul.mubr.bf16.gmra.mxu0 %v3615
        %v3664 = vpop.f32.mrf.mxu0
        %v3665 = vadd.f32 %v399, %v3664
        %v3666 = vpop.f32.mrf.mxu0
        %v3667 = vpop.f32.mrf.mxu0
        %v3668 = vadd.f32 %v399, %v3667
        %v3669 = vpop.f32.mrf.mxu0
        %3670 = vmatprep.mubr.bf16.mxu0 0
        %3671 = vmatmul.mubr.bf16.gmra.mxu0 %v3616
        %v3672 = vpop.f32.mrf.mxu0
        %v3673 = vadd.f32 %v399, %v3672
        %v3674 = vpop.f32.mrf.mxu0
        %v3675 = vpop.f32.mrf.mxu0
        %v3676 = vadd.f32 %v399, %v3675
        %v3677 = vpop.f32.mrf.mxu0
        %3678 = vmatprep.mubr.bf16.mxu0 0
        %3679 = vmatmul.mubr.bf16.gmra.mxu0 %v3617
        %v3680 = vpop.f32.mrf.mxu0
        %v3681 = vadd.f32 %v399, %v3680
        %v3682 = vpop.f32.mrf.mxu0
        %v3683 = vpop.f32.mrf.mxu0
        %v3684 = vadd.f32 %v399, %v3683
        %v3685 = vpop.f32.mrf.mxu0
        %3686 = vmatprep.mubr.bf16.mxu0 0
        %3687 = vmatmul.mubr.bf16.gmra.mxu0 %v3618
        %v3688 = vpop.f32.mrf.mxu0
        %v3689 = vadd.f32 %v399, %v3688
        %v3690 = vpop.f32.mrf.mxu0
        %v3691 = vpop.f32.mrf.mxu0
        %v3692 = vadd.f32 %v399, %v3691
        %v3693 = vpop.f32.mrf.mxu0
        %3694 = vmatprep.mubr.bf16.mxu0 0
        %3695 = vmatmul.mubr.bf16.gmra.mxu0 %v3619
        %v3696 = vpop.f32.mrf.mxu0
        %v3697 = vadd.f32 %v399, %v3696
        %v3698 = vpop.f32.mrf.mxu0
        %v3699 = vpop.f32.mrf.mxu0
        %v3700 = vadd.f32 %v399, %v3699
        %v3701 = vpop.f32.mrf.mxu0
        %3702 = vmatprep.mubr.bf16.mxu0 0
        %3703 = vmatmul.mubr.bf16.gmra.mxu0 %v3620
        %v3704 = vpop.f32.mrf.mxu0
        %v3705 = vadd.f32 %v399, %v3704
        %v3706 = vpop.f32.mrf.mxu0
        %v3707 = vpop.f32.mrf.mxu0
        %v3708 = vadd.f32 %v399, %v3707
        %v3709 = vpop.f32.mrf.mxu0
        %3710 = vmatprep.mubr.bf16.mxu0 0
        %3711 = vmatmul.mubr.bf16.gmra.mxu0 %v3621
        %v3712 = vpop.f32.mrf.mxu0
        %v3713 = vadd.f32 %v399, %v3712
        %v3714 = vpop.f32.mrf.mxu0
        %v3715 = vpop.f32.mrf.mxu0
        %v3716 = vadd.f32 %v399, %v3715
        %v3717 = vpop.f32.mrf.mxu0
        %3718 = vdwg.mxu0
        %v3719 = vtanh.pop %v3657
        %v3720 = vtanh.pop %v3660
        %v3721 = vtanh.pop %v3665
        %v3722 = vtanh.pop %v3668
        %v3723 = vtanh.pop %v3673
        %v3724 = vtanh.pop %v3676
        %v3725 = vtanh.pop %v3681
        %v3726 = vtanh.pop %v3684
        %v3727 = vtanh.pop %v3689
        %v3728 = vtanh.pop %v3692
        %v3729 = vtanh.pop %v3697
        %v3730 = vtanh.pop %v3700
        %v3731 = vtanh.pop %v3705
        %v3732 = vtanh.pop %v3708
        %v3733 = vtanh.pop %v3713
        %v3734 = vtanh.pop %v3716
        %v3735 = vpack.c.bf16 %v3720, %v3719
        %v3736 = vpack.c.bf16 %v3722, %v3721
        %v3737 = vpack.c.bf16 %v3724, %v3723
        %v3738 = vpack.c.bf16 %v3726, %v3725
        %v3739 = vpack.c.bf16 %v3728, %v3727
        %v3740 = vpack.c.bf16 %v3730, %v3729
        %v3741 = vpack.c.bf16 %v3732, %v3731
        %v3742 = vpack.c.bf16 %v3734, %v3733
        %3743 = vmatprep.subr.bf16.mxu0 0
        %3744 = vmatpush1.bf16.msra.mxu0 %v3217
        %3745 = vmatprep.subr.bf16.mxu0 0
        %3746 = vmatpush1.bf16.msra.mxu0 %v3216
        %3747 = vmatprep.subr.bf16.mxu0 0
        %3748 = vmatpush1.bf16.msra.mxu0 %v3215
        %3749 = vmatprep.subr.bf16.mxu0 0
        %3750 = vmatpush1.bf16.msra.mxu0 %v3214
        %3751 = vmatprep.subr.bf16.mxu0 0
        %3752 = vmatpush1.bf16.msra.mxu0 %v3213
        %3753 = vmatprep.subr.bf16.mxu0 0
        %3754 = vmatpush1.bf16.msra.mxu0 %v3212
        %3755 = vmatprep.subr.bf16.mxu0 0
        %3756 = vmatpush1.bf16.msra.mxu0 %v3211
        %3757 = vmatprep.subr.bf16.mxu0 0
        %3758 = vmatpush1.bf16.msra.mxu0 %v3210
        %3759 = vmatprep.subr.bf16.mxu0 0
        %3760 = vmatpush2.bf16.msra.mxu0 0
        %3761 = vmatprep.subr.bf16.mxu0 0
        %3762 = vmatpush2.bf16.msra.mxu0 0
        %3763 = vmatprep.subr.bf16.mxu0 0
        %3764 = vmatpush2.bf16.msra.mxu0 0
        %3765 = vmatprep.subr.bf16.mxu0 0
        %3766 = vmatpush2.bf16.msra.mxu0 0
        %3767 = vmatprep.subr.bf16.mxu0 0
        %3768 = vmatpush2.bf16.msra.mxu0 0
        %3769 = vmatprep.subr.bf16.mxu0 0
        %3770 = vmatpush2.bf16.msra.mxu0 0
        %3771 = vmatprep.subr.bf16.mxu0 0
        %3772 = vmatpush2.bf16.msra.mxu0 0
        %3773 = vmatprep.subr.bf16.mxu0 0
        %3774 = vmatpush2.bf16.msra.mxu0 0
        %3775 = vmatprep.mubr.bf16.mxu0 0
        %3776 = vmatmul.mubr.bf16.gmra.mxu0 %v3735
        %v3777 = vpop.f32.mrf.mxu0
        %v3778 = vadd.f32 %v406, %v3777
        %v3779 = vpop.f32.mrf.mxu0
        %v3780 = vpop.f32.mrf.mxu0
        %v3781 = vadd.f32 %v406, %v3780
        %v3782 = vpop.f32.mrf.mxu0
        %3783 = vmatprep.mubr.bf16.mxu0 0
        %3784 = vmatmul.mubr.bf16.gmra.mxu0 %v3736
        %v3785 = vpop.f32.mrf.mxu0
        %v3786 = vadd.f32 %v406, %v3785
        %v3787 = vpop.f32.mrf.mxu0
        %v3788 = vpop.f32.mrf.mxu0
        %v3789 = vadd.f32 %v406, %v3788
        %v3790 = vpop.f32.mrf.mxu0
        %3791 = vmatprep.mubr.bf16.mxu0 0
        %3792 = vmatmul.mubr.bf16.gmra.mxu0 %v3737
        %v3793 = vpop.f32.mrf.mxu0
        %v3794 = vadd.f32 %v406, %v3793
        %v3795 = vpop.f32.mrf.mxu0
        %v3796 = vpop.f32.mrf.mxu0
        %v3797 = vadd.f32 %v406, %v3796
        %v3798 = vpop.f32.mrf.mxu0
        %3799 = vmatprep.mubr.bf16.mxu0 0
        %3800 = vmatmul.mubr.bf16.gmra.mxu0 %v3738
        %v3801 = vpop.f32.mrf.mxu0
        %v3802 = vadd.f32 %v406, %v3801
        %v3803 = vpop.f32.mrf.mxu0
        %v3804 = vpop.f32.mrf.mxu0
        %v3805 = vadd.f32 %v406, %v3804
        %v3806 = vpop.f32.mrf.mxu0
        %3807 = vmatprep.mubr.bf16.mxu0 0
        %3808 = vmatmul.mubr.bf16.gmra.mxu0 %v3739
        %v3809 = vpop.f32.mrf.mxu0
        %v3810 = vadd.f32 %v406, %v3809
        %v3811 = vpop.f32.mrf.mxu0
        %v3812 = vpop.f32.mrf.mxu0
        %v3813 = vadd.f32 %v406, %v3812
        %v3814 = vpop.f32.mrf.mxu0
        %3815 = vmatprep.mubr.bf16.mxu0 0
        %3816 = vmatmul.mubr.bf16.gmra.mxu0 %v3740
        %v3817 = vpop.f32.mrf.mxu0
        %v3818 = vadd.f32 %v406, %v3817
        %v3819 = vpop.f32.mrf.mxu0
        %v3820 = vpop.f32.mrf.mxu0
        %v3821 = vadd.f32 %v406, %v3820
        %v3822 = vpop.f32.mrf.mxu0
        %3823 = vmatprep.mubr.bf16.mxu0 0
        %3824 = vmatmul.mubr.bf16.gmra.mxu0 %v3741
        %v3825 = vpop.f32.mrf.mxu0
        %v3826 = vadd.f32 %v406, %v3825
        %v3827 = vpop.f32.mrf.mxu0
        %v3828 = vpop.f32.mrf.mxu0
        %v3829 = vadd.f32 %v406, %v3828
        %v3830 = vpop.f32.mrf.mxu0
        %3831 = vmatprep.mubr.bf16.mxu0 0
        %3832 = vmatmul.mubr.bf16.gmra.mxu0 %v3742
        %v3833 = vpop.f32.mrf.mxu0
        %v3834 = vadd.f32 %v406, %v3833
        %v3835 = vpop.f32.mrf.mxu0
        %v3836 = vpop.f32.mrf.mxu0
        %v3837 = vadd.f32 %v406, %v3836
        %v3838 = vpop.f32.mrf.mxu0
        %3839 = vdwg.mxu0
        %v3840 = vstv %s2966
        %v3841 = vmul.f32 %v3840, %v3778
        %v3842 = vmul.f32 %v3840, %v3781
        %v3843 = vmul.f32 %v3840, %v3786
        %v3844 = vmul.f32 %v3840, %v3789
        %v3845 = vmul.f32 %v3840, %v3794
        %v3846 = vmul.f32 %v3840, %v3797
        %v3847 = vmul.f32 %v3840, %v3802
        %v3848 = vmul.f32 %v3840, %v3805
        %v3849 = vmul.f32 %v3840, %v3810
        %v3850 = vmul.f32 %v3840, %v3813
        %v3851 = vmul.f32 %v3840, %v3818
        %v3852 = vmul.f32 %v3840, %v3821
        %v3853 = vmul.f32 %v3840, %v3826
        %v3854 = vmul.f32 %v3840, %v3829
        %v3855 = vmul.f32 %v3840, %v3834
        %v3856 = vmul.f32 %v3840, %v3837
        %v3857 = vadd.f32 %v2933, %v3841
        %v3858 = vadd.f32 %v2934, %v3842
        %v3859 = vadd.f32 %v2935, %v3843
        %v3860 = vadd.f32 %v2936, %v3844
        %v3861 = vadd.f32 %v2937, %v3845
        %v3862 = vadd.f32 %v2938, %v3846
        %v3863 = vadd.f32 %v2939, %v3847
        %v3864 = vadd.f32 %v2940, %v3848
        %v3865 = vadd.f32 %v2941, %v3849
        %v3866 = vadd.f32 %v2942, %v3850
        %v3867 = vadd.f32 %v2943, %v3851
        %v3868 = vadd.f32 %v2944, %v3852
        %v3869 = vadd.f32 %v2945, %v3853
        %v3870 = vadd.f32 %v2946, %v3854
        %v3871 = vadd.f32 %v2947, %v3855
        %v3872 = vadd.f32 %v2948, %v3856
        %v3873 = vpack.c.bf16 %v3858, %v3857
        %v3874 = vpack.c.bf16 %v3860, %v3859
        %v3875 = vpack.c.bf16 %v3862, %v3861
        %v3876 = vpack.c.bf16 %v3864, %v3863
        %v3877 = vpack.c.bf16 %v3866, %v3865
        %v3878 = vpack.c.bf16 %v3868, %v3867
        %v3879 = vpack.c.bf16 %v3870, %v3869
        %v3880 = vpack.c.bf16 %v3872, %v3871
        %3881 = vmatprep.subr.bf16.mxu0 0
        %3882 = vmatpush1.bf16.msra.mxu0 %v3032
        %3883 = vmatprep.subr.bf16.mxu0 0
        %3884 = vmatpush1.bf16.msra.mxu0 %v3031
        %3885 = vmatprep.subr.bf16.mxu0 0
        %3886 = vmatpush1.bf16.msra.mxu0 %v3030
        %3887 = vmatprep.subr.bf16.mxu0 0
        %3888 = vmatpush1.bf16.msra.mxu0 %v3029
        %3889 = vmatprep.subr.bf16.mxu0 0
        %3890 = vmatpush1.bf16.msra.mxu0 %v3028
        %3891 = vmatprep.subr.bf16.mxu0 0
        %3892 = vmatpush1.bf16.msra.mxu0 %v3027
        %3893 = vmatprep.subr.bf16.mxu0 0
        %3894 = vmatpush1.bf16.msra.mxu0 %v3026
        %3895 = vmatprep.subr.bf16.mxu0 0
        %3896 = vmatpush1.bf16.msra.mxu0 %v3025
        %3897 = vmatprep.subr.bf16.mxu0 0
        %3898 = vmatpush2.bf16.msra.mxu0 0
        %3899 = vmatprep.subr.bf16.mxu0 0
        %3900 = vmatpush2.bf16.msra.mxu0 0
        %3901 = vmatprep.subr.bf16.mxu0 0
        %3902 = vmatpush2.bf16.msra.mxu0 0
        %3903 = vmatprep.subr.bf16.mxu0 0
        %3904 = vmatpush2.bf16.msra.mxu0 0
        %3905 = vmatprep.subr.bf16.mxu0 0
        %3906 = vmatpush2.bf16.msra.mxu0 0
        %3907 = vmatprep.subr.bf16.mxu0 0
        %3908 = vmatpush2.bf16.msra.mxu0 0
        %3909 = vmatprep.subr.bf16.mxu0 0
        %3910 = vmatpush2.bf16.msra.mxu0 0
        %3911 = vmatprep.subr.bf16.mxu0 0
        %3912 = vmatpush2.bf16.msra.mxu0 0
        %3913 = vmatprep.mubr.bf16.mxu0 0
        %3914 = vmatmul.mubr.bf16.gmra.mxu0 %v3873
        %v3915 = vpop.f32.mrf.mxu0
        %v3916 = vadd.f32 %v399, %v3915
        %v3917 = vpop.f32.mrf.mxu0
        %v3918 = vpop.f32.mrf.mxu0
        %v3919 = vadd.f32 %v399, %v3918
        %v3920 = vpop.f32.mrf.mxu0
        %3921 = vmatprep.mubr.bf16.mxu0 0
        %3922 = vmatmul.mubr.bf16.gmra.mxu0 %v3874
        %v3923 = vpop.f32.mrf.mxu0
        %v3924 = vadd.f32 %v399, %v3923
        %v3925 = vpop.f32.mrf.mxu0
        %v3926 = vpop.f32.mrf.mxu0
        %v3927 = vadd.f32 %v399, %v3926
        %v3928 = vpop.f32.mrf.mxu0
        %3929 = vmatprep.mubr.bf16.mxu0 0
        %3930 = vmatmul.mubr.bf16.gmra.mxu0 %v3875
        %v3931 = vpop.f32.mrf.mxu0
        %v3932 = vadd.f32 %v399, %v3931
        %v3933 = vpop.f32.mrf.mxu0
        %v3934 = vpop.f32.mrf.mxu0
        %v3935 = vadd.f32 %v399, %v3934
        %v3936 = vpop.f32.mrf.mxu0
        %3937 = vmatprep.mubr.bf16.mxu0 0
        %3938 = vmatmul.mubr.bf16.gmra.mxu0 %v3876
        %v3939 = vpop.f32.mrf.mxu0
        %v3940 = vadd.f32 %v399, %v3939
        %v3941 = vpop.f32.mrf.mxu0
        %v3942 = vpop.f32.mrf.mxu0
        %v3943 = vadd.f32 %v399, %v3942
        %v3944 = vpop.f32.mrf.mxu0
        %3945 = vmatprep.mubr.bf16.mxu0 0
        %3946 = vmatmul.mubr.bf16.gmra.mxu0 %v3877
        %v3947 = vpop.f32.mrf.mxu0
        %v3948 = vadd.f32 %v399, %v3947
        %v3949 = vpop.f32.mrf.mxu0
        %v3950 = vpop.f32.mrf.mxu0
        %v3951 = vadd.f32 %v399, %v3950
        %v3952 = vpop.f32.mrf.mxu0
        %3953 = vmatprep.mubr.bf16.mxu0 0
        %3954 = vmatmul.mubr.bf16.gmra.mxu0 %v3878
        %v3955 = vpop.f32.mrf.mxu0
        %v3956 = vadd.f32 %v399, %v3955
        %v3957 = vpop.f32.mrf.mxu0
        %v3958 = vpop.f32.mrf.mxu0
        %v3959 = vadd.f32 %v399, %v3958
        %v3960 = vpop.f32.mrf.mxu0
        %3961 = vmatprep.mubr.bf16.mxu0 0
        %3962 = vmatmul.mubr.bf16.gmra.mxu0 %v3879
        %v3963 = vpop.f32.mrf.mxu0
        %v3964 = vadd.f32 %v399, %v3963
        %v3965 = vpop.f32.mrf.mxu0
        %v3966 = vpop.f32.mrf.mxu0
        %v3967 = vadd.f32 %v399, %v3966
        %v3968 = vpop.f32.mrf.mxu0
        %3969 = vmatprep.mubr.bf16.mxu0 0
        %3970 = vmatmul.mubr.bf16.gmra.mxu0 %v3880
        %v3971 = vpop.f32.mrf.mxu0
        %v3972 = vadd.f32 %v399, %v3971
        %v3973 = vpop.f32.mrf.mxu0
        %v3974 = vpop.f32.mrf.mxu0
        %v3975 = vadd.f32 %v399, %v3974
        %v3976 = vpop.f32.mrf.mxu0
        %3977 = vdwg.mxu0
        %v3978 = vtanh.pop %v3916
        %v3979 = vtanh.pop %v3919
        %v3980 = vtanh.pop %v3924
        %v3981 = vtanh.pop %v3927
        %v3982 = vtanh.pop %v3932
        %v3983 = vtanh.pop %v3935
        %v3984 = vtanh.pop %v3940
        %v3985 = vtanh.pop %v3943
        %v3986 = vtanh.pop %v3948
        %v3987 = vtanh.pop %v3951
        %v3988 = vtanh.pop %v3956
        %v3989 = vtanh.pop %v3959
        %v3990 = vtanh.pop %v3964
        %v3991 = vtanh.pop %v3967
        %v3992 = vtanh.pop %v3972
        %v3993 = vtanh.pop %v3975
        %v3994 = vpack.c.bf16 %v3979, %v3978
        %v3995 = vpack.c.bf16 %v3981, %v3980
        %v3996 = vpack.c.bf16 %v3983, %v3982
        %v3997 = vpack.c.bf16 %v3985, %v3984
        %v3998 = vpack.c.bf16 %v3987, %v3986
        %v3999 = vpack.c.bf16 %v3989, %v3988
        %v4000 = vpack.c.bf16 %v3991, %v3990
        %v4001 = vpack.c.bf16 %v3993, %v3992
        %4002 = vmatprep.subr.bf16.mxu0 0
        %4003 = vmatpush1.bf16.msra.mxu0 %v3217
        %4004 = vmatprep.subr.bf16.mxu0 0
        %4005 = vmatpush1.bf16.msra.mxu0 %v3216
        %4006 = vmatprep.subr.bf16.mxu0 0
        %4007 = vmatpush1.bf16.msra.mxu0 %v3215
        %4008 = vmatprep.subr.bf16.mxu0 0
        %4009 = vmatpush1.bf16.msra.mxu0 %v3214
        %4010 = vmatprep.subr.bf16.mxu0 0
        %4011 = vmatpush1.bf16.msra.mxu0 %v3213
        %4012 = vmatprep.subr.bf16.mxu0 0
        %4013 = vmatpush1.bf16.msra.mxu0 %v3212
        %4014 = vmatprep.subr.bf16.mxu0 0
        %4015 = vmatpush1.bf16.msra.mxu0 %v3211
        %4016 = vmatprep.subr.bf16.mxu0 0
        %4017 = vmatpush1.bf16.msra.mxu0 %v3210
        %4018 = vmatprep.subr.bf16.mxu0 0
        %4019 = vmatpush2.bf16.msra.mxu0 0
        %4020 = vmatprep.subr.bf16.mxu0 0
        %4021 = vmatpush2.bf16.msra.mxu0 0
        %4022 = vmatprep.subr.bf16.mxu0 0
        %4023 = vmatpush2.bf16.msra.mxu0 0
        %4024 = vmatprep.subr.bf16.mxu0 0
        %4025 = vmatpush2.bf16.msra.mxu0 0
        %4026 = vmatprep.subr.bf16.mxu0 0
        %4027 = vmatpush2.bf16.msra.mxu0 0
        %4028 = vmatprep.subr.bf16.mxu0 0
        %4029 = vmatpush2.bf16.msra.mxu0 0
        %4030 = vmatprep.subr.bf16.mxu0 0
        %4031 = vmatpush2.bf16.msra.mxu0 0
        %4032 = vmatprep.subr.bf16.mxu0 0
        %4033 = vmatpush2.bf16.msra.mxu0 0
        %4034 = vmatprep.mubr.bf16.mxu0 0
        %4035 = vmatmul.mubr.bf16.gmra.mxu0 %v3994
        %v4036 = vpop.f32.mrf.mxu0
        %v4037 = vadd.f32 %v406, %v4036
        %v4038 = vpop.f32.mrf.mxu0
        %v4039 = vpop.f32.mrf.mxu0
        %v4040 = vadd.f32 %v406, %v4039
        %v4041 = vpop.f32.mrf.mxu0
        %4042 = vmatprep.mubr.bf16.mxu0 0
        %4043 = vmatmul.mubr.bf16.gmra.mxu0 %v3995
        %v4044 = vpop.f32.mrf.mxu0
        %v4045 = vadd.f32 %v406, %v4044
        %v4046 = vpop.f32.mrf.mxu0
        %v4047 = vpop.f32.mrf.mxu0
        %v4048 = vadd.f32 %v406, %v4047
        %v4049 = vpop.f32.mrf.mxu0
        %4050 = vmatprep.mubr.bf16.mxu0 0
        %4051 = vmatmul.mubr.bf16.gmra.mxu0 %v3996
        %v4052 = vpop.f32.mrf.mxu0
        %v4053 = vadd.f32 %v406, %v4052
        %v4054 = vpop.f32.mrf.mxu0
        %v4055 = vpop.f32.mrf.mxu0
        %v4056 = vadd.f32 %v406, %v4055
        %v4057 = vpop.f32.mrf.mxu0
        %4058 = vmatprep.mubr.bf16.mxu0 0
        %4059 = vmatmul.mubr.bf16.gmra.mxu0 %v3997
        %v4060 = vpop.f32.mrf.mxu0
        %v4061 = vadd.f32 %v406, %v4060
        %v4062 = vpop.f32.mrf.mxu0
        %v4063 = vpop.f32.mrf.mxu0
        %v4064 = vadd.f32 %v406, %v4063
        %v4065 = vpop.f32.mrf.mxu0
        %4066 = vmatprep.mubr.bf16.mxu0 0
        %4067 = vmatmul.mubr.bf16.gmra.mxu0 %v3998
        %v4068 = vpop.f32.mrf.mxu0
        %v4069 = vadd.f32 %v406, %v4068
        %v4070 = vpop.f32.mrf.mxu0
        %v4071 = vpop.f32.mrf.mxu0
        %v4072 = vadd.f32 %v406, %v4071
        %v4073 = vpop.f32.mrf.mxu0
        %4074 = vmatprep.mubr.bf16.mxu0 0
        %4075 = vmatmul.mubr.bf16.gmra.mxu0 %v3999
        %v4076 = vpop.f32.mrf.mxu0
        %v4077 = vadd.f32 %v406, %v4076
        %v4078 = vpop.f32.mrf.mxu0
        %v4079 = vpop.f32.mrf.mxu0
        %v4080 = vadd.f32 %v406, %v4079
        %v4081 = vpop.f32.mrf.mxu0
        %4082 = vmatprep.mubr.bf16.mxu0 0
        %4083 = vmatmul.mubr.bf16.gmra.mxu0 %v4000
        %v4084 = vpop.f32.mrf.mxu0
        %v4085 = vadd.f32 %v406, %v4084
        %v4086 = vpop.f32.mrf.mxu0
        %v4087 = vpop.f32.mrf.mxu0
        %v4088 = vadd.f32 %v406, %v4087
        %v4089 = vpop.f32.mrf.mxu0
        %4090 = vmatprep.mubr.bf16.mxu0 0
        %4091 = vmatmul.mubr.bf16.gmra.mxu0 %v4001
        %v4092 = vpop.f32.mrf.mxu0
        %v4093 = vadd.f32 %v406, %v4092
        %v4094 = vpop.f32.mrf.mxu0
        %v4095 = vpop.f32.mrf.mxu0
        %v4096 = vadd.f32 %v406, %v4095
        %v4097 = vpop.f32.mrf.mxu0
        %4098 = vdwg.mxu0
        %v4099 = vmul.f32 %v3520, 2.0
        %v4100 = vmul.f32 %v3523, 2.0
        %v4101 = vmul.f32 %v3528, 2.0
        %v4102 = vmul.f32 %v3531, 2.0
        %v4103 = vmul.f32 %v3536, 2.0
        %v4104 = vmul.f32 %v3539, 2.0
        %v4105 = vmul.f32 %v3544, 2.0
        %v4106 = vmul.f32 %v3547, 2.0
        %v4107 = vmul.f32 %v3552, 2.0
        %v4108 = vmul.f32 %v3555, 2.0
        %v4109 = vmul.f32 %v3560, 2.0
        %v4110 = vmul.f32 %v3563, 2.0
        %v4111 = vmul.f32 %v3568, 2.0
        %v4112 = vmul.f32 %v3571, 2.0
        %v4113 = vmul.f32 %v3576, 2.0
        %v4114 = vmul.f32 %v3579, 2.0
        %v4115 = vadd.f32 %v3261, %v4099
        %v4116 = vadd.f32 %v3264, %v4100
        %v4117 = vadd.f32 %v3269, %v4101
        %v4118 = vadd.f32 %v3272, %v4102
        %v4119 = vadd.f32 %v3277, %v4103
        %v4120 = vadd.f32 %v3280, %v4104
        %v4121 = vadd.f32 %v3285, %v4105
        %v4122 = vadd.f32 %v3288, %v4106
        %v4123 = vadd.f32 %v3293, %v4107
        %v4124 = vadd.f32 %v3296, %v4108
        %v4125 = vadd.f32 %v3301, %v4109
        %v4126 = vadd.f32 %v3304, %v4110
        %v4127 = vadd.f32 %v3309, %v4111
        %v4128 = vadd.f32 %v3312, %v4112
        %v4129 = vadd.f32 %v3317, %v4113
        %v4130 = vadd.f32 %v3320, %v4114
        %v4131 = vmul.f32 %v3778, 2.0
        %v4132 = vmul.f32 %v3781, 2.0
        %v4133 = vmul.f32 %v3786, 2.0
        %v4134 = vmul.f32 %v3789, 2.0
        %v4135 = vmul.f32 %v3794, 2.0
        %v4136 = vmul.f32 %v3797, 2.0
        %v4137 = vmul.f32 %v3802, 2.0
        %v4138 = vmul.f32 %v3805, 2.0
        %v4139 = vmul.f32 %v3810, 2.0
        %v4140 = vmul.f32 %v3813, 2.0
        %v4141 = vmul.f32 %v3818, 2.0
        %v4142 = vmul.f32 %v3821, 2.0
        %v4143 = vmul.f32 %v3826, 2.0
        %v4144 = vmul.f32 %v3829, 2.0
        %v4145 = vmul.f32 %v3834, 2.0
        %v4146 = vmul.f32 %v3837, 2.0
        %v4147 = vadd.f32 %v4115, %v4131
        %v4148 = vadd.f32 %v4116, %v4132
        %v4149 = vadd.f32 %v4117, %v4133
        %v4150 = vadd.f32 %v4118, %v4134
        %v4151 = vadd.f32 %v4119, %v4135
        %v4152 = vadd.f32 %v4120, %v4136
        %v4153 = vadd.f32 %v4121, %v4137
        %v4154 = vadd.f32 %v4122, %v4138
        %v4155 = vadd.f32 %v4123, %v4139
        %v4156 = vadd.f32 %v4124, %v4140
        %v4157 = vadd.f32 %v4125, %v4141
        %v4158 = vadd.f32 %v4126, %v4142
        %v4159 = vadd.f32 %v4127, %v4143
        %v4160 = vadd.f32 %v4128, %v4144
        %v4161 = vadd.f32 %v4129, %v4145
        %v4162 = vadd.f32 %v4130, %v4146
        %v4163 = vadd.f32 %v4147, %v4037
        %v4164 = vadd.f32 %v4148, %v4040
        %v4165 = vadd.f32 %v4149, %v4045
        %v4166 = vadd.f32 %v4150, %v4048
        %v4167 = vadd.f32 %v4151, %v4053
        %v4168 = vadd.f32 %v4152, %v4056
        %v4169 = vadd.f32 %v4153, %v4061
        %v4170 = vadd.f32 %v4154, %v4064
        %v4171 = vadd.f32 %v4155, %v4069
        %v4172 = vadd.f32 %v4156, %v4072
        %v4173 = vadd.f32 %v4157, %v4077
        %v4174 = vadd.f32 %v4158, %v4080
        %v4175 = vadd.f32 %v4159, %v4085
        %v4176 = vadd.f32 %v4160, %v4088
        %v4177 = vadd.f32 %v4161, %v4093
        %v4178 = vadd.f32 %v4162, %v4096
        %v4179 = vstv %s2968
        %v4180 = vmul.f32 %v4179, %v4163
        %v4181 = vmul.f32 %v4179, %v4164
        %v4182 = vmul.f32 %v4179, %v4165
        %v4183 = vmul.f32 %v4179, %v4166
        %v4184 = vmul.f32 %v4179, %v4167
        %v4185 = vmul.f32 %v4179, %v4168
        %v4186 = vmul.f32 %v4179, %v4169
        %v4187 = vmul.f32 %v4179, %v4170
        %v4188 = vmul.f32 %v4179, %v4171
        %v4189 = vmul.f32 %v4179, %v4172
        %v4190 = vmul.f32 %v4179, %v4173
        %v4191 = vmul.f32 %v4179, %v4174
        %v4192 = vmul.f32 %v4179, %v4175
        %v4193 = vmul.f32 %v4179, %v4176
        %v4194 = vmul.f32 %v4179, %v4177
        %v4195 = vmul.f32 %v4179, %v4178
        %v4196 = vadd.f32 %v2933, %v4180
        %v4197 = vadd.f32 %v2934, %v4181
        %v4198 = vadd.f32 %v2935, %v4182
        %v4199 = vadd.f32 %v2936, %v4183
        %v4200 = vadd.f32 %v2937, %v4184
        %v4201 = vadd.f32 %v2938, %v4185
        %v4202 = vadd.f32 %v2939, %v4186
        %v4203 = vadd.f32 %v2940, %v4187
        %v4204 = vadd.f32 %v2941, %v4188
        %v4205 = vadd.f32 %v2942, %v4189
        %v4206 = vadd.f32 %v2943, %v4190
        %v4207 = vadd.f32 %v2944, %v4191
        %v4208 = vadd.f32 %v2945, %v4192
        %v4209 = vadd.f32 %v2946, %v4193
        %v4210 = vadd.f32 %v2947, %v4194
        %v4211 = vadd.f32 %v2948, %v4195
        %s4212 = scalar_lea.vmem %s390, 384 [#allocation14]
        %4213 = vst [vmem:[%s4212] sm:$0xff] %v4196
        %4214 = vst [vmem:[%s4212 + $0x8] sm:$0xff] %v4197
        %4215 = vst [vmem:[%s4212 + $0x10] sm:$0xff] %v4198
        %4216 = vst [vmem:[%s4212 + $0x18] sm:$0xff] %v4199
        %4217 = vst [vmem:[%s4212 + $0x20] sm:$0xff] %v4200
        %4218 = vst [vmem:[%s4212 + $0x28] sm:$0xff] %v4201
        %4219 = vst [vmem:[%s4212 + $0x30] sm:$0xff] %v4202
        %4220 = vst [vmem:[%s4212 + $0x38] sm:$0xff] %v4203
        %4221 = vst [vmem:[%s4212 + $0x40] sm:$0xff] %v4204
        %4222 = vst [vmem:[%s4212 + $0x48] sm:$0xff] %v4205
        %4223 = vst [vmem:[%s4212 + $0x50] sm:$0xff] %v4206
        %4224 = vst [vmem:[%s4212 + $0x58] sm:$0xff] %v4207
        %4225 = vst [vmem:[%s4212 + $0x60] sm:$0xff] %v4208
        %4226 = vst [vmem:[%s4212 + $0x68] sm:$0xff] %v4209
        %4227 = vst [vmem:[%s4212 + $0x70] sm:$0xff] %v4210
        %4228 = vst [vmem:[%s4212 + $0x78] sm:$0xff] %v4211
        %s4229 = sld [smem:[#allocation2 + $0x3]]
        %s4230 = sld [smem:[#allocation7 + $0x3]]
        %s4231 = sld [smem:[#allocation8 + $0x3]]
        %v4232 = vpack.c.bf16 %v4197, %v4196
        %v4233 = vpack.c.bf16 %v4199, %v4198
        %v4234 = vpack.c.bf16 %v4201, %v4200
        %v4235 = vpack.c.bf16 %v4203, %v4202
        %v4236 = vpack.c.bf16 %v4205, %v4204
        %v4237 = vpack.c.bf16 %v4207, %v4206
        %v4238 = vpack.c.bf16 %v4209, %v4208
        %v4239 = vpack.c.bf16 %v4211, %v4210
        %v4240 = vld [vmem:[#allocation11] sm:$0xf]
        %v4241 = vld [vmem:[#allocation11 + $0x4] sm:$0xf]
        %v4242 = vld [vmem:[#allocation11 + $0x8] sm:$0xf]
        %v4243 = vld [vmem:[#allocation11 + $0xc] sm:$0xf]
        %v4244 = vld [vmem:[#allocation11 + $0x10] sm:$0xf]
        %v4245 = vld [vmem:[#allocation11 + $0x14] sm:$0xf]
        %v4246 = vld [vmem:[#allocation11 + $0x18] sm:$0xf]
        %v4247 = vld [vmem:[#allocation11 + $0x1c] sm:$0xf]
        %v4248 = vld [vmem:[#allocation11 + $0x20] sm:$0xf]
        %v4249 = vld [vmem:[#allocation11 + $0x24] sm:$0xf]
        %v4250 = vld [vmem:[#allocation11 + $0x28] sm:$0xf]
        %v4251 = vld [vmem:[#allocation11 + $0x2c] sm:$0xf]
        %v4252 = vld [vmem:[#allocation11 + $0x30] sm:$0xf]
        %v4253 = vld [vmem:[#allocation11 + $0x34] sm:$0xf]
        %v4254 = vld [vmem:[#allocation11 + $0x38] sm:$0xf]
        %v4255 = vld [vmem:[#allocation11 + $0x3c] sm:$0xf]
        %v4272 = vunpack.c.l.b16 %v4240
        %v4273 = vunpack.c.l.b16 %v4241
        %v4274 = vunpack.c.l.b16 %v4242
        %v4275 = vunpack.c.l.b16 %v4243
        %v4276 = vunpack.c.l.b16 %v4244
        %v4277 = vunpack.c.l.b16 %v4245
        %v4278 = vunpack.c.l.b16 %v4246
        %v4279 = vunpack.c.l.b16 %v4247
        %v4280 = vunpack.c.l.b16 %v4248
        %v4281 = vunpack.c.l.b16 %v4249
        %v4282 = vunpack.c.l.b16 %v4250
        %v4283 = vunpack.c.l.b16 %v4251
        %v4284 = vunpack.c.l.b16 %v4252
        %v4285 = vunpack.c.l.b16 %v4253
        %v4286 = vunpack.c.l.b16 %v4254
        %v4287 = vunpack.c.l.b16 %v4255
        %v4288 = vpack.c.b16 %v4273, %v4272
        %v4289 = vpack.c.b16 %v4275, %v4274
        %v4290 = vpack.c.b16 %v4277, %v4276
        %v4291 = vpack.c.b16 %v4279, %v4278
        %v4292 = vpack.c.b16 %v4281, %v4280
        %v4293 = vpack.c.b16 %v4283, %v4282
        %v4294 = vpack.c.b16 %v4285, %v4284
        %v4295 = vpack.c.b16 %v4287, %v4286
        %4304 = vmatprep.subr.bf16.mxu0 0
        %4305 = vmatpush1.bf16.msra.mxu0 %v4295
        %4306 = vmatprep.subr.bf16.mxu0 0
        %4307 = vmatpush1.bf16.msra.mxu0 %v4294
        %4308 = vmatprep.subr.bf16.mxu0 0
        %4309 = vmatpush1.bf16.msra.mxu0 %v4293
        %4310 = vmatprep.subr.bf16.mxu0 0
        %4311 = vmatpush1.bf16.msra.mxu0 %v4292
        %4312 = vmatprep.subr.bf16.mxu0 0
        %4313 = vmatpush1.bf16.msra.mxu0 %v4291
        %4314 = vmatprep.subr.bf16.mxu0 0
        %4315 = vmatpush1.bf16.msra.mxu0 %v4290
        %4316 = vmatprep.subr.bf16.mxu0 0
        %4317 = vmatpush1.bf16.msra.mxu0 %v4289
        %4318 = vmatprep.subr.bf16.mxu0 0
        %4319 = vmatpush1.bf16.msra.mxu0 %v4288
        %4320 = vmatprep.subr.bf16.mxu0 0
        %4321 = vmatpush2.bf16.msra.mxu0 0
        %4322 = vmatprep.subr.bf16.mxu0 0
        %4323 = vmatpush2.bf16.msra.mxu0 0
        %4324 = vmatprep.subr.bf16.mxu0 0
        %4325 = vmatpush2.bf16.msra.mxu0 0
        %4326 = vmatprep.subr.bf16.mxu0 0
        %4327 = vmatpush2.bf16.msra.mxu0 0
        %4328 = vmatprep.subr.bf16.mxu0 0
        %4329 = vmatpush2.bf16.msra.mxu0 0
        %4330 = vmatprep.subr.bf16.mxu0 0
        %4331 = vmatpush2.bf16.msra.mxu0 0
        %4332 = vmatprep.subr.bf16.mxu0 0
        %4333 = vmatpush2.bf16.msra.mxu0 0
        %4334 = vmatprep.subr.bf16.mxu0 0
        %4335 = vmatpush2.bf16.msra.mxu0 0
        %4336 = vmatprep.mubr.bf16.mxu0 0
        %4337 = vmatmul.mubr.bf16.gmra.mxu0 %v4232
        %v4338 = vpop.f32.mrf.mxu0
        %v4339 = vadd.f32 %v399, %v4338
        %v4340 = vpop.f32.mrf.mxu0
        %v4341 = vpop.f32.mrf.mxu0
        %v4342 = vadd.f32 %v399, %v4341
        %v4343 = vpop.f32.mrf.mxu0
        %4344 = vmatprep.mubr.bf16.mxu0 0
        %4345 = vmatmul.mubr.bf16.gmra.mxu0 %v4233
        %v4346 = vpop.f32.mrf.mxu0
        %v4347 = vadd.f32 %v399, %v4346
        %v4348 = vpop.f32.mrf.mxu0
        %v4349 = vpop.f32.mrf.mxu0
        %v4350 = vadd.f32 %v399, %v4349
        %v4351 = vpop.f32.mrf.mxu0
        %4352 = vmatprep.mubr.bf16.mxu0 0
        %4353 = vmatmul.mubr.bf16.gmra.mxu0 %v4234
        %v4354 = vpop.f32.mrf.mxu0
        %v4355 = vadd.f32 %v399, %v4354
        %v4356 = vpop.f32.mrf.mxu0
        %v4357 = vpop.f32.mrf.mxu0
        %v4358 = vadd.f32 %v399, %v4357
        %v4359 = vpop.f32.mrf.mxu0
        %4360 = vmatprep.mubr.bf16.mxu0 0
        %4361 = vmatmul.mubr.bf16.gmra.mxu0 %v4235
        %v4362 = vpop.f32.mrf.mxu0
        %v4363 = vadd.f32 %v399, %v4362
        %v4364 = vpop.f32.mrf.mxu0
        %v4365 = vpop.f32.mrf.mxu0
        %v4366 = vadd.f32 %v399, %v4365
        %v4367 = vpop.f32.mrf.mxu0
        %4368 = vmatprep.mubr.bf16.mxu0 0
        %4369 = vmatmul.mubr.bf16.gmra.mxu0 %v4236
        %v4370 = vpop.f32.mrf.mxu0
        %v4371 = vadd.f32 %v399, %v4370
        %v4372 = vpop.f32.mrf.mxu0
        %v4373 = vpop.f32.mrf.mxu0
        %v4374 = vadd.f32 %v399, %v4373
        %v4375 = vpop.f32.mrf.mxu0
        %4376 = vmatprep.mubr.bf16.mxu0 0
        %4377 = vmatmul.mubr.bf16.gmra.mxu0 %v4237
        %v4378 = vpop.f32.mrf.mxu0
        %v4379 = vadd.f32 %v399, %v4378
        %v4380 = vpop.f32.mrf.mxu0
        %v4381 = vpop.f32.mrf.mxu0
        %v4382 = vadd.f32 %v399, %v4381
        %v4383 = vpop.f32.mrf.mxu0
        %4384 = vmatprep.mubr.bf16.mxu0 0
        %4385 = vmatmul.mubr.bf16.gmra.mxu0 %v4238
        %v4386 = vpop.f32.mrf.mxu0
        %v4387 = vadd.f32 %v399, %v4386
        %v4388 = vpop.f32.mrf.mxu0
        %v4389 = vpop.f32.mrf.mxu0
        %v4390 = vadd.f32 %v399, %v4389
        %v4391 = vpop.f32.mrf.mxu0
        %4392 = vmatprep.mubr.bf16.mxu0 0
        %4393 = vmatmul.mubr.bf16.gmra.mxu0 %v4239
        %v4394 = vpop.f32.mrf.mxu0
        %v4395 = vadd.f32 %v399, %v4394
        %v4396 = vpop.f32.mrf.mxu0
        %v4397 = vpop.f32.mrf.mxu0
        %v4398 = vadd.f32 %v399, %v4397
        %v4399 = vpop.f32.mrf.mxu0
        %4400 = vdwg.mxu0
        %v4401 = vtanh.pop %v4339
        %v4402 = vtanh.pop %v4342
        %v4403 = vtanh.pop %v4347
        %v4404 = vtanh.pop %v4350
        %v4405 = vtanh.pop %v4355
        %v4406 = vtanh.pop %v4358
        %v4407 = vtanh.pop %v4363
        %v4408 = vtanh.pop %v4366
        %v4409 = vtanh.pop %v4371
        %v4410 = vtanh.pop %v4374
        %v4411 = vtanh.pop %v4379
        %v4412 = vtanh.pop %v4382
        %v4413 = vtanh.pop %v4387
        %v4414 = vtanh.pop %v4390
        %v4415 = vtanh.pop %v4395
        %v4416 = vtanh.pop %v4398
        %v4417 = vpack.c.bf16 %v4402, %v4401
        %v4418 = vpack.c.bf16 %v4404, %v4403
        %v4419 = vpack.c.bf16 %v4406, %v4405
        %v4420 = vpack.c.bf16 %v4408, %v4407
        %v4421 = vpack.c.bf16 %v4410, %v4409
        %v4422 = vpack.c.bf16 %v4412, %v4411
        %v4423 = vpack.c.bf16 %v4414, %v4413
        %v4424 = vpack.c.bf16 %v4416, %v4415
        %v4425 = vld [vmem:[#allocation13] sm:$0xf]
        %v4426 = vld [vmem:[#allocation13 + $0x4] sm:$0xf]
        %v4427 = vld [vmem:[#allocation13 + $0x8] sm:$0xf]
        %v4428 = vld [vmem:[#allocation13 + $0xc] sm:$0xf]
        %v4429 = vld [vmem:[#allocation13 + $0x10] sm:$0xf]
        %v4430 = vld [vmem:[#allocation13 + $0x14] sm:$0xf]
        %v4431 = vld [vmem:[#allocation13 + $0x18] sm:$0xf]
        %v4432 = vld [vmem:[#allocation13 + $0x1c] sm:$0xf]
        %v4433 = vld [vmem:[#allocation13 + $0x20] sm:$0xf]
        %v4434 = vld [vmem:[#allocation13 + $0x24] sm:$0xf]
        %v4435 = vld [vmem:[#allocation13 + $0x28] sm:$0xf]
        %v4436 = vld [vmem:[#allocation13 + $0x2c] sm:$0xf]
        %v4437 = vld [vmem:[#allocation13 + $0x30] sm:$0xf]
        %v4438 = vld [vmem:[#allocation13 + $0x34] sm:$0xf]
        %v4439 = vld [vmem:[#allocation13 + $0x38] sm:$0xf]
        %v4440 = vld [vmem:[#allocation13 + $0x3c] sm:$0xf]
        %v4457 = vunpack.c.l.b16 %v4425
        %v4458 = vunpack.c.l.b16 %v4426
        %v4459 = vunpack.c.l.b16 %v4427
        %v4460 = vunpack.c.l.b16 %v4428
        %v4461 = vunpack.c.l.b16 %v4429
        %v4462 = vunpack.c.l.b16 %v4430
        %v4463 = vunpack.c.l.b16 %v4431
        %v4464 = vunpack.c.l.b16 %v4432
        %v4465 = vunpack.c.l.b16 %v4433
        %v4466 = vunpack.c.l.b16 %v4434
        %v4467 = vunpack.c.l.b16 %v4435
        %v4468 = vunpack.c.l.b16 %v4436
        %v4469 = vunpack.c.l.b16 %v4437
        %v4470 = vunpack.c.l.b16 %v4438
        %v4471 = vunpack.c.l.b16 %v4439
        %v4472 = vunpack.c.l.b16 %v4440
        %v4473 = vpack.c.b16 %v4458, %v4457
        %v4474 = vpack.c.b16 %v4460, %v4459
        %v4475 = vpack.c.b16 %v4462, %v4461
        %v4476 = vpack.c.b16 %v4464, %v4463
        %v4477 = vpack.c.b16 %v4466, %v4465
        %v4478 = vpack.c.b16 %v4468, %v4467
        %v4479 = vpack.c.b16 %v4470, %v4469
        %v4480 = vpack.c.b16 %v4472, %v4471
        %4489 = vmatprep.subr.bf16.mxu0 0
        %4490 = vmatpush1.bf16.msra.mxu0 %v4480
        %4491 = vmatprep.subr.bf16.mxu0 0
        %4492 = vmatpush1.bf16.msra.mxu0 %v4479
        %4493 = vmatprep.subr.bf16.mxu0 0
        %4494 = vmatpush1.bf16.msra.mxu0 %v4478
        %4495 = vmatprep.subr.bf16.mxu0 0
        %4496 = vmatpush1.bf16.msra.mxu0 %v4477
        %4497 = vmatprep.subr.bf16.mxu0 0
        %4498 = vmatpush1.bf16.msra.mxu0 %v4476
        %4499 = vmatprep.subr.bf16.mxu0 0
        %4500 = vmatpush1.bf16.msra.mxu0 %v4475
        %4501 = vmatprep.subr.bf16.mxu0 0
        %4502 = vmatpush1.bf16.msra.mxu0 %v4474
        %4503 = vmatprep.subr.bf16.mxu0 0
        %4504 = vmatpush1.bf16.msra.mxu0 %v4473
        %4505 = vmatprep.subr.bf16.mxu0 0
        %4506 = vmatpush2.bf16.msra.mxu0 0
        %4507 = vmatprep.subr.bf16.mxu0 0
        %4508 = vmatpush2.bf16.msra.mxu0 0
        %4509 = vmatprep.subr.bf16.mxu0 0
        %4510 = vmatpush2.bf16.msra.mxu0 0
        %4511 = vmatprep.subr.bf16.mxu0 0
        %4512 = vmatpush2.bf16.msra.mxu0 0
        %4513 = vmatprep.subr.bf16.mxu0 0
        %4514 = vmatpush2.bf16.msra.mxu0 0
        %4515 = vmatprep.subr.bf16.mxu0 0
        %4516 = vmatpush2.bf16.msra.mxu0 0
        %4517 = vmatprep.subr.bf16.mxu0 0
        %4518 = vmatpush2.bf16.msra.mxu0 0
        %4519 = vmatprep.subr.bf16.mxu0 0
        %4520 = vmatpush2.bf16.msra.mxu0 0
        %4521 = vmatprep.mubr.bf16.mxu0 0
        %4522 = vmatmul.mubr.bf16.gmra.mxu0 %v4417
        %v4523 = vpop.f32.mrf.mxu0
        %v4524 = vadd.f32 %v406, %v4523
        %v4525 = vpop.f32.mrf.mxu0
        %v4526 = vpop.f32.mrf.mxu0
        %v4527 = vadd.f32 %v406, %v4526
        %v4528 = vpop.f32.mrf.mxu0
        %4529 = vmatprep.mubr.bf16.mxu0 0
        %4530 = vmatmul.mubr.bf16.gmra.mxu0 %v4418
        %v4531 = vpop.f32.mrf.mxu0
        %v4532 = vadd.f32 %v406, %v4531
        %v4533 = vpop.f32.mrf.mxu0
        %v4534 = vpop.f32.mrf.mxu0
        %v4535 = vadd.f32 %v406, %v4534
        %v4536 = vpop.f32.mrf.mxu0
        %4537 = vmatprep.mubr.bf16.mxu0 0
        %4538 = vmatmul.mubr.bf16.gmra.mxu0 %v4419
        %v4539 = vpop.f32.mrf.mxu0
        %v4540 = vadd.f32 %v406, %v4539
        %v4541 = vpop.f32.mrf.mxu0
        %v4542 = vpop.f32.mrf.mxu0
        %v4543 = vadd.f32 %v406, %v4542
        %v4544 = vpop.f32.mrf.mxu0
        %4545 = vmatprep.mubr.bf16.mxu0 0
        %4546 = vmatmul.mubr.bf16.gmra.mxu0 %v4420
        %v4547 = vpop.f32.mrf.mxu0
        %v4548 = vadd.f32 %v406, %v4547
        %v4549 = vpop.f32.mrf.mxu0
        %v4550 = vpop.f32.mrf.mxu0
        %v4551 = vadd.f32 %v406, %v4550
        %v4552 = vpop.f32.mrf.mxu0
        %4553 = vmatprep.mubr.bf16.mxu0 0
        %4554 = vmatmul.mubr.bf16.gmra.mxu0 %v4421
        %v4555 = vpop.f32.mrf.mxu0
        %v4556 = vadd.f32 %v406, %v4555
        %v4557 = vpop.f32.mrf.mxu0
        %v4558 = vpop.f32.mrf.mxu0
        %v4559 = vadd.f32 %v406, %v4558
        %v4560 = vpop.f32.mrf.mxu0
        %4561 = vmatprep.mubr.bf16.mxu0 0
        %4562 = vmatmul.mubr.bf16.gmra.mxu0 %v4422
        %v4563 = vpop.f32.mrf.mxu0
        %v4564 = vadd.f32 %v406, %v4563
        %v4565 = vpop.f32.mrf.mxu0
        %v4566 = vpop.f32.mrf.mxu0
        %v4567 = vadd.f32 %v406, %v4566
        %v4568 = vpop.f32.mrf.mxu0
        %4569 = vmatprep.mubr.bf16.mxu0 0
        %4570 = vmatmul.mubr.bf16.gmra.mxu0 %v4423
        %v4571 = vpop.f32.mrf.mxu0
        %v4572 = vadd.f32 %v406, %v4571
        %v4573 = vpop.f32.mrf.mxu0
        %v4574 = vpop.f32.mrf.mxu0
        %v4575 = vadd.f32 %v406, %v4574
        %v4576 = vpop.f32.mrf.mxu0
        %4577 = vmatprep.mubr.bf16.mxu0 0
        %4578 = vmatmul.mubr.bf16.gmra.mxu0 %v4424
        %v4579 = vpop.f32.mrf.mxu0
        %v4580 = vadd.f32 %v406, %v4579
        %v4581 = vpop.f32.mrf.mxu0
        %v4582 = vpop.f32.mrf.mxu0
        %v4583 = vadd.f32 %v406, %v4582
        %v4584 = vpop.f32.mrf.mxu0
        %4585 = vdwg.mxu0
        %v4586 = vstv %s4230
        %v4587 = vmul.f32 %v4586, %v4524
        %v4588 = vmul.f32 %v4586, %v4527
        %v4589 = vmul.f32 %v4586, %v4532
        %v4590 = vmul.f32 %v4586, %v4535
        %v4591 = vmul.f32 %v4586, %v4540
        %v4592 = vmul.f32 %v4586, %v4543
        %v4593 = vmul.f32 %v4586, %v4548
        %v4594 = vmul.f32 %v4586, %v4551
        %v4595 = vmul.f32 %v4586, %v4556
        %v4596 = vmul.f32 %v4586, %v4559
        %v4597 = vmul.f32 %v4586, %v4564
        %v4598 = vmul.f32 %v4586, %v4567
        %v4599 = vmul.f32 %v4586, %v4572
        %v4600 = vmul.f32 %v4586, %v4575
        %v4601 = vmul.f32 %v4586, %v4580
        %v4602 = vmul.f32 %v4586, %v4583
        %v4603 = vadd.f32 %v4196, %v4587
        %v4604 = vadd.f32 %v4197, %v4588
        %v4605 = vadd.f32 %v4198, %v4589
        %v4606 = vadd.f32 %v4199, %v4590
        %v4607 = vadd.f32 %v4200, %v4591
        %v4608 = vadd.f32 %v4201, %v4592
        %v4609 = vadd.f32 %v4202, %v4593
        %v4610 = vadd.f32 %v4203, %v4594
        %v4611 = vadd.f32 %v4204, %v4595
        %v4612 = vadd.f32 %v4205, %v4596
        %v4613 = vadd.f32 %v4206, %v4597
        %v4614 = vadd.f32 %v4207, %v4598
        %v4615 = vadd.f32 %v4208, %v4599
        %v4616 = vadd.f32 %v4209, %v4600
        %v4617 = vadd.f32 %v4210, %v4601
        %v4618 = vadd.f32 %v4211, %v4602
        %v4619 = vpack.c.bf16 %v4604, %v4603
        %v4620 = vpack.c.bf16 %v4606, %v4605
        %v4621 = vpack.c.bf16 %v4608, %v4607
        %v4622 = vpack.c.bf16 %v4610, %v4609
        %v4623 = vpack.c.bf16 %v4612, %v4611
        %v4624 = vpack.c.bf16 %v4614, %v4613
        %v4625 = vpack.c.bf16 %v4616, %v4615
        %v4626 = vpack.c.bf16 %v4618, %v4617
        %4627 = vmatprep.subr.bf16.mxu0 0
        %4628 = vmatpush1.bf16.msra.mxu0 %v4295
        %4629 = vmatprep.subr.bf16.mxu0 0
        %4630 = vmatpush1.bf16.msra.mxu0 %v4294
        %4631 = vmatprep.subr.bf16.mxu0 0
        %4632 = vmatpush1.bf16.msra.mxu0 %v4293
        %4633 = vmatprep.subr.bf16.mxu0 0
        %4634 = vmatpush1.bf16.msra.mxu0 %v4292
        %4635 = vmatprep.subr.bf16.mxu0 0
        %4636 = vmatpush1.bf16.msra.mxu0 %v4291
        %4637 = vmatprep.subr.bf16.mxu0 0
        %4638 = vmatpush1.bf16.msra.mxu0 %v4290
        %4639 = vmatprep.subr.bf16.mxu0 0
        %4640 = vmatpush1.bf16.msra.mxu0 %v4289
        %4641 = vmatprep.subr.bf16.mxu0 0
        %4642 = vmatpush1.bf16.msra.mxu0 %v4288
        %4643 = vmatprep.subr.bf16.mxu0 0
        %4644 = vmatpush2.bf16.msra.mxu0 0
        %4645 = vmatprep.subr.bf16.mxu0 0
        %4646 = vmatpush2.bf16.msra.mxu0 0
        %4647 = vmatprep.subr.bf16.mxu0 0
        %4648 = vmatpush2.bf16.msra.mxu0 0
        %4649 = vmatprep.subr.bf16.mxu0 0
        %4650 = vmatpush2.bf16.msra.mxu0 0
        %4651 = vmatprep.subr.bf16.mxu0 0
        %4652 = vmatpush2.bf16.msra.mxu0 0
        %4653 = vmatprep.subr.bf16.mxu0 0
        %4654 = vmatpush2.bf16.msra.mxu0 0
        %4655 = vmatprep.subr.bf16.mxu0 0
        %4656 = vmatpush2.bf16.msra.mxu0 0
        %4657 = vmatprep.subr.bf16.mxu0 0
        %4658 = vmatpush2.bf16.msra.mxu0 0
        %4659 = vmatprep.mubr.bf16.mxu0 0
        %4660 = vmatmul.mubr.bf16.gmra.mxu0 %v4619
        %v4661 = vpop.f32.mrf.mxu0
        %v4662 = vadd.f32 %v399, %v4661
        %v4663 = vpop.f32.mrf.mxu0
        %v4664 = vpop.f32.mrf.mxu0
        %v4665 = vadd.f32 %v399, %v4664
        %v4666 = vpop.f32.mrf.mxu0
        %4667 = vmatprep.mubr.bf16.mxu0 0
        %4668 = vmatmul.mubr.bf16.gmra.mxu0 %v4620
        %v4669 = vpop.f32.mrf.mxu0
        %v4670 = vadd.f32 %v399, %v4669
        %v4671 = vpop.f32.mrf.mxu0
        %v4672 = vpop.f32.mrf.mxu0
        %v4673 = vadd.f32 %v399, %v4672
        %v4674 = vpop.f32.mrf.mxu0
        %4675 = vmatprep.mubr.bf16.mxu0 0
        %4676 = vmatmul.mubr.bf16.gmra.mxu0 %v4621
        %v4677 = vpop.f32.mrf.mxu0
        %v4678 = vadd.f32 %v399, %v4677
        %v4679 = vpop.f32.mrf.mxu0
        %v4680 = vpop.f32.mrf.mxu0
        %v4681 = vadd.f32 %v399, %v4680
        %v4682 = vpop.f32.mrf.mxu0
        %4683 = vmatprep.mubr.bf16.mxu0 0
        %4684 = vmatmul.mubr.bf16.gmra.mxu0 %v4622
        %v4685 = vpop.f32.mrf.mxu0
        %v4686 = vadd.f32 %v399, %v4685
        %v4687 = vpop.f32.mrf.mxu0
        %v4688 = vpop.f32.mrf.mxu0
        %v4689 = vadd.f32 %v399, %v4688
        %v4690 = vpop.f32.mrf.mxu0
        %4691 = vmatprep.mubr.bf16.mxu0 0
        %4692 = vmatmul.mubr.bf16.gmra.mxu0 %v4623
        %v4693 = vpop.f32.mrf.mxu0
        %v4694 = vadd.f32 %v399, %v4693
        %v4695 = vpop.f32.mrf.mxu0
        %v4696 = vpop.f32.mrf.mxu0
        %v4697 = vadd.f32 %v399, %v4696
        %v4698 = vpop.f32.mrf.mxu0
        %4699 = vmatprep.mubr.bf16.mxu0 0
        %4700 = vmatmul.mubr.bf16.gmra.mxu0 %v4624
        %v4701 = vpop.f32.mrf.mxu0
        %v4702 = vadd.f32 %v399, %v4701
        %v4703 = vpop.f32.mrf.mxu0
        %v4704 = vpop.f32.mrf.mxu0
        %v4705 = vadd.f32 %v399, %v4704
        %v4706 = vpop.f32.mrf.mxu0
        %4707 = vmatprep.mubr.bf16.mxu0 0
        %4708 = vmatmul.mubr.bf16.gmra.mxu0 %v4625
        %v4709 = vpop.f32.mrf.mxu0
        %v4710 = vadd.f32 %v399, %v4709
        %v4711 = vpop.f32.mrf.mxu0
        %v4712 = vpop.f32.mrf.mxu0
        %v4713 = vadd.f32 %v399, %v4712
        %v4714 = vpop.f32.mrf.mxu0
        %4715 = vmatprep.mubr.bf16.mxu0 0
        %4716 = vmatmul.mubr.bf16.gmra.mxu0 %v4626
        %v4717 = vpop.f32.mrf.mxu0
        %v4718 = vadd.f32 %v399, %v4717
        %v4719 = vpop.f32.mrf.mxu0
        %v4720 = vpop.f32.mrf.mxu0
        %v4721 = vadd.f32 %v399, %v4720
        %v4722 = vpop.f32.mrf.mxu0
        %4723 = vdwg.mxu0
        %v4724 = vtanh.pop %v4662
        %v4725 = vtanh.pop %v4665
        %v4726 = vtanh.pop %v4670
        %v4727 = vtanh.pop %v4673
        %v4728 = vtanh.pop %v4678
        %v4729 = vtanh.pop %v4681
        %v4730 = vtanh.pop %v4686
        %v4731 = vtanh.pop %v4689
        %v4732 = vtanh.pop %v4694
        %v4733 = vtanh.pop %v4697
        %v4734 = vtanh.pop %v4702
        %v4735 = vtanh.pop %v4705
        %v4736 = vtanh.pop %v4710
        %v4737 = vtanh.pop %v4713
        %v4738 = vtanh.pop %v4718
        %v4739 = vtanh.pop %v4721
        %v4740 = vpack.c.bf16 %v4725, %v4724
        %v4741 = vpack.c.bf16 %v4727, %v4726
        %v4742 = vpack.c.bf16 %v4729, %v4728
        %v4743 = vpack.c.bf16 %v4731, %v4730
        %v4744 = vpack.c.bf16 %v4733, %v4732
        %v4745 = vpack.c.bf16 %v4735, %v4734
        %v4746 = vpack.c.bf16 %v4737, %v4736
        %v4747 = vpack.c.bf16 %v4739, %v4738
        %4748 = vmatprep.subr.bf16.mxu0 0
        %4749 = vmatpush1.bf16.msra.mxu0 %v4480
        %4750 = vmatprep.subr.bf16.mxu0 0
        %4751 = vmatpush1.bf16.msra.mxu0 %v4479
        %4752 = vmatprep.subr.bf16.mxu0 0
        %4753 = vmatpush1.bf16.msra.mxu0 %v4478
        %4754 = vmatprep.subr.bf16.mxu0 0
        %4755 = vmatpush1.bf16.msra.mxu0 %v4477
        %4756 = vmatprep.subr.bf16.mxu0 0
        %4757 = vmatpush1.bf16.msra.mxu0 %v4476
        %4758 = vmatprep.subr.bf16.mxu0 0
        %4759 = vmatpush1.bf16.msra.mxu0 %v4475
        %4760 = vmatprep.subr.bf16.mxu0 0
        %4761 = vmatpush1.bf16.msra.mxu0 %v4474
        %4762 = vmatprep.subr.bf16.mxu0 0
        %4763 = vmatpush1.bf16.msra.mxu0 %v4473
        %4764 = vmatprep.subr.bf16.mxu0 0
        %4765 = vmatpush2.bf16.msra.mxu0 0
        %4766 = vmatprep.subr.bf16.mxu0 0
        %4767 = vmatpush2.bf16.msra.mxu0 0
        %4768 = vmatprep.subr.bf16.mxu0 0
        %4769 = vmatpush2.bf16.msra.mxu0 0
        %4770 = vmatprep.subr.bf16.mxu0 0
        %4771 = vmatpush2.bf16.msra.mxu0 0
        %4772 = vmatprep.subr.bf16.mxu0 0
        %4773 = vmatpush2.bf16.msra.mxu0 0
        %4774 = vmatprep.subr.bf16.mxu0 0
        %4775 = vmatpush2.bf16.msra.mxu0 0
        %4776 = vmatprep.subr.bf16.mxu0 0
        %4777 = vmatpush2.bf16.msra.mxu0 0
        %4778 = vmatprep.subr.bf16.mxu0 0
        %4779 = vmatpush2.bf16.msra.mxu0 0
        %4780 = vmatprep.mubr.bf16.mxu0 0
        %4781 = vmatmul.mubr.bf16.gmra.mxu0 %v4740
        %v4782 = vpop.f32.mrf.mxu0
        %v4783 = vadd.f32 %v406, %v4782
        %v4784 = vpop.f32.mrf.mxu0
        %v4785 = vpop.f32.mrf.mxu0
        %v4786 = vadd.f32 %v406, %v4785
        %v4787 = vpop.f32.mrf.mxu0
        %4788 = vmatprep.mubr.bf16.mxu0 0
        %4789 = vmatmul.mubr.bf16.gmra.mxu0 %v4741
        %v4790 = vpop.f32.mrf.mxu0
        %v4791 = vadd.f32 %v406, %v4790
        %v4792 = vpop.f32.mrf.mxu0
        %v4793 = vpop.f32.mrf.mxu0
        %v4794 = vadd.f32 %v406, %v4793
        %v4795 = vpop.f32.mrf.mxu0
        %4796 = vmatprep.mubr.bf16.mxu0 0
        %4797 = vmatmul.mubr.bf16.gmra.mxu0 %v4742
        %v4798 = vpop.f32.mrf.mxu0
        %v4799 = vadd.f32 %v406, %v4798
        %v4800 = vpop.f32.mrf.mxu0
        %v4801 = vpop.f32.mrf.mxu0
        %v4802 = vadd.f32 %v406, %v4801
        %v4803 = vpop.f32.mrf.mxu0
        %4804 = vmatprep.mubr.bf16.mxu0 0
        %4805 = vmatmul.mubr.bf16.gmra.mxu0 %v4743
        %v4806 = vpop.f32.mrf.mxu0
        %v4807 = vadd.f32 %v406, %v4806
        %v4808 = vpop.f32.mrf.mxu0
        %v4809 = vpop.f32.mrf.mxu0
        %v4810 = vadd.f32 %v406, %v4809
        %v4811 = vpop.f32.mrf.mxu0
        %4812 = vmatprep.mubr.bf16.mxu0 0
        %4813 = vmatmul.mubr.bf16.gmra.mxu0 %v4744
        %v4814 = vpop.f32.mrf.mxu0
        %v4815 = vadd.f32 %v406, %v4814
        %v4816 = vpop.f32.mrf.mxu0
        %v4817 = vpop.f32.mrf.mxu0
        %v4818 = vadd.f32 %v406, %v4817
        %v4819 = vpop.f32.mrf.mxu0
        %4820 = vmatprep.mubr.bf16.mxu0 0
        %4821 = vmatmul.mubr.bf16.gmra.mxu0 %v4745
        %v4822 = vpop.f32.mrf.mxu0
        %v4823 = vadd.f32 %v406, %v4822
        %v4824 = vpop.f32.mrf.mxu0
        %v4825 = vpop.f32.mrf.mxu0
        %v4826 = vadd.f32 %v406, %v4825
        %v4827 = vpop.f32.mrf.mxu0
        %4828 = vmatprep.mubr.bf16.mxu0 0
        %4829 = vmatmul.mubr.bf16.gmra.mxu0 %v4746
        %v4830 = vpop.f32.mrf.mxu0
        %v4831 = vadd.f32 %v406, %v4830
        %v4832 = vpop.f32.mrf.mxu0
        %v4833 = vpop.f32.mrf.mxu0
        %v4834 = vadd.f32 %v406, %v4833
        %v4835 = vpop.f32.mrf.mxu0
        %4836 = vmatprep.mubr.bf16.mxu0 0
        %4837 = vmatmul.mubr.bf16.gmra.mxu0 %v4747
        %v4838 = vpop.f32.mrf.mxu0
        %v4839 = vadd.f32 %v406, %v4838
        %v4840 = vpop.f32.mrf.mxu0
        %v4841 = vpop.f32.mrf.mxu0
        %v4842 = vadd.f32 %v406, %v4841
        %v4843 = vpop.f32.mrf.mxu0
        %4844 = vdwg.mxu0
        %v4845 = vmul.f32 %v4586, %v4783
        %v4846 = vmul.f32 %v4586, %v4786
        %v4847 = vmul.f32 %v4586, %v4791
        %v4848 = vmul.f32 %v4586, %v4794
        %v4849 = vmul.f32 %v4586, %v4799
        %v4850 = vmul.f32 %v4586, %v4802
        %v4851 = vmul.f32 %v4586, %v4807
        %v4852 = vmul.f32 %v4586, %v4810
        %v4853 = vmul.f32 %v4586, %v4815
        %v4854 = vmul.f32 %v4586, %v4818
        %v4855 = vmul.f32 %v4586, %v4823
        %v4856 = vmul.f32 %v4586, %v4826
        %v4857 = vmul.f32 %v4586, %v4831
        %v4858 = vmul.f32 %v4586, %v4834
        %v4859 = vmul.f32 %v4586, %v4839
        %v4860 = vmul.f32 %v4586, %v4842
        %v4861 = vadd.f32 %v4196, %v4845
        %v4862 = vadd.f32 %v4197, %v4846
        %v4863 = vadd.f32 %v4198, %v4847
        %v4864 = vadd.f32 %v4199, %v4848
        %v4865 = vadd.f32 %v4200, %v4849
        %v4866 = vadd.f32 %v4201, %v4850
        %v4867 = vadd.f32 %v4202, %v4851
        %v4868 = vadd.f32 %v4203, %v4852
        %v4869 = vadd.f32 %v4204, %v4853
        %v4870 = vadd.f32 %v4205, %v4854
        %v4871 = vadd.f32 %v4206, %v4855
        %v4872 = vadd.f32 %v4207, %v4856
        %v4873 = vadd.f32 %v4208, %v4857
        %v4874 = vadd.f32 %v4209, %v4858
        %v4875 = vadd.f32 %v4210, %v4859
        %v4876 = vadd.f32 %v4211, %v4860
        %v4877 = vpack.c.bf16 %v4862, %v4861
        %v4878 = vpack.c.bf16 %v4864, %v4863
        %v4879 = vpack.c.bf16 %v4866, %v4865
        %v4880 = vpack.c.bf16 %v4868, %v4867
        %v4881 = vpack.c.bf16 %v4870, %v4869
        %v4882 = vpack.c.bf16 %v4872, %v4871
        %v4883 = vpack.c.bf16 %v4874, %v4873
        %v4884 = vpack.c.bf16 %v4876, %v4875
        %4885 = vmatprep.subr.bf16.mxu0 0
        %4886 = vmatpush1.bf16.msra.mxu0 %v4295
        %4887 = vmatprep.subr.bf16.mxu0 0
        %4888 = vmatpush1.bf16.msra.mxu0 %v4294
        %4889 = vmatprep.subr.bf16.mxu0 0
        %4890 = vmatpush1.bf16.msra.mxu0 %v4293
        %4891 = vmatprep.subr.bf16.mxu0 0
        %4892 = vmatpush1.bf16.msra.mxu0 %v4292
        %4893 = vmatprep.subr.bf16.mxu0 0
        %4894 = vmatpush1.bf16.msra.mxu0 %v4291
        %4895 = vmatprep.subr.bf16.mxu0 0
        %4896 = vmatpush1.bf16.msra.mxu0 %v4290
        %4897 = vmatprep.subr.bf16.mxu0 0
        %4898 = vmatpush1.bf16.msra.mxu0 %v4289
        %4899 = vmatprep.subr.bf16.mxu0 0
        %4900 = vmatpush1.bf16.msra.mxu0 %v4288
        %4901 = vmatprep.subr.bf16.mxu0 0
        %4902 = vmatpush2.bf16.msra.mxu0 0
        %4903 = vmatprep.subr.bf16.mxu0 0
        %4904 = vmatpush2.bf16.msra.mxu0 0
        %4905 = vmatprep.subr.bf16.mxu0 0
        %4906 = vmatpush2.bf16.msra.mxu0 0
        %4907 = vmatprep.subr.bf16.mxu0 0
        %4908 = vmatpush2.bf16.msra.mxu0 0
        %4909 = vmatprep.subr.bf16.mxu0 0
        %4910 = vmatpush2.bf16.msra.mxu0 0
        %4911 = vmatprep.subr.bf16.mxu0 0
        %4912 = vmatpush2.bf16.msra.mxu0 0
        %4913 = vmatprep.subr.bf16.mxu0 0
        %4914 = vmatpush2.bf16.msra.mxu0 0
        %4915 = vmatprep.subr.bf16.mxu0 0
        %4916 = vmatpush2.bf16.msra.mxu0 0
        %4917 = vmatprep.mubr.bf16.mxu0 0
        %4918 = vmatmul.mubr.bf16.gmra.mxu0 %v4877
        %v4919 = vpop.f32.mrf.mxu0
        %v4920 = vadd.f32 %v399, %v4919
        %v4921 = vpop.f32.mrf.mxu0
        %v4922 = vpop.f32.mrf.mxu0
        %v4923 = vadd.f32 %v399, %v4922
        %v4924 = vpop.f32.mrf.mxu0
        %4925 = vmatprep.mubr.bf16.mxu0 0
        %4926 = vmatmul.mubr.bf16.gmra.mxu0 %v4878
        %v4927 = vpop.f32.mrf.mxu0
        %v4928 = vadd.f32 %v399, %v4927
        %v4929 = vpop.f32.mrf.mxu0
        %v4930 = vpop.f32.mrf.mxu0
        %v4931 = vadd.f32 %v399, %v4930
        %v4932 = vpop.f32.mrf.mxu0
        %4933 = vmatprep.mubr.bf16.mxu0 0
        %4934 = vmatmul.mubr.bf16.gmra.mxu0 %v4879
        %v4935 = vpop.f32.mrf.mxu0
        %v4936 = vadd.f32 %v399, %v4935
        %v4937 = vpop.f32.mrf.mxu0
        %v4938 = vpop.f32.mrf.mxu0
        %v4939 = vadd.f32 %v399, %v4938
        %v4940 = vpop.f32.mrf.mxu0
        %4941 = vmatprep.mubr.bf16.mxu0 0
        %4942 = vmatmul.mubr.bf16.gmra.mxu0 %v4880
        %v4943 = vpop.f32.mrf.mxu0
        %v4944 = vadd.f32 %v399, %v4943
        %v4945 = vpop.f32.mrf.mxu0
        %v4946 = vpop.f32.mrf.mxu0
        %v4947 = vadd.f32 %v399, %v4946
        %v4948 = vpop.f32.mrf.mxu0
        %4949 = vmatprep.mubr.bf16.mxu0 0
        %4950 = vmatmul.mubr.bf16.gmra.mxu0 %v4881
        %v4951 = vpop.f32.mrf.mxu0
        %v4952 = vadd.f32 %v399, %v4951
        %v4953 = vpop.f32.mrf.mxu0
        %v4954 = vpop.f32.mrf.mxu0
        %v4955 = vadd.f32 %v399, %v4954
        %v4956 = vpop.f32.mrf.mxu0
        %4957 = vmatprep.mubr.bf16.mxu0 0
        %4958 = vmatmul.mubr.bf16.gmra.mxu0 %v4882
        %v4959 = vpop.f32.mrf.mxu0
        %v4960 = vadd.f32 %v399, %v4959
        %v4961 = vpop.f32.mrf.mxu0
        %v4962 = vpop.f32.mrf.mxu0
        %v4963 = vadd.f32 %v399, %v4962
        %v4964 = vpop.f32.mrf.mxu0
        %4965 = vmatprep.mubr.bf16.mxu0 0
        %4966 = vmatmul.mubr.bf16.gmra.mxu0 %v4883
        %v4967 = vpop.f32.mrf.mxu0
        %v4968 = vadd.f32 %v399, %v4967
        %v4969 = vpop.f32.mrf.mxu0
        %v4970 = vpop.f32.mrf.mxu0
        %v4971 = vadd.f32 %v399, %v4970
        %v4972 = vpop.f32.mrf.mxu0
        %4973 = vmatprep.mubr.bf16.mxu0 0
        %4974 = vmatmul.mubr.bf16.gmra.mxu0 %v4884
        %v4975 = vpop.f32.mrf.mxu0
        %v4976 = vadd.f32 %v399, %v4975
        %v4977 = vpop.f32.mrf.mxu0
        %v4978 = vpop.f32.mrf.mxu0
        %v4979 = vadd.f32 %v399, %v4978
        %v4980 = vpop.f32.mrf.mxu0
        %4981 = vdwg.mxu0
        %v4982 = vtanh.pop %v4920
        %v4983 = vtanh.pop %v4923
        %v4984 = vtanh.pop %v4928
        %v4985 = vtanh.pop %v4931
        %v4986 = vtanh.pop %v4936
        %v4987 = vtanh.pop %v4939
        %v4988 = vtanh.pop %v4944
        %v4989 = vtanh.pop %v4947
        %v4990 = vtanh.pop %v4952
        %v4991 = vtanh.pop %v4955
        %v4992 = vtanh.pop %v4960
        %v4993 = vtanh.pop %v4963
        %v4994 = vtanh.pop %v4968
        %v4995 = vtanh.pop %v4971
        %v4996 = vtanh.pop %v4976
        %v4997 = vtanh.pop %v4979
        %v4998 = vpack.c.bf16 %v4983, %v4982
        %v4999 = vpack.c.bf16 %v4985, %v4984
        %v5000 = vpack.c.bf16 %v4987, %v4986
        %v5001 = vpack.c.bf16 %v4989, %v4988
        %v5002 = vpack.c.bf16 %v4991, %v4990
        %v5003 = vpack.c.bf16 %v4993, %v4992
        %v5004 = vpack.c.bf16 %v4995, %v4994
        %v5005 = vpack.c.bf16 %v4997, %v4996
        %5006 = vmatprep.subr.bf16.mxu0 0
        %5007 = vmatpush1.bf16.msra.mxu0 %v4480
        %5008 = vmatprep.subr.bf16.mxu0 0
        %5009 = vmatpush1.bf16.msra.mxu0 %v4479
        %5010 = vmatprep.subr.bf16.mxu0 0
        %5011 = vmatpush1.bf16.msra.mxu0 %v4478
        %5012 = vmatprep.subr.bf16.mxu0 0
        %5013 = vmatpush1.bf16.msra.mxu0 %v4477
        %5014 = vmatprep.subr.bf16.mxu0 0
        %5015 = vmatpush1.bf16.msra.mxu0 %v4476
        %5016 = vmatprep.subr.bf16.mxu0 0
        %5017 = vmatpush1.bf16.msra.mxu0 %v4475
        %5018 = vmatprep.subr.bf16.mxu0 0
        %5019 = vmatpush1.bf16.msra.mxu0 %v4474
        %5020 = vmatprep.subr.bf16.mxu0 0
        %5021 = vmatpush1.bf16.msra.mxu0 %v4473
        %5022 = vmatprep.subr.bf16.mxu0 0
        %5023 = vmatpush2.bf16.msra.mxu0 0
        %5024 = vmatprep.subr.bf16.mxu0 0
        %5025 = vmatpush2.bf16.msra.mxu0 0
        %5026 = vmatprep.subr.bf16.mxu0 0
        %5027 = vmatpush2.bf16.msra.mxu0 0
        %5028 = vmatprep.subr.bf16.mxu0 0
        %5029 = vmatpush2.bf16.msra.mxu0 0
        %5030 = vmatprep.subr.bf16.mxu0 0
        %5031 = vmatpush2.bf16.msra.mxu0 0
        %5032 = vmatprep.subr.bf16.mxu0 0
        %5033 = vmatpush2.bf16.msra.mxu0 0
        %5034 = vmatprep.subr.bf16.mxu0 0
        %5035 = vmatpush2.bf16.msra.mxu0 0
        %5036 = vmatprep.subr.bf16.mxu0 0
        %5037 = vmatpush2.bf16.msra.mxu0 0
        %5038 = vmatprep.mubr.bf16.mxu0 0
        %5039 = vmatmul.mubr.bf16.gmra.mxu0 %v4998
        %v5040 = vpop.f32.mrf.mxu0
        %v5041 = vadd.f32 %v406, %v5040
        %v5042 = vpop.f32.mrf.mxu0
        %v5043 = vpop.f32.mrf.mxu0
        %v5044 = vadd.f32 %v406, %v5043
        %v5045 = vpop.f32.mrf.mxu0
        %5046 = vmatprep.mubr.bf16.mxu0 0
        %5047 = vmatmul.mubr.bf16.gmra.mxu0 %v4999
        %v5048 = vpop.f32.mrf.mxu0
        %v5049 = vadd.f32 %v406, %v5048
        %v5050 = vpop.f32.mrf.mxu0
        %v5051 = vpop.f32.mrf.mxu0
        %v5052 = vadd.f32 %v406, %v5051
        %v5053 = vpop.f32.mrf.mxu0
        %5054 = vmatprep.mubr.bf16.mxu0 0
        %5055 = vmatmul.mubr.bf16.gmra.mxu0 %v5000
        %v5056 = vpop.f32.mrf.mxu0
        %v5057 = vadd.f32 %v406, %v5056
        %v5058 = vpop.f32.mrf.mxu0
        %v5059 = vpop.f32.mrf.mxu0
        %v5060 = vadd.f32 %v406, %v5059
        %v5061 = vpop.f32.mrf.mxu0
        %5062 = vmatprep.mubr.bf16.mxu0 0
        %5063 = vmatmul.mubr.bf16.gmra.mxu0 %v5001
        %v5064 = vpop.f32.mrf.mxu0
        %v5065 = vadd.f32 %v406, %v5064
        %v5066 = vpop.f32.mrf.mxu0
        %v5067 = vpop.f32.mrf.mxu0
        %v5068 = vadd.f32 %v406, %v5067
        %v5069 = vpop.f32.mrf.mxu0
        %5070 = vmatprep.mubr.bf16.mxu0 0
        %5071 = vmatmul.mubr.bf16.gmra.mxu0 %v5002
        %v5072 = vpop.f32.mrf.mxu0
        %v5073 = vadd.f32 %v406, %v5072
        %v5074 = vpop.f32.mrf.mxu0
        %v5075 = vpop.f32.mrf.mxu0
        %v5076 = vadd.f32 %v406, %v5075
        %v5077 = vpop.f32.mrf.mxu0
        %5078 = vmatprep.mubr.bf16.mxu0 0
        %5079 = vmatmul.mubr.bf16.gmra.mxu0 %v5003
        %v5080 = vpop.f32.mrf.mxu0
        %v5081 = vadd.f32 %v406, %v5080
        %v5082 = vpop.f32.mrf.mxu0
        %v5083 = vpop.f32.mrf.mxu0
        %v5084 = vadd.f32 %v406, %v5083
        %v5085 = vpop.f32.mrf.mxu0
        %5086 = vmatprep.mubr.bf16.mxu0 0
        %5087 = vmatmul.mubr.bf16.gmra.mxu0 %v5004
        %v5088 = vpop.f32.mrf.mxu0
        %v5089 = vadd.f32 %v406, %v5088
        %v5090 = vpop.f32.mrf.mxu0
        %v5091 = vpop.f32.mrf.mxu0
        %v5092 = vadd.f32 %v406, %v5091
        %v5093 = vpop.f32.mrf.mxu0
        %5094 = vmatprep.mubr.bf16.mxu0 0
        %5095 = vmatmul.mubr.bf16.gmra.mxu0 %v5005
        %v5096 = vpop.f32.mrf.mxu0
        %v5097 = vadd.f32 %v406, %v5096
        %v5098 = vpop.f32.mrf.mxu0
        %v5099 = vpop.f32.mrf.mxu0
        %v5100 = vadd.f32 %v406, %v5099
        %v5101 = vpop.f32.mrf.mxu0
        %5102 = vdwg.mxu0
        %v5103 = vstv %s4229
        %v5104 = vmul.f32 %v5103, %v5041
        %v5105 = vmul.f32 %v5103, %v5044
        %v5106 = vmul.f32 %v5103, %v5049
        %v5107 = vmul.f32 %v5103, %v5052
        %v5108 = vmul.f32 %v5103, %v5057
        %v5109 = vmul.f32 %v5103, %v5060
        %v5110 = vmul.f32 %v5103, %v5065
        %v5111 = vmul.f32 %v5103, %v5068
        %v5112 = vmul.f32 %v5103, %v5073
        %v5113 = vmul.f32 %v5103, %v5076
        %v5114 = vmul.f32 %v5103, %v5081
        %v5115 = vmul.f32 %v5103, %v5084
        %v5116 = vmul.f32 %v5103, %v5089
        %v5117 = vmul.f32 %v5103, %v5092
        %v5118 = vmul.f32 %v5103, %v5097
        %v5119 = vmul.f32 %v5103, %v5100
        %v5120 = vadd.f32 %v4196, %v5104
        %v5121 = vadd.f32 %v4197, %v5105
        %v5122 = vadd.f32 %v4198, %v5106
        %v5123 = vadd.f32 %v4199, %v5107
        %v5124 = vadd.f32 %v4200, %v5108
        %v5125 = vadd.f32 %v4201, %v5109
        %v5126 = vadd.f32 %v4202, %v5110
        %v5127 = vadd.f32 %v4203, %v5111
        %v5128 = vadd.f32 %v4204, %v5112
        %v5129 = vadd.f32 %v4205, %v5113
        %v5130 = vadd.f32 %v4206, %v5114
        %v5131 = vadd.f32 %v4207, %v5115
        %v5132 = vadd.f32 %v4208, %v5116
        %v5133 = vadd.f32 %v4209, %v5117
        %v5134 = vadd.f32 %v4210, %v5118
        %v5135 = vadd.f32 %v4211, %v5119
        %v5136 = vpack.c.bf16 %v5121, %v5120
        %v5137 = vpack.c.bf16 %v5123, %v5122
        %v5138 = vpack.c.bf16 %v5125, %v5124
        %v5139 = vpack.c.bf16 %v5127, %v5126
        %v5140 = vpack.c.bf16 %v5129, %v5128
        %v5141 = vpack.c.bf16 %v5131, %v5130
        %v5142 = vpack.c.bf16 %v5133, %v5132
        %v5143 = vpack.c.bf16 %v5135, %v5134
        %5144 = vmatprep.subr.bf16.mxu0 0
        %5145 = vmatpush1.bf16.msra.mxu0 %v4295
        %5146 = vmatprep.subr.bf16.mxu0 0
        %5147 = vmatpush1.bf16.msra.mxu0 %v4294
        %5148 = vmatprep.subr.bf16.mxu0 0
        %5149 = vmatpush1.bf16.msra.mxu0 %v4293
        %5150 = vmatprep.subr.bf16.mxu0 0
        %5151 = vmatpush1.bf16.msra.mxu0 %v4292
        %5152 = vmatprep.subr.bf16.mxu0 0
        %5153 = vmatpush1.bf16.msra.mxu0 %v4291
        %5154 = vmatprep.subr.bf16.mxu0 0
        %5155 = vmatpush1.bf16.msra.mxu0 %v4290
        %5156 = vmatprep.subr.bf16.mxu0 0
        %5157 = vmatpush1.bf16.msra.mxu0 %v4289
        %5158 = vmatprep.subr.bf16.mxu0 0
        %5159 = vmatpush1.bf16.msra.mxu0 %v4288
        %5160 = vmatprep.subr.bf16.mxu0 0
        %5161 = vmatpush2.bf16.msra.mxu0 0
        %5162 = vmatprep.subr.bf16.mxu0 0
        %5163 = vmatpush2.bf16.msra.mxu0 0
        %5164 = vmatprep.subr.bf16.mxu0 0
        %5165 = vmatpush2.bf16.msra.mxu0 0
        %5166 = vmatprep.subr.bf16.mxu0 0
        %5167 = vmatpush2.bf16.msra.mxu0 0
        %5168 = vmatprep.subr.bf16.mxu0 0
        %5169 = vmatpush2.bf16.msra.mxu0 0
        %5170 = vmatprep.subr.bf16.mxu0 0
        %5171 = vmatpush2.bf16.msra.mxu0 0
        %5172 = vmatprep.subr.bf16.mxu0 0
        %5173 = vmatpush2.bf16.msra.mxu0 0
        %5174 = vmatprep.subr.bf16.mxu0 0
        %5175 = vmatpush2.bf16.msra.mxu0 0
        %5176 = vmatprep.mubr.bf16.mxu0 0
        %5177 = vmatmul.mubr.bf16.gmra.mxu0 %v5136
        %v5178 = vpop.f32.mrf.mxu0
        %v5179 = vadd.f32 %v399, %v5178
        %v5180 = vpop.f32.mrf.mxu0
        %v5181 = vpop.f32.mrf.mxu0
        %v5182 = vadd.f32 %v399, %v5181
        %v5183 = vpop.f32.mrf.mxu0
        %5184 = vmatprep.mubr.bf16.mxu0 0
        %5185 = vmatmul.mubr.bf16.gmra.mxu0 %v5137
        %v5186 = vpop.f32.mrf.mxu0
        %v5187 = vadd.f32 %v399, %v5186
        %v5188 = vpop.f32.mrf.mxu0
        %v5189 = vpop.f32.mrf.mxu0
        %v5190 = vadd.f32 %v399, %v5189
        %v5191 = vpop.f32.mrf.mxu0
        %5192 = vmatprep.mubr.bf16.mxu0 0
        %5193 = vmatmul.mubr.bf16.gmra.mxu0 %v5138
        %v5194 = vpop.f32.mrf.mxu0
        %v5195 = vadd.f32 %v399, %v5194
        %v5196 = vpop.f32.mrf.mxu0
        %v5197 = vpop.f32.mrf.mxu0
        %v5198 = vadd.f32 %v399, %v5197
        %v5199 = vpop.f32.mrf.mxu0
        %5200 = vmatprep.mubr.bf16.mxu0 0
        %5201 = vmatmul.mubr.bf16.gmra.mxu0 %v5139
        %v5202 = vpop.f32.mrf.mxu0
        %v5203 = vadd.f32 %v399, %v5202
        %v5204 = vpop.f32.mrf.mxu0
        %v5205 = vpop.f32.mrf.mxu0
        %v5206 = vadd.f32 %v399, %v5205
        %v5207 = vpop.f32.mrf.mxu0
        %5208 = vmatprep.mubr.bf16.mxu0 0
        %5209 = vmatmul.mubr.bf16.gmra.mxu0 %v5140
        %v5210 = vpop.f32.mrf.mxu0
        %v5211 = vadd.f32 %v399, %v5210
        %v5212 = vpop.f32.mrf.mxu0
        %v5213 = vpop.f32.mrf.mxu0
        %v5214 = vadd.f32 %v399, %v5213
        %v5215 = vpop.f32.mrf.mxu0
        %5216 = vmatprep.mubr.bf16.mxu0 0
        %5217 = vmatmul.mubr.bf16.gmra.mxu0 %v5141
        %v5218 = vpop.f32.mrf.mxu0
        %v5219 = vadd.f32 %v399, %v5218
        %v5220 = vpop.f32.mrf.mxu0
        %v5221 = vpop.f32.mrf.mxu0
        %v5222 = vadd.f32 %v399, %v5221
        %v5223 = vpop.f32.mrf.mxu0
        %5224 = vmatprep.mubr.bf16.mxu0 0
        %5225 = vmatmul.mubr.bf16.gmra.mxu0 %v5142
        %v5226 = vpop.f32.mrf.mxu0
        %v5227 = vadd.f32 %v399, %v5226
        %v5228 = vpop.f32.mrf.mxu0
        %v5229 = vpop.f32.mrf.mxu0
        %v5230 = vadd.f32 %v399, %v5229
        %v5231 = vpop.f32.mrf.mxu0
        %5232 = vmatprep.mubr.bf16.mxu0 0
        %5233 = vmatmul.mubr.bf16.gmra.mxu0 %v5143
        %v5234 = vpop.f32.mrf.mxu0
        %v5235 = vadd.f32 %v399, %v5234
        %v5236 = vpop.f32.mrf.mxu0
        %v5237 = vpop.f32.mrf.mxu0
        %v5238 = vadd.f32 %v399, %v5237
        %v5239 = vpop.f32.mrf.mxu0
        %5240 = vdwg.mxu0
        %v5241 = vtanh.pop %v5179
        %v5242 = vtanh.pop %v5182
        %v5243 = vtanh.pop %v5187
        %v5244 = vtanh.pop %v5190
        %v5245 = vtanh.pop %v5195
        %v5246 = vtanh.pop %v5198
        %v5247 = vtanh.pop %v5203
        %v5248 = vtanh.pop %v5206
        %v5249 = vtanh.pop %v5211
        %v5250 = vtanh.pop %v5214
        %v5251 = vtanh.pop %v5219
        %v5252 = vtanh.pop %v5222
        %v5253 = vtanh.pop %v5227
        %v5254 = vtanh.pop %v5230
        %v5255 = vtanh.pop %v5235
        %v5256 = vtanh.pop %v5238
        %v5257 = vpack.c.bf16 %v5242, %v5241
        %v5258 = vpack.c.bf16 %v5244, %v5243
        %v5259 = vpack.c.bf16 %v5246, %v5245
        %v5260 = vpack.c.bf16 %v5248, %v5247
        %v5261 = vpack.c.bf16 %v5250, %v5249
        %v5262 = vpack.c.bf16 %v5252, %v5251
        %v5263 = vpack.c.bf16 %v5254, %v5253
        %v5264 = vpack.c.bf16 %v5256, %v5255
        %5265 = vmatprep.subr.bf16.mxu0 0
        %5266 = vmatpush1.bf16.msra.mxu0 %v4480
        %5267 = vmatprep.subr.bf16.mxu0 0
        %5268 = vmatpush1.bf16.msra.mxu0 %v4479
        %5269 = vmatprep.subr.bf16.mxu0 0
        %5270 = vmatpush1.bf16.msra.mxu0 %v4478
        %5271 = vmatprep.subr.bf16.mxu0 0
        %5272 = vmatpush1.bf16.msra.mxu0 %v4477
        %5273 = vmatprep.subr.bf16.mxu0 0
        %5274 = vmatpush1.bf16.msra.mxu0 %v4476
        %5275 = vmatprep.subr.bf16.mxu0 0
        %5276 = vmatpush1.bf16.msra.mxu0 %v4475
        %5277 = vmatprep.subr.bf16.mxu0 0
        %5278 = vmatpush1.bf16.msra.mxu0 %v4474
        %5279 = vmatprep.subr.bf16.mxu0 0
        %5280 = vmatpush1.bf16.msra.mxu0 %v4473
        %5281 = vmatprep.subr.bf16.mxu0 0
        %5282 = vmatpush2.bf16.msra.mxu0 0
        %5283 = vmatprep.subr.bf16.mxu0 0
        %5284 = vmatpush2.bf16.msra.mxu0 0
        %5285 = vmatprep.subr.bf16.mxu0 0
        %5286 = vmatpush2.bf16.msra.mxu0 0
        %5287 = vmatprep.subr.bf16.mxu0 0
        %5288 = vmatpush2.bf16.msra.mxu0 0
        %5289 = vmatprep.subr.bf16.mxu0 0
        %5290 = vmatpush2.bf16.msra.mxu0 0
        %5291 = vmatprep.subr.bf16.mxu0 0
        %5292 = vmatpush2.bf16.msra.mxu0 0
        %5293 = vmatprep.subr.bf16.mxu0 0
        %5294 = vmatpush2.bf16.msra.mxu0 0
        %5295 = vmatprep.subr.bf16.mxu0 0
        %5296 = vmatpush2.bf16.msra.mxu0 0
        %5297 = vmatprep.mubr.bf16.mxu0 0
        %5298 = vmatmul.mubr.bf16.gmra.mxu0 %v5257
        %v5299 = vpop.f32.mrf.mxu0
        %v5300 = vadd.f32 %v406, %v5299
        %v5301 = vpop.f32.mrf.mxu0
        %v5302 = vpop.f32.mrf.mxu0
        %v5303 = vadd.f32 %v406, %v5302
        %v5304 = vpop.f32.mrf.mxu0
        %5305 = vmatprep.mubr.bf16.mxu0 0
        %5306 = vmatmul.mubr.bf16.gmra.mxu0 %v5258
        %v5307 = vpop.f32.mrf.mxu0
        %v5308 = vadd.f32 %v406, %v5307
        %v5309 = vpop.f32.mrf.mxu0
        %v5310 = vpop.f32.mrf.mxu0
        %v5311 = vadd.f32 %v406, %v5310
        %v5312 = vpop.f32.mrf.mxu0
        %5313 = vmatprep.mubr.bf16.mxu0 0
        %5314 = vmatmul.mubr.bf16.gmra.mxu0 %v5259
        %v5315 = vpop.f32.mrf.mxu0
        %v5316 = vadd.f32 %v406, %v5315
        %v5317 = vpop.f32.mrf.mxu0
        %v5318 = vpop.f32.mrf.mxu0
        %v5319 = vadd.f32 %v406, %v5318
        %v5320 = vpop.f32.mrf.mxu0
        %5321 = vmatprep.mubr.bf16.mxu0 0
        %5322 = vmatmul.mubr.bf16.gmra.mxu0 %v5260
        %v5323 = vpop.f32.mrf.mxu0
        %v5324 = vadd.f32 %v406, %v5323
        %v5325 = vpop.f32.mrf.mxu0
        %v5326 = vpop.f32.mrf.mxu0
        %v5327 = vadd.f32 %v406, %v5326
        %v5328 = vpop.f32.mrf.mxu0
        %5329 = vmatprep.mubr.bf16.mxu0 0
        %5330 = vmatmul.mubr.bf16.gmra.mxu0 %v5261
        %v5331 = vpop.f32.mrf.mxu0
        %v5332 = vadd.f32 %v406, %v5331
        %v5333 = vpop.f32.mrf.mxu0
        %v5334 = vpop.f32.mrf.mxu0
        %v5335 = vadd.f32 %v406, %v5334
        %v5336 = vpop.f32.mrf.mxu0
        %5337 = vmatprep.mubr.bf16.mxu0 0
        %5338 = vmatmul.mubr.bf16.gmra.mxu0 %v5262
        %v5339 = vpop.f32.mrf.mxu0
        %v5340 = vadd.f32 %v406, %v5339
        %v5341 = vpop.f32.mrf.mxu0
        %v5342 = vpop.f32.mrf.mxu0
        %v5343 = vadd.f32 %v406, %v5342
        %v5344 = vpop.f32.mrf.mxu0
        %5345 = vmatprep.mubr.bf16.mxu0 0
        %5346 = vmatmul.mubr.bf16.gmra.mxu0 %v5263
        %v5347 = vpop.f32.mrf.mxu0
        %v5348 = vadd.f32 %v406, %v5347
        %v5349 = vpop.f32.mrf.mxu0
        %v5350 = vpop.f32.mrf.mxu0
        %v5351 = vadd.f32 %v406, %v5350
        %v5352 = vpop.f32.mrf.mxu0
        %5353 = vmatprep.mubr.bf16.mxu0 0
        %5354 = vmatmul.mubr.bf16.gmra.mxu0 %v5264
        %v5355 = vpop.f32.mrf.mxu0
        %v5356 = vadd.f32 %v406, %v5355
        %v5357 = vpop.f32.mrf.mxu0
        %v5358 = vpop.f32.mrf.mxu0
        %v5359 = vadd.f32 %v406, %v5358
        %v5360 = vpop.f32.mrf.mxu0
        %5361 = vdwg.mxu0
        %v5362 = vmul.f32 %v4783, 2.0
        %v5363 = vmul.f32 %v4786, 2.0
        %v5364 = vmul.f32 %v4791, 2.0
        %v5365 = vmul.f32 %v4794, 2.0
        %v5366 = vmul.f32 %v4799, 2.0
        %v5367 = vmul.f32 %v4802, 2.0
        %v5368 = vmul.f32 %v4807, 2.0
        %v5369 = vmul.f32 %v4810, 2.0
        %v5370 = vmul.f32 %v4815, 2.0
        %v5371 = vmul.f32 %v4818, 2.0
        %v5372 = vmul.f32 %v4823, 2.0
        %v5373 = vmul.f32 %v4826, 2.0
        %v5374 = vmul.f32 %v4831, 2.0
        %v5375 = vmul.f32 %v4834, 2.0
        %v5376 = vmul.f32 %v4839, 2.0
        %v5377 = vmul.f32 %v4842, 2.0
        %v5378 = vadd.f32 %v4524, %v5362
        %v5379 = vadd.f32 %v4527, %v5363
        %v5380 = vadd.f32 %v4532, %v5364
        %v5381 = vadd.f32 %v4535, %v5365
        %v5382 = vadd.f32 %v4540, %v5366
        %v5383 = vadd.f32 %v4543, %v5367
        %v5384 = vadd.f32 %v4548, %v5368
        %v5385 = vadd.f32 %v4551, %v5369
        %v5386 = vadd.f32 %v4556, %v5370
        %v5387 = vadd.f32 %v4559, %v5371
        %v5388 = vadd.f32 %v4564, %v5372
        %v5389 = vadd.f32 %v4567, %v5373
        %v5390 = vadd.f32 %v4572, %v5374
        %v5391 = vadd.f32 %v4575, %v5375
        %v5392 = vadd.f32 %v4580, %v5376
        %v5393 = vadd.f32 %v4583, %v5377
        %v5394 = vmul.f32 %v5041, 2.0
        %v5395 = vmul.f32 %v5044, 2.0
        %v5396 = vmul.f32 %v5049, 2.0
        %v5397 = vmul.f32 %v5052, 2.0
        %v5398 = vmul.f32 %v5057, 2.0
        %v5399 = vmul.f32 %v5060, 2.0
        %v5400 = vmul.f32 %v5065, 2.0
        %v5401 = vmul.f32 %v5068, 2.0
        %v5402 = vmul.f32 %v5073, 2.0
        %v5403 = vmul.f32 %v5076, 2.0
        %v5404 = vmul.f32 %v5081, 2.0
        %v5405 = vmul.f32 %v5084, 2.0
        %v5406 = vmul.f32 %v5089, 2.0
        %v5407 = vmul.f32 %v5092, 2.0
        %v5408 = vmul.f32 %v5097, 2.0
        %v5409 = vmul.f32 %v5100, 2.0
        %v5410 = vadd.f32 %v5378, %v5394
        %v5411 = vadd.f32 %v5379, %v5395
        %v5412 = vadd.f32 %v5380, %v5396
        %v5413 = vadd.f32 %v5381, %v5397
        %v5414 = vadd.f32 %v5382, %v5398
        %v5415 = vadd.f32 %v5383, %v5399
        %v5416 = vadd.f32 %v5384, %v5400
        %v5417 = vadd.f32 %v5385, %v5401
        %v5418 = vadd.f32 %v5386, %v5402
        %v5419 = vadd.f32 %v5387, %v5403
        %v5420 = vadd.f32 %v5388, %v5404
        %v5421 = vadd.f32 %v5389, %v5405
        %v5422 = vadd.f32 %v5390, %v5406
        %v5423 = vadd.f32 %v5391, %v5407
        %v5424 = vadd.f32 %v5392, %v5408
        %v5425 = vadd.f32 %v5393, %v5409
        %v5426 = vadd.f32 %v5410, %v5300
        %v5427 = vadd.f32 %v5411, %v5303
        %v5428 = vadd.f32 %v5412, %v5308
        %v5429 = vadd.f32 %v5413, %v5311
        %v5430 = vadd.f32 %v5414, %v5316
        %v5431 = vadd.f32 %v5415, %v5319
        %v5432 = vadd.f32 %v5416, %v5324
        %v5433 = vadd.f32 %v5417, %v5327
        %v5434 = vadd.f32 %v5418, %v5332
        %v5435 = vadd.f32 %v5419, %v5335
        %v5436 = vadd.f32 %v5420, %v5340
        %v5437 = vadd.f32 %v5421, %v5343
        %v5438 = vadd.f32 %v5422, %v5348
        %v5439 = vadd.f32 %v5423, %v5351
        %v5440 = vadd.f32 %v5424, %v5356
        %v5441 = vadd.f32 %v5425, %v5359
        %v5442 = vstv %s4231
        %v5443 = vmul.f32 %v5442, %v5426
        %v5444 = vmul.f32 %v5442, %v5427
        %v5445 = vmul.f32 %v5442, %v5428
        %v5446 = vmul.f32 %v5442, %v5429
        %v5447 = vmul.f32 %v5442, %v5430
        %v5448 = vmul.f32 %v5442, %v5431
        %v5449 = vmul.f32 %v5442, %v5432
        %v5450 = vmul.f32 %v5442, %v5433
        %v5451 = vmul.f32 %v5442, %v5434
        %v5452 = vmul.f32 %v5442, %v5435
        %v5453 = vmul.f32 %v5442, %v5436
        %v5454 = vmul.f32 %v5442, %v5437
        %v5455 = vmul.f32 %v5442, %v5438
        %v5456 = vmul.f32 %v5442, %v5439
        %v5457 = vmul.f32 %v5442, %v5440
        %v5458 = vmul.f32 %v5442, %v5441
        %v5459 = vadd.f32 %v4196, %v5443
        %v5460 = vadd.f32 %v4197, %v5444
        %v5461 = vadd.f32 %v4198, %v5445
        %v5462 = vadd.f32 %v4199, %v5446
        %v5463 = vadd.f32 %v4200, %v5447
        %v5464 = vadd.f32 %v4201, %v5448
        %v5465 = vadd.f32 %v4202, %v5449
        %v5466 = vadd.f32 %v4203, %v5450
        %v5467 = vadd.f32 %v4204, %v5451
        %v5468 = vadd.f32 %v4205, %v5452
        %v5469 = vadd.f32 %v4206, %v5453
        %v5470 = vadd.f32 %v4207, %v5454
        %v5471 = vadd.f32 %v4208, %v5455
        %v5472 = vadd.f32 %v4209, %v5456
        %v5473 = vadd.f32 %v4210, %v5457
        %v5474 = vadd.f32 %v4211, %v5458
        %s5475 = scalar_lea.vmem %s390, 512 [#allocation14]
        %5476 = vst [vmem:[%s5475] sm:$0xff] %v5459
        %5477 = vst [vmem:[%s5475 + $0x8] sm:$0xff] %v5460
        %5478 = vst [vmem:[%s5475 + $0x10] sm:$0xff] %v5461
        %5479 = vst [vmem:[%s5475 + $0x18] sm:$0xff] %v5462
        %5480 = vst [vmem:[%s5475 + $0x20] sm:$0xff] %v5463
        %5481 = vst [vmem:[%s5475 + $0x28] sm:$0xff] %v5464
        %5482 = vst [vmem:[%s5475 + $0x30] sm:$0xff] %v5465
        %5483 = vst [vmem:[%s5475 + $0x38] sm:$0xff] %v5466
        %5484 = vst [vmem:[%s5475 + $0x40] sm:$0xff] %v5467
        %5485 = vst [vmem:[%s5475 + $0x48] sm:$0xff] %v5468
        %5486 = vst [vmem:[%s5475 + $0x50] sm:$0xff] %v5469
        %5487 = vst [vmem:[%s5475 + $0x58] sm:$0xff] %v5470
        %5488 = vst [vmem:[%s5475 + $0x60] sm:$0xff] %v5471
        %5489 = vst [vmem:[%s5475 + $0x68] sm:$0xff] %v5472
        %5490 = vst [vmem:[%s5475 + $0x70] sm:$0xff] %v5473
        %5491 = vst [vmem:[%s5475 + $0x78] sm:$0xff] %v5474
        %s5492 = sld [smem:[#allocation2 + $0x4]]
        %s5493 = sld [smem:[#allocation7 + $0x4]]
        %s5494 = sld [smem:[#allocation8 + $0x4]]
        %v5495 = vpack.c.bf16 %v5460, %v5459
        %v5496 = vpack.c.bf16 %v5462, %v5461
        %v5497 = vpack.c.bf16 %v5464, %v5463
        %v5498 = vpack.c.bf16 %v5466, %v5465
        %v5499 = vpack.c.bf16 %v5468, %v5467
        %v5500 = vpack.c.bf16 %v5470, %v5469
        %v5501 = vpack.c.bf16 %v5472, %v5471
        %v5502 = vpack.c.bf16 %v5474, %v5473
        %v5503 = vld [vmem:[#allocation11] sm:$0xf]
        %v5504 = vld [vmem:[#allocation11 + $0x4] sm:$0xf]
        %v5505 = vld [vmem:[#allocation11 + $0x8] sm:$0xf]
        %v5506 = vld [vmem:[#allocation11 + $0xc] sm:$0xf]
        %v5507 = vld [vmem:[#allocation11 + $0x10] sm:$0xf]
        %v5508 = vld [vmem:[#allocation11 + $0x14] sm:$0xf]
        %v5509 = vld [vmem:[#allocation11 + $0x18] sm:$0xf]
        %v5510 = vld [vmem:[#allocation11 + $0x1c] sm:$0xf]
        %v5511 = vld [vmem:[#allocation11 + $0x20] sm:$0xf]
        %v5512 = vld [vmem:[#allocation11 + $0x24] sm:$0xf]
        %v5513 = vld [vmem:[#allocation11 + $0x28] sm:$0xf]
        %v5514 = vld [vmem:[#allocation11 + $0x2c] sm:$0xf]
        %v5515 = vld [vmem:[#allocation11 + $0x30] sm:$0xf]
        %v5516 = vld [vmem:[#allocation11 + $0x34] sm:$0xf]
        %v5517 = vld [vmem:[#allocation11 + $0x38] sm:$0xf]
        %v5518 = vld [vmem:[#allocation11 + $0x3c] sm:$0xf]
        %v5535 = vunpack.c.l.b16 %v5503
        %v5536 = vunpack.c.l.b16 %v5504
        %v5537 = vunpack.c.l.b16 %v5505
        %v5538 = vunpack.c.l.b16 %v5506
        %v5539 = vunpack.c.l.b16 %v5507
        %v5540 = vunpack.c.l.b16 %v5508
        %v5541 = vunpack.c.l.b16 %v5509
        %v5542 = vunpack.c.l.b16 %v5510
        %v5543 = vunpack.c.l.b16 %v5511
        %v5544 = vunpack.c.l.b16 %v5512
        %v5545 = vunpack.c.l.b16 %v5513
        %v5546 = vunpack.c.l.b16 %v5514
        %v5547 = vunpack.c.l.b16 %v5515
        %v5548 = vunpack.c.l.b16 %v5516
        %v5549 = vunpack.c.l.b16 %v5517
        %v5550 = vunpack.c.l.b16 %v5518
        %v5551 = vpack.c.b16 %v5536, %v5535
        %v5552 = vpack.c.b16 %v5538, %v5537
        %v5553 = vpack.c.b16 %v5540, %v5539
        %v5554 = vpack.c.b16 %v5542, %v5541
        %v5555 = vpack.c.b16 %v5544, %v5543
        %v5556 = vpack.c.b16 %v5546, %v5545
        %v5557 = vpack.c.b16 %v5548, %v5547
        %v5558 = vpack.c.b16 %v5550, %v5549
        %5567 = vmatprep.subr.bf16.mxu0 0
        %5568 = vmatpush1.bf16.msra.mxu0 %v5558
        %5569 = vmatprep.subr.bf16.mxu0 0
        %5570 = vmatpush1.bf16.msra.mxu0 %v5557
        %5571 = vmatprep.subr.bf16.mxu0 0
        %5572 = vmatpush1.bf16.msra.mxu0 %v5556
        %5573 = vmatprep.subr.bf16.mxu0 0
        %5574 = vmatpush1.bf16.msra.mxu0 %v5555
        %5575 = vmatprep.subr.bf16.mxu0 0
        %5576 = vmatpush1.bf16.msra.mxu0 %v5554
        %5577 = vmatprep.subr.bf16.mxu0 0
        %5578 = vmatpush1.bf16.msra.mxu0 %v5553
        %5579 = vmatprep.subr.bf16.mxu0 0
        %5580 = vmatpush1.bf16.msra.mxu0 %v5552
        %5581 = vmatprep.subr.bf16.mxu0 0
        %5582 = vmatpush1.bf16.msra.mxu0 %v5551
        %5583 = vmatprep.subr.bf16.mxu0 0
        %5584 = vmatpush2.bf16.msra.mxu0 0
        %5585 = vmatprep.subr.bf16.mxu0 0
        %5586 = vmatpush2.bf16.msra.mxu0 0
        %5587 = vmatprep.subr.bf16.mxu0 0
        %5588 = vmatpush2.bf16.msra.mxu0 0
        %5589 = vmatprep.subr.bf16.mxu0 0
        %5590 = vmatpush2.bf16.msra.mxu0 0
        %5591 = vmatprep.subr.bf16.mxu0 0
        %5592 = vmatpush2.bf16.msra.mxu0 0
        %5593 = vmatprep.subr.bf16.mxu0 0
        %5594 = vmatpush2.bf16.msra.mxu0 0
        %5595 = vmatprep.subr.bf16.mxu0 0
        %5596 = vmatpush2.bf16.msra.mxu0 0
        %5597 = vmatprep.subr.bf16.mxu0 0
        %5598 = vmatpush2.bf16.msra.mxu0 0
        %5599 = vmatprep.mubr.bf16.mxu0 0
        %5600 = vmatmul.mubr.bf16.gmra.mxu0 %v5495
        %v5601 = vpop.f32.mrf.mxu0
        %v5602 = vadd.f32 %v399, %v5601
        %v5603 = vpop.f32.mrf.mxu0
        %v5604 = vpop.f32.mrf.mxu0
        %v5605 = vadd.f32 %v399, %v5604
        %v5606 = vpop.f32.mrf.mxu0
        %5607 = vmatprep.mubr.bf16.mxu0 0
        %5608 = vmatmul.mubr.bf16.gmra.mxu0 %v5496
        %v5609 = vpop.f32.mrf.mxu0
        %v5610 = vadd.f32 %v399, %v5609
        %v5611 = vpop.f32.mrf.mxu0
        %v5612 = vpop.f32.mrf.mxu0
        %v5613 = vadd.f32 %v399, %v5612
        %v5614 = vpop.f32.mrf.mxu0
        %5615 = vmatprep.mubr.bf16.mxu0 0
        %5616 = vmatmul.mubr.bf16.gmra.mxu0 %v5497
        %v5617 = vpop.f32.mrf.mxu0
        %v5618 = vadd.f32 %v399, %v5617
        %v5619 = vpop.f32.mrf.mxu0
        %v5620 = vpop.f32.mrf.mxu0
        %v5621 = vadd.f32 %v399, %v5620
        %v5622 = vpop.f32.mrf.mxu0
        %5623 = vmatprep.mubr.bf16.mxu0 0
        %5624 = vmatmul.mubr.bf16.gmra.mxu0 %v5498
        %v5625 = vpop.f32.mrf.mxu0
        %v5626 = vadd.f32 %v399, %v5625
        %v5627 = vpop.f32.mrf.mxu0
        %v5628 = vpop.f32.mrf.mxu0
        %v5629 = vadd.f32 %v399, %v5628
        %v5630 = vpop.f32.mrf.mxu0
        %5631 = vmatprep.mubr.bf16.mxu0 0
        %5632 = vmatmul.mubr.bf16.gmra.mxu0 %v5499
        %v5633 = vpop.f32.mrf.mxu0
        %v5634 = vadd.f32 %v399, %v5633
        %v5635 = vpop.f32.mrf.mxu0
        %v5636 = vpop.f32.mrf.mxu0
        %v5637 = vadd.f32 %v399, %v5636
        %v5638 = vpop.f32.mrf.mxu0
        %5639 = vmatprep.mubr.bf16.mxu0 0
        %5640 = vmatmul.mubr.bf16.gmra.mxu0 %v5500
        %v5641 = vpop.f32.mrf.mxu0
        %v5642 = vadd.f32 %v399, %v5641
        %v5643 = vpop.f32.mrf.mxu0
        %v5644 = vpop.f32.mrf.mxu0
        %v5645 = vadd.f32 %v399, %v5644
        %v5646 = vpop.f32.mrf.mxu0
        %5647 = vmatprep.mubr.bf16.mxu0 0
        %5648 = vmatmul.mubr.bf16.gmra.mxu0 %v5501
        %v5649 = vpop.f32.mrf.mxu0
        %v5650 = vadd.f32 %v399, %v5649
        %v5651 = vpop.f32.mrf.mxu0
        %v5652 = vpop.f32.mrf.mxu0
        %v5653 = vadd.f32 %v399, %v5652
        %v5654 = vpop.f32.mrf.mxu0
        %5655 = vmatprep.mubr.bf16.mxu0 0
        %5656 = vmatmul.mubr.bf16.gmra.mxu0 %v5502
        %v5657 = vpop.f32.mrf.mxu0
        %v5658 = vadd.f32 %v399, %v5657
        %v5659 = vpop.f32.mrf.mxu0
        %v5660 = vpop.f32.mrf.mxu0
        %v5661 = vadd.f32 %v399, %v5660
        %v5662 = vpop.f32.mrf.mxu0
        %5663 = vdwg.mxu0
        %v5664 = vtanh.pop %v5602
        %v5665 = vtanh.pop %v5605
        %v5666 = vtanh.pop %v5610
        %v5667 = vtanh.pop %v5613
        %v5668 = vtanh.pop %v5618
        %v5669 = vtanh.pop %v5621
        %v5670 = vtanh.pop %v5626
        %v5671 = vtanh.pop %v5629
        %v5672 = vtanh.pop %v5634
        %v5673 = vtanh.pop %v5637
        %v5674 = vtanh.pop %v5642
        %v5675 = vtanh.pop %v5645
        %v5676 = vtanh.pop %v5650
        %v5677 = vtanh.pop %v5653
        %v5678 = vtanh.pop %v5658
        %v5679 = vtanh.pop %v5661
        %v5680 = vpack.c.bf16 %v5665, %v5664
        %v5681 = vpack.c.bf16 %v5667, %v5666
        %v5682 = vpack.c.bf16 %v5669, %v5668
        %v5683 = vpack.c.bf16 %v5671, %v5670
        %v5684 = vpack.c.bf16 %v5673, %v5672
        %v5685 = vpack.c.bf16 %v5675, %v5674
        %v5686 = vpack.c.bf16 %v5677, %v5676
        %v5687 = vpack.c.bf16 %v5679, %v5678
        %v5688 = vld [vmem:[#allocation13] sm:$0xf]
        %v5689 = vld [vmem:[#allocation13 + $0x4] sm:$0xf]
        %v5690 = vld [vmem:[#allocation13 + $0x8] sm:$0xf]
        %v5691 = vld [vmem:[#allocation13 + $0xc] sm:$0xf]
        %v5692 = vld [vmem:[#allocation13 + $0x10] sm:$0xf]
        %v5693 = vld [vmem:[#allocation13 + $0x14] sm:$0xf]
        %v5694 = vld [vmem:[#allocation13 + $0x18] sm:$0xf]
        %v5695 = vld [vmem:[#allocation13 + $0x1c] sm:$0xf]
        %v5696 = vld [vmem:[#allocation13 + $0x20] sm:$0xf]
        %v5697 = vld [vmem:[#allocation13 + $0x24] sm:$0xf]
        %v5698 = vld [vmem:[#allocation13 + $0x28] sm:$0xf]
        %v5699 = vld [vmem:[#allocation13 + $0x2c] sm:$0xf]
        %v5700 = vld [vmem:[#allocation13 + $0x30] sm:$0xf]
        %v5701 = vld [vmem:[#allocation13 + $0x34] sm:$0xf]
        %v5702 = vld [vmem:[#allocation13 + $0x38] sm:$0xf]
        %v5703 = vld [vmem:[#allocation13 + $0x3c] sm:$0xf]
        %v5720 = vunpack.c.l.b16 %v5688
        %v5721 = vunpack.c.l.b16 %v5689
        %v5722 = vunpack.c.l.b16 %v5690
        %v5723 = vunpack.c.l.b16 %v5691
        %v5724 = vunpack.c.l.b16 %v5692
        %v5725 = vunpack.c.l.b16 %v5693
        %v5726 = vunpack.c.l.b16 %v5694
        %v5727 = vunpack.c.l.b16 %v5695
        %v5728 = vunpack.c.l.b16 %v5696
        %v5729 = vunpack.c.l.b16 %v5697
        %v5730 = vunpack.c.l.b16 %v5698
        %v5731 = vunpack.c.l.b16 %v5699
        %v5732 = vunpack.c.l.b16 %v5700
        %v5733 = vunpack.c.l.b16 %v5701
        %v5734 = vunpack.c.l.b16 %v5702
        %v5735 = vunpack.c.l.b16 %v5703
        %v5736 = vpack.c.b16 %v5721, %v5720
        %v5737 = vpack.c.b16 %v5723, %v5722
        %v5738 = vpack.c.b16 %v5725, %v5724
        %v5739 = vpack.c.b16 %v5727, %v5726
        %v5740 = vpack.c.b16 %v5729, %v5728
        %v5741 = vpack.c.b16 %v5731, %v5730
        %v5742 = vpack.c.b16 %v5733, %v5732
        %v5743 = vpack.c.b16 %v5735, %v5734
        %5752 = vmatprep.subr.bf16.mxu0 0
        %5753 = vmatpush1.bf16.msra.mxu0 %v5743
        %5754 = vmatprep.subr.bf16.mxu0 0
        %5755 = vmatpush1.bf16.msra.mxu0 %v5742
        %5756 = vmatprep.subr.bf16.mxu0 0
        %5757 = vmatpush1.bf16.msra.mxu0 %v5741
        %5758 = vmatprep.subr.bf16.mxu0 0
        %5759 = vmatpush1.bf16.msra.mxu0 %v5740
        %5760 = vmatprep.subr.bf16.mxu0 0
        %5761 = vmatpush1.bf16.msra.mxu0 %v5739
        %5762 = vmatprep.subr.bf16.mxu0 0
        %5763 = vmatpush1.bf16.msra.mxu0 %v5738
        %5764 = vmatprep.subr.bf16.mxu0 0
        %5765 = vmatpush1.bf16.msra.mxu0 %v5737
        %5766 = vmatprep.subr.bf16.mxu0 0
        %5767 = vmatpush1.bf16.msra.mxu0 %v5736
        %5768 = vmatprep.subr.bf16.mxu0 0
        %5769 = vmatpush2.bf16.msra.mxu0 0
        %5770 = vmatprep.subr.bf16.mxu0 0
        %5771 = vmatpush2.bf16.msra.mxu0 0
        %5772 = vmatprep.subr.bf16.mxu0 0
        %5773 = vmatpush2.bf16.msra.mxu0 0
        %5774 = vmatprep.subr.bf16.mxu0 0
        %5775 = vmatpush2.bf16.msra.mxu0 0
        %5776 = vmatprep.subr.bf16.mxu0 0
        %5777 = vmatpush2.bf16.msra.mxu0 0
        %5778 = vmatprep.subr.bf16.mxu0 0
        %5779 = vmatpush2.bf16.msra.mxu0 0
        %5780 = vmatprep.subr.bf16.mxu0 0
        %5781 = vmatpush2.bf16.msra.mxu0 0
        %5782 = vmatprep.subr.bf16.mxu0 0
        %5783 = vmatpush2.bf16.msra.mxu0 0
        %5784 = vmatprep.mubr.bf16.mxu0 0
        %5785 = vmatmul.mubr.bf16.gmra.mxu0 %v5680
        %v5786 = vpop.f32.mrf.mxu0
        %v5787 = vadd.f32 %v406, %v5786
        %v5788 = vpop.f32.mrf.mxu0
        %v5789 = vpop.f32.mrf.mxu0
        %v5790 = vadd.f32 %v406, %v5789
        %v5791 = vpop.f32.mrf.mxu0
        %5792 = vmatprep.mubr.bf16.mxu0 0
        %5793 = vmatmul.mubr.bf16.gmra.mxu0 %v5681
        %v5794 = vpop.f32.mrf.mxu0
        %v5795 = vadd.f32 %v406, %v5794
        %v5796 = vpop.f32.mrf.mxu0
        %v5797 = vpop.f32.mrf.mxu0
        %v5798 = vadd.f32 %v406, %v5797
        %v5799 = vpop.f32.mrf.mxu0
        %5800 = vmatprep.mubr.bf16.mxu0 0
        %5801 = vmatmul.mubr.bf16.gmra.mxu0 %v5682
        %v5802 = vpop.f32.mrf.mxu0
        %v5803 = vadd.f32 %v406, %v5802
        %v5804 = vpop.f32.mrf.mxu0
        %v5805 = vpop.f32.mrf.mxu0
        %v5806 = vadd.f32 %v406, %v5805
        %v5807 = vpop.f32.mrf.mxu0
        %5808 = vmatprep.mubr.bf16.mxu0 0
        %5809 = vmatmul.mubr.bf16.gmra.mxu0 %v5683
        %v5810 = vpop.f32.mrf.mxu0
        %v5811 = vadd.f32 %v406, %v5810
        %v5812 = vpop.f32.mrf.mxu0
        %v5813 = vpop.f32.mrf.mxu0
        %v5814 = vadd.f32 %v406, %v5813
        %v5815 = vpop.f32.mrf.mxu0
        %5816 = vmatprep.mubr.bf16.mxu0 0
        %5817 = vmatmul.mubr.bf16.gmra.mxu0 %v5684
        %v5818 = vpop.f32.mrf.mxu0
        %v5819 = vadd.f32 %v406, %v5818
        %v5820 = vpop.f32.mrf.mxu0
        %v5821 = vpop.f32.mrf.mxu0
        %v5822 = vadd.f32 %v406, %v5821
        %v5823 = vpop.f32.mrf.mxu0
        %5824 = vmatprep.mubr.bf16.mxu0 0
        %5825 = vmatmul.mubr.bf16.gmra.mxu0 %v5685
        %v5826 = vpop.f32.mrf.mxu0
        %v5827 = vadd.f32 %v406, %v5826
        %v5828 = vpop.f32.mrf.mxu0
        %v5829 = vpop.f32.mrf.mxu0
        %v5830 = vadd.f32 %v406, %v5829
        %v5831 = vpop.f32.mrf.mxu0
        %5832 = vmatprep.mubr.bf16.mxu0 0
        %5833 = vmatmul.mubr.bf16.gmra.mxu0 %v5686
        %v5834 = vpop.f32.mrf.mxu0
        %v5835 = vadd.f32 %v406, %v5834
        %v5836 = vpop.f32.mrf.mxu0
        %v5837 = vpop.f32.mrf.mxu0
        %v5838 = vadd.f32 %v406, %v5837
        %v5839 = vpop.f32.mrf.mxu0
        %5840 = vmatprep.mubr.bf16.mxu0 0
        %5841 = vmatmul.mubr.bf16.gmra.mxu0 %v5687
        %v5842 = vpop.f32.mrf.mxu0
        %v5843 = vadd.f32 %v406, %v5842
        %v5844 = vpop.f32.mrf.mxu0
        %v5845 = vpop.f32.mrf.mxu0
        %v5846 = vadd.f32 %v406, %v5845
        %v5847 = vpop.f32.mrf.mxu0
        %5848 = vdwg.mxu0
        %v5849 = vstv %s5493
        %v5850 = vmul.f32 %v5849, %v5787
        %v5851 = vmul.f32 %v5849, %v5790
        %v5852 = vmul.f32 %v5849, %v5795
        %v5853 = vmul.f32 %v5849, %v5798
        %v5854 = vmul.f32 %v5849, %v5803
        %v5855 = vmul.f32 %v5849, %v5806
        %v5856 = vmul.f32 %v5849, %v5811
        %v5857 = vmul.f32 %v5849, %v5814
        %v5858 = vmul.f32 %v5849, %v5819
        %v5859 = vmul.f32 %v5849, %v5822
        %v5860 = vmul.f32 %v5849, %v5827
        %v5861 = vmul.f32 %v5849, %v5830
        %v5862 = vmul.f32 %v5849, %v5835
        %v5863 = vmul.f32 %v5849, %v5838
        %v5864 = vmul.f32 %v5849, %v5843
        %v5865 = vmul.f32 %v5849, %v5846
        %v5866 = vadd.f32 %v5459, %v5850
        %v5867 = vadd.f32 %v5460, %v5851
        %v5868 = vadd.f32 %v5461, %v5852
        %v5869 = vadd.f32 %v5462, %v5853
        %v5870 = vadd.f32 %v5463, %v5854
        %v5871 = vadd.f32 %v5464, %v5855
        %v5872 = vadd.f32 %v5465, %v5856
        %v5873 = vadd.f32 %v5466, %v5857
        %v5874 = vadd.f32 %v5467, %v5858
        %v5875 = vadd.f32 %v5468, %v5859
        %v5876 = vadd.f32 %v5469, %v5860
        %v5877 = vadd.f32 %v5470, %v5861
        %v5878 = vadd.f32 %v5471, %v5862
        %v5879 = vadd.f32 %v5472, %v5863
        %v5880 = vadd.f32 %v5473, %v5864
        %v5881 = vadd.f32 %v5474, %v5865
        %v5882 = vpack.c.bf16 %v5867, %v5866
        %v5883 = vpack.c.bf16 %v5869, %v5868
        %v5884 = vpack.c.bf16 %v5871, %v5870
        %v5885 = vpack.c.bf16 %v5873, %v5872
        %v5886 = vpack.c.bf16 %v5875, %v5874
        %v5887 = vpack.c.bf16 %v5877, %v5876
        %v5888 = vpack.c.bf16 %v5879, %v5878
        %v5889 = vpack.c.bf16 %v5881, %v5880
        %5890 = vmatprep.subr.bf16.mxu0 0
        %5891 = vmatpush1.bf16.msra.mxu0 %v5558
        %5892 = vmatprep.subr.bf16.mxu0 0
        %5893 = vmatpush1.bf16.msra.mxu0 %v5557
        %5894 = vmatprep.subr.bf16.mxu0 0
        %5895 = vmatpush1.bf16.msra.mxu0 %v5556
        %5896 = vmatprep.subr.bf16.mxu0 0
        %5897 = vmatpush1.bf16.msra.mxu0 %v5555
        %5898 = vmatprep.subr.bf16.mxu0 0
        %5899 = vmatpush1.bf16.msra.mxu0 %v5554
        %5900 = vmatprep.subr.bf16.mxu0 0
        %5901 = vmatpush1.bf16.msra.mxu0 %v5553
        %5902 = vmatprep.subr.bf16.mxu0 0
        %5903 = vmatpush1.bf16.msra.mxu0 %v5552
        %5904 = vmatprep.subr.bf16.mxu0 0
        %5905 = vmatpush1.bf16.msra.mxu0 %v5551
        %5906 = vmatprep.subr.bf16.mxu0 0
        %5907 = vmatpush2.bf16.msra.mxu0 0
        %5908 = vmatprep.subr.bf16.mxu0 0
        %5909 = vmatpush2.bf16.msra.mxu0 0
        %5910 = vmatprep.subr.bf16.mxu0 0
        %5911 = vmatpush2.bf16.msra.mxu0 0
        %5912 = vmatprep.subr.bf16.mxu0 0
        %5913 = vmatpush2.bf16.msra.mxu0 0
        %5914 = vmatprep.subr.bf16.mxu0 0
        %5915 = vmatpush2.bf16.msra.mxu0 0
        %5916 = vmatprep.subr.bf16.mxu0 0
        %5917 = vmatpush2.bf16.msra.mxu0 0
        %5918 = vmatprep.subr.bf16.mxu0 0
        %5919 = vmatpush2.bf16.msra.mxu0 0
        %5920 = vmatprep.subr.bf16.mxu0 0
        %5921 = vmatpush2.bf16.msra.mxu0 0
        %5922 = vmatprep.mubr.bf16.mxu0 0
        %5923 = vmatmul.mubr.bf16.gmra.mxu0 %v5882
        %v5924 = vpop.f32.mrf.mxu0
        %v5925 = vadd.f32 %v399, %v5924
        %v5926 = vpop.f32.mrf.mxu0
        %v5927 = vpop.f32.mrf.mxu0
        %v5928 = vadd.f32 %v399, %v5927
        %v5929 = vpop.f32.mrf.mxu0
        %5930 = vmatprep.mubr.bf16.mxu0 0
        %5931 = vmatmul.mubr.bf16.gmra.mxu0 %v5883
        %v5932 = vpop.f32.mrf.mxu0
        %v5933 = vadd.f32 %v399, %v5932
        %v5934 = vpop.f32.mrf.mxu0
        %v5935 = vpop.f32.mrf.mxu0
        %v5936 = vadd.f32 %v399, %v5935
        %v5937 = vpop.f32.mrf.mxu0
        %5938 = vmatprep.mubr.bf16.mxu0 0
        %5939 = vmatmul.mubr.bf16.gmra.mxu0 %v5884
        %v5940 = vpop.f32.mrf.mxu0
        %v5941 = vadd.f32 %v399, %v5940
        %v5942 = vpop.f32.mrf.mxu0
        %v5943 = vpop.f32.mrf.mxu0
        %v5944 = vadd.f32 %v399, %v5943
        %v5945 = vpop.f32.mrf.mxu0
        %5946 = vmatprep.mubr.bf16.mxu0 0
        %5947 = vmatmul.mubr.bf16.gmra.mxu0 %v5885
        %v5948 = vpop.f32.mrf.mxu0
        %v5949 = vadd.f32 %v399, %v5948
        %v5950 = vpop.f32.mrf.mxu0
        %v5951 = vpop.f32.mrf.mxu0
        %v5952 = vadd.f32 %v399, %v5951
        %v5953 = vpop.f32.mrf.mxu0
        %5954 = vmatprep.mubr.bf16.mxu0 0
        %5955 = vmatmul.mubr.bf16.gmra.mxu0 %v5886
        %v5956 = vpop.f32.mrf.mxu0
        %v5957 = vadd.f32 %v399, %v5956
        %v5958 = vpop.f32.mrf.mxu0
        %v5959 = vpop.f32.mrf.mxu0
        %v5960 = vadd.f32 %v399, %v5959
        %v5961 = vpop.f32.mrf.mxu0
        %5962 = vmatprep.mubr.bf16.mxu0 0
        %5963 = vmatmul.mubr.bf16.gmra.mxu0 %v5887
        %v5964 = vpop.f32.mrf.mxu0
        %v5965 = vadd.f32 %v399, %v5964
        %v5966 = vpop.f32.mrf.mxu0
        %v5967 = vpop.f32.mrf.mxu0
        %v5968 = vadd.f32 %v399, %v5967
        %v5969 = vpop.f32.mrf.mxu0
        %5970 = vmatprep.mubr.bf16.mxu0 0
        %5971 = vmatmul.mubr.bf16.gmra.mxu0 %v5888
        %v5972 = vpop.f32.mrf.mxu0
        %v5973 = vadd.f32 %v399, %v5972
        %v5974 = vpop.f32.mrf.mxu0
        %v5975 = vpop.f32.mrf.mxu0
        %v5976 = vadd.f32 %v399, %v5975
        %v5977 = vpop.f32.mrf.mxu0
        %5978 = vmatprep.mubr.bf16.mxu0 0
        %5979 = vmatmul.mubr.bf16.gmra.mxu0 %v5889
        %v5980 = vpop.f32.mrf.mxu0
        %v5981 = vadd.f32 %v399, %v5980
        %v5982 = vpop.f32.mrf.mxu0
        %v5983 = vpop.f32.mrf.mxu0
        %v5984 = vadd.f32 %v399, %v5983
        %v5985 = vpop.f32.mrf.mxu0
        %5986 = vdwg.mxu0
        %v5987 = vtanh.pop %v5925
        %v5988 = vtanh.pop %v5928
        %v5989 = vtanh.pop %v5933
        %v5990 = vtanh.pop %v5936
        %v5991 = vtanh.pop %v5941
        %v5992 = vtanh.pop %v5944
        %v5993 = vtanh.pop %v5949
        %v5994 = vtanh.pop %v5952
        %v5995 = vtanh.pop %v5957
        %v5996 = vtanh.pop %v5960
        %v5997 = vtanh.pop %v5965
        %v5998 = vtanh.pop %v5968
        %v5999 = vtanh.pop %v5973
        %v6000 = vtanh.pop %v5976
        %v6001 = vtanh.pop %v5981
        %v6002 = vtanh.pop %v5984
        %v6003 = vpack.c.bf16 %v5988, %v5987
        %v6004 = vpack.c.bf16 %v5990, %v5989
        %v6005 = vpack.c.bf16 %v5992, %v5991
        %v6006 = vpack.c.bf16 %v5994, %v5993
        %v6007 = vpack.c.bf16 %v5996, %v5995
        %v6008 = vpack.c.bf16 %v5998, %v5997
        %v6009 = vpack.c.bf16 %v6000, %v5999
        %v6010 = vpack.c.bf16 %v6002, %v6001
        %6011 = vmatprep.subr.bf16.mxu0 0
        %6012 = vmatpush1.bf16.msra.mxu0 %v5743
        %6013 = vmatprep.subr.bf16.mxu0 0
        %6014 = vmatpush1.bf16.msra.mxu0 %v5742
        %6015 = vmatprep.subr.bf16.mxu0 0
        %6016 = vmatpush1.bf16.msra.mxu0 %v5741
        %6017 = vmatprep.subr.bf16.mxu0 0
        %6018 = vmatpush1.bf16.msra.mxu0 %v5740
        %6019 = vmatprep.subr.bf16.mxu0 0
        %6020 = vmatpush1.bf16.msra.mxu0 %v5739
        %6021 = vmatprep.subr.bf16.mxu0 0
        %6022 = vmatpush1.bf16.msra.mxu0 %v5738
        %6023 = vmatprep.subr.bf16.mxu0 0
        %6024 = vmatpush1.bf16.msra.mxu0 %v5737
        %6025 = vmatprep.subr.bf16.mxu0 0
        %6026 = vmatpush1.bf16.msra.mxu0 %v5736
        %6027 = vmatprep.subr.bf16.mxu0 0
        %6028 = vmatpush2.bf16.msra.mxu0 0
        %6029 = vmatprep.subr.bf16.mxu0 0
        %6030 = vmatpush2.bf16.msra.mxu0 0
        %6031 = vmatprep.subr.bf16.mxu0 0
        %6032 = vmatpush2.bf16.msra.mxu0 0
        %6033 = vmatprep.subr.bf16.mxu0 0
        %6034 = vmatpush2.bf16.msra.mxu0 0
        %6035 = vmatprep.subr.bf16.mxu0 0
        %6036 = vmatpush2.bf16.msra.mxu0 0
        %6037 = vmatprep.subr.bf16.mxu0 0
        %6038 = vmatpush2.bf16.msra.mxu0 0
        %6039 = vmatprep.subr.bf16.mxu0 0
        %6040 = vmatpush2.bf16.msra.mxu0 0
        %6041 = vmatprep.subr.bf16.mxu0 0
        %6042 = vmatpush2.bf16.msra.mxu0 0
        %6043 = vmatprep.mubr.bf16.mxu0 0
        %6044 = vmatmul.mubr.bf16.gmra.mxu0 %v6003
        %v6045 = vpop.f32.mrf.mxu0
        %v6046 = vadd.f32 %v406, %v6045
        %v6047 = vpop.f32.mrf.mxu0
        %v6048 = vpop.f32.mrf.mxu0
        %v6049 = vadd.f32 %v406, %v6048
        %v6050 = vpop.f32.mrf.mxu0
        %6051 = vmatprep.mubr.bf16.mxu0 0
        %6052 = vmatmul.mubr.bf16.gmra.mxu0 %v6004
        %v6053 = vpop.f32.mrf.mxu0
        %v6054 = vadd.f32 %v406, %v6053
        %v6055 = vpop.f32.mrf.mxu0
        %v6056 = vpop.f32.mrf.mxu0
        %v6057 = vadd.f32 %v406, %v6056
        %v6058 = vpop.f32.mrf.mxu0
        %6059 = vmatprep.mubr.bf16.mxu0 0
        %6060 = vmatmul.mubr.bf16.gmra.mxu0 %v6005
        %v6061 = vpop.f32.mrf.mxu0
        %v6062 = vadd.f32 %v406, %v6061
        %v6063 = vpop.f32.mrf.mxu0
        %v6064 = vpop.f32.mrf.mxu0
        %v6065 = vadd.f32 %v406, %v6064
        %v6066 = vpop.f32.mrf.mxu0
        %6067 = vmatprep.mubr.bf16.mxu0 0
        %6068 = vmatmul.mubr.bf16.gmra.mxu0 %v6006
        %v6069 = vpop.f32.mrf.mxu0
        %v6070 = vadd.f32 %v406, %v6069
        %v6071 = vpop.f32.mrf.mxu0
        %v6072 = vpop.f32.mrf.mxu0
        %v6073 = vadd.f32 %v406, %v6072
        %v6074 = vpop.f32.mrf.mxu0
        %6075 = vmatprep.mubr.bf16.mxu0 0
        %6076 = vmatmul.mubr.bf16.gmra.mxu0 %v6007
        %v6077 = vpop.f32.mrf.mxu0
        %v6078 = vadd.f32 %v406, %v6077
        %v6079 = vpop.f32.mrf.mxu0
        %v6080 = vpop.f32.mrf.mxu0
        %v6081 = vadd.f32 %v406, %v6080
        %v6082 = vpop.f32.mrf.mxu0
        %6083 = vmatprep.mubr.bf16.mxu0 0
        %6084 = vmatmul.mubr.bf16.gmra.mxu0 %v6008
        %v6085 = vpop.f32.mrf.mxu0
        %v6086 = vadd.f32 %v406, %v6085
        %v6087 = vpop.f32.mrf.mxu0
        %v6088 = vpop.f32.mrf.mxu0
        %v6089 = vadd.f32 %v406, %v6088
        %v6090 = vpop.f32.mrf.mxu0
        %6091 = vmatprep.mubr.bf16.mxu0 0
        %6092 = vmatmul.mubr.bf16.gmra.mxu0 %v6009
        %v6093 = vpop.f32.mrf.mxu0
        %v6094 = vadd.f32 %v406, %v6093
        %v6095 = vpop.f32.mrf.mxu0
        %v6096 = vpop.f32.mrf.mxu0
        %v6097 = vadd.f32 %v406, %v6096
        %v6098 = vpop.f32.mrf.mxu0
        %6099 = vmatprep.mubr.bf16.mxu0 0
        %6100 = vmatmul.mubr.bf16.gmra.mxu0 %v6010
        %v6101 = vpop.f32.mrf.mxu0
        %v6102 = vadd.f32 %v406, %v6101
        %v6103 = vpop.f32.mrf.mxu0
        %v6104 = vpop.f32.mrf.mxu0
        %v6105 = vadd.f32 %v406, %v6104
        %v6106 = vpop.f32.mrf.mxu0
        %6107 = vdwg.mxu0
        %v6108 = vmul.f32 %v5849, %v6046
        %v6109 = vmul.f32 %v5849, %v6049
        %v6110 = vmul.f32 %v5849, %v6054
        %v6111 = vmul.f32 %v5849, %v6057
        %v6112 = vmul.f32 %v5849, %v6062
        %v6113 = vmul.f32 %v5849, %v6065
        %v6114 = vmul.f32 %v5849, %v6070
        %v6115 = vmul.f32 %v5849, %v6073
        %v6116 = vmul.f32 %v5849, %v6078
        %v6117 = vmul.f32 %v5849, %v6081
        %v6118 = vmul.f32 %v5849, %v6086
        %v6119 = vmul.f32 %v5849, %v6089
        %v6120 = vmul.f32 %v5849, %v6094
        %v6121 = vmul.f32 %v5849, %v6097
        %v6122 = vmul.f32 %v5849, %v6102
        %v6123 = vmul.f32 %v5849, %v6105
        %v6124 = vadd.f32 %v5459, %v6108
        %v6125 = vadd.f32 %v5460, %v6109
        %v6126 = vadd.f32 %v5461, %v6110
        %v6127 = vadd.f32 %v5462, %v6111
        %v6128 = vadd.f32 %v5463, %v6112
        %v6129 = vadd.f32 %v5464, %v6113
        %v6130 = vadd.f32 %v5465, %v6114
        %v6131 = vadd.f32 %v5466, %v6115
        %v6132 = vadd.f32 %v5467, %v6116
        %v6133 = vadd.f32 %v5468, %v6117
        %v6134 = vadd.f32 %v5469, %v6118
        %v6135 = vadd.f32 %v5470, %v6119
        %v6136 = vadd.f32 %v5471, %v6120
        %v6137 = vadd.f32 %v5472, %v6121
        %v6138 = vadd.f32 %v5473, %v6122
        %v6139 = vadd.f32 %v5474, %v6123
        %v6140 = vpack.c.bf16 %v6125, %v6124
        %v6141 = vpack.c.bf16 %v6127, %v6126
        %v6142 = vpack.c.bf16 %v6129, %v6128
        %v6143 = vpack.c.bf16 %v6131, %v6130
        %v6144 = vpack.c.bf16 %v6133, %v6132
        %v6145 = vpack.c.bf16 %v6135, %v6134
        %v6146 = vpack.c.bf16 %v6137, %v6136
        %v6147 = vpack.c.bf16 %v6139, %v6138
        %6148 = vmatprep.subr.bf16.mxu0 0
        %6149 = vmatpush1.bf16.msra.mxu0 %v5558
        %6150 = vmatprep.subr.bf16.mxu0 0
        %6151 = vmatpush1.bf16.msra.mxu0 %v5557
        %6152 = vmatprep.subr.bf16.mxu0 0
        %6153 = vmatpush1.bf16.msra.mxu0 %v5556
        %6154 = vmatprep.subr.bf16.mxu0 0
        %6155 = vmatpush1.bf16.msra.mxu0 %v5555
        %6156 = vmatprep.subr.bf16.mxu0 0
        %6157 = vmatpush1.bf16.msra.mxu0 %v5554
        %6158 = vmatprep.subr.bf16.mxu0 0
        %6159 = vmatpush1.bf16.msra.mxu0 %v5553
        %6160 = vmatprep.subr.bf16.mxu0 0
        %6161 = vmatpush1.bf16.msra.mxu0 %v5552
        %6162 = vmatprep.subr.bf16.mxu0 0
        %6163 = vmatpush1.bf16.msra.mxu0 %v5551
        %6164 = vmatprep.subr.bf16.mxu0 0
        %6165 = vmatpush2.bf16.msra.mxu0 0
        %6166 = vmatprep.subr.bf16.mxu0 0
        %6167 = vmatpush2.bf16.msra.mxu0 0
        %6168 = vmatprep.subr.bf16.mxu0 0
        %6169 = vmatpush2.bf16.msra.mxu0 0
        %6170 = vmatprep.subr.bf16.mxu0 0
        %6171 = vmatpush2.bf16.msra.mxu0 0
        %6172 = vmatprep.subr.bf16.mxu0 0
        %6173 = vmatpush2.bf16.msra.mxu0 0
        %6174 = vmatprep.subr.bf16.mxu0 0
        %6175 = vmatpush2.bf16.msra.mxu0 0
        %6176 = vmatprep.subr.bf16.mxu0 0
        %6177 = vmatpush2.bf16.msra.mxu0 0
        %6178 = vmatprep.subr.bf16.mxu0 0
        %6179 = vmatpush2.bf16.msra.mxu0 0
        %6180 = vmatprep.mubr.bf16.mxu0 0
        %6181 = vmatmul.mubr.bf16.gmra.mxu0 %v6140
        %v6182 = vpop.f32.mrf.mxu0
        %v6183 = vadd.f32 %v399, %v6182
        %v6184 = vpop.f32.mrf.mxu0
        %v6185 = vpop.f32.mrf.mxu0
        %v6186 = vadd.f32 %v399, %v6185
        %v6187 = vpop.f32.mrf.mxu0
        %6188 = vmatprep.mubr.bf16.mxu0 0
        %6189 = vmatmul.mubr.bf16.gmra.mxu0 %v6141
        %v6190 = vpop.f32.mrf.mxu0
        %v6191 = vadd.f32 %v399, %v6190
        %v6192 = vpop.f32.mrf.mxu0
        %v6193 = vpop.f32.mrf.mxu0
        %v6194 = vadd.f32 %v399, %v6193
        %v6195 = vpop.f32.mrf.mxu0
        %6196 = vmatprep.mubr.bf16.mxu0 0
        %6197 = vmatmul.mubr.bf16.gmra.mxu0 %v6142
        %v6198 = vpop.f32.mrf.mxu0
        %v6199 = vadd.f32 %v399, %v6198
        %v6200 = vpop.f32.mrf.mxu0
        %v6201 = vpop.f32.mrf.mxu0
        %v6202 = vadd.f32 %v399, %v6201
        %v6203 = vpop.f32.mrf.mxu0
        %6204 = vmatprep.mubr.bf16.mxu0 0
        %6205 = vmatmul.mubr.bf16.gmra.mxu0 %v6143
        %v6206 = vpop.f32.mrf.mxu0
        %v6207 = vadd.f32 %v399, %v6206
        %v6208 = vpop.f32.mrf.mxu0
        %v6209 = vpop.f32.mrf.mxu0
        %v6210 = vadd.f32 %v399, %v6209
        %v6211 = vpop.f32.mrf.mxu0
        %6212 = vmatprep.mubr.bf16.mxu0 0
        %6213 = vmatmul.mubr.bf16.gmra.mxu0 %v6144
        %v6214 = vpop.f32.mrf.mxu0
        %v6215 = vadd.f32 %v399, %v6214
        %v6216 = vpop.f32.mrf.mxu0
        %v6217 = vpop.f32.mrf.mxu0
        %v6218 = vadd.f32 %v399, %v6217
        %v6219 = vpop.f32.mrf.mxu0
        %6220 = vmatprep.mubr.bf16.mxu0 0
        %6221 = vmatmul.mubr.bf16.gmra.mxu0 %v6145
        %v6222 = vpop.f32.mrf.mxu0
        %v6223 = vadd.f32 %v399, %v6222
        %v6224 = vpop.f32.mrf.mxu0
        %v6225 = vpop.f32.mrf.mxu0
        %v6226 = vadd.f32 %v399, %v6225
        %v6227 = vpop.f32.mrf.mxu0
        %6228 = vmatprep.mubr.bf16.mxu0 0
        %6229 = vmatmul.mubr.bf16.gmra.mxu0 %v6146
        %v6230 = vpop.f32.mrf.mxu0
        %v6231 = vadd.f32 %v399, %v6230
        %v6232 = vpop.f32.mrf.mxu0
        %v6233 = vpop.f32.mrf.mxu0
        %v6234 = vadd.f32 %v399, %v6233
        %v6235 = vpop.f32.mrf.mxu0
        %6236 = vmatprep.mubr.bf16.mxu0 0
        %6237 = vmatmul.mubr.bf16.gmra.mxu0 %v6147
        %v6238 = vpop.f32.mrf.mxu0
        %v6239 = vadd.f32 %v399, %v6238
        %v6240 = vpop.f32.mrf.mxu0
        %v6241 = vpop.f32.mrf.mxu0
        %v6242 = vadd.f32 %v399, %v6241
        %v6243 = vpop.f32.mrf.mxu0
        %6244 = vdwg.mxu0
        %v6245 = vtanh.pop %v6183
        %v6246 = vtanh.pop %v6186
        %v6247 = vtanh.pop %v6191
        %v6248 = vtanh.pop %v6194
        %v6249 = vtanh.pop %v6199
        %v6250 = vtanh.pop %v6202
        %v6251 = vtanh.pop %v6207
        %v6252 = vtanh.pop %v6210
        %v6253 = vtanh.pop %v6215
        %v6254 = vtanh.pop %v6218
        %v6255 = vtanh.pop %v6223
        %v6256 = vtanh.pop %v6226
        %v6257 = vtanh.pop %v6231
        %v6258 = vtanh.pop %v6234
        %v6259 = vtanh.pop %v6239
        %v6260 = vtanh.pop %v6242
        %v6261 = vpack.c.bf16 %v6246, %v6245
        %v6262 = vpack.c.bf16 %v6248, %v6247
        %v6263 = vpack.c.bf16 %v6250, %v6249
        %v6264 = vpack.c.bf16 %v6252, %v6251
        %v6265 = vpack.c.bf16 %v6254, %v6253
        %v6266 = vpack.c.bf16 %v6256, %v6255
        %v6267 = vpack.c.bf16 %v6258, %v6257
        %v6268 = vpack.c.bf16 %v6260, %v6259
        %6269 = vmatprep.subr.bf16.mxu0 0
        %6270 = vmatpush1.bf16.msra.mxu0 %v5743
        %6271 = vmatprep.subr.bf16.mxu0 0
        %6272 = vmatpush1.bf16.msra.mxu0 %v5742
        %6273 = vmatprep.subr.bf16.mxu0 0
        %6274 = vmatpush1.bf16.msra.mxu0 %v5741
        %6275 = vmatprep.subr.bf16.mxu0 0
        %6276 = vmatpush1.bf16.msra.mxu0 %v5740
        %6277 = vmatprep.subr.bf16.mxu0 0
        %6278 = vmatpush1.bf16.msra.mxu0 %v5739
        %6279 = vmatprep.subr.bf16.mxu0 0
        %6280 = vmatpush1.bf16.msra.mxu0 %v5738
        %6281 = vmatprep.subr.bf16.mxu0 0
        %6282 = vmatpush1.bf16.msra.mxu0 %v5737
        %6283 = vmatprep.subr.bf16.mxu0 0
        %6284 = vmatpush1.bf16.msra.mxu0 %v5736
        %6285 = vmatprep.subr.bf16.mxu0 0
        %6286 = vmatpush2.bf16.msra.mxu0 0
        %6287 = vmatprep.subr.bf16.mxu0 0
        %6288 = vmatpush2.bf16.msra.mxu0 0
        %6289 = vmatprep.subr.bf16.mxu0 0
        %6290 = vmatpush2.bf16.msra.mxu0 0
        %6291 = vmatprep.subr.bf16.mxu0 0
        %6292 = vmatpush2.bf16.msra.mxu0 0
        %6293 = vmatprep.subr.bf16.mxu0 0
        %6294 = vmatpush2.bf16.msra.mxu0 0
        %6295 = vmatprep.subr.bf16.mxu0 0
        %6296 = vmatpush2.bf16.msra.mxu0 0
        %6297 = vmatprep.subr.bf16.mxu0 0
        %6298 = vmatpush2.bf16.msra.mxu0 0
        %6299 = vmatprep.subr.bf16.mxu0 0
        %6300 = vmatpush2.bf16.msra.mxu0 0
        %6301 = vmatprep.mubr.bf16.mxu0 0
        %6302 = vmatmul.mubr.bf16.gmra.mxu0 %v6261
        %v6303 = vpop.f32.mrf.mxu0
        %v6304 = vadd.f32 %v406, %v6303
        %v6305 = vpop.f32.mrf.mxu0
        %v6306 = vpop.f32.mrf.mxu0
        %v6307 = vadd.f32 %v406, %v6306
        %v6308 = vpop.f32.mrf.mxu0
        %6309 = vmatprep.mubr.bf16.mxu0 0
        %6310 = vmatmul.mubr.bf16.gmra.mxu0 %v6262
        %v6311 = vpop.f32.mrf.mxu0
        %v6312 = vadd.f32 %v406, %v6311
        %v6313 = vpop.f32.mrf.mxu0
        %v6314 = vpop.f32.mrf.mxu0
        %v6315 = vadd.f32 %v406, %v6314
        %v6316 = vpop.f32.mrf.mxu0
        %6317 = vmatprep.mubr.bf16.mxu0 0
        %6318 = vmatmul.mubr.bf16.gmra.mxu0 %v6263
        %v6319 = vpop.f32.mrf.mxu0
        %v6320 = vadd.f32 %v406, %v6319
        %v6321 = vpop.f32.mrf.mxu0
        %v6322 = vpop.f32.mrf.mxu0
        %v6323 = vadd.f32 %v406, %v6322
        %v6324 = vpop.f32.mrf.mxu0
        %6325 = vmatprep.mubr.bf16.mxu0 0
        %6326 = vmatmul.mubr.bf16.gmra.mxu0 %v6264
        %v6327 = vpop.f32.mrf.mxu0
        %v6328 = vadd.f32 %v406, %v6327
        %v6329 = vpop.f32.mrf.mxu0
        %v6330 = vpop.f32.mrf.mxu0
        %v6331 = vadd.f32 %v406, %v6330
        %v6332 = vpop.f32.mrf.mxu0
        %6333 = vmatprep.mubr.bf16.mxu0 0
        %6334 = vmatmul.mubr.bf16.gmra.mxu0 %v6265
        %v6335 = vpop.f32.mrf.mxu0
        %v6336 = vadd.f32 %v406, %v6335
        %v6337 = vpop.f32.mrf.mxu0
        %v6338 = vpop.f32.mrf.mxu0
        %v6339 = vadd.f32 %v406, %v6338
        %v6340 = vpop.f32.mrf.mxu0
        %6341 = vmatprep.mubr.bf16.mxu0 0
        %6342 = vmatmul.mubr.bf16.gmra.mxu0 %v6266
        %v6343 = vpop.f32.mrf.mxu0
        %v6344 = vadd.f32 %v406, %v6343
        %v6345 = vpop.f32.mrf.mxu0
        %v6346 = vpop.f32.mrf.mxu0
        %v6347 = vadd.f32 %v406, %v6346
        %v6348 = vpop.f32.mrf.mxu0
        %6349 = vmatprep.mubr.bf16.mxu0 0
        %6350 = vmatmul.mubr.bf16.gmra.mxu0 %v6267
        %v6351 = vpop.f32.mrf.mxu0
        %v6352 = vadd.f32 %v406, %v6351
        %v6353 = vpop.f32.mrf.mxu0
        %v6354 = vpop.f32.mrf.mxu0
        %v6355 = vadd.f32 %v406, %v6354
        %v6356 = vpop.f32.mrf.mxu0
        %6357 = vmatprep.mubr.bf16.mxu0 0
        %6358 = vmatmul.mubr.bf16.gmra.mxu0 %v6268
        %v6359 = vpop.f32.mrf.mxu0
        %v6360 = vadd.f32 %v406, %v6359
        %v6361 = vpop.f32.mrf.mxu0
        %v6362 = vpop.f32.mrf.mxu0
        %v6363 = vadd.f32 %v406, %v6362
        %v6364 = vpop.f32.mrf.mxu0
        %6365 = vdwg.mxu0
        %v6366 = vstv %s5492
        %v6367 = vmul.f32 %v6366, %v6304
        %v6368 = vmul.f32 %v6366, %v6307
        %v6369 = vmul.f32 %v6366, %v6312
        %v6370 = vmul.f32 %v6366, %v6315
        %v6371 = vmul.f32 %v6366, %v6320
        %v6372 = vmul.f32 %v6366, %v6323
        %v6373 = vmul.f32 %v6366, %v6328
        %v6374 = vmul.f32 %v6366, %v6331
        %v6375 = vmul.f32 %v6366, %v6336
        %v6376 = vmul.f32 %v6366, %v6339
        %v6377 = vmul.f32 %v6366, %v6344
        %v6378 = vmul.f32 %v6366, %v6347
        %v6379 = vmul.f32 %v6366, %v6352
        %v6380 = vmul.f32 %v6366, %v6355
        %v6381 = vmul.f32 %v6366, %v6360
        %v6382 = vmul.f32 %v6366, %v6363
        %v6383 = vadd.f32 %v5459, %v6367
        %v6384 = vadd.f32 %v5460, %v6368
        %v6385 = vadd.f32 %v5461, %v6369
        %v6386 = vadd.f32 %v5462, %v6370
        %v6387 = vadd.f32 %v5463, %v6371
        %v6388 = vadd.f32 %v5464, %v6372
        %v6389 = vadd.f32 %v5465, %v6373
        %v6390 = vadd.f32 %v5466, %v6374
        %v6391 = vadd.f32 %v5467, %v6375
        %v6392 = vadd.f32 %v5468, %v6376
        %v6393 = vadd.f32 %v5469, %v6377
        %v6394 = vadd.f32 %v5470, %v6378
        %v6395 = vadd.f32 %v5471, %v6379
        %v6396 = vadd.f32 %v5472, %v6380
        %v6397 = vadd.f32 %v5473, %v6381
        %v6398 = vadd.f32 %v5474, %v6382
        %v6399 = vpack.c.bf16 %v6384, %v6383
        %v6400 = vpack.c.bf16 %v6386, %v6385
        %v6401 = vpack.c.bf16 %v6388, %v6387
        %v6402 = vpack.c.bf16 %v6390, %v6389
        %v6403 = vpack.c.bf16 %v6392, %v6391
        %v6404 = vpack.c.bf16 %v6394, %v6393
        %v6405 = vpack.c.bf16 %v6396, %v6395
        %v6406 = vpack.c.bf16 %v6398, %v6397
        %6407 = vmatprep.subr.bf16.mxu0 0
        %6408 = vmatpush1.bf16.msra.mxu0 %v5558
        %6409 = vmatprep.subr.bf16.mxu0 0
        %6410 = vmatpush1.bf16.msra.mxu0 %v5557
        %6411 = vmatprep.subr.bf16.mxu0 0
        %6412 = vmatpush1.bf16.msra.mxu0 %v5556
        %6413 = vmatprep.subr.bf16.mxu0 0
        %6414 = vmatpush1.bf16.msra.mxu0 %v5555
        %6415 = vmatprep.subr.bf16.mxu0 0
        %6416 = vmatpush1.bf16.msra.mxu0 %v5554
        %6417 = vmatprep.subr.bf16.mxu0 0
        %6418 = vmatpush1.bf16.msra.mxu0 %v5553
        %6419 = vmatprep.subr.bf16.mxu0 0
        %6420 = vmatpush1.bf16.msra.mxu0 %v5552
        %6421 = vmatprep.subr.bf16.mxu0 0
        %6422 = vmatpush1.bf16.msra.mxu0 %v5551
        %6423 = vmatprep.subr.bf16.mxu0 0
        %6424 = vmatpush2.bf16.msra.mxu0 0
        %6425 = vmatprep.subr.bf16.mxu0 0
        %6426 = vmatpush2.bf16.msra.mxu0 0
        %6427 = vmatprep.subr.bf16.mxu0 0
        %6428 = vmatpush2.bf16.msra.mxu0 0
        %6429 = vmatprep.subr.bf16.mxu0 0
        %6430 = vmatpush2.bf16.msra.mxu0 0
        %6431 = vmatprep.subr.bf16.mxu0 0
        %6432 = vmatpush2.bf16.msra.mxu0 0
        %6433 = vmatprep.subr.bf16.mxu0 0
        %6434 = vmatpush2.bf16.msra.mxu0 0
        %6435 = vmatprep.subr.bf16.mxu0 0
        %6436 = vmatpush2.bf16.msra.mxu0 0
        %6437 = vmatprep.subr.bf16.mxu0 0
        %6438 = vmatpush2.bf16.msra.mxu0 0
        %6439 = vmatprep.mubr.bf16.mxu0 0
        %6440 = vmatmul.mubr.bf16.gmra.mxu0 %v6399
        %v6441 = vpop.f32.mrf.mxu0
        %v6442 = vadd.f32 %v399, %v6441
        %v6443 = vpop.f32.mrf.mxu0
        %v6444 = vpop.f32.mrf.mxu0
        %v6445 = vadd.f32 %v399, %v6444
        %v6446 = vpop.f32.mrf.mxu0
        %6447 = vmatprep.mubr.bf16.mxu0 0
        %6448 = vmatmul.mubr.bf16.gmra.mxu0 %v6400
        %v6449 = vpop.f32.mrf.mxu0
        %v6450 = vadd.f32 %v399, %v6449
        %v6451 = vpop.f32.mrf.mxu0
        %v6452 = vpop.f32.mrf.mxu0
        %v6453 = vadd.f32 %v399, %v6452
        %v6454 = vpop.f32.mrf.mxu0
        %6455 = vmatprep.mubr.bf16.mxu0 0
        %6456 = vmatmul.mubr.bf16.gmra.mxu0 %v6401
        %v6457 = vpop.f32.mrf.mxu0
        %v6458 = vadd.f32 %v399, %v6457
        %v6459 = vpop.f32.mrf.mxu0
        %v6460 = vpop.f32.mrf.mxu0
        %v6461 = vadd.f32 %v399, %v6460
        %v6462 = vpop.f32.mrf.mxu0
        %6463 = vmatprep.mubr.bf16.mxu0 0
        %6464 = vmatmul.mubr.bf16.gmra.mxu0 %v6402
        %v6465 = vpop.f32.mrf.mxu0
        %v6466 = vadd.f32 %v399, %v6465
        %v6467 = vpop.f32.mrf.mxu0
        %v6468 = vpop.f32.mrf.mxu0
        %v6469 = vadd.f32 %v399, %v6468
        %v6470 = vpop.f32.mrf.mxu0
        %6471 = vmatprep.mubr.bf16.mxu0 0
        %6472 = vmatmul.mubr.bf16.gmra.mxu0 %v6403
        %v6473 = vpop.f32.mrf.mxu0
        %v6474 = vadd.f32 %v399, %v6473
        %v6475 = vpop.f32.mrf.mxu0
        %v6476 = vpop.f32.mrf.mxu0
        %v6477 = vadd.f32 %v399, %v6476
        %v6478 = vpop.f32.mrf.mxu0
        %6479 = vmatprep.mubr.bf16.mxu0 0
        %6480 = vmatmul.mubr.bf16.gmra.mxu0 %v6404
        %v6481 = vpop.f32.mrf.mxu0
        %v6482 = vadd.f32 %v399, %v6481
        %v6483 = vpop.f32.mrf.mxu0
        %v6484 = vpop.f32.mrf.mxu0
        %v6485 = vadd.f32 %v399, %v6484
        %v6486 = vpop.f32.mrf.mxu0
        %6487 = vmatprep.mubr.bf16.mxu0 0
        %6488 = vmatmul.mubr.bf16.gmra.mxu0 %v6405
        %v6489 = vpop.f32.mrf.mxu0
        %v6490 = vadd.f32 %v399, %v6489
        %v6491 = vpop.f32.mrf.mxu0
        %v6492 = vpop.f32.mrf.mxu0
        %v6493 = vadd.f32 %v399, %v6492
        %v6494 = vpop.f32.mrf.mxu0
        %6495 = vmatprep.mubr.bf16.mxu0 0
        %6496 = vmatmul.mubr.bf16.gmra.mxu0 %v6406
        %v6497 = vpop.f32.mrf.mxu0
        %v6498 = vadd.f32 %v399, %v6497
        %v6499 = vpop.f32.mrf.mxu0
        %v6500 = vpop.f32.mrf.mxu0
        %v6501 = vadd.f32 %v399, %v6500
        %v6502 = vpop.f32.mrf.mxu0
        %6503 = vdwg.mxu0
        %v6504 = vtanh.pop %v6442
        %v6505 = vtanh.pop %v6445
        %v6506 = vtanh.pop %v6450
        %v6507 = vtanh.pop %v6453
        %v6508 = vtanh.pop %v6458
        %v6509 = vtanh.pop %v6461
        %v6510 = vtanh.pop %v6466
        %v6511 = vtanh.pop %v6469
        %v6512 = vtanh.pop %v6474
        %v6513 = vtanh.pop %v6477
        %v6514 = vtanh.pop %v6482
        %v6515 = vtanh.pop %v6485
        %v6516 = vtanh.pop %v6490
        %v6517 = vtanh.pop %v6493
        %v6518 = vtanh.pop %v6498
        %v6519 = vtanh.pop %v6501
        %v6520 = vpack.c.bf16 %v6505, %v6504
        %v6521 = vpack.c.bf16 %v6507, %v6506
        %v6522 = vpack.c.bf16 %v6509, %v6508
        %v6523 = vpack.c.bf16 %v6511, %v6510
        %v6524 = vpack.c.bf16 %v6513, %v6512
        %v6525 = vpack.c.bf16 %v6515, %v6514
        %v6526 = vpack.c.bf16 %v6517, %v6516
        %v6527 = vpack.c.bf16 %v6519, %v6518
        %6528 = vmatprep.subr.bf16.mxu0 0
        %6529 = vmatpush1.bf16.msra.mxu0 %v5743
        %6530 = vmatprep.subr.bf16.mxu0 0
        %6531 = vmatpush1.bf16.msra.mxu0 %v5742
        %6532 = vmatprep.subr.bf16.mxu0 0
        %6533 = vmatpush1.bf16.msra.mxu0 %v5741
        %6534 = vmatprep.subr.bf16.mxu0 0
        %6535 = vmatpush1.bf16.msra.mxu0 %v5740
        %6536 = vmatprep.subr.bf16.mxu0 0
        %6537 = vmatpush1.bf16.msra.mxu0 %v5739
        %6538 = vmatprep.subr.bf16.mxu0 0
        %6539 = vmatpush1.bf16.msra.mxu0 %v5738
        %6540 = vmatprep.subr.bf16.mxu0 0
        %6541 = vmatpush1.bf16.msra.mxu0 %v5737
        %6542 = vmatprep.subr.bf16.mxu0 0
        %6543 = vmatpush1.bf16.msra.mxu0 %v5736
        %6544 = vmatprep.subr.bf16.mxu0 0
        %6545 = vmatpush2.bf16.msra.mxu0 0
        %6546 = vmatprep.subr.bf16.mxu0 0
        %6547 = vmatpush2.bf16.msra.mxu0 0
        %6548 = vmatprep.subr.bf16.mxu0 0
        %6549 = vmatpush2.bf16.msra.mxu0 0
        %6550 = vmatprep.subr.bf16.mxu0 0
        %6551 = vmatpush2.bf16.msra.mxu0 0
        %6552 = vmatprep.subr.bf16.mxu0 0
        %6553 = vmatpush2.bf16.msra.mxu0 0
        %6554 = vmatprep.subr.bf16.mxu0 0
        %6555 = vmatpush2.bf16.msra.mxu0 0
        %6556 = vmatprep.subr.bf16.mxu0 0
        %6557 = vmatpush2.bf16.msra.mxu0 0
        %6558 = vmatprep.subr.bf16.mxu0 0
        %6559 = vmatpush2.bf16.msra.mxu0 0
        %6560 = vmatprep.mubr.bf16.mxu0 0
        %6561 = vmatmul.mubr.bf16.gmra.mxu0 %v6520
        %v6562 = vpop.f32.mrf.mxu0
        %v6563 = vadd.f32 %v406, %v6562
        %v6564 = vpop.f32.mrf.mxu0
        %v6565 = vpop.f32.mrf.mxu0
        %v6566 = vadd.f32 %v406, %v6565
        %v6567 = vpop.f32.mrf.mxu0
        %6568 = vmatprep.mubr.bf16.mxu0 0
        %6569 = vmatmul.mubr.bf16.gmra.mxu0 %v6521
        %v6570 = vpop.f32.mrf.mxu0
        %v6571 = vadd.f32 %v406, %v6570
        %v6572 = vpop.f32.mrf.mxu0
        %v6573 = vpop.f32.mrf.mxu0
        %v6574 = vadd.f32 %v406, %v6573
        %v6575 = vpop.f32.mrf.mxu0
        %6576 = vmatprep.mubr.bf16.mxu0 0
        %6577 = vmatmul.mubr.bf16.gmra.mxu0 %v6522
        %v6578 = vpop.f32.mrf.mxu0
        %v6579 = vadd.f32 %v406, %v6578
        %v6580 = vpop.f32.mrf.mxu0
        %v6581 = vpop.f32.mrf.mxu0
        %v6582 = vadd.f32 %v406, %v6581
        %v6583 = vpop.f32.mrf.mxu0
        %6584 = vmatprep.mubr.bf16.mxu0 0
        %6585 = vmatmul.mubr.bf16.gmra.mxu0 %v6523
        %v6586 = vpop.f32.mrf.mxu0
        %v6587 = vadd.f32 %v406, %v6586
        %v6588 = vpop.f32.mrf.mxu0
        %v6589 = vpop.f32.mrf.mxu0
        %v6590 = vadd.f32 %v406, %v6589
        %v6591 = vpop.f32.mrf.mxu0
        %6592 = vmatprep.mubr.bf16.mxu0 0
        %6593 = vmatmul.mubr.bf16.gmra.mxu0 %v6524
        %v6594 = vpop.f32.mrf.mxu0
        %v6595 = vadd.f32 %v406, %v6594
        %v6596 = vpop.f32.mrf.mxu0
        %v6597 = vpop.f32.mrf.mxu0
        %v6598 = vadd.f32 %v406, %v6597
        %v6599 = vpop.f32.mrf.mxu0
        %6600 = vmatprep.mubr.bf16.mxu0 0
        %6601 = vmatmul.mubr.bf16.gmra.mxu0 %v6525
        %v6602 = vpop.f32.mrf.mxu0
        %v6603 = vadd.f32 %v406, %v6602
        %v6604 = vpop.f32.mrf.mxu0
        %v6605 = vpop.f32.mrf.mxu0
        %v6606 = vadd.f32 %v406, %v6605
        %v6607 = vpop.f32.mrf.mxu0
        %6608 = vmatprep.mubr.bf16.mxu0 0
        %6609 = vmatmul.mubr.bf16.gmra.mxu0 %v6526
        %v6610 = vpop.f32.mrf.mxu0
        %v6611 = vadd.f32 %v406, %v6610
        %v6612 = vpop.f32.mrf.mxu0
        %v6613 = vpop.f32.mrf.mxu0
        %v6614 = vadd.f32 %v406, %v6613
        %v6615 = vpop.f32.mrf.mxu0
        %6616 = vmatprep.mubr.bf16.mxu0 0
        %6617 = vmatmul.mubr.bf16.gmra.mxu0 %v6527
        %v6618 = vpop.f32.mrf.mxu0
        %v6619 = vadd.f32 %v406, %v6618
        %v6620 = vpop.f32.mrf.mxu0
        %v6621 = vpop.f32.mrf.mxu0
        %v6622 = vadd.f32 %v406, %v6621
        %v6623 = vpop.f32.mrf.mxu0
        %6624 = vdwg.mxu0
        %v6625 = vmul.f32 %v6046, 2.0
        %v6626 = vmul.f32 %v6049, 2.0
        %v6627 = vmul.f32 %v6054, 2.0
        %v6628 = vmul.f32 %v6057, 2.0
        %v6629 = vmul.f32 %v6062, 2.0
        %v6630 = vmul.f32 %v6065, 2.0
        %v6631 = vmul.f32 %v6070, 2.0
        %v6632 = vmul.f32 %v6073, 2.0
        %v6633 = vmul.f32 %v6078, 2.0
        %v6634 = vmul.f32 %v6081, 2.0
        %v6635 = vmul.f32 %v6086, 2.0
        %v6636 = vmul.f32 %v6089, 2.0
        %v6637 = vmul.f32 %v6094, 2.0
        %v6638 = vmul.f32 %v6097, 2.0
        %v6639 = vmul.f32 %v6102, 2.0
        %v6640 = vmul.f32 %v6105, 2.0
        %v6641 = vadd.f32 %v5787, %v6625
        %v6642 = vadd.f32 %v5790, %v6626
        %v6643 = vadd.f32 %v5795, %v6627
        %v6644 = vadd.f32 %v5798, %v6628
        %v6645 = vadd.f32 %v5803, %v6629
        %v6646 = vadd.f32 %v5806, %v6630
        %v6647 = vadd.f32 %v5811, %v6631
        %v6648 = vadd.f32 %v5814, %v6632
        %v6649 = vadd.f32 %v5819, %v6633
        %v6650 = vadd.f32 %v5822, %v6634
        %v6651 = vadd.f32 %v5827, %v6635
        %v6652 = vadd.f32 %v5830, %v6636
        %v6653 = vadd.f32 %v5835, %v6637
        %v6654 = vadd.f32 %v5838, %v6638
        %v6655 = vadd.f32 %v5843, %v6639
        %v6656 = vadd.f32 %v5846, %v6640
        %v6657 = vmul.f32 %v6304, 2.0
        %v6658 = vmul.f32 %v6307, 2.0
        %v6659 = vmul.f32 %v6312, 2.0
        %v6660 = vmul.f32 %v6315, 2.0
        %v6661 = vmul.f32 %v6320, 2.0
        %v6662 = vmul.f32 %v6323, 2.0
        %v6663 = vmul.f32 %v6328, 2.0
        %v6664 = vmul.f32 %v6331, 2.0
        %v6665 = vmul.f32 %v6336, 2.0
        %v6666 = vmul.f32 %v6339, 2.0
        %v6667 = vmul.f32 %v6344, 2.0
        %v6668 = vmul.f32 %v6347, 2.0
        %v6669 = vmul.f32 %v6352, 2.0
        %v6670 = vmul.f32 %v6355, 2.0
        %v6671 = vmul.f32 %v6360, 2.0
        %v6672 = vmul.f32 %v6363, 2.0
        %v6673 = vadd.f32 %v6641, %v6657
        %v6674 = vadd.f32 %v6642, %v6658
        %v6675 = vadd.f32 %v6643, %v6659
        %v6676 = vadd.f32 %v6644, %v6660
        %v6677 = vadd.f32 %v6645, %v6661
        %v6678 = vadd.f32 %v6646, %v6662
        %v6679 = vadd.f32 %v6647, %v6663
        %v6680 = vadd.f32 %v6648, %v6664
        %v6681 = vadd.f32 %v6649, %v6665
        %v6682 = vadd.f32 %v6650, %v6666
        %v6683 = vadd.f32 %v6651, %v6667
        %v6684 = vadd.f32 %v6652, %v6668
        %v6685 = vadd.f32 %v6653, %v6669
        %v6686 = vadd.f32 %v6654, %v6670
        %v6687 = vadd.f32 %v6655, %v6671
        %v6688 = vadd.f32 %v6656, %v6672
        %v6689 = vadd.f32 %v6673, %v6563
        %v6690 = vadd.f32 %v6674, %v6566
        %v6691 = vadd.f32 %v6675, %v6571
        %v6692 = vadd.f32 %v6676, %v6574
        %v6693 = vadd.f32 %v6677, %v6579
        %v6694 = vadd.f32 %v6678, %v6582
        %v6695 = vadd.f32 %v6679, %v6587
        %v6696 = vadd.f32 %v6680, %v6590
        %v6697 = vadd.f32 %v6681, %v6595
        %v6698 = vadd.f32 %v6682, %v6598
        %v6699 = vadd.f32 %v6683, %v6603
        %v6700 = vadd.f32 %v6684, %v6606
        %v6701 = vadd.f32 %v6685, %v6611
        %v6702 = vadd.f32 %v6686, %v6614
        %v6703 = vadd.f32 %v6687, %v6619
        %v6704 = vadd.f32 %v6688, %v6622
        %v6705 = vstv %s5494
        %v6706 = vmul.f32 %v6705, %v6689
        %v6707 = vmul.f32 %v6705, %v6690
        %v6708 = vmul.f32 %v6705, %v6691
        %v6709 = vmul.f32 %v6705, %v6692
        %v6710 = vmul.f32 %v6705, %v6693
        %v6711 = vmul.f32 %v6705, %v6694
        %v6712 = vmul.f32 %v6705, %v6695
        %v6713 = vmul.f32 %v6705, %v6696
        %v6714 = vmul.f32 %v6705, %v6697
        %v6715 = vmul.f32 %v6705, %v6698
        %v6716 = vmul.f32 %v6705, %v6699
        %v6717 = vmul.f32 %v6705, %v6700
        %v6718 = vmul.f32 %v6705, %v6701
        %v6719 = vmul.f32 %v6705, %v6702
        %v6720 = vmul.f32 %v6705, %v6703
        %v6721 = vmul.f32 %v6705, %v6704
        %v6722 = vadd.f32 %v5459, %v6706
        %v6723 = vadd.f32 %v5460, %v6707
        %v6724 = vadd.f32 %v5461, %v6708
        %v6725 = vadd.f32 %v5462, %v6709
        %v6726 = vadd.f32 %v5463, %v6710
        %v6727 = vadd.f32 %v5464, %v6711
        %v6728 = vadd.f32 %v5465, %v6712
        %v6729 = vadd.f32 %v5466, %v6713
        %v6730 = vadd.f32 %v5467, %v6714
        %v6731 = vadd.f32 %v5468, %v6715
        %v6732 = vadd.f32 %v5469, %v6716
        %v6733 = vadd.f32 %v5470, %v6717
        %v6734 = vadd.f32 %v5471, %v6718
        %v6735 = vadd.f32 %v5472, %v6719
        %v6736 = vadd.f32 %v5473, %v6720
        %v6737 = vadd.f32 %v5474, %v6721
        %s6738 = scalar_lea.vmem %s390, 640 [#allocation14]
        %6739 = vst [vmem:[%s6738] sm:$0xff] %v6722
        %6740 = vst [vmem:[%s6738 + $0x8] sm:$0xff] %v6723
        %6741 = vst [vmem:[%s6738 + $0x10] sm:$0xff] %v6724
        %6742 = vst [vmem:[%s6738 + $0x18] sm:$0xff] %v6725
        %6743 = vst [vmem:[%s6738 + $0x20] sm:$0xff] %v6726
        %6744 = vst [vmem:[%s6738 + $0x28] sm:$0xff] %v6727
        %6745 = vst [vmem:[%s6738 + $0x30] sm:$0xff] %v6728
        %6746 = vst [vmem:[%s6738 + $0x38] sm:$0xff] %v6729
        %6747 = vst [vmem:[%s6738 + $0x40] sm:$0xff] %v6730
        %6748 = vst [vmem:[%s6738 + $0x48] sm:$0xff] %v6731
        %6749 = vst [vmem:[%s6738 + $0x50] sm:$0xff] %v6732
        %6750 = vst [vmem:[%s6738 + $0x58] sm:$0xff] %v6733
        %6751 = vst [vmem:[%s6738 + $0x60] sm:$0xff] %v6734
        %6752 = vst [vmem:[%s6738 + $0x68] sm:$0xff] %v6735
        %6753 = vst [vmem:[%s6738 + $0x70] sm:$0xff] %v6736
        %6754 = vst [vmem:[%s6738 + $0x78] sm:$0xff] %v6737
        %s6755 = sld [smem:[#allocation2 + $0x5]]
        %s6756 = sld [smem:[#allocation7 + $0x5]]
        %s6757 = sld [smem:[#allocation8 + $0x5]]
        %v6758 = vpack.c.bf16 %v6723, %v6722
        %v6759 = vpack.c.bf16 %v6725, %v6724
        %v6760 = vpack.c.bf16 %v6727, %v6726
        %v6761 = vpack.c.bf16 %v6729, %v6728
        %v6762 = vpack.c.bf16 %v6731, %v6730
        %v6763 = vpack.c.bf16 %v6733, %v6732
        %v6764 = vpack.c.bf16 %v6735, %v6734
        %v6765 = vpack.c.bf16 %v6737, %v6736
        %v6766 = vld [vmem:[#allocation11] sm:$0xf]
        %v6767 = vld [vmem:[#allocation11 + $0x4] sm:$0xf]
        %v6768 = vld [vmem:[#allocation11 + $0x8] sm:$0xf]
        %v6769 = vld [vmem:[#allocation11 + $0xc] sm:$0xf]
        %v6770 = vld [vmem:[#allocation11 + $0x10] sm:$0xf]
        %v6771 = vld [vmem:[#allocation11 + $0x14] sm:$0xf]
        %v6772 = vld [vmem:[#allocation11 + $0x18] sm:$0xf]
        %v6773 = vld [vmem:[#allocation11 + $0x1c] sm:$0xf]
        %v6774 = vld [vmem:[#allocation11 + $0x20] sm:$0xf]
        %v6775 = vld [vmem:[#allocation11 + $0x24] sm:$0xf]
        %v6776 = vld [vmem:[#allocation11 + $0x28] sm:$0xf]
        %v6777 = vld [vmem:[#allocation11 + $0x2c] sm:$0xf]
        %v6778 = vld [vmem:[#allocation11 + $0x30] sm:$0xf]
        %v6779 = vld [vmem:[#allocation11 + $0x34] sm:$0xf]
        %v6780 = vld [vmem:[#allocation11 + $0x38] sm:$0xf]
        %v6781 = vld [vmem:[#allocation11 + $0x3c] sm:$0xf]
        %v6798 = vunpack.c.l.b16 %v6766
        %v6799 = vunpack.c.l.b16 %v6767
        %v6800 = vunpack.c.l.b16 %v6768
        %v6801 = vunpack.c.l.b16 %v6769
        %v6802 = vunpack.c.l.b16 %v6770
        %v6803 = vunpack.c.l.b16 %v6771
        %v6804 = vunpack.c.l.b16 %v6772
        %v6805 = vunpack.c.l.b16 %v6773
        %v6806 = vunpack.c.l.b16 %v6774
        %v6807 = vunpack.c.l.b16 %v6775
        %v6808 = vunpack.c.l.b16 %v6776
        %v6809 = vunpack.c.l.b16 %v6777
        %v6810 = vunpack.c.l.b16 %v6778
        %v6811 = vunpack.c.l.b16 %v6779
        %v6812 = vunpack.c.l.b16 %v6780
        %v6813 = vunpack.c.l.b16 %v6781
        %v6814 = vpack.c.b16 %v6799, %v6798
        %v6815 = vpack.c.b16 %v6801, %v6800
        %v6816 = vpack.c.b16 %v6803, %v6802
        %v6817 = vpack.c.b16 %v6805, %v6804
        %v6818 = vpack.c.b16 %v6807, %v6806
        %v6819 = vpack.c.b16 %v6809, %v6808
        %v6820 = vpack.c.b16 %v6811, %v6810
        %v6821 = vpack.c.b16 %v6813, %v6812
        %6830 = vmatprep.subr.bf16.mxu0 0
        %6831 = vmatpush1.bf16.msra.mxu0 %v6821
        %6832 = vmatprep.subr.bf16.mxu0 0
        %6833 = vmatpush1.bf16.msra.mxu0 %v6820
        %6834 = vmatprep.subr.bf16.mxu0 0
        %6835 = vmatpush1.bf16.msra.mxu0 %v6819
        %6836 = vmatprep.subr.bf16.mxu0 0
        %6837 = vmatpush1.bf16.msra.mxu0 %v6818
        %6838 = vmatprep.subr.bf16.mxu0 0
        %6839 = vmatpush1.bf16.msra.mxu0 %v6817
        %6840 = vmatprep.subr.bf16.mxu0 0
        %6841 = vmatpush1.bf16.msra.mxu0 %v6816
        %6842 = vmatprep.subr.bf16.mxu0 0
        %6843 = vmatpush1.bf16.msra.mxu0 %v6815
        %6844 = vmatprep.subr.bf16.mxu0 0
        %6845 = vmatpush1.bf16.msra.mxu0 %v6814
        %6846 = vmatprep.subr.bf16.mxu0 0
        %6847 = vmatpush2.bf16.msra.mxu0 0
        %6848 = vmatprep.subr.bf16.mxu0 0
        %6849 = vmatpush2.bf16.msra.mxu0 0
        %6850 = vmatprep.subr.bf16.mxu0 0
        %6851 = vmatpush2.bf16.msra.mxu0 0
        %6852 = vmatprep.subr.bf16.mxu0 0
        %6853 = vmatpush2.bf16.msra.mxu0 0
        %6854 = vmatprep.subr.bf16.mxu0 0
        %6855 = vmatpush2.bf16.msra.mxu0 0
        %6856 = vmatprep.subr.bf16.mxu0 0
        %6857 = vmatpush2.bf16.msra.mxu0 0
        %6858 = vmatprep.subr.bf16.mxu0 0
        %6859 = vmatpush2.bf16.msra.mxu0 0
        %6860 = vmatprep.subr.bf16.mxu0 0
        %6861 = vmatpush2.bf16.msra.mxu0 0
        %6862 = vmatprep.mubr.bf16.mxu0 0
        %6863 = vmatmul.mubr.bf16.gmra.mxu0 %v6758
        %v6864 = vpop.f32.mrf.mxu0
        %v6865 = vadd.f32 %v399, %v6864
        %v6866 = vpop.f32.mrf.mxu0
        %v6867 = vpop.f32.mrf.mxu0
        %v6868 = vadd.f32 %v399, %v6867
        %v6869 = vpop.f32.mrf.mxu0
        %6870 = vmatprep.mubr.bf16.mxu0 0
        %6871 = vmatmul.mubr.bf16.gmra.mxu0 %v6759
        %v6872 = vpop.f32.mrf.mxu0
        %v6873 = vadd.f32 %v399, %v6872
        %v6874 = vpop.f32.mrf.mxu0
        %v6875 = vpop.f32.mrf.mxu0
        %v6876 = vadd.f32 %v399, %v6875
        %v6877 = vpop.f32.mrf.mxu0
        %6878 = vmatprep.mubr.bf16.mxu0 0
        %6879 = vmatmul.mubr.bf16.gmra.mxu0 %v6760
        %v6880 = vpop.f32.mrf.mxu0
        %v6881 = vadd.f32 %v399, %v6880
        %v6882 = vpop.f32.mrf.mxu0
        %v6883 = vpop.f32.mrf.mxu0
        %v6884 = vadd.f32 %v399, %v6883
        %v6885 = vpop.f32.mrf.mxu0
        %6886 = vmatprep.mubr.bf16.mxu0 0
        %6887 = vmatmul.mubr.bf16.gmra.mxu0 %v6761
        %v6888 = vpop.f32.mrf.mxu0
        %v6889 = vadd.f32 %v399, %v6888
        %v6890 = vpop.f32.mrf.mxu0
        %v6891 = vpop.f32.mrf.mxu0
        %v6892 = vadd.f32 %v399, %v6891
        %v6893 = vpop.f32.mrf.mxu0
        %6894 = vmatprep.mubr.bf16.mxu0 0
        %6895 = vmatmul.mubr.bf16.gmra.mxu0 %v6762
        %v6896 = vpop.f32.mrf.mxu0
        %v6897 = vadd.f32 %v399, %v6896
        %v6898 = vpop.f32.mrf.mxu0
        %v6899 = vpop.f32.mrf.mxu0
        %v6900 = vadd.f32 %v399, %v6899
        %v6901 = vpop.f32.mrf.mxu0
        %6902 = vmatprep.mubr.bf16.mxu0 0
        %6903 = vmatmul.mubr.bf16.gmra.mxu0 %v6763
        %v6904 = vpop.f32.mrf.mxu0
        %v6905 = vadd.f32 %v399, %v6904
        %v6906 = vpop.f32.mrf.mxu0
        %v6907 = vpop.f32.mrf.mxu0
        %v6908 = vadd.f32 %v399, %v6907
        %v6909 = vpop.f32.mrf.mxu0
        %6910 = vmatprep.mubr.bf16.mxu0 0
        %6911 = vmatmul.mubr.bf16.gmra.mxu0 %v6764
        %v6912 = vpop.f32.mrf.mxu0
        %v6913 = vadd.f32 %v399, %v6912
        %v6914 = vpop.f32.mrf.mxu0
        %v6915 = vpop.f32.mrf.mxu0
        %v6916 = vadd.f32 %v399, %v6915
        %v6917 = vpop.f32.mrf.mxu0
        %6918 = vmatprep.mubr.bf16.mxu0 0
        %6919 = vmatmul.mubr.bf16.gmra.mxu0 %v6765
        %v6920 = vpop.f32.mrf.mxu0
        %v6921 = vadd.f32 %v399, %v6920
        %v6922 = vpop.f32.mrf.mxu0
        %v6923 = vpop.f32.mrf.mxu0
        %v6924 = vadd.f32 %v399, %v6923
        %v6925 = vpop.f32.mrf.mxu0
        %6926 = vdwg.mxu0
        %v6927 = vtanh.pop %v6865
        %v6928 = vtanh.pop %v6868
        %v6929 = vtanh.pop %v6873
        %v6930 = vtanh.pop %v6876
        %v6931 = vtanh.pop %v6881
        %v6932 = vtanh.pop %v6884
        %v6933 = vtanh.pop %v6889
        %v6934 = vtanh.pop %v6892
        %v6935 = vtanh.pop %v6897
        %v6936 = vtanh.pop %v6900
        %v6937 = vtanh.pop %v6905
        %v6938 = vtanh.pop %v6908
        %v6939 = vtanh.pop %v6913
        %v6940 = vtanh.pop %v6916
        %v6941 = vtanh.pop %v6921
        %v6942 = vtanh.pop %v6924
        %v6943 = vpack.c.bf16 %v6928, %v6927
        %v6944 = vpack.c.bf16 %v6930, %v6929
        %v6945 = vpack.c.bf16 %v6932, %v6931
        %v6946 = vpack.c.bf16 %v6934, %v6933
        %v6947 = vpack.c.bf16 %v6936, %v6935
        %v6948 = vpack.c.bf16 %v6938, %v6937
        %v6949 = vpack.c.bf16 %v6940, %v6939
        %v6950 = vpack.c.bf16 %v6942, %v6941
        %v6951 = vld [vmem:[#allocation13] sm:$0xf]
        %v6952 = vld [vmem:[#allocation13 + $0x4] sm:$0xf]
        %v6953 = vld [vmem:[#allocation13 + $0x8] sm:$0xf]
        %v6954 = vld [vmem:[#allocation13 + $0xc] sm:$0xf]
        %v6955 = vld [vmem:[#allocation13 + $0x10] sm:$0xf]
        %v6956 = vld [vmem:[#allocation13 + $0x14] sm:$0xf]
        %v6957 = vld [vmem:[#allocation13 + $0x18] sm:$0xf]
        %v6958 = vld [vmem:[#allocation13 + $0x1c] sm:$0xf]
        %v6959 = vld [vmem:[#allocation13 + $0x20] sm:$0xf]
        %v6960 = vld [vmem:[#allocation13 + $0x24] sm:$0xf]
        %v6961 = vld [vmem:[#allocation13 + $0x28] sm:$0xf]
        %v6962 = vld [vmem:[#allocation13 + $0x2c] sm:$0xf]
        %v6963 = vld [vmem:[#allocation13 + $0x30] sm:$0xf]
        %v6964 = vld [vmem:[#allocation13 + $0x34] sm:$0xf]
        %v6965 = vld [vmem:[#allocation13 + $0x38] sm:$0xf]
        %v6966 = vld [vmem:[#allocation13 + $0x3c] sm:$0xf]
        %v6983 = vunpack.c.l.b16 %v6951
        %v6984 = vunpack.c.l.b16 %v6952
        %v6985 = vunpack.c.l.b16 %v6953
        %v6986 = vunpack.c.l.b16 %v6954
        %v6987 = vunpack.c.l.b16 %v6955
        %v6988 = vunpack.c.l.b16 %v6956
        %v6989 = vunpack.c.l.b16 %v6957
        %v6990 = vunpack.c.l.b16 %v6958
        %v6991 = vunpack.c.l.b16 %v6959
        %v6992 = vunpack.c.l.b16 %v6960
        %v6993 = vunpack.c.l.b16 %v6961
        %v6994 = vunpack.c.l.b16 %v6962
        %v6995 = vunpack.c.l.b16 %v6963
        %v6996 = vunpack.c.l.b16 %v6964
        %v6997 = vunpack.c.l.b16 %v6965
        %v6998 = vunpack.c.l.b16 %v6966
        %v6999 = vpack.c.b16 %v6984, %v6983
        %v7000 = vpack.c.b16 %v6986, %v6985
        %v7001 = vpack.c.b16 %v6988, %v6987
        %v7002 = vpack.c.b16 %v6990, %v6989
        %v7003 = vpack.c.b16 %v6992, %v6991
        %v7004 = vpack.c.b16 %v6994, %v6993
        %v7005 = vpack.c.b16 %v6996, %v6995
        %v7006 = vpack.c.b16 %v6998, %v6997
        %7015 = vmatprep.subr.bf16.mxu0 0
        %7016 = vmatpush1.bf16.msra.mxu0 %v7006
        %7017 = vmatprep.subr.bf16.mxu0 0
        %7018 = vmatpush1.bf16.msra.mxu0 %v7005
        %7019 = vmatprep.subr.bf16.mxu0 0
        %7020 = vmatpush1.bf16.msra.mxu0 %v7004
        %7021 = vmatprep.subr.bf16.mxu0 0
        %7022 = vmatpush1.bf16.msra.mxu0 %v7003
        %7023 = vmatprep.subr.bf16.mxu0 0
        %7024 = vmatpush1.bf16.msra.mxu0 %v7002
        %7025 = vmatprep.subr.bf16.mxu0 0
        %7026 = vmatpush1.bf16.msra.mxu0 %v7001
        %7027 = vmatprep.subr.bf16.mxu0 0
        %7028 = vmatpush1.bf16.msra.mxu0 %v7000
        %7029 = vmatprep.subr.bf16.mxu0 0
        %7030 = vmatpush1.bf16.msra.mxu0 %v6999
        %7031 = vmatprep.subr.bf16.mxu0 0
        %7032 = vmatpush2.bf16.msra.mxu0 0
        %7033 = vmatprep.subr.bf16.mxu0 0
        %7034 = vmatpush2.bf16.msra.mxu0 0
        %7035 = vmatprep.subr.bf16.mxu0 0
        %7036 = vmatpush2.bf16.msra.mxu0 0
        %7037 = vmatprep.subr.bf16.mxu0 0
        %7038 = vmatpush2.bf16.msra.mxu0 0
        %7039 = vmatprep.subr.bf16.mxu0 0
        %7040 = vmatpush2.bf16.msra.mxu0 0
        %7041 = vmatprep.subr.bf16.mxu0 0
        %7042 = vmatpush2.bf16.msra.mxu0 0
        %7043 = vmatprep.subr.bf16.mxu0 0
        %7044 = vmatpush2.bf16.msra.mxu0 0
        %7045 = vmatprep.subr.bf16.mxu0 0
        %7046 = vmatpush2.bf16.msra.mxu0 0
        %7047 = vmatprep.mubr.bf16.mxu0 0
        %7048 = vmatmul.mubr.bf16.gmra.mxu0 %v6943
        %v7049 = vpop.f32.mrf.mxu0
        %v7050 = vadd.f32 %v406, %v7049
        %v7051 = vpop.f32.mrf.mxu0
        %v7052 = vpop.f32.mrf.mxu0
        %v7053 = vadd.f32 %v406, %v7052
        %v7054 = vpop.f32.mrf.mxu0
        %7055 = vmatprep.mubr.bf16.mxu0 0
        %7056 = vmatmul.mubr.bf16.gmra.mxu0 %v6944
        %v7057 = vpop.f32.mrf.mxu0
        %v7058 = vadd.f32 %v406, %v7057
        %v7059 = vpop.f32.mrf.mxu0
        %v7060 = vpop.f32.mrf.mxu0
        %v7061 = vadd.f32 %v406, %v7060
        %v7062 = vpop.f32.mrf.mxu0
        %7063 = vmatprep.mubr.bf16.mxu0 0
        %7064 = vmatmul.mubr.bf16.gmra.mxu0 %v6945
        %v7065 = vpop.f32.mrf.mxu0
        %v7066 = vadd.f32 %v406, %v7065
        %v7067 = vpop.f32.mrf.mxu0
        %v7068 = vpop.f32.mrf.mxu0
        %v7069 = vadd.f32 %v406, %v7068
        %v7070 = vpop.f32.mrf.mxu0
        %7071 = vmatprep.mubr.bf16.mxu0 0
        %7072 = vmatmul.mubr.bf16.gmra.mxu0 %v6946
        %v7073 = vpop.f32.mrf.mxu0
        %v7074 = vadd.f32 %v406, %v7073
        %v7075 = vpop.f32.mrf.mxu0
        %v7076 = vpop.f32.mrf.mxu0
        %v7077 = vadd.f32 %v406, %v7076
        %v7078 = vpop.f32.mrf.mxu0
        %7079 = vmatprep.mubr.bf16.mxu0 0
        %7080 = vmatmul.mubr.bf16.gmra.mxu0 %v6947
        %v7081 = vpop.f32.mrf.mxu0
        %v7082 = vadd.f32 %v406, %v7081
        %v7083 = vpop.f32.mrf.mxu0
        %v7084 = vpop.f32.mrf.mxu0
        %v7085 = vadd.f32 %v406, %v7084
        %v7086 = vpop.f32.mrf.mxu0
        %7087 = vmatprep.mubr.bf16.mxu0 0
        %7088 = vmatmul.mubr.bf16.gmra.mxu0 %v6948
        %v7089 = vpop.f32.mrf.mxu0
        %v7090 = vadd.f32 %v406, %v7089
        %v7091 = vpop.f32.mrf.mxu0
        %v7092 = vpop.f32.mrf.mxu0
        %v7093 = vadd.f32 %v406, %v7092
        %v7094 = vpop.f32.mrf.mxu0
        %7095 = vmatprep.mubr.bf16.mxu0 0
        %7096 = vmatmul.mubr.bf16.gmra.mxu0 %v6949
        %v7097 = vpop.f32.mrf.mxu0
        %v7098 = vadd.f32 %v406, %v7097
        %v7099 = vpop.f32.mrf.mxu0
        %v7100 = vpop.f32.mrf.mxu0
        %v7101 = vadd.f32 %v406, %v7100
        %v7102 = vpop.f32.mrf.mxu0
        %7103 = vmatprep.mubr.bf16.mxu0 0
        %7104 = vmatmul.mubr.bf16.gmra.mxu0 %v6950
        %v7105 = vpop.f32.mrf.mxu0
        %v7106 = vadd.f32 %v406, %v7105
        %v7107 = vpop.f32.mrf.mxu0
        %v7108 = vpop.f32.mrf.mxu0
        %v7109 = vadd.f32 %v406, %v7108
        %v7110 = vpop.f32.mrf.mxu0
        %7111 = vdwg.mxu0
        %v7112 = vstv %s6756
        %v7113 = vmul.f32 %v7112, %v7050
        %v7114 = vmul.f32 %v7112, %v7053
        %v7115 = vmul.f32 %v7112, %v7058
        %v7116 = vmul.f32 %v7112, %v7061
        %v7117 = vmul.f32 %v7112, %v7066
        %v7118 = vmul.f32 %v7112, %v7069
        %v7119 = vmul.f32 %v7112, %v7074
        %v7120 = vmul.f32 %v7112, %v7077
        %v7121 = vmul.f32 %v7112, %v7082
        %v7122 = vmul.f32 %v7112, %v7085
        %v7123 = vmul.f32 %v7112, %v7090
        %v7124 = vmul.f32 %v7112, %v7093
        %v7125 = vmul.f32 %v7112, %v7098
        %v7126 = vmul.f32 %v7112, %v7101
        %v7127 = vmul.f32 %v7112, %v7106
        %v7128 = vmul.f32 %v7112, %v7109
        %v7129 = vadd.f32 %v6722, %v7113
        %v7130 = vadd.f32 %v6723, %v7114
        %v7131 = vadd.f32 %v6724, %v7115
        %v7132 = vadd.f32 %v6725, %v7116
        %v7133 = vadd.f32 %v6726, %v7117
        %v7134 = vadd.f32 %v6727, %v7118
        %v7135 = vadd.f32 %v6728, %v7119
        %v7136 = vadd.f32 %v6729, %v7120
        %v7137 = vadd.f32 %v6730, %v7121
        %v7138 = vadd.f32 %v6731, %v7122
        %v7139 = vadd.f32 %v6732, %v7123
        %v7140 = vadd.f32 %v6733, %v7124
        %v7141 = vadd.f32 %v6734, %v7125
        %v7142 = vadd.f32 %v6735, %v7126
        %v7143 = vadd.f32 %v6736, %v7127
        %v7144 = vadd.f32 %v6737, %v7128
        %v7145 = vpack.c.bf16 %v7130, %v7129
        %v7146 = vpack.c.bf16 %v7132, %v7131
        %v7147 = vpack.c.bf16 %v7134, %v7133
        %v7148 = vpack.c.bf16 %v7136, %v7135
        %v7149 = vpack.c.bf16 %v7138, %v7137
        %v7150 = vpack.c.bf16 %v7140, %v7139
        %v7151 = vpack.c.bf16 %v7142, %v7141
        %v7152 = vpack.c.bf16 %v7144, %v7143
        %7153 = vmatprep.subr.bf16.mxu0 0
        %7154 = vmatpush1.bf16.msra.mxu0 %v6821
        %7155 = vmatprep.subr.bf16.mxu0 0
        %7156 = vmatpush1.bf16.msra.mxu0 %v6820
        %7157 = vmatprep.subr.bf16.mxu0 0
        %7158 = vmatpush1.bf16.msra.mxu0 %v6819
        %7159 = vmatprep.subr.bf16.mxu0 0
        %7160 = vmatpush1.bf16.msra.mxu0 %v6818
        %7161 = vmatprep.subr.bf16.mxu0 0
        %7162 = vmatpush1.bf16.msra.mxu0 %v6817
        %7163 = vmatprep.subr.bf16.mxu0 0
        %7164 = vmatpush1.bf16.msra.mxu0 %v6816
        %7165 = vmatprep.subr.bf16.mxu0 0
        %7166 = vmatpush1.bf16.msra.mxu0 %v6815
        %7167 = vmatprep.subr.bf16.mxu0 0
        %7168 = vmatpush1.bf16.msra.mxu0 %v6814
        %7169 = vmatprep.subr.bf16.mxu0 0
        %7170 = vmatpush2.bf16.msra.mxu0 0
        %7171 = vmatprep.subr.bf16.mxu0 0
        %7172 = vmatpush2.bf16.msra.mxu0 0
        %7173 = vmatprep.subr.bf16.mxu0 0
        %7174 = vmatpush2.bf16.msra.mxu0 0
        %7175 = vmatprep.subr.bf16.mxu0 0
        %7176 = vmatpush2.bf16.msra.mxu0 0
        %7177 = vmatprep.subr.bf16.mxu0 0
        %7178 = vmatpush2.bf16.msra.mxu0 0
        %7179 = vmatprep.subr.bf16.mxu0 0
        %7180 = vmatpush2.bf16.msra.mxu0 0
        %7181 = vmatprep.subr.bf16.mxu0 0
        %7182 = vmatpush2.bf16.msra.mxu0 0
        %7183 = vmatprep.subr.bf16.mxu0 0
        %7184 = vmatpush2.bf16.msra.mxu0 0
        %7185 = vmatprep.mubr.bf16.mxu0 0
        %7186 = vmatmul.mubr.bf16.gmra.mxu0 %v7145
        %v7187 = vpop.f32.mrf.mxu0
        %v7188 = vadd.f32 %v399, %v7187
        %v7189 = vpop.f32.mrf.mxu0
        %v7190 = vpop.f32.mrf.mxu0
        %v7191 = vadd.f32 %v399, %v7190
        %v7192 = vpop.f32.mrf.mxu0
        %7193 = vmatprep.mubr.bf16.mxu0 0
        %7194 = vmatmul.mubr.bf16.gmra.mxu0 %v7146
        %v7195 = vpop.f32.mrf.mxu0
        %v7196 = vadd.f32 %v399, %v7195
        %v7197 = vpop.f32.mrf.mxu0
        %v7198 = vpop.f32.mrf.mxu0
        %v7199 = vadd.f32 %v399, %v7198
        %v7200 = vpop.f32.mrf.mxu0
        %7201 = vmatprep.mubr.bf16.mxu0 0
        %7202 = vmatmul.mubr.bf16.gmra.mxu0 %v7147
        %v7203 = vpop.f32.mrf.mxu0
        %v7204 = vadd.f32 %v399, %v7203
        %v7205 = vpop.f32.mrf.mxu0
        %v7206 = vpop.f32.mrf.mxu0
        %v7207 = vadd.f32 %v399, %v7206
        %v7208 = vpop.f32.mrf.mxu0
        %7209 = vmatprep.mubr.bf16.mxu0 0
        %7210 = vmatmul.mubr.bf16.gmra.mxu0 %v7148
        %v7211 = vpop.f32.mrf.mxu0
        %v7212 = vadd.f32 %v399, %v7211
        %v7213 = vpop.f32.mrf.mxu0
        %v7214 = vpop.f32.mrf.mxu0
        %v7215 = vadd.f32 %v399, %v7214
        %v7216 = vpop.f32.mrf.mxu0
        %7217 = vmatprep.mubr.bf16.mxu0 0
        %7218 = vmatmul.mubr.bf16.gmra.mxu0 %v7149
        %v7219 = vpop.f32.mrf.mxu0
        %v7220 = vadd.f32 %v399, %v7219
        %v7221 = vpop.f32.mrf.mxu0
        %v7222 = vpop.f32.mrf.mxu0
        %v7223 = vadd.f32 %v399, %v7222
        %v7224 = vpop.f32.mrf.mxu0
        %7225 = vmatprep.mubr.bf16.mxu0 0
        %7226 = vmatmul.mubr.bf16.gmra.mxu0 %v7150
        %v7227 = vpop.f32.mrf.mxu0
        %v7228 = vadd.f32 %v399, %v7227
        %v7229 = vpop.f32.mrf.mxu0
        %v7230 = vpop.f32.mrf.mxu0
        %v7231 = vadd.f32 %v399, %v7230
        %v7232 = vpop.f32.mrf.mxu0
        %7233 = vmatprep.mubr.bf16.mxu0 0
        %7234 = vmatmul.mubr.bf16.gmra.mxu0 %v7151
        %v7235 = vpop.f32.mrf.mxu0
        %v7236 = vadd.f32 %v399, %v7235
        %v7237 = vpop.f32.mrf.mxu0
        %v7238 = vpop.f32.mrf.mxu0
        %v7239 = vadd.f32 %v399, %v7238
        %v7240 = vpop.f32.mrf.mxu0
        %7241 = vmatprep.mubr.bf16.mxu0 0
        %7242 = vmatmul.mubr.bf16.gmra.mxu0 %v7152
        %v7243 = vpop.f32.mrf.mxu0
        %v7244 = vadd.f32 %v399, %v7243
        %v7245 = vpop.f32.mrf.mxu0
        %v7246 = vpop.f32.mrf.mxu0
        %v7247 = vadd.f32 %v399, %v7246
        %v7248 = vpop.f32.mrf.mxu0
        %7249 = vdwg.mxu0
        %v7250 = vtanh.pop %v7188
        %v7251 = vtanh.pop %v7191
        %v7252 = vtanh.pop %v7196
        %v7253 = vtanh.pop %v7199
        %v7254 = vtanh.pop %v7204
        %v7255 = vtanh.pop %v7207
        %v7256 = vtanh.pop %v7212
        %v7257 = vtanh.pop %v7215
        %v7258 = vtanh.pop %v7220
        %v7259 = vtanh.pop %v7223
        %v7260 = vtanh.pop %v7228
        %v7261 = vtanh.pop %v7231
        %v7262 = vtanh.pop %v7236
        %v7263 = vtanh.pop %v7239
        %v7264 = vtanh.pop %v7244
        %v7265 = vtanh.pop %v7247
        %v7266 = vpack.c.bf16 %v7251, %v7250
        %v7267 = vpack.c.bf16 %v7253, %v7252
        %v7268 = vpack.c.bf16 %v7255, %v7254
        %v7269 = vpack.c.bf16 %v7257, %v7256
        %v7270 = vpack.c.bf16 %v7259, %v7258
        %v7271 = vpack.c.bf16 %v7261, %v7260
        %v7272 = vpack.c.bf16 %v7263, %v7262
        %v7273 = vpack.c.bf16 %v7265, %v7264
        %7274 = vmatprep.subr.bf16.mxu0 0
        %7275 = vmatpush1.bf16.msra.mxu0 %v7006
        %7276 = vmatprep.subr.bf16.mxu0 0
        %7277 = vmatpush1.bf16.msra.mxu0 %v7005
        %7278 = vmatprep.subr.bf16.mxu0 0
        %7279 = vmatpush1.bf16.msra.mxu0 %v7004
        %7280 = vmatprep.subr.bf16.mxu0 0
        %7281 = vmatpush1.bf16.msra.mxu0 %v7003
        %7282 = vmatprep.subr.bf16.mxu0 0
        %7283 = vmatpush1.bf16.msra.mxu0 %v7002
        %7284 = vmatprep.subr.bf16.mxu0 0
        %7285 = vmatpush1.bf16.msra.mxu0 %v7001
        %7286 = vmatprep.subr.bf16.mxu0 0
        %7287 = vmatpush1.bf16.msra.mxu0 %v7000
        %7288 = vmatprep.subr.bf16.mxu0 0
        %7289 = vmatpush1.bf16.msra.mxu0 %v6999
        %7290 = vmatprep.subr.bf16.mxu0 0
        %7291 = vmatpush2.bf16.msra.mxu0 0
        %7292 = vmatprep.subr.bf16.mxu0 0
        %7293 = vmatpush2.bf16.msra.mxu0 0
        %7294 = vmatprep.subr.bf16.mxu0 0
        %7295 = vmatpush2.bf16.msra.mxu0 0
        %7296 = vmatprep.subr.bf16.mxu0 0
        %7297 = vmatpush2.bf16.msra.mxu0 0
        %7298 = vmatprep.subr.bf16.mxu0 0
        %7299 = vmatpush2.bf16.msra.mxu0 0
        %7300 = vmatprep.subr.bf16.mxu0 0
        %7301 = vmatpush2.bf16.msra.mxu0 0
        %7302 = vmatprep.subr.bf16.mxu0 0
        %7303 = vmatpush2.bf16.msra.mxu0 0
        %7304 = vmatprep.subr.bf16.mxu0 0
        %7305 = vmatpush2.bf16.msra.mxu0 0
        %7306 = vmatprep.mubr.bf16.mxu0 0
        %7307 = vmatmul.mubr.bf16.gmra.mxu0 %v7266
        %v7308 = vpop.f32.mrf.mxu0
        %v7309 = vadd.f32 %v406, %v7308
        %v7310 = vpop.f32.mrf.mxu0
        %v7311 = vpop.f32.mrf.mxu0
        %v7312 = vadd.f32 %v406, %v7311
        %v7313 = vpop.f32.mrf.mxu0
        %7314 = vmatprep.mubr.bf16.mxu0 0
        %7315 = vmatmul.mubr.bf16.gmra.mxu0 %v7267
        %v7316 = vpop.f32.mrf.mxu0
        %v7317 = vadd.f32 %v406, %v7316
        %v7318 = vpop.f32.mrf.mxu0
        %v7319 = vpop.f32.mrf.mxu0
        %v7320 = vadd.f32 %v406, %v7319
        %v7321 = vpop.f32.mrf.mxu0
        %7322 = vmatprep.mubr.bf16.mxu0 0
        %7323 = vmatmul.mubr.bf16.gmra.mxu0 %v7268
        %v7324 = vpop.f32.mrf.mxu0
        %v7325 = vadd.f32 %v406, %v7324
        %v7326 = vpop.f32.mrf.mxu0
        %v7327 = vpop.f32.mrf.mxu0
        %v7328 = vadd.f32 %v406, %v7327
        %v7329 = vpop.f32.mrf.mxu0
        %7330 = vmatprep.mubr.bf16.mxu0 0
        %7331 = vmatmul.mubr.bf16.gmra.mxu0 %v7269
        %v7332 = vpop.f32.mrf.mxu0
        %v7333 = vadd.f32 %v406, %v7332
        %v7334 = vpop.f32.mrf.mxu0
        %v7335 = vpop.f32.mrf.mxu0
        %v7336 = vadd.f32 %v406, %v7335
        %v7337 = vpop.f32.mrf.mxu0
        %7338 = vmatprep.mubr.bf16.mxu0 0
        %7339 = vmatmul.mubr.bf16.gmra.mxu0 %v7270
        %v7340 = vpop.f32.mrf.mxu0
        %v7341 = vadd.f32 %v406, %v7340
        %v7342 = vpop.f32.mrf.mxu0
        %v7343 = vpop.f32.mrf.mxu0
        %v7344 = vadd.f32 %v406, %v7343
        %v7345 = vpop.f32.mrf.mxu0
        %7346 = vmatprep.mubr.bf16.mxu0 0
        %7347 = vmatmul.mubr.bf16.gmra.mxu0 %v7271
        %v7348 = vpop.f32.mrf.mxu0
        %v7349 = vadd.f32 %v406, %v7348
        %v7350 = vpop.f32.mrf.mxu0
        %v7351 = vpop.f32.mrf.mxu0
        %v7352 = vadd.f32 %v406, %v7351
        %v7353 = vpop.f32.mrf.mxu0
        %7354 = vmatprep.mubr.bf16.mxu0 0
        %7355 = vmatmul.mubr.bf16.gmra.mxu0 %v7272
        %v7356 = vpop.f32.mrf.mxu0
        %v7357 = vadd.f32 %v406, %v7356
        %v7358 = vpop.f32.mrf.mxu0
        %v7359 = vpop.f32.mrf.mxu0
        %v7360 = vadd.f32 %v406, %v7359
        %v7361 = vpop.f32.mrf.mxu0
        %7362 = vmatprep.mubr.bf16.mxu0 0
        %7363 = vmatmul.mubr.bf16.gmra.mxu0 %v7273
        %v7364 = vpop.f32.mrf.mxu0
        %v7365 = vadd.f32 %v406, %v7364
        %v7366 = vpop.f32.mrf.mxu0
        %v7367 = vpop.f32.mrf.mxu0
        %v7368 = vadd.f32 %v406, %v7367
        %v7369 = vpop.f32.mrf.mxu0
        %7370 = vdwg.mxu0
        %v7371 = vmul.f32 %v7112, %v7309
        %v7372 = vmul.f32 %v7112, %v7312
        %v7373 = vmul.f32 %v7112, %v7317
        %v7374 = vmul.f32 %v7112, %v7320
        %v7375 = vmul.f32 %v7112, %v7325
        %v7376 = vmul.f32 %v7112, %v7328
        %v7377 = vmul.f32 %v7112, %v7333
        %v7378 = vmul.f32 %v7112, %v7336
        %v7379 = vmul.f32 %v7112, %v7341
        %v7380 = vmul.f32 %v7112, %v7344
        %v7381 = vmul.f32 %v7112, %v7349
        %v7382 = vmul.f32 %v7112, %v7352
        %v7383 = vmul.f32 %v7112, %v7357
        %v7384 = vmul.f32 %v7112, %v7360
        %v7385 = vmul.f32 %v7112, %v7365
        %v7386 = vmul.f32 %v7112, %v7368
        %v7387 = vadd.f32 %v6722, %v7371
        %v7388 = vadd.f32 %v6723, %v7372
        %v7389 = vadd.f32 %v6724, %v7373
        %v7390 = vadd.f32 %v6725, %v7374
        %v7391 = vadd.f32 %v6726, %v7375
        %v7392 = vadd.f32 %v6727, %v7376
        %v7393 = vadd.f32 %v6728, %v7377
        %v7394 = vadd.f32 %v6729, %v7378
        %v7395 = vadd.f32 %v6730, %v7379
        %v7396 = vadd.f32 %v6731, %v7380
        %v7397 = vadd.f32 %v6732, %v7381
        %v7398 = vadd.f32 %v6733, %v7382
        %v7399 = vadd.f32 %v6734, %v7383
        %v7400 = vadd.f32 %v6735, %v7384
        %v7401 = vadd.f32 %v6736, %v7385
        %v7402 = vadd.f32 %v6737, %v7386
        %v7403 = vpack.c.bf16 %v7388, %v7387
        %v7404 = vpack.c.bf16 %v7390, %v7389
        %v7405 = vpack.c.bf16 %v7392, %v7391
        %v7406 = vpack.c.bf16 %v7394, %v7393
        %v7407 = vpack.c.bf16 %v7396, %v7395
        %v7408 = vpack.c.bf16 %v7398, %v7397
        %v7409 = vpack.c.bf16 %v7400, %v7399
        %v7410 = vpack.c.bf16 %v7402, %v7401
        %7411 = vmatprep.subr.bf16.mxu0 0
        %7412 = vmatpush1.bf16.msra.mxu0 %v6821
        %7413 = vmatprep.subr.bf16.mxu0 0
        %7414 = vmatpush1.bf16.msra.mxu0 %v6820
        %7415 = vmatprep.subr.bf16.mxu0 0
        %7416 = vmatpush1.bf16.msra.mxu0 %v6819
        %7417 = vmatprep.subr.bf16.mxu0 0
        %7418 = vmatpush1.bf16.msra.mxu0 %v6818
        %7419 = vmatprep.subr.bf16.mxu0 0
        %7420 = vmatpush1.bf16.msra.mxu0 %v6817
        %7421 = vmatprep.subr.bf16.mxu0 0
        %7422 = vmatpush1.bf16.msra.mxu0 %v6816
        %7423 = vmatprep.subr.bf16.mxu0 0
        %7424 = vmatpush1.bf16.msra.mxu0 %v6815
        %7425 = vmatprep.subr.bf16.mxu0 0
        %7426 = vmatpush1.bf16.msra.mxu0 %v6814
        %7427 = vmatprep.subr.bf16.mxu0 0
        %7428 = vmatpush2.bf16.msra.mxu0 0
        %7429 = vmatprep.subr.bf16.mxu0 0
        %7430 = vmatpush2.bf16.msra.mxu0 0
        %7431 = vmatprep.subr.bf16.mxu0 0
        %7432 = vmatpush2.bf16.msra.mxu0 0
        %7433 = vmatprep.subr.bf16.mxu0 0
        %7434 = vmatpush2.bf16.msra.mxu0 0
        %7435 = vmatprep.subr.bf16.mxu0 0
        %7436 = vmatpush2.bf16.msra.mxu0 0
        %7437 = vmatprep.subr.bf16.mxu0 0
        %7438 = vmatpush2.bf16.msra.mxu0 0
        %7439 = vmatprep.subr.bf16.mxu0 0
        %7440 = vmatpush2.bf16.msra.mxu0 0
        %7441 = vmatprep.subr.bf16.mxu0 0
        %7442 = vmatpush2.bf16.msra.mxu0 0
        %7443 = vmatprep.mubr.bf16.mxu0 0
        %7444 = vmatmul.mubr.bf16.gmra.mxu0 %v7403
        %v7445 = vpop.f32.mrf.mxu0
        %v7446 = vadd.f32 %v399, %v7445
        %v7447 = vpop.f32.mrf.mxu0
        %v7448 = vpop.f32.mrf.mxu0
        %v7449 = vadd.f32 %v399, %v7448
        %v7450 = vpop.f32.mrf.mxu0
        %7451 = vmatprep.mubr.bf16.mxu0 0
        %7452 = vmatmul.mubr.bf16.gmra.mxu0 %v7404
        %v7453 = vpop.f32.mrf.mxu0
        %v7454 = vadd.f32 %v399, %v7453
        %v7455 = vpop.f32.mrf.mxu0
        %v7456 = vpop.f32.mrf.mxu0
        %v7457 = vadd.f32 %v399, %v7456
        %v7458 = vpop.f32.mrf.mxu0
        %7459 = vmatprep.mubr.bf16.mxu0 0
        %7460 = vmatmul.mubr.bf16.gmra.mxu0 %v7405
        %v7461 = vpop.f32.mrf.mxu0
        %v7462 = vadd.f32 %v399, %v7461
        %v7463 = vpop.f32.mrf.mxu0
        %v7464 = vpop.f32.mrf.mxu0
        %v7465 = vadd.f32 %v399, %v7464
        %v7466 = vpop.f32.mrf.mxu0
        %7467 = vmatprep.mubr.bf16.mxu0 0
        %7468 = vmatmul.mubr.bf16.gmra.mxu0 %v7406
        %v7469 = vpop.f32.mrf.mxu0
        %v7470 = vadd.f32 %v399, %v7469
        %v7471 = vpop.f32.mrf.mxu0
        %v7472 = vpop.f32.mrf.mxu0
        %v7473 = vadd.f32 %v399, %v7472
        %v7474 = vpop.f32.mrf.mxu0
        %7475 = vmatprep.mubr.bf16.mxu0 0
        %7476 = vmatmul.mubr.bf16.gmra.mxu0 %v7407
        %v7477 = vpop.f32.mrf.mxu0
        %v7478 = vadd.f32 %v399, %v7477
        %v7479 = vpop.f32.mrf.mxu0
        %v7480 = vpop.f32.mrf.mxu0
        %v7481 = vadd.f32 %v399, %v7480
        %v7482 = vpop.f32.mrf.mxu0
        %7483 = vmatprep.mubr.bf16.mxu0 0
        %7484 = vmatmul.mubr.bf16.gmra.mxu0 %v7408
        %v7485 = vpop.f32.mrf.mxu0
        %v7486 = vadd.f32 %v399, %v7485
        %v7487 = vpop.f32.mrf.mxu0
        %v7488 = vpop.f32.mrf.mxu0
        %v7489 = vadd.f32 %v399, %v7488
        %v7490 = vpop.f32.mrf.mxu0
        %7491 = vmatprep.mubr.bf16.mxu0 0
        %7492 = vmatmul.mubr.bf16.gmra.mxu0 %v7409
        %v7493 = vpop.f32.mrf.mxu0
        %v7494 = vadd.f32 %v399, %v7493
        %v7495 = vpop.f32.mrf.mxu0
        %v7496 = vpop.f32.mrf.mxu0
        %v7497 = vadd.f32 %v399, %v7496
        %v7498 = vpop.f32.mrf.mxu0
        %7499 = vmatprep.mubr.bf16.mxu0 0
        %7500 = vmatmul.mubr.bf16.gmra.mxu0 %v7410
        %v7501 = vpop.f32.mrf.mxu0
        %v7502 = vadd.f32 %v399, %v7501
        %v7503 = vpop.f32.mrf.mxu0
        %v7504 = vpop.f32.mrf.mxu0
        %v7505 = vadd.f32 %v399, %v7504
        %v7506 = vpop.f32.mrf.mxu0
        %7507 = vdwg.mxu0
        %v7508 = vtanh.pop %v7446
        %v7509 = vtanh.pop %v7449
        %v7510 = vtanh.pop %v7454
        %v7511 = vtanh.pop %v7457
        %v7512 = vtanh.pop %v7462
        %v7513 = vtanh.pop %v7465
        %v7514 = vtanh.pop %v7470
        %v7515 = vtanh.pop %v7473
        %v7516 = vtanh.pop %v7478
        %v7517 = vtanh.pop %v7481
        %v7518 = vtanh.pop %v7486
        %v7519 = vtanh.pop %v7489
        %v7520 = vtanh.pop %v7494
        %v7521 = vtanh.pop %v7497
        %v7522 = vtanh.pop %v7502
        %v7523 = vtanh.pop %v7505
        %v7524 = vpack.c.bf16 %v7509, %v7508
        %v7525 = vpack.c.bf16 %v7511, %v7510
        %v7526 = vpack.c.bf16 %v7513, %v7512
        %v7527 = vpack.c.bf16 %v7515, %v7514
        %v7528 = vpack.c.bf16 %v7517, %v7516
        %v7529 = vpack.c.bf16 %v7519, %v7518
        %v7530 = vpack.c.bf16 %v7521, %v7520
        %v7531 = vpack.c.bf16 %v7523, %v7522
        %7532 = vmatprep.subr.bf16.mxu0 0
        %7533 = vmatpush1.bf16.msra.mxu0 %v7006
        %7534 = vmatprep.subr.bf16.mxu0 0
        %7535 = vmatpush1.bf16.msra.mxu0 %v7005
        %7536 = vmatprep.subr.bf16.mxu0 0
        %7537 = vmatpush1.bf16.msra.mxu0 %v7004
        %7538 = vmatprep.subr.bf16.mxu0 0
        %7539 = vmatpush1.bf16.msra.mxu0 %v7003
        %7540 = vmatprep.subr.bf16.mxu0 0
        %7541 = vmatpush1.bf16.msra.mxu0 %v7002
        %7542 = vmatprep.subr.bf16.mxu0 0
        %7543 = vmatpush1.bf16.msra.mxu0 %v7001
        %7544 = vmatprep.subr.bf16.mxu0 0
        %7545 = vmatpush1.bf16.msra.mxu0 %v7000
        %7546 = vmatprep.subr.bf16.mxu0 0
        %7547 = vmatpush1.bf16.msra.mxu0 %v6999
        %7548 = vmatprep.subr.bf16.mxu0 0
        %7549 = vmatpush2.bf16.msra.mxu0 0
        %7550 = vmatprep.subr.bf16.mxu0 0
        %7551 = vmatpush2.bf16.msra.mxu0 0
        %7552 = vmatprep.subr.bf16.mxu0 0
        %7553 = vmatpush2.bf16.msra.mxu0 0
        %7554 = vmatprep.subr.bf16.mxu0 0
        %7555 = vmatpush2.bf16.msra.mxu0 0
        %7556 = vmatprep.subr.bf16.mxu0 0
        %7557 = vmatpush2.bf16.msra.mxu0 0
        %7558 = vmatprep.subr.bf16.mxu0 0
        %7559 = vmatpush2.bf16.msra.mxu0 0
        %7560 = vmatprep.subr.bf16.mxu0 0
        %7561 = vmatpush2.bf16.msra.mxu0 0
        %7562 = vmatprep.subr.bf16.mxu0 0
        %7563 = vmatpush2.bf16.msra.mxu0 0
        %7564 = vmatprep.mubr.bf16.mxu0 0
        %7565 = vmatmul.mubr.bf16.gmra.mxu0 %v7524
        %v7566 = vpop.f32.mrf.mxu0
        %v7567 = vadd.f32 %v406, %v7566
        %v7568 = vpop.f32.mrf.mxu0
        %v7569 = vpop.f32.mrf.mxu0
        %v7570 = vadd.f32 %v406, %v7569
        %v7571 = vpop.f32.mrf.mxu0
        %7572 = vmatprep.mubr.bf16.mxu0 0
        %7573 = vmatmul.mubr.bf16.gmra.mxu0 %v7525
        %v7574 = vpop.f32.mrf.mxu0
        %v7575 = vadd.f32 %v406, %v7574
        %v7576 = vpop.f32.mrf.mxu0
        %v7577 = vpop.f32.mrf.mxu0
        %v7578 = vadd.f32 %v406, %v7577
        %v7579 = vpop.f32.mrf.mxu0
        %7580 = vmatprep.mubr.bf16.mxu0 0
        %7581 = vmatmul.mubr.bf16.gmra.mxu0 %v7526
        %v7582 = vpop.f32.mrf.mxu0
        %v7583 = vadd.f32 %v406, %v7582
        %v7584 = vpop.f32.mrf.mxu0
        %v7585 = vpop.f32.mrf.mxu0
        %v7586 = vadd.f32 %v406, %v7585
        %v7587 = vpop.f32.mrf.mxu0
        %7588 = vmatprep.mubr.bf16.mxu0 0
        %7589 = vmatmul.mubr.bf16.gmra.mxu0 %v7527
        %v7590 = vpop.f32.mrf.mxu0
        %v7591 = vadd.f32 %v406, %v7590
        %v7592 = vpop.f32.mrf.mxu0
        %v7593 = vpop.f32.mrf.mxu0
        %v7594 = vadd.f32 %v406, %v7593
        %v7595 = vpop.f32.mrf.mxu0
        %7596 = vmatprep.mubr.bf16.mxu0 0
        %7597 = vmatmul.mubr.bf16.gmra.mxu0 %v7528
        %v7598 = vpop.f32.mrf.mxu0
        %v7599 = vadd.f32 %v406, %v7598
        %v7600 = vpop.f32.mrf.mxu0
        %v7601 = vpop.f32.mrf.mxu0
        %v7602 = vadd.f32 %v406, %v7601
        %v7603 = vpop.f32.mrf.mxu0
        %7604 = vmatprep.mubr.bf16.mxu0 0
        %7605 = vmatmul.mubr.bf16.gmra.mxu0 %v7529
        %v7606 = vpop.f32.mrf.mxu0
        %v7607 = vadd.f32 %v406, %v7606
        %v7608 = vpop.f32.mrf.mxu0
        %v7609 = vpop.f32.mrf.mxu0
        %v7610 = vadd.f32 %v406, %v7609
        %v7611 = vpop.f32.mrf.mxu0
        %7612 = vmatprep.mubr.bf16.mxu0 0
        %7613 = vmatmul.mubr.bf16.gmra.mxu0 %v7530
        %v7614 = vpop.f32.mrf.mxu0
        %v7615 = vadd.f32 %v406, %v7614
        %v7616 = vpop.f32.mrf.mxu0
        %v7617 = vpop.f32.mrf.mxu0
        %v7618 = vadd.f32 %v406, %v7617
        %v7619 = vpop.f32.mrf.mxu0
        %7620 = vmatprep.mubr.bf16.mxu0 0
        %7621 = vmatmul.mubr.bf16.gmra.mxu0 %v7531
        %v7622 = vpop.f32.mrf.mxu0
        %v7623 = vadd.f32 %v406, %v7622
        %v7624 = vpop.f32.mrf.mxu0
        %v7625 = vpop.f32.mrf.mxu0
        %v7626 = vadd.f32 %v406, %v7625
        %v7627 = vpop.f32.mrf.mxu0
        %7628 = vdwg.mxu0
        %v7629 = vstv %s6755
        %v7630 = vmul.f32 %v7629, %v7567
        %v7631 = vmul.f32 %v7629, %v7570
        %v7632 = vmul.f32 %v7629, %v7575
        %v7633 = vmul.f32 %v7629, %v7578
        %v7634 = vmul.f32 %v7629, %v7583
        %v7635 = vmul.f32 %v7629, %v7586
        %v7636 = vmul.f32 %v7629, %v7591
        %v7637 = vmul.f32 %v7629, %v7594
        %v7638 = vmul.f32 %v7629, %v7599
        %v7639 = vmul.f32 %v7629, %v7602
        %v7640 = vmul.f32 %v7629, %v7607
        %v7641 = vmul.f32 %v7629, %v7610
        %v7642 = vmul.f32 %v7629, %v7615
        %v7643 = vmul.f32 %v7629, %v7618
        %v7644 = vmul.f32 %v7629, %v7623
        %v7645 = vmul.f32 %v7629, %v7626
        %v7646 = vadd.f32 %v6722, %v7630
        %v7647 = vadd.f32 %v6723, %v7631
        %v7648 = vadd.f32 %v6724, %v7632
        %v7649 = vadd.f32 %v6725, %v7633
        %v7650 = vadd.f32 %v6726, %v7634
        %v7651 = vadd.f32 %v6727, %v7635
        %v7652 = vadd.f32 %v6728, %v7636
        %v7653 = vadd.f32 %v6729, %v7637
        %v7654 = vadd.f32 %v6730, %v7638
        %v7655 = vadd.f32 %v6731, %v7639
        %v7656 = vadd.f32 %v6732, %v7640
        %v7657 = vadd.f32 %v6733, %v7641
        %v7658 = vadd.f32 %v6734, %v7642
        %v7659 = vadd.f32 %v6735, %v7643
        %v7660 = vadd.f32 %v6736, %v7644
        %v7661 = vadd.f32 %v6737, %v7645
        %v7662 = vpack.c.bf16 %v7647, %v7646
        %v7663 = vpack.c.bf16 %v7649, %v7648
        %v7664 = vpack.c.bf16 %v7651, %v7650
        %v7665 = vpack.c.bf16 %v7653, %v7652
        %v7666 = vpack.c.bf16 %v7655, %v7654
        %v7667 = vpack.c.bf16 %v7657, %v7656
        %v7668 = vpack.c.bf16 %v7659, %v7658
        %v7669 = vpack.c.bf16 %v7661, %v7660
        %7670 = vmatprep.subr.bf16.mxu0 0
        %7671 = vmatpush1.bf16.msra.mxu0 %v6821
        %7672 = vmatprep.subr.bf16.mxu0 0
        %7673 = vmatpush1.bf16.msra.mxu0 %v6820
        %7674 = vmatprep.subr.bf16.mxu0 0
        %7675 = vmatpush1.bf16.msra.mxu0 %v6819
        %7676 = vmatprep.subr.bf16.mxu0 0
        %7677 = vmatpush1.bf16.msra.mxu0 %v6818
        %7678 = vmatprep.subr.bf16.mxu0 0
        %7679 = vmatpush1.bf16.msra.mxu0 %v6817
        %7680 = vmatprep.subr.bf16.mxu0 0
        %7681 = vmatpush1.bf16.msra.mxu0 %v6816
        %7682 = vmatprep.subr.bf16.mxu0 0
        %7683 = vmatpush1.bf16.msra.mxu0 %v6815
        %7684 = vmatprep.subr.bf16.mxu0 0
        %7685 = vmatpush1.bf16.msra.mxu0 %v6814
        %7686 = vmatprep.subr.bf16.mxu0 0
        %7687 = vmatpush2.bf16.msra.mxu0 0
        %7688 = vmatprep.subr.bf16.mxu0 0
        %7689 = vmatpush2.bf16.msra.mxu0 0
        %7690 = vmatprep.subr.bf16.mxu0 0
        %7691 = vmatpush2.bf16.msra.mxu0 0
        %7692 = vmatprep.subr.bf16.mxu0 0
        %7693 = vmatpush2.bf16.msra.mxu0 0
        %7694 = vmatprep.subr.bf16.mxu0 0
        %7695 = vmatpush2.bf16.msra.mxu0 0
        %7696 = vmatprep.subr.bf16.mxu0 0
        %7697 = vmatpush2.bf16.msra.mxu0 0
        %7698 = vmatprep.subr.bf16.mxu0 0
        %7699 = vmatpush2.bf16.msra.mxu0 0
        %7700 = vmatprep.subr.bf16.mxu0 0
        %7701 = vmatpush2.bf16.msra.mxu0 0
        %7702 = vmatprep.mubr.bf16.mxu0 0
        %7703 = vmatmul.mubr.bf16.gmra.mxu0 %v7662
        %v7704 = vpop.f32.mrf.mxu0
        %v7705 = vadd.f32 %v399, %v7704
        %v7706 = vpop.f32.mrf.mxu0
        %v7707 = vpop.f32.mrf.mxu0
        %v7708 = vadd.f32 %v399, %v7707
        %v7709 = vpop.f32.mrf.mxu0
        %7710 = vmatprep.mubr.bf16.mxu0 0
        %7711 = vmatmul.mubr.bf16.gmra.mxu0 %v7663
        %v7712 = vpop.f32.mrf.mxu0
        %v7713 = vadd.f32 %v399, %v7712
        %v7714 = vpop.f32.mrf.mxu0
        %v7715 = vpop.f32.mrf.mxu0
        %v7716 = vadd.f32 %v399, %v7715
        %v7717 = vpop.f32.mrf.mxu0
        %7718 = vmatprep.mubr.bf16.mxu0 0
        %7719 = vmatmul.mubr.bf16.gmra.mxu0 %v7664
        %v7720 = vpop.f32.mrf.mxu0
        %v7721 = vadd.f32 %v399, %v7720
        %v7722 = vpop.f32.mrf.mxu0
        %v7723 = vpop.f32.mrf.mxu0
        %v7724 = vadd.f32 %v399, %v7723
        %v7725 = vpop.f32.mrf.mxu0
        %7726 = vmatprep.mubr.bf16.mxu0 0
        %7727 = vmatmul.mubr.bf16.gmra.mxu0 %v7665
        %v7728 = vpop.f32.mrf.mxu0
        %v7729 = vadd.f32 %v399, %v7728
        %v7730 = vpop.f32.mrf.mxu0
        %v7731 = vpop.f32.mrf.mxu0
        %v7732 = vadd.f32 %v399, %v7731
        %v7733 = vpop.f32.mrf.mxu0
        %7734 = vmatprep.mubr.bf16.mxu0 0
        %7735 = vmatmul.mubr.bf16.gmra.mxu0 %v7666
        %v7736 = vpop.f32.mrf.mxu0
        %v7737 = vadd.f32 %v399, %v7736
        %v7738 = vpop.f32.mrf.mxu0
        %v7739 = vpop.f32.mrf.mxu0
        %v7740 = vadd.f32 %v399, %v7739
        %v7741 = vpop.f32.mrf.mxu0
        %7742 = vmatprep.mubr.bf16.mxu0 0
        %7743 = vmatmul.mubr.bf16.gmra.mxu0 %v7667
        %v7744 = vpop.f32.mrf.mxu0
        %v7745 = vadd.f32 %v399, %v7744
        %v7746 = vpop.f32.mrf.mxu0
        %v7747 = vpop.f32.mrf.mxu0
        %v7748 = vadd.f32 %v399, %v7747
        %v7749 = vpop.f32.mrf.mxu0
        %7750 = vmatprep.mubr.bf16.mxu0 0
        %7751 = vmatmul.mubr.bf16.gmra.mxu0 %v7668
        %v7752 = vpop.f32.mrf.mxu0
        %v7753 = vadd.f32 %v399, %v7752
        %v7754 = vpop.f32.mrf.mxu0
        %v7755 = vpop.f32.mrf.mxu0
        %v7756 = vadd.f32 %v399, %v7755
        %v7757 = vpop.f32.mrf.mxu0
        %7758 = vmatprep.mubr.bf16.mxu0 0
        %7759 = vmatmul.mubr.bf16.gmra.mxu0 %v7669
        %v7760 = vpop.f32.mrf.mxu0
        %v7761 = vadd.f32 %v399, %v7760
        %v7762 = vpop.f32.mrf.mxu0
        %v7763 = vpop.f32.mrf.mxu0
        %v7764 = vadd.f32 %v399, %v7763
        %v7765 = vpop.f32.mrf.mxu0
        %7766 = vdwg.mxu0
        %v7767 = vtanh.pop %v7705
        %v7768 = vtanh.pop %v7708
        %v7769 = vtanh.pop %v7713
        %v7770 = vtanh.pop %v7716
        %v7771 = vtanh.pop %v7721
        %v7772 = vtanh.pop %v7724
        %v7773 = vtanh.pop %v7729
        %v7774 = vtanh.pop %v7732
        %v7775 = vtanh.pop %v7737
        %v7776 = vtanh.pop %v7740
        %v7777 = vtanh.pop %v7745
        %v7778 = vtanh.pop %v7748
        %v7779 = vtanh.pop %v7753
        %v7780 = vtanh.pop %v7756
        %v7781 = vtanh.pop %v7761
        %v7782 = vtanh.pop %v7764
        %v7783 = vpack.c.bf16 %v7768, %v7767
        %v7784 = vpack.c.bf16 %v7770, %v7769
        %v7785 = vpack.c.bf16 %v7772, %v7771
        %v7786 = vpack.c.bf16 %v7774, %v7773
        %v7787 = vpack.c.bf16 %v7776, %v7775
        %v7788 = vpack.c.bf16 %v7778, %v7777
        %v7789 = vpack.c.bf16 %v7780, %v7779
        %v7790 = vpack.c.bf16 %v7782, %v7781
        %7791 = vmatprep.subr.bf16.mxu0 0
        %7792 = vmatpush1.bf16.msra.mxu0 %v7006
        %7793 = vmatprep.subr.bf16.mxu0 0
        %7794 = vmatpush1.bf16.msra.mxu0 %v7005
        %7795 = vmatprep.subr.bf16.mxu0 0
        %7796 = vmatpush1.bf16.msra.mxu0 %v7004
        %7797 = vmatprep.subr.bf16.mxu0 0
        %7798 = vmatpush1.bf16.msra.mxu0 %v7003
        %7799 = vmatprep.subr.bf16.mxu0 0
        %7800 = vmatpush1.bf16.msra.mxu0 %v7002
        %7801 = vmatprep.subr.bf16.mxu0 0
        %7802 = vmatpush1.bf16.msra.mxu0 %v7001
        %7803 = vmatprep.subr.bf16.mxu0 0
        %7804 = vmatpush1.bf16.msra.mxu0 %v7000
        %7805 = vmatprep.subr.bf16.mxu0 0
        %7806 = vmatpush1.bf16.msra.mxu0 %v6999
        %7807 = vmatprep.subr.bf16.mxu0 0
        %7808 = vmatpush2.bf16.msra.mxu0 0
        %7809 = vmatprep.subr.bf16.mxu0 0
        %7810 = vmatpush2.bf16.msra.mxu0 0
        %7811 = vmatprep.subr.bf16.mxu0 0
        %7812 = vmatpush2.bf16.msra.mxu0 0
        %7813 = vmatprep.subr.bf16.mxu0 0
        %7814 = vmatpush2.bf16.msra.mxu0 0
        %7815 = vmatprep.subr.bf16.mxu0 0
        %7816 = vmatpush2.bf16.msra.mxu0 0
        %7817 = vmatprep.subr.bf16.mxu0 0
        %7818 = vmatpush2.bf16.msra.mxu0 0
        %7819 = vmatprep.subr.bf16.mxu0 0
        %7820 = vmatpush2.bf16.msra.mxu0 0
        %7821 = vmatprep.subr.bf16.mxu0 0
        %7822 = vmatpush2.bf16.msra.mxu0 0
        %7823 = vmatprep.mubr.bf16.mxu0 0
        %7824 = vmatmul.mubr.bf16.gmra.mxu0 %v7783
        %v7825 = vpop.f32.mrf.mxu0
        %v7826 = vadd.f32 %v406, %v7825
        %v7827 = vpop.f32.mrf.mxu0
        %v7828 = vpop.f32.mrf.mxu0
        %v7829 = vadd.f32 %v406, %v7828
        %v7830 = vpop.f32.mrf.mxu0
        %7831 = vmatprep.mubr.bf16.mxu0 0
        %7832 = vmatmul.mubr.bf16.gmra.mxu0 %v7784
        %v7833 = vpop.f32.mrf.mxu0
        %v7834 = vadd.f32 %v406, %v7833
        %v7835 = vpop.f32.mrf.mxu0
        %v7836 = vpop.f32.mrf.mxu0
        %v7837 = vadd.f32 %v406, %v7836
        %v7838 = vpop.f32.mrf.mxu0
        %7839 = vmatprep.mubr.bf16.mxu0 0
        %7840 = vmatmul.mubr.bf16.gmra.mxu0 %v7785
        %v7841 = vpop.f32.mrf.mxu0
        %v7842 = vadd.f32 %v406, %v7841
        %v7843 = vpop.f32.mrf.mxu0
        %v7844 = vpop.f32.mrf.mxu0
        %v7845 = vadd.f32 %v406, %v7844
        %v7846 = vpop.f32.mrf.mxu0
        %7847 = vmatprep.mubr.bf16.mxu0 0
        %7848 = vmatmul.mubr.bf16.gmra.mxu0 %v7786
        %v7849 = vpop.f32.mrf.mxu0
        %v7850 = vadd.f32 %v406, %v7849
        %v7851 = vpop.f32.mrf.mxu0
        %v7852 = vpop.f32.mrf.mxu0
        %v7853 = vadd.f32 %v406, %v7852
        %v7854 = vpop.f32.mrf.mxu0
        %7855 = vmatprep.mubr.bf16.mxu0 0
        %7856 = vmatmul.mubr.bf16.gmra.mxu0 %v7787
        %v7857 = vpop.f32.mrf.mxu0
        %v7858 = vadd.f32 %v406, %v7857
        %v7859 = vpop.f32.mrf.mxu0
        %v7860 = vpop.f32.mrf.mxu0
        %v7861 = vadd.f32 %v406, %v7860
        %v7862 = vpop.f32.mrf.mxu0
        %7863 = vmatprep.mubr.bf16.mxu0 0
        %7864 = vmatmul.mubr.bf16.gmra.mxu0 %v7788
        %v7865 = vpop.f32.mrf.mxu0
        %v7866 = vadd.f32 %v406, %v7865
        %v7867 = vpop.f32.mrf.mxu0
        %v7868 = vpop.f32.mrf.mxu0
        %v7869 = vadd.f32 %v406, %v7868
        %v7870 = vpop.f32.mrf.mxu0
        %7871 = vmatprep.mubr.bf16.mxu0 0
        %7872 = vmatmul.mubr.bf16.gmra.mxu0 %v7789
        %v7873 = vpop.f32.mrf.mxu0
        %v7874 = vadd.f32 %v406, %v7873
        %v7875 = vpop.f32.mrf.mxu0
        %v7876 = vpop.f32.mrf.mxu0
        %v7877 = vadd.f32 %v406, %v7876
        %v7878 = vpop.f32.mrf.mxu0
        %7879 = vmatprep.mubr.bf16.mxu0 0
        %7880 = vmatmul.mubr.bf16.gmra.mxu0 %v7790
        %v7881 = vpop.f32.mrf.mxu0
        %v7882 = vadd.f32 %v406, %v7881
        %v7883 = vpop.f32.mrf.mxu0
        %v7884 = vpop.f32.mrf.mxu0
        %v7885 = vadd.f32 %v406, %v7884
        %v7886 = vpop.f32.mrf.mxu0
        %7887 = vdwg.mxu0
        %v7888 = vmul.f32 %v7309, 2.0
        %v7889 = vmul.f32 %v7312, 2.0
        %v7890 = vmul.f32 %v7317, 2.0
        %v7891 = vmul.f32 %v7320, 2.0
        %v7892 = vmul.f32 %v7325, 2.0
        %v7893 = vmul.f32 %v7328, 2.0
        %v7894 = vmul.f32 %v7333, 2.0
        %v7895 = vmul.f32 %v7336, 2.0
        %v7896 = vmul.f32 %v7341, 2.0
        %v7897 = vmul.f32 %v7344, 2.0
        %v7898 = vmul.f32 %v7349, 2.0
        %v7899 = vmul.f32 %v7352, 2.0
        %v7900 = vmul.f32 %v7357, 2.0
        %v7901 = vmul.f32 %v7360, 2.0
        %v7902 = vmul.f32 %v7365, 2.0
        %v7903 = vmul.f32 %v7368, 2.0
        %v7904 = vadd.f32 %v7050, %v7888
        %v7905 = vadd.f32 %v7053, %v7889
        %v7906 = vadd.f32 %v7058, %v7890
        %v7907 = vadd.f32 %v7061, %v7891
        %v7908 = vadd.f32 %v7066, %v7892
        %v7909 = vadd.f32 %v7069, %v7893
        %v7910 = vadd.f32 %v7074, %v7894
        %v7911 = vadd.f32 %v7077, %v7895
        %v7912 = vadd.f32 %v7082, %v7896
        %v7913 = vadd.f32 %v7085, %v7897
        %v7914 = vadd.f32 %v7090, %v7898
        %v7915 = vadd.f32 %v7093, %v7899
        %v7916 = vadd.f32 %v7098, %v7900
        %v7917 = vadd.f32 %v7101, %v7901
        %v7918 = vadd.f32 %v7106, %v7902
        %v7919 = vadd.f32 %v7109, %v7903
        %v7920 = vmul.f32 %v7567, 2.0
        %v7921 = vmul.f32 %v7570, 2.0
        %v7922 = vmul.f32 %v7575, 2.0
        %v7923 = vmul.f32 %v7578, 2.0
        %v7924 = vmul.f32 %v7583, 2.0
        %v7925 = vmul.f32 %v7586, 2.0
        %v7926 = vmul.f32 %v7591, 2.0
        %v7927 = vmul.f32 %v7594, 2.0
        %v7928 = vmul.f32 %v7599, 2.0
        %v7929 = vmul.f32 %v7602, 2.0
        %v7930 = vmul.f32 %v7607, 2.0
        %v7931 = vmul.f32 %v7610, 2.0
        %v7932 = vmul.f32 %v7615, 2.0
        %v7933 = vmul.f32 %v7618, 2.0
        %v7934 = vmul.f32 %v7623, 2.0
        %v7935 = vmul.f32 %v7626, 2.0
        %v7936 = vadd.f32 %v7904, %v7920
        %v7937 = vadd.f32 %v7905, %v7921
        %v7938 = vadd.f32 %v7906, %v7922
        %v7939 = vadd.f32 %v7907, %v7923
        %v7940 = vadd.f32 %v7908, %v7924
        %v7941 = vadd.f32 %v7909, %v7925
        %v7942 = vadd.f32 %v7910, %v7926
        %v7943 = vadd.f32 %v7911, %v7927
        %v7944 = vadd.f32 %v7912, %v7928
        %v7945 = vadd.f32 %v7913, %v7929
        %v7946 = vadd.f32 %v7914, %v7930
        %v7947 = vadd.f32 %v7915, %v7931
        %v7948 = vadd.f32 %v7916, %v7932
        %v7949 = vadd.f32 %v7917, %v7933
        %v7950 = vadd.f32 %v7918, %v7934
        %v7951 = vadd.f32 %v7919, %v7935
        %v7952 = vadd.f32 %v7936, %v7826
        %v7953 = vadd.f32 %v7937, %v7829
        %v7954 = vadd.f32 %v7938, %v7834
        %v7955 = vadd.f32 %v7939, %v7837
        %v7956 = vadd.f32 %v7940, %v7842
        %v7957 = vadd.f32 %v7941, %v7845
        %v7958 = vadd.f32 %v7942, %v7850
        %v7959 = vadd.f32 %v7943, %v7853
        %v7960 = vadd.f32 %v7944, %v7858
        %v7961 = vadd.f32 %v7945, %v7861
        %v7962 = vadd.f32 %v7946, %v7866
        %v7963 = vadd.f32 %v7947, %v7869
        %v7964 = vadd.f32 %v7948, %v7874
        %v7965 = vadd.f32 %v7949, %v7877
        %v7966 = vadd.f32 %v7950, %v7882
        %v7967 = vadd.f32 %v7951, %v7885
        %v7968 = vstv %s6757
        %v7969 = vmul.f32 %v7968, %v7952
        %v7970 = vmul.f32 %v7968, %v7953
        %v7971 = vmul.f32 %v7968, %v7954
        %v7972 = vmul.f32 %v7968, %v7955
        %v7973 = vmul.f32 %v7968, %v7956
        %v7974 = vmul.f32 %v7968, %v7957
        %v7975 = vmul.f32 %v7968, %v7958
        %v7976 = vmul.f32 %v7968, %v7959
        %v7977 = vmul.f32 %v7968, %v7960
        %v7978 = vmul.f32 %v7968, %v7961
        %v7979 = vmul.f32 %v7968, %v7962
        %v7980 = vmul.f32 %v7968, %v7963
        %v7981 = vmul.f32 %v7968, %v7964
        %v7982 = vmul.f32 %v7968, %v7965
        %v7983 = vmul.f32 %v7968, %v7966
        %v7984 = vmul.f32 %v7968, %v7967
        %v7985 = vadd.f32 %v6722, %v7969
        %v7986 = vadd.f32 %v6723, %v7970
        %v7987 = vadd.f32 %v6724, %v7971
        %v7988 = vadd.f32 %v6725, %v7972
        %v7989 = vadd.f32 %v6726, %v7973
        %v7990 = vadd.f32 %v6727, %v7974
        %v7991 = vadd.f32 %v6728, %v7975
        %v7992 = vadd.f32 %v6729, %v7976
        %v7993 = vadd.f32 %v6730, %v7977
        %v7994 = vadd.f32 %v6731, %v7978
        %v7995 = vadd.f32 %v6732, %v7979
        %v7996 = vadd.f32 %v6733, %v7980
        %v7997 = vadd.f32 %v6734, %v7981
        %v7998 = vadd.f32 %v6735, %v7982
        %v7999 = vadd.f32 %v6736, %v7983
        %v8000 = vadd.f32 %v6737, %v7984
        %s8001 = scalar_lea.vmem %s390, 768 [#allocation14]
        %8002 = vst [vmem:[%s8001] sm:$0xff] %v7985
        %8003 = vst [vmem:[%s8001 + $0x8] sm:$0xff] %v7986
        %8004 = vst [vmem:[%s8001 + $0x10] sm:$0xff] %v7987
        %8005 = vst [vmem:[%s8001 + $0x18] sm:$0xff] %v7988
        %8006 = vst [vmem:[%s8001 + $0x20] sm:$0xff] %v7989
        %8007 = vst [vmem:[%s8001 + $0x28] sm:$0xff] %v7990
        %8008 = vst [vmem:[%s8001 + $0x30] sm:$0xff] %v7991
        %8009 = vst [vmem:[%s8001 + $0x38] sm:$0xff] %v7992
        %8010 = vst [vmem:[%s8001 + $0x40] sm:$0xff] %v7993
        %8011 = vst [vmem:[%s8001 + $0x48] sm:$0xff] %v7994
        %8012 = vst [vmem:[%s8001 + $0x50] sm:$0xff] %v7995
        %8013 = vst [vmem:[%s8001 + $0x58] sm:$0xff] %v7996
        %8014 = vst [vmem:[%s8001 + $0x60] sm:$0xff] %v7997
        %8015 = vst [vmem:[%s8001 + $0x68] sm:$0xff] %v7998
        %8016 = vst [vmem:[%s8001 + $0x70] sm:$0xff] %v7999
        %8017 = vst [vmem:[%s8001 + $0x78] sm:$0xff] %v8000
        %s8018 = sld [smem:[#allocation2 + $0x6]]
        %s8019 = sld [smem:[#allocation7 + $0x6]]
        %s8020 = sld [smem:[#allocation8 + $0x6]]
        %v8021 = vpack.c.bf16 %v7986, %v7985
        %v8022 = vpack.c.bf16 %v7988, %v7987
        %v8023 = vpack.c.bf16 %v7990, %v7989
        %v8024 = vpack.c.bf16 %v7992, %v7991
        %v8025 = vpack.c.bf16 %v7994, %v7993
        %v8026 = vpack.c.bf16 %v7996, %v7995
        %v8027 = vpack.c.bf16 %v7998, %v7997
        %v8028 = vpack.c.bf16 %v8000, %v7999
        %v8029 = vld [vmem:[#allocation11] sm:$0xf]
        %v8030 = vld [vmem:[#allocation11 + $0x4] sm:$0xf]
        %v8031 = vld [vmem:[#allocation11 + $0x8] sm:$0xf]
        %v8032 = vld [vmem:[#allocation11 + $0xc] sm:$0xf]
        %v8033 = vld [vmem:[#allocation11 + $0x10] sm:$0xf]
        %v8034 = vld [vmem:[#allocation11 + $0x14] sm:$0xf]
        %v8035 = vld [vmem:[#allocation11 + $0x18] sm:$0xf]
        %v8036 = vld [vmem:[#allocation11 + $0x1c] sm:$0xf]
        %v8037 = vld [vmem:[#allocation11 + $0x20] sm:$0xf]
        %v8038 = vld [vmem:[#allocation11 + $0x24] sm:$0xf]
        %v8039 = vld [vmem:[#allocation11 + $0x28] sm:$0xf]
        %v8040 = vld [vmem:[#allocation11 + $0x2c] sm:$0xf]
        %v8041 = vld [vmem:[#allocation11 + $0x30] sm:$0xf]
        %v8042 = vld [vmem:[#allocation11 + $0x34] sm:$0xf]
        %v8043 = vld [vmem:[#allocation11 + $0x38] sm:$0xf]
        %v8044 = vld [vmem:[#allocation11 + $0x3c] sm:$0xf]
        %v8061 = vunpack.c.l.b16 %v8029
        %v8062 = vunpack.c.l.b16 %v8030
        %v8063 = vunpack.c.l.b16 %v8031
        %v8064 = vunpack.c.l.b16 %v8032
        %v8065 = vunpack.c.l.b16 %v8033
        %v8066 = vunpack.c.l.b16 %v8034
        %v8067 = vunpack.c.l.b16 %v8035
        %v8068 = vunpack.c.l.b16 %v8036
        %v8069 = vunpack.c.l.b16 %v8037
        %v8070 = vunpack.c.l.b16 %v8038
        %v8071 = vunpack.c.l.b16 %v8039
        %v8072 = vunpack.c.l.b16 %v8040
        %v8073 = vunpack.c.l.b16 %v8041
        %v8074 = vunpack.c.l.b16 %v8042
        %v8075 = vunpack.c.l.b16 %v8043
        %v8076 = vunpack.c.l.b16 %v8044
        %v8077 = vpack.c.b16 %v8062, %v8061
        %v8078 = vpack.c.b16 %v8064, %v8063
        %v8079 = vpack.c.b16 %v8066, %v8065
        %v8080 = vpack.c.b16 %v8068, %v8067
        %v8081 = vpack.c.b16 %v8070, %v8069
        %v8082 = vpack.c.b16 %v8072, %v8071
        %v8083 = vpack.c.b16 %v8074, %v8073
        %v8084 = vpack.c.b16 %v8076, %v8075
        %8093 = vmatprep.subr.bf16.mxu0 0
        %8094 = vmatpush1.bf16.msra.mxu0 %v8084
        %8095 = vmatprep.subr.bf16.mxu0 0
        %8096 = vmatpush1.bf16.msra.mxu0 %v8083
        %8097 = vmatprep.subr.bf16.mxu0 0
        %8098 = vmatpush1.bf16.msra.mxu0 %v8082
        %8099 = vmatprep.subr.bf16.mxu0 0
        %8100 = vmatpush1.bf16.msra.mxu0 %v8081
        %8101 = vmatprep.subr.bf16.mxu0 0
        %8102 = vmatpush1.bf16.msra.mxu0 %v8080
        %8103 = vmatprep.subr.bf16.mxu0 0
        %8104 = vmatpush1.bf16.msra.mxu0 %v8079
        %8105 = vmatprep.subr.bf16.mxu0 0
        %8106 = vmatpush1.bf16.msra.mxu0 %v8078
        %8107 = vmatprep.subr.bf16.mxu0 0
        %8108 = vmatpush1.bf16.msra.mxu0 %v8077
        %8109 = vmatprep.subr.bf16.mxu0 0
        %8110 = vmatpush2.bf16.msra.mxu0 0
        %8111 = vmatprep.subr.bf16.mxu0 0
        %8112 = vmatpush2.bf16.msra.mxu0 0
        %8113 = vmatprep.subr.bf16.mxu0 0
        %8114 = vmatpush2.bf16.msra.mxu0 0
        %8115 = vmatprep.subr.bf16.mxu0 0
        %8116 = vmatpush2.bf16.msra.mxu0 0
        %8117 = vmatprep.subr.bf16.mxu0 0
        %8118 = vmatpush2.bf16.msra.mxu0 0
        %8119 = vmatprep.subr.bf16.mxu0 0
        %8120 = vmatpush2.bf16.msra.mxu0 0
        %8121 = vmatprep.subr.bf16.mxu0 0
        %8122 = vmatpush2.bf16.msra.mxu0 0
        %8123 = vmatprep.subr.bf16.mxu0 0
        %8124 = vmatpush2.bf16.msra.mxu0 0
        %8125 = vmatprep.mubr.bf16.mxu0 0
        %8126 = vmatmul.mubr.bf16.gmra.mxu0 %v8021
        %v8127 = vpop.f32.mrf.mxu0
        %v8128 = vadd.f32 %v399, %v8127
        %v8129 = vpop.f32.mrf.mxu0
        %v8130 = vpop.f32.mrf.mxu0
        %v8131 = vadd.f32 %v399, %v8130
        %v8132 = vpop.f32.mrf.mxu0
        %8133 = vmatprep.mubr.bf16.mxu0 0
        %8134 = vmatmul.mubr.bf16.gmra.mxu0 %v8022
        %v8135 = vpop.f32.mrf.mxu0
        %v8136 = vadd.f32 %v399, %v8135
        %v8137 = vpop.f32.mrf.mxu0
        %v8138 = vpop.f32.mrf.mxu0
        %v8139 = vadd.f32 %v399, %v8138
        %v8140 = vpop.f32.mrf.mxu0
        %8141 = vmatprep.mubr.bf16.mxu0 0
        %8142 = vmatmul.mubr.bf16.gmra.mxu0 %v8023
        %v8143 = vpop.f32.mrf.mxu0
        %v8144 = vadd.f32 %v399, %v8143
        %v8145 = vpop.f32.mrf.mxu0
        %v8146 = vpop.f32.mrf.mxu0
        %v8147 = vadd.f32 %v399, %v8146
        %v8148 = vpop.f32.mrf.mxu0
        %8149 = vmatprep.mubr.bf16.mxu0 0
        %8150 = vmatmul.mubr.bf16.gmra.mxu0 %v8024
        %v8151 = vpop.f32.mrf.mxu0
        %v8152 = vadd.f32 %v399, %v8151
        %v8153 = vpop.f32.mrf.mxu0
        %v8154 = vpop.f32.mrf.mxu0
        %v8155 = vadd.f32 %v399, %v8154
        %v8156 = vpop.f32.mrf.mxu0
        %8157 = vmatprep.mubr.bf16.mxu0 0
        %8158 = vmatmul.mubr.bf16.gmra.mxu0 %v8025
        %v8159 = vpop.f32.mrf.mxu0
        %v8160 = vadd.f32 %v399, %v8159
        %v8161 = vpop.f32.mrf.mxu0
        %v8162 = vpop.f32.mrf.mxu0
        %v8163 = vadd.f32 %v399, %v8162
        %v8164 = vpop.f32.mrf.mxu0
        %8165 = vmatprep.mubr.bf16.mxu0 0
        %8166 = vmatmul.mubr.bf16.gmra.mxu0 %v8026
        %v8167 = vpop.f32.mrf.mxu0
        %v8168 = vadd.f32 %v399, %v8167
        %v8169 = vpop.f32.mrf.mxu0
        %v8170 = vpop.f32.mrf.mxu0
        %v8171 = vadd.f32 %v399, %v8170
        %v8172 = vpop.f32.mrf.mxu0
        %8173 = vmatprep.mubr.bf16.mxu0 0
        %8174 = vmatmul.mubr.bf16.gmra.mxu0 %v8027
        %v8175 = vpop.f32.mrf.mxu0
        %v8176 = vadd.f32 %v399, %v8175
        %v8177 = vpop.f32.mrf.mxu0
        %v8178 = vpop.f32.mrf.mxu0
        %v8179 = vadd.f32 %v399, %v8178
        %v8180 = vpop.f32.mrf.mxu0
        %8181 = vmatprep.mubr.bf16.mxu0 0
        %8182 = vmatmul.mubr.bf16.gmra.mxu0 %v8028
        %v8183 = vpop.f32.mrf.mxu0
        %v8184 = vadd.f32 %v399, %v8183
        %v8185 = vpop.f32.mrf.mxu0
        %v8186 = vpop.f32.mrf.mxu0
        %v8187 = vadd.f32 %v399, %v8186
        %v8188 = vpop.f32.mrf.mxu0
        %8189 = vdwg.mxu0
        %v8190 = vtanh.pop %v8128
        %v8191 = vtanh.pop %v8131
        %v8192 = vtanh.pop %v8136
        %v8193 = vtanh.pop %v8139
        %v8194 = vtanh.pop %v8144
        %v8195 = vtanh.pop %v8147
        %v8196 = vtanh.pop %v8152
        %v8197 = vtanh.pop %v8155
        %v8198 = vtanh.pop %v8160
        %v8199 = vtanh.pop %v8163
        %v8200 = vtanh.pop %v8168
        %v8201 = vtanh.pop %v8171
        %v8202 = vtanh.pop %v8176
        %v8203 = vtanh.pop %v8179
        %v8204 = vtanh.pop %v8184
        %v8205 = vtanh.pop %v8187
        %v8206 = vpack.c.bf16 %v8191, %v8190
        %v8207 = vpack.c.bf16 %v8193, %v8192
        %v8208 = vpack.c.bf16 %v8195, %v8194
        %v8209 = vpack.c.bf16 %v8197, %v8196
        %v8210 = vpack.c.bf16 %v8199, %v8198
        %v8211 = vpack.c.bf16 %v8201, %v8200
        %v8212 = vpack.c.bf16 %v8203, %v8202
        %v8213 = vpack.c.bf16 %v8205, %v8204
        %v8214 = vld [vmem:[#allocation13] sm:$0xf]
        %v8215 = vld [vmem:[#allocation13 + $0x4] sm:$0xf]
        %v8216 = vld [vmem:[#allocation13 + $0x8] sm:$0xf]
        %v8217 = vld [vmem:[#allocation13 + $0xc] sm:$0xf]
        %v8218 = vld [vmem:[#allocation13 + $0x10] sm:$0xf]
        %v8219 = vld [vmem:[#allocation13 + $0x14] sm:$0xf]
        %v8220 = vld [vmem:[#allocation13 + $0x18] sm:$0xf]
        %v8221 = vld [vmem:[#allocation13 + $0x1c] sm:$0xf]
        %v8222 = vld [vmem:[#allocation13 + $0x20] sm:$0xf]
        %v8223 = vld [vmem:[#allocation13 + $0x24] sm:$0xf]
        %v8224 = vld [vmem:[#allocation13 + $0x28] sm:$0xf]
        %v8225 = vld [vmem:[#allocation13 + $0x2c] sm:$0xf]
        %v8226 = vld [vmem:[#allocation13 + $0x30] sm:$0xf]
        %v8227 = vld [vmem:[#allocation13 + $0x34] sm:$0xf]
        %v8228 = vld [vmem:[#allocation13 + $0x38] sm:$0xf]
        %v8229 = vld [vmem:[#allocation13 + $0x3c] sm:$0xf]
        %v8246 = vunpack.c.l.b16 %v8214
        %v8247 = vunpack.c.l.b16 %v8215
        %v8248 = vunpack.c.l.b16 %v8216
        %v8249 = vunpack.c.l.b16 %v8217
        %v8250 = vunpack.c.l.b16 %v8218
        %v8251 = vunpack.c.l.b16 %v8219
        %v8252 = vunpack.c.l.b16 %v8220
        %v8253 = vunpack.c.l.b16 %v8221
        %v8254 = vunpack.c.l.b16 %v8222
        %v8255 = vunpack.c.l.b16 %v8223
        %v8256 = vunpack.c.l.b16 %v8224
        %v8257 = vunpack.c.l.b16 %v8225
        %v8258 = vunpack.c.l.b16 %v8226
        %v8259 = vunpack.c.l.b16 %v8227
        %v8260 = vunpack.c.l.b16 %v8228
        %v8261 = vunpack.c.l.b16 %v8229
        %v8262 = vpack.c.b16 %v8247, %v8246
        %v8263 = vpack.c.b16 %v8249, %v8248
        %v8264 = vpack.c.b16 %v8251, %v8250
        %v8265 = vpack.c.b16 %v8253, %v8252
        %v8266 = vpack.c.b16 %v8255, %v8254
        %v8267 = vpack.c.b16 %v8257, %v8256
        %v8268 = vpack.c.b16 %v8259, %v8258
        %v8269 = vpack.c.b16 %v8261, %v8260
        %8278 = vmatprep.subr.bf16.mxu0 0
        %8279 = vmatpush1.bf16.msra.mxu0 %v8269
        %8280 = vmatprep.subr.bf16.mxu0 0
        %8281 = vmatpush1.bf16.msra.mxu0 %v8268
        %8282 = vmatprep.subr.bf16.mxu0 0
        %8283 = vmatpush1.bf16.msra.mxu0 %v8267
        %8284 = vmatprep.subr.bf16.mxu0 0
        %8285 = vmatpush1.bf16.msra.mxu0 %v8266
        %8286 = vmatprep.subr.bf16.mxu0 0
        %8287 = vmatpush1.bf16.msra.mxu0 %v8265
        %8288 = vmatprep.subr.bf16.mxu0 0
        %8289 = vmatpush1.bf16.msra.mxu0 %v8264
        %8290 = vmatprep.subr.bf16.mxu0 0
        %8291 = vmatpush1.bf16.msra.mxu0 %v8263
        %8292 = vmatprep.subr.bf16.mxu0 0
        %8293 = vmatpush1.bf16.msra.mxu0 %v8262
        %8294 = vmatprep.subr.bf16.mxu0 0
        %8295 = vmatpush2.bf16.msra.mxu0 0
        %8296 = vmatprep.subr.bf16.mxu0 0
        %8297 = vmatpush2.bf16.msra.mxu0 0
        %8298 = vmatprep.subr.bf16.mxu0 0
        %8299 = vmatpush2.bf16.msra.mxu0 0
        %8300 = vmatprep.subr.bf16.mxu0 0
        %8301 = vmatpush2.bf16.msra.mxu0 0
        %8302 = vmatprep.subr.bf16.mxu0 0
        %8303 = vmatpush2.bf16.msra.mxu0 0
        %8304 = vmatprep.subr.bf16.mxu0 0
        %8305 = vmatpush2.bf16.msra.mxu0 0
        %8306 = vmatprep.subr.bf16.mxu0 0
        %8307 = vmatpush2.bf16.msra.mxu0 0
        %8308 = vmatprep.subr.bf16.mxu0 0
        %8309 = vmatpush2.bf16.msra.mxu0 0
        %8310 = vmatprep.mubr.bf16.mxu0 0
        %8311 = vmatmul.mubr.bf16.gmra.mxu0 %v8206
        %v8312 = vpop.f32.mrf.mxu0
        %v8313 = vadd.f32 %v406, %v8312
        %v8314 = vpop.f32.mrf.mxu0
        %v8315 = vpop.f32.mrf.mxu0
        %v8316 = vadd.f32 %v406, %v8315
        %v8317 = vpop.f32.mrf.mxu0
        %8318 = vmatprep.mubr.bf16.mxu0 0
        %8319 = vmatmul.mubr.bf16.gmra.mxu0 %v8207
        %v8320 = vpop.f32.mrf.mxu0
        %v8321 = vadd.f32 %v406, %v8320
        %v8322 = vpop.f32.mrf.mxu0
        %v8323 = vpop.f32.mrf.mxu0
        %v8324 = vadd.f32 %v406, %v8323
        %v8325 = vpop.f32.mrf.mxu0
        %8326 = vmatprep.mubr.bf16.mxu0 0
        %8327 = vmatmul.mubr.bf16.gmra.mxu0 %v8208
        %v8328 = vpop.f32.mrf.mxu0
        %v8329 = vadd.f32 %v406, %v8328
        %v8330 = vpop.f32.mrf.mxu0
        %v8331 = vpop.f32.mrf.mxu0
        %v8332 = vadd.f32 %v406, %v8331
        %v8333 = vpop.f32.mrf.mxu0
        %8334 = vmatprep.mubr.bf16.mxu0 0
        %8335 = vmatmul.mubr.bf16.gmra.mxu0 %v8209
        %v8336 = vpop.f32.mrf.mxu0
        %v8337 = vadd.f32 %v406, %v8336
        %v8338 = vpop.f32.mrf.mxu0
        %v8339 = vpop.f32.mrf.mxu0
        %v8340 = vadd.f32 %v406, %v8339
        %v8341 = vpop.f32.mrf.mxu0
        %8342 = vmatprep.mubr.bf16.mxu0 0
        %8343 = vmatmul.mubr.bf16.gmra.mxu0 %v8210
        %v8344 = vpop.f32.mrf.mxu0
        %v8345 = vadd.f32 %v406, %v8344
        %v8346 = vpop.f32.mrf.mxu0
        %v8347 = vpop.f32.mrf.mxu0
        %v8348 = vadd.f32 %v406, %v8347
        %v8349 = vpop.f32.mrf.mxu0
        %8350 = vmatprep.mubr.bf16.mxu0 0
        %8351 = vmatmul.mubr.bf16.gmra.mxu0 %v8211
        %v8352 = vpop.f32.mrf.mxu0
        %v8353 = vadd.f32 %v406, %v8352
        %v8354 = vpop.f32.mrf.mxu0
        %v8355 = vpop.f32.mrf.mxu0
        %v8356 = vadd.f32 %v406, %v8355
        %v8357 = vpop.f32.mrf.mxu0
        %8358 = vmatprep.mubr.bf16.mxu0 0
        %8359 = vmatmul.mubr.bf16.gmra.mxu0 %v8212
        %v8360 = vpop.f32.mrf.mxu0
        %v8361 = vadd.f32 %v406, %v8360
        %v8362 = vpop.f32.mrf.mxu0
        %v8363 = vpop.f32.mrf.mxu0
        %v8364 = vadd.f32 %v406, %v8363
        %v8365 = vpop.f32.mrf.mxu0
        %8366 = vmatprep.mubr.bf16.mxu0 0
        %8367 = vmatmul.mubr.bf16.gmra.mxu0 %v8213
        %v8368 = vpop.f32.mrf.mxu0
        %v8369 = vadd.f32 %v406, %v8368
        %v8370 = vpop.f32.mrf.mxu0
        %v8371 = vpop.f32.mrf.mxu0
        %v8372 = vadd.f32 %v406, %v8371
        %v8373 = vpop.f32.mrf.mxu0
        %8374 = vdwg.mxu0
        %v8375 = vstv %s8019
        %v8376 = vmul.f32 %v8375, %v8313
        %v8377 = vmul.f32 %v8375, %v8316
        %v8378 = vmul.f32 %v8375, %v8321
        %v8379 = vmul.f32 %v8375, %v8324
        %v8380 = vmul.f32 %v8375, %v8329
        %v8381 = vmul.f32 %v8375, %v8332
        %v8382 = vmul.f32 %v8375, %v8337
        %v8383 = vmul.f32 %v8375, %v8340
        %v8384 = vmul.f32 %v8375, %v8345
        %v8385 = vmul.f32 %v8375, %v8348
        %v8386 = vmul.f32 %v8375, %v8353
        %v8387 = vmul.f32 %v8375, %v8356
        %v8388 = vmul.f32 %v8375, %v8361
        %v8389 = vmul.f32 %v8375, %v8364
        %v8390 = vmul.f32 %v8375, %v8369
        %v8391 = vmul.f32 %v8375, %v8372
        %v8392 = vadd.f32 %v7985, %v8376
        %v8393 = vadd.f32 %v7986, %v8377
        %v8394 = vadd.f32 %v7987, %v8378
        %v8395 = vadd.f32 %v7988, %v8379
        %v8396 = vadd.f32 %v7989, %v8380
        %v8397 = vadd.f32 %v7990, %v8381
        %v8398 = vadd.f32 %v7991, %v8382
        %v8399 = vadd.f32 %v7992, %v8383
        %v8400 = vadd.f32 %v7993, %v8384
        %v8401 = vadd.f32 %v7994, %v8385
        %v8402 = vadd.f32 %v7995, %v8386
        %v8403 = vadd.f32 %v7996, %v8387
        %v8404 = vadd.f32 %v7997, %v8388
        %v8405 = vadd.f32 %v7998, %v8389
        %v8406 = vadd.f32 %v7999, %v8390
        %v8407 = vadd.f32 %v8000, %v8391
        %v8408 = vpack.c.bf16 %v8393, %v8392
        %v8409 = vpack.c.bf16 %v8395, %v8394
        %v8410 = vpack.c.bf16 %v8397, %v8396
        %v8411 = vpack.c.bf16 %v8399, %v8398
        %v8412 = vpack.c.bf16 %v8401, %v8400
        %v8413 = vpack.c.bf16 %v8403, %v8402
        %v8414 = vpack.c.bf16 %v8405, %v8404
        %v8415 = vpack.c.bf16 %v8407, %v8406
        %8416 = vmatprep.subr.bf16.mxu0 0
        %8417 = vmatpush1.bf16.msra.mxu0 %v8084
        %8418 = vmatprep.subr.bf16.mxu0 0
        %8419 = vmatpush1.bf16.msra.mxu0 %v8083
        %8420 = vmatprep.subr.bf16.mxu0 0
        %8421 = vmatpush1.bf16.msra.mxu0 %v8082
        %8422 = vmatprep.subr.bf16.mxu0 0
        %8423 = vmatpush1.bf16.msra.mxu0 %v8081
        %8424 = vmatprep.subr.bf16.mxu0 0
        %8425 = vmatpush1.bf16.msra.mxu0 %v8080
        %8426 = vmatprep.subr.bf16.mxu0 0
        %8427 = vmatpush1.bf16.msra.mxu0 %v8079
        %8428 = vmatprep.subr.bf16.mxu0 0
        %8429 = vmatpush1.bf16.msra.mxu0 %v8078
        %8430 = vmatprep.subr.bf16.mxu0 0
        %8431 = vmatpush1.bf16.msra.mxu0 %v8077
        %8432 = vmatprep.subr.bf16.mxu0 0
        %8433 = vmatpush2.bf16.msra.mxu0 0
        %8434 = vmatprep.subr.bf16.mxu0 0
        %8435 = vmatpush2.bf16.msra.mxu0 0
        %8436 = vmatprep.subr.bf16.mxu0 0
        %8437 = vmatpush2.bf16.msra.mxu0 0
        %8438 = vmatprep.subr.bf16.mxu0 0
        %8439 = vmatpush2.bf16.msra.mxu0 0
        %8440 = vmatprep.subr.bf16.mxu0 0
        %8441 = vmatpush2.bf16.msra.mxu0 0
        %8442 = vmatprep.subr.bf16.mxu0 0
        %8443 = vmatpush2.bf16.msra.mxu0 0
        %8444 = vmatprep.subr.bf16.mxu0 0
        %8445 = vmatpush2.bf16.msra.mxu0 0
        %8446 = vmatprep.subr.bf16.mxu0 0
        %8447 = vmatpush2.bf16.msra.mxu0 0
        %8448 = vmatprep.mubr.bf16.mxu0 0
        %8449 = vmatmul.mubr.bf16.gmra.mxu0 %v8408
        %v8450 = vpop.f32.mrf.mxu0
        %v8451 = vadd.f32 %v399, %v8450
        %v8452 = vpop.f32.mrf.mxu0
        %v8453 = vpop.f32.mrf.mxu0
        %v8454 = vadd.f32 %v399, %v8453
        %v8455 = vpop.f32.mrf.mxu0
        %8456 = vmatprep.mubr.bf16.mxu0 0
        %8457 = vmatmul.mubr.bf16.gmra.mxu0 %v8409
        %v8458 = vpop.f32.mrf.mxu0
        %v8459 = vadd.f32 %v399, %v8458
        %v8460 = vpop.f32.mrf.mxu0
        %v8461 = vpop.f32.mrf.mxu0
        %v8462 = vadd.f32 %v399, %v8461
        %v8463 = vpop.f32.mrf.mxu0
        %8464 = vmatprep.mubr.bf16.mxu0 0
        %8465 = vmatmul.mubr.bf16.gmra.mxu0 %v8410
        %v8466 = vpop.f32.mrf.mxu0
        %v8467 = vadd.f32 %v399, %v8466
        %v8468 = vpop.f32.mrf.mxu0
        %v8469 = vpop.f32.mrf.mxu0
        %v8470 = vadd.f32 %v399, %v8469
        %v8471 = vpop.f32.mrf.mxu0
        %8472 = vmatprep.mubr.bf16.mxu0 0
        %8473 = vmatmul.mubr.bf16.gmra.mxu0 %v8411
        %v8474 = vpop.f32.mrf.mxu0
        %v8475 = vadd.f32 %v399, %v8474
        %v8476 = vpop.f32.mrf.mxu0
        %v8477 = vpop.f32.mrf.mxu0
        %v8478 = vadd.f32 %v399, %v8477
        %v8479 = vpop.f32.mrf.mxu0
        %8480 = vmatprep.mubr.bf16.mxu0 0
        %8481 = vmatmul.mubr.bf16.gmra.mxu0 %v8412
        %v8482 = vpop.f32.mrf.mxu0
        %v8483 = vadd.f32 %v399, %v8482
        %v8484 = vpop.f32.mrf.mxu0
        %v8485 = vpop.f32.mrf.mxu0
        %v8486 = vadd.f32 %v399, %v8485
        %v8487 = vpop.f32.mrf.mxu0
        %8488 = vmatprep.mubr.bf16.mxu0 0
        %8489 = vmatmul.mubr.bf16.gmra.mxu0 %v8413
        %v8490 = vpop.f32.mrf.mxu0
        %v8491 = vadd.f32 %v399, %v8490
        %v8492 = vpop.f32.mrf.mxu0
        %v8493 = vpop.f32.mrf.mxu0
        %v8494 = vadd.f32 %v399, %v8493
        %v8495 = vpop.f32.mrf.mxu0
        %8496 = vmatprep.mubr.bf16.mxu0 0
        %8497 = vmatmul.mubr.bf16.gmra.mxu0 %v8414
        %v8498 = vpop.f32.mrf.mxu0
        %v8499 = vadd.f32 %v399, %v8498
        %v8500 = vpop.f32.mrf.mxu0
        %v8501 = vpop.f32.mrf.mxu0
        %v8502 = vadd.f32 %v399, %v8501
        %v8503 = vpop.f32.mrf.mxu0
        %8504 = vmatprep.mubr.bf16.mxu0 0
        %8505 = vmatmul.mubr.bf16.gmra.mxu0 %v8415
        %v8506 = vpop.f32.mrf.mxu0
        %v8507 = vadd.f32 %v399, %v8506
        %v8508 = vpop.f32.mrf.mxu0
        %v8509 = vpop.f32.mrf.mxu0
        %v8510 = vadd.f32 %v399, %v8509
        %v8511 = vpop.f32.mrf.mxu0
        %8512 = vdwg.mxu0
        %v8513 = vtanh.pop %v8451
        %v8514 = vtanh.pop %v8454
        %v8515 = vtanh.pop %v8459
        %v8516 = vtanh.pop %v8462
        %v8517 = vtanh.pop %v8467
        %v8518 = vtanh.pop %v8470
        %v8519 = vtanh.pop %v8475
        %v8520 = vtanh.pop %v8478
        %v8521 = vtanh.pop %v8483
        %v8522 = vtanh.pop %v8486
        %v8523 = vtanh.pop %v8491
        %v8524 = vtanh.pop %v8494
        %v8525 = vtanh.pop %v8499
        %v8526 = vtanh.pop %v8502
        %v8527 = vtanh.pop %v8507
        %v8528 = vtanh.pop %v8510
        %v8529 = vpack.c.bf16 %v8514, %v8513
        %v8530 = vpack.c.bf16 %v8516, %v8515
        %v8531 = vpack.c.bf16 %v8518, %v8517
        %v8532 = vpack.c.bf16 %v8520, %v8519
        %v8533 = vpack.c.bf16 %v8522, %v8521
        %v8534 = vpack.c.bf16 %v8524, %v8523
        %v8535 = vpack.c.bf16 %v8526, %v8525
        %v8536 = vpack.c.bf16 %v8528, %v8527
        %8537 = vmatprep.subr.bf16.mxu0 0
        %8538 = vmatpush1.bf16.msra.mxu0 %v8269
        %8539 = vmatprep.subr.bf16.mxu0 0
        %8540 = vmatpush1.bf16.msra.mxu0 %v8268
        %8541 = vmatprep.subr.bf16.mxu0 0
        %8542 = vmatpush1.bf16.msra.mxu0 %v8267
        %8543 = vmatprep.subr.bf16.mxu0 0
        %8544 = vmatpush1.bf16.msra.mxu0 %v8266
        %8545 = vmatprep.subr.bf16.mxu0 0
        %8546 = vmatpush1.bf16.msra.mxu0 %v8265
        %8547 = vmatprep.subr.bf16.mxu0 0
        %8548 = vmatpush1.bf16.msra.mxu0 %v8264
        %8549 = vmatprep.subr.bf16.mxu0 0
        %8550 = vmatpush1.bf16.msra.mxu0 %v8263
        %8551 = vmatprep.subr.bf16.mxu0 0
        %8552 = vmatpush1.bf16.msra.mxu0 %v8262
        %8553 = vmatprep.subr.bf16.mxu0 0
        %8554 = vmatpush2.bf16.msra.mxu0 0
        %8555 = vmatprep.subr.bf16.mxu0 0
        %8556 = vmatpush2.bf16.msra.mxu0 0
        %8557 = vmatprep.subr.bf16.mxu0 0
        %8558 = vmatpush2.bf16.msra.mxu0 0
        %8559 = vmatprep.subr.bf16.mxu0 0
        %8560 = vmatpush2.bf16.msra.mxu0 0
        %8561 = vmatprep.subr.bf16.mxu0 0
        %8562 = vmatpush2.bf16.msra.mxu0 0
        %8563 = vmatprep.subr.bf16.mxu0 0
        %8564 = vmatpush2.bf16.msra.mxu0 0
        %8565 = vmatprep.subr.bf16.mxu0 0
        %8566 = vmatpush2.bf16.msra.mxu0 0
        %8567 = vmatprep.subr.bf16.mxu0 0
        %8568 = vmatpush2.bf16.msra.mxu0 0
        %8569 = vmatprep.mubr.bf16.mxu0 0
        %8570 = vmatmul.mubr.bf16.gmra.mxu0 %v8529
        %v8571 = vpop.f32.mrf.mxu0
        %v8572 = vadd.f32 %v406, %v8571
        %v8573 = vpop.f32.mrf.mxu0
        %v8574 = vpop.f32.mrf.mxu0
        %v8575 = vadd.f32 %v406, %v8574
        %v8576 = vpop.f32.mrf.mxu0
        %8577 = vmatprep.mubr.bf16.mxu0 0
        %8578 = vmatmul.mubr.bf16.gmra.mxu0 %v8530
        %v8579 = vpop.f32.mrf.mxu0
        %v8580 = vadd.f32 %v406, %v8579
        %v8581 = vpop.f32.mrf.mxu0
        %v8582 = vpop.f32.mrf.mxu0
        %v8583 = vadd.f32 %v406, %v8582
        %v8584 = vpop.f32.mrf.mxu0
        %8585 = vmatprep.mubr.bf16.mxu0 0
        %8586 = vmatmul.mubr.bf16.gmra.mxu0 %v8531
        %v8587 = vpop.f32.mrf.mxu0
        %v8588 = vadd.f32 %v406, %v8587
        %v8589 = vpop.f32.mrf.mxu0
        %v8590 = vpop.f32.mrf.mxu0
        %v8591 = vadd.f32 %v406, %v8590
        %v8592 = vpop.f32.mrf.mxu0
        %8593 = vmatprep.mubr.bf16.mxu0 0
        %8594 = vmatmul.mubr.bf16.gmra.mxu0 %v8532
        %v8595 = vpop.f32.mrf.mxu0
        %v8596 = vadd.f32 %v406, %v8595
        %v8597 = vpop.f32.mrf.mxu0
        %v8598 = vpop.f32.mrf.mxu0
        %v8599 = vadd.f32 %v406, %v8598
        %v8600 = vpop.f32.mrf.mxu0
        %8601 = vmatprep.mubr.bf16.mxu0 0
        %8602 = vmatmul.mubr.bf16.gmra.mxu0 %v8533
        %v8603 = vpop.f32.mrf.mxu0
        %v8604 = vadd.f32 %v406, %v8603
        %v8605 = vpop.f32.mrf.mxu0
        %v8606 = vpop.f32.mrf.mxu0
        %v8607 = vadd.f32 %v406, %v8606
        %v8608 = vpop.f32.mrf.mxu0
        %8609 = vmatprep.mubr.bf16.mxu0 0
        %8610 = vmatmul.mubr.bf16.gmra.mxu0 %v8534
        %v8611 = vpop.f32.mrf.mxu0
        %v8612 = vadd.f32 %v406, %v8611
        %v8613 = vpop.f32.mrf.mxu0
        %v8614 = vpop.f32.mrf.mxu0
        %v8615 = vadd.f32 %v406, %v8614
        %v8616 = vpop.f32.mrf.mxu0
        %8617 = vmatprep.mubr.bf16.mxu0 0
        %8618 = vmatmul.mubr.bf16.gmra.mxu0 %v8535
        %v8619 = vpop.f32.mrf.mxu0
        %v8620 = vadd.f32 %v406, %v8619
        %v8621 = vpop.f32.mrf.mxu0
        %v8622 = vpop.f32.mrf.mxu0
        %v8623 = vadd.f32 %v406, %v8622
        %v8624 = vpop.f32.mrf.mxu0
        %8625 = vmatprep.mubr.bf16.mxu0 0
        %8626 = vmatmul.mubr.bf16.gmra.mxu0 %v8536
        %v8627 = vpop.f32.mrf.mxu0
        %v8628 = vadd.f32 %v406, %v8627
        %v8629 = vpop.f32.mrf.mxu0
        %v8630 = vpop.f32.mrf.mxu0
        %v8631 = vadd.f32 %v406, %v8630
        %v8632 = vpop.f32.mrf.mxu0
        %8633 = vdwg.mxu0
        %v8634 = vmul.f32 %v8375, %v8572
        %v8635 = vmul.f32 %v8375, %v8575
        %v8636 = vmul.f32 %v8375, %v8580
        %v8637 = vmul.f32 %v8375, %v8583
        %v8638 = vmul.f32 %v8375, %v8588
        %v8639 = vmul.f32 %v8375, %v8591
        %v8640 = vmul.f32 %v8375, %v8596
        %v8641 = vmul.f32 %v8375, %v8599
        %v8642 = vmul.f32 %v8375, %v8604
        %v8643 = vmul.f32 %v8375, %v8607
        %v8644 = vmul.f32 %v8375, %v8612
        %v8645 = vmul.f32 %v8375, %v8615
        %v8646 = vmul.f32 %v8375, %v8620
        %v8647 = vmul.f32 %v8375, %v8623
        %v8648 = vmul.f32 %v8375, %v8628
        %v8649 = vmul.f32 %v8375, %v8631
        %v8650 = vadd.f32 %v7985, %v8634
        %v8651 = vadd.f32 %v7986, %v8635
        %v8652 = vadd.f32 %v7987, %v8636
        %v8653 = vadd.f32 %v7988, %v8637
        %v8654 = vadd.f32 %v7989, %v8638
        %v8655 = vadd.f32 %v7990, %v8639
        %v8656 = vadd.f32 %v7991, %v8640
        %v8657 = vadd.f32 %v7992, %v8641
        %v8658 = vadd.f32 %v7993, %v8642
        %v8659 = vadd.f32 %v7994, %v8643
        %v8660 = vadd.f32 %v7995, %v8644
        %v8661 = vadd.f32 %v7996, %v8645
        %v8662 = vadd.f32 %v7997, %v8646
        %v8663 = vadd.f32 %v7998, %v8647
        %v8664 = vadd.f32 %v7999, %v8648
        %v8665 = vadd.f32 %v8000, %v8649
        %v8666 = vpack.c.bf16 %v8651, %v8650
        %v8667 = vpack.c.bf16 %v8653, %v8652
        %v8668 = vpack.c.bf16 %v8655, %v8654
        %v8669 = vpack.c.bf16 %v8657, %v8656
        %v8670 = vpack.c.bf16 %v8659, %v8658
        %v8671 = vpack.c.bf16 %v8661, %v8660
        %v8672 = vpack.c.bf16 %v8663, %v8662
        %v8673 = vpack.c.bf16 %v8665, %v8664
        %8674 = vmatprep.subr.bf16.mxu0 0
        %8675 = vmatpush1.bf16.msra.mxu0 %v8084
        %8676 = vmatprep.subr.bf16.mxu0 0
        %8677 = vmatpush1.bf16.msra.mxu0 %v8083
        %8678 = vmatprep.subr.bf16.mxu0 0
        %8679 = vmatpush1.bf16.msra.mxu0 %v8082
        %8680 = vmatprep.subr.bf16.mxu0 0
        %8681 = vmatpush1.bf16.msra.mxu0 %v8081
        %8682 = vmatprep.subr.bf16.mxu0 0
        %8683 = vmatpush1.bf16.msra.mxu0 %v8080
        %8684 = vmatprep.subr.bf16.mxu0 0
        %8685 = vmatpush1.bf16.msra.mxu0 %v8079
        %8686 = vmatprep.subr.bf16.mxu0 0
        %8687 = vmatpush1.bf16.msra.mxu0 %v8078
        %8688 = vmatprep.subr.bf16.mxu0 0
        %8689 = vmatpush1.bf16.msra.mxu0 %v8077
        %8690 = vmatprep.subr.bf16.mxu0 0
        %8691 = vmatpush2.bf16.msra.mxu0 0
        %8692 = vmatprep.subr.bf16.mxu0 0
        %8693 = vmatpush2.bf16.msra.mxu0 0
        %8694 = vmatprep.subr.bf16.mxu0 0
        %8695 = vmatpush2.bf16.msra.mxu0 0
        %8696 = vmatprep.subr.bf16.mxu0 0
        %8697 = vmatpush2.bf16.msra.mxu0 0
        %8698 = vmatprep.subr.bf16.mxu0 0
        %8699 = vmatpush2.bf16.msra.mxu0 0
        %8700 = vmatprep.subr.bf16.mxu0 0
        %8701 = vmatpush2.bf16.msra.mxu0 0
        %8702 = vmatprep.subr.bf16.mxu0 0
        %8703 = vmatpush2.bf16.msra.mxu0 0
        %8704 = vmatprep.subr.bf16.mxu0 0
        %8705 = vmatpush2.bf16.msra.mxu0 0
        %8706 = vmatprep.mubr.bf16.mxu0 0
        %8707 = vmatmul.mubr.bf16.gmra.mxu0 %v8666
        %v8708 = vpop.f32.mrf.mxu0
        %v8709 = vadd.f32 %v399, %v8708
        %v8710 = vpop.f32.mrf.mxu0
        %v8711 = vpop.f32.mrf.mxu0
        %v8712 = vadd.f32 %v399, %v8711
        %v8713 = vpop.f32.mrf.mxu0
        %8714 = vmatprep.mubr.bf16.mxu0 0
        %8715 = vmatmul.mubr.bf16.gmra.mxu0 %v8667
        %v8716 = vpop.f32.mrf.mxu0
        %v8717 = vadd.f32 %v399, %v8716
        %v8718 = vpop.f32.mrf.mxu0
        %v8719 = vpop.f32.mrf.mxu0
        %v8720 = vadd.f32 %v399, %v8719
        %v8721 = vpop.f32.mrf.mxu0
        %8722 = vmatprep.mubr.bf16.mxu0 0
        %8723 = vmatmul.mubr.bf16.gmra.mxu0 %v8668
        %v8724 = vpop.f32.mrf.mxu0
        %v8725 = vadd.f32 %v399, %v8724
        %v8726 = vpop.f32.mrf.mxu0
        %v8727 = vpop.f32.mrf.mxu0
        %v8728 = vadd.f32 %v399, %v8727
        %v8729 = vpop.f32.mrf.mxu0
        %8730 = vmatprep.mubr.bf16.mxu0 0
        %8731 = vmatmul.mubr.bf16.gmra.mxu0 %v8669
        %v8732 = vpop.f32.mrf.mxu0
        %v8733 = vadd.f32 %v399, %v8732
        %v8734 = vpop.f32.mrf.mxu0
        %v8735 = vpop.f32.mrf.mxu0
        %v8736 = vadd.f32 %v399, %v8735
        %v8737 = vpop.f32.mrf.mxu0
        %8738 = vmatprep.mubr.bf16.mxu0 0
        %8739 = vmatmul.mubr.bf16.gmra.mxu0 %v8670
        %v8740 = vpop.f32.mrf.mxu0
        %v8741 = vadd.f32 %v399, %v8740
        %v8742 = vpop.f32.mrf.mxu0
        %v8743 = vpop.f32.mrf.mxu0
        %v8744 = vadd.f32 %v399, %v8743
        %v8745 = vpop.f32.mrf.mxu0
        %8746 = vmatprep.mubr.bf16.mxu0 0
        %8747 = vmatmul.mubr.bf16.gmra.mxu0 %v8671
        %v8748 = vpop.f32.mrf.mxu0
        %v8749 = vadd.f32 %v399, %v8748
        %v8750 = vpop.f32.mrf.mxu0
        %v8751 = vpop.f32.mrf.mxu0
        %v8752 = vadd.f32 %v399, %v8751
        %v8753 = vpop.f32.mrf.mxu0
        %8754 = vmatprep.mubr.bf16.mxu0 0
        %8755 = vmatmul.mubr.bf16.gmra.mxu0 %v8672
        %v8756 = vpop.f32.mrf.mxu0
        %v8757 = vadd.f32 %v399, %v8756
        %v8758 = vpop.f32.mrf.mxu0
        %v8759 = vpop.f32.mrf.mxu0
        %v8760 = vadd.f32 %v399, %v8759
        %v8761 = vpop.f32.mrf.mxu0
        %8762 = vmatprep.mubr.bf16.mxu0 0
        %8763 = vmatmul.mubr.bf16.gmra.mxu0 %v8673
        %v8764 = vpop.f32.mrf.mxu0
        %v8765 = vadd.f32 %v399, %v8764
        %v8766 = vpop.f32.mrf.mxu0
        %v8767 = vpop.f32.mrf.mxu0
        %v8768 = vadd.f32 %v399, %v8767
        %v8769 = vpop.f32.mrf.mxu0
        %8770 = vdwg.mxu0
        %v8771 = vtanh.pop %v8709
        %v8772 = vtanh.pop %v8712
        %v8773 = vtanh.pop %v8717
        %v8774 = vtanh.pop %v8720
        %v8775 = vtanh.pop %v8725
        %v8776 = vtanh.pop %v8728
        %v8777 = vtanh.pop %v8733
        %v8778 = vtanh.pop %v8736
        %v8779 = vtanh.pop %v8741
        %v8780 = vtanh.pop %v8744
        %v8781 = vtanh.pop %v8749
        %v8782 = vtanh.pop %v8752
        %v8783 = vtanh.pop %v8757
        %v8784 = vtanh.pop %v8760
        %v8785 = vtanh.pop %v8765
        %v8786 = vtanh.pop %v8768
        %v8787 = vpack.c.bf16 %v8772, %v8771
        %v8788 = vpack.c.bf16 %v8774, %v8773
        %v8789 = vpack.c.bf16 %v8776, %v8775
        %v8790 = vpack.c.bf16 %v8778, %v8777
        %v8791 = vpack.c.bf16 %v8780, %v8779
        %v8792 = vpack.c.bf16 %v8782, %v8781
        %v8793 = vpack.c.bf16 %v8784, %v8783
        %v8794 = vpack.c.bf16 %v8786, %v8785
        %8795 = vmatprep.subr.bf16.mxu0 0
        %8796 = vmatpush1.bf16.msra.mxu0 %v8269
        %8797 = vmatprep.subr.bf16.mxu0 0
        %8798 = vmatpush1.bf16.msra.mxu0 %v8268
        %8799 = vmatprep.subr.bf16.mxu0 0
        %8800 = vmatpush1.bf16.msra.mxu0 %v8267
        %8801 = vmatprep.subr.bf16.mxu0 0
        %8802 = vmatpush1.bf16.msra.mxu0 %v8266
        %8803 = vmatprep.subr.bf16.mxu0 0
        %8804 = vmatpush1.bf16.msra.mxu0 %v8265
        %8805 = vmatprep.subr.bf16.mxu0 0
        %8806 = vmatpush1.bf16.msra.mxu0 %v8264
        %8807 = vmatprep.subr.bf16.mxu0 0
        %8808 = vmatpush1.bf16.msra.mxu0 %v8263
        %8809 = vmatprep.subr.bf16.mxu0 0
        %8810 = vmatpush1.bf16.msra.mxu0 %v8262
        %8811 = vmatprep.subr.bf16.mxu0 0
        %8812 = vmatpush2.bf16.msra.mxu0 0
        %8813 = vmatprep.subr.bf16.mxu0 0
        %8814 = vmatpush2.bf16.msra.mxu0 0
        %8815 = vmatprep.subr.bf16.mxu0 0
        %8816 = vmatpush2.bf16.msra.mxu0 0
        %8817 = vmatprep.subr.bf16.mxu0 0
        %8818 = vmatpush2.bf16.msra.mxu0 0
        %8819 = vmatprep.subr.bf16.mxu0 0
        %8820 = vmatpush2.bf16.msra.mxu0 0
        %8821 = vmatprep.subr.bf16.mxu0 0
        %8822 = vmatpush2.bf16.msra.mxu0 0
        %8823 = vmatprep.subr.bf16.mxu0 0
        %8824 = vmatpush2.bf16.msra.mxu0 0
        %8825 = vmatprep.subr.bf16.mxu0 0
        %8826 = vmatpush2.bf16.msra.mxu0 0
        %8827 = vmatprep.mubr.bf16.mxu0 0
        %8828 = vmatmul.mubr.bf16.gmra.mxu0 %v8787
        %v8829 = vpop.f32.mrf.mxu0
        %v8830 = vadd.f32 %v406, %v8829
        %v8831 = vpop.f32.mrf.mxu0
        %v8832 = vpop.f32.mrf.mxu0
        %v8833 = vadd.f32 %v406, %v8832
        %v8834 = vpop.f32.mrf.mxu0
        %8835 = vmatprep.mubr.bf16.mxu0 0
        %8836 = vmatmul.mubr.bf16.gmra.mxu0 %v8788
        %v8837 = vpop.f32.mrf.mxu0
        %v8838 = vadd.f32 %v406, %v8837
        %v8839 = vpop.f32.mrf.mxu0
        %v8840 = vpop.f32.mrf.mxu0
        %v8841 = vadd.f32 %v406, %v8840
        %v8842 = vpop.f32.mrf.mxu0
        %8843 = vmatprep.mubr.bf16.mxu0 0
        %8844 = vmatmul.mubr.bf16.gmra.mxu0 %v8789
        %v8845 = vpop.f32.mrf.mxu0
        %v8846 = vadd.f32 %v406, %v8845
        %v8847 = vpop.f32.mrf.mxu0
        %v8848 = vpop.f32.mrf.mxu0
        %v8849 = vadd.f32 %v406, %v8848
        %v8850 = vpop.f32.mrf.mxu0
        %8851 = vmatprep.mubr.bf16.mxu0 0
        %8852 = vmatmul.mubr.bf16.gmra.mxu0 %v8790
        %v8853 = vpop.f32.mrf.mxu0
        %v8854 = vadd.f32 %v406, %v8853
        %v8855 = vpop.f32.mrf.mxu0
        %v8856 = vpop.f32.mrf.mxu0
        %v8857 = vadd.f32 %v406, %v8856
        %v8858 = vpop.f32.mrf.mxu0
        %8859 = vmatprep.mubr.bf16.mxu0 0
        %8860 = vmatmul.mubr.bf16.gmra.mxu0 %v8791
        %v8861 = vpop.f32.mrf.mxu0
        %v8862 = vadd.f32 %v406, %v8861
        %v8863 = vpop.f32.mrf.mxu0
        %v8864 = vpop.f32.mrf.mxu0
        %v8865 = vadd.f32 %v406, %v8864
        %v8866 = vpop.f32.mrf.mxu0
        %8867 = vmatprep.mubr.bf16.mxu0 0
        %8868 = vmatmul.mubr.bf16.gmra.mxu0 %v8792
        %v8869 = vpop.f32.mrf.mxu0
        %v8870 = vadd.f32 %v406, %v8869
        %v8871 = vpop.f32.mrf.mxu0
        %v8872 = vpop.f32.mrf.mxu0
        %v8873 = vadd.f32 %v406, %v8872
        %v8874 = vpop.f32.mrf.mxu0
        %8875 = vmatprep.mubr.bf16.mxu0 0
        %8876 = vmatmul.mubr.bf16.gmra.mxu0 %v8793
        %v8877 = vpop.f32.mrf.mxu0
        %v8878 = vadd.f32 %v406, %v8877
        %v8879 = vpop.f32.mrf.mxu0
        %v8880 = vpop.f32.mrf.mxu0
        %v8881 = vadd.f32 %v406, %v8880
        %v8882 = vpop.f32.mrf.mxu0
        %8883 = vmatprep.mubr.bf16.mxu0 0
        %8884 = vmatmul.mubr.bf16.gmra.mxu0 %v8794
        %v8885 = vpop.f32.mrf.mxu0
        %v8886 = vadd.f32 %v406, %v8885
        %v8887 = vpop.f32.mrf.mxu0
        %v8888 = vpop.f32.mrf.mxu0
        %v8889 = vadd.f32 %v406, %v8888
        %v8890 = vpop.f32.mrf.mxu0
        %8891 = vdwg.mxu0
        %v8892 = vstv %s8018
        %v8893 = vmul.f32 %v8892, %v8830
        %v8894 = vmul.f32 %v8892, %v8833
        %v8895 = vmul.f32 %v8892, %v8838
        %v8896 = vmul.f32 %v8892, %v8841
        %v8897 = vmul.f32 %v8892, %v8846
        %v8898 = vmul.f32 %v8892, %v8849
        %v8899 = vmul.f32 %v8892, %v8854
        %v8900 = vmul.f32 %v8892, %v8857
        %v8901 = vmul.f32 %v8892, %v8862
        %v8902 = vmul.f32 %v8892, %v8865
        %v8903 = vmul.f32 %v8892, %v8870
        %v8904 = vmul.f32 %v8892, %v8873
        %v8905 = vmul.f32 %v8892, %v8878
        %v8906 = vmul.f32 %v8892, %v8881
        %v8907 = vmul.f32 %v8892, %v8886
        %v8908 = vmul.f32 %v8892, %v8889
        %v8909 = vadd.f32 %v7985, %v8893
        %v8910 = vadd.f32 %v7986, %v8894
        %v8911 = vadd.f32 %v7987, %v8895
        %v8912 = vadd.f32 %v7988, %v8896
        %v8913 = vadd.f32 %v7989, %v8897
        %v8914 = vadd.f32 %v7990, %v8898
        %v8915 = vadd.f32 %v7991, %v8899
        %v8916 = vadd.f32 %v7992, %v8900
        %v8917 = vadd.f32 %v7993, %v8901
        %v8918 = vadd.f32 %v7994, %v8902
        %v8919 = vadd.f32 %v7995, %v8903
        %v8920 = vadd.f32 %v7996, %v8904
        %v8921 = vadd.f32 %v7997, %v8905
        %v8922 = vadd.f32 %v7998, %v8906
        %v8923 = vadd.f32 %v7999, %v8907
        %v8924 = vadd.f32 %v8000, %v8908
        %v8925 = vpack.c.bf16 %v8910, %v8909
        %v8926 = vpack.c.bf16 %v8912, %v8911
        %v8927 = vpack.c.bf16 %v8914, %v8913
        %v8928 = vpack.c.bf16 %v8916, %v8915
        %v8929 = vpack.c.bf16 %v8918, %v8917
        %v8930 = vpack.c.bf16 %v8920, %v8919
        %v8931 = vpack.c.bf16 %v8922, %v8921
        %v8932 = vpack.c.bf16 %v8924, %v8923
        %8933 = vmatprep.subr.bf16.mxu0 0
        %8934 = vmatpush1.bf16.msra.mxu0 %v8084
        %8935 = vmatprep.subr.bf16.mxu0 0
        %8936 = vmatpush1.bf16.msra.mxu0 %v8083
        %8937 = vmatprep.subr.bf16.mxu0 0
        %8938 = vmatpush1.bf16.msra.mxu0 %v8082
        %8939 = vmatprep.subr.bf16.mxu0 0
        %8940 = vmatpush1.bf16.msra.mxu0 %v8081
        %8941 = vmatprep.subr.bf16.mxu0 0
        %8942 = vmatpush1.bf16.msra.mxu0 %v8080
        %8943 = vmatprep.subr.bf16.mxu0 0
        %8944 = vmatpush1.bf16.msra.mxu0 %v8079
        %8945 = vmatprep.subr.bf16.mxu0 0
        %8946 = vmatpush1.bf16.msra.mxu0 %v8078
        %8947 = vmatprep.subr.bf16.mxu0 0
        %8948 = vmatpush1.bf16.msra.mxu0 %v8077
        %8949 = vmatprep.subr.bf16.mxu0 0
        %8950 = vmatpush2.bf16.msra.mxu0 0
        %8951 = vmatprep.subr.bf16.mxu0 0
        %8952 = vmatpush2.bf16.msra.mxu0 0
        %8953 = vmatprep.subr.bf16.mxu0 0
        %8954 = vmatpush2.bf16.msra.mxu0 0
        %8955 = vmatprep.subr.bf16.mxu0 0
        %8956 = vmatpush2.bf16.msra.mxu0 0
        %8957 = vmatprep.subr.bf16.mxu0 0
        %8958 = vmatpush2.bf16.msra.mxu0 0
        %8959 = vmatprep.subr.bf16.mxu0 0
        %8960 = vmatpush2.bf16.msra.mxu0 0
        %8961 = vmatprep.subr.bf16.mxu0 0
        %8962 = vmatpush2.bf16.msra.mxu0 0
        %8963 = vmatprep.subr.bf16.mxu0 0
        %8964 = vmatpush2.bf16.msra.mxu0 0
        %8965 = vmatprep.mubr.bf16.mxu0 0
        %8966 = vmatmul.mubr.bf16.gmra.mxu0 %v8925
        %v8967 = vpop.f32.mrf.mxu0
        %v8968 = vadd.f32 %v399, %v8967
        %v8969 = vpop.f32.mrf.mxu0
        %v8970 = vpop.f32.mrf.mxu0
        %v8971 = vadd.f32 %v399, %v8970
        %v8972 = vpop.f32.mrf.mxu0
        %8973 = vmatprep.mubr.bf16.mxu0 0
        %8974 = vmatmul.mubr.bf16.gmra.mxu0 %v8926
        %v8975 = vpop.f32.mrf.mxu0
        %v8976 = vadd.f32 %v399, %v8975
        %v8977 = vpop.f32.mrf.mxu0
        %v8978 = vpop.f32.mrf.mxu0
        %v8979 = vadd.f32 %v399, %v8978
        %v8980 = vpop.f32.mrf.mxu0
        %8981 = vmatprep.mubr.bf16.mxu0 0
        %8982 = vmatmul.mubr.bf16.gmra.mxu0 %v8927
        %v8983 = vpop.f32.mrf.mxu0
        %v8984 = vadd.f32 %v399, %v8983
        %v8985 = vpop.f32.mrf.mxu0
        %v8986 = vpop.f32.mrf.mxu0
        %v8987 = vadd.f32 %v399, %v8986
        %v8988 = vpop.f32.mrf.mxu0
        %8989 = vmatprep.mubr.bf16.mxu0 0
        %8990 = vmatmul.mubr.bf16.gmra.mxu0 %v8928
        %v8991 = vpop.f32.mrf.mxu0
        %v8992 = vadd.f32 %v399, %v8991
        %v8993 = vpop.f32.mrf.mxu0
        %v8994 = vpop.f32.mrf.mxu0
        %v8995 = vadd.f32 %v399, %v8994
        %v8996 = vpop.f32.mrf.mxu0
        %8997 = vmatprep.mubr.bf16.mxu0 0
        %8998 = vmatmul.mubr.bf16.gmra.mxu0 %v8929
        %v8999 = vpop.f32.mrf.mxu0
        %v9000 = vadd.f32 %v399, %v8999
        %v9001 = vpop.f32.mrf.mxu0
        %v9002 = vpop.f32.mrf.mxu0
        %v9003 = vadd.f32 %v399, %v9002
        %v9004 = vpop.f32.mrf.mxu0
        %9005 = vmatprep.mubr.bf16.mxu0 0
        %9006 = vmatmul.mubr.bf16.gmra.mxu0 %v8930
        %v9007 = vpop.f32.mrf.mxu0
        %v9008 = vadd.f32 %v399, %v9007
        %v9009 = vpop.f32.mrf.mxu0
        %v9010 = vpop.f32.mrf.mxu0
        %v9011 = vadd.f32 %v399, %v9010
        %v9012 = vpop.f32.mrf.mxu0
        %9013 = vmatprep.mubr.bf16.mxu0 0
        %9014 = vmatmul.mubr.bf16.gmra.mxu0 %v8931
        %v9015 = vpop.f32.mrf.mxu0
        %v9016 = vadd.f32 %v399, %v9015
        %v9017 = vpop.f32.mrf.mxu0
        %v9018 = vpop.f32.mrf.mxu0
        %v9019 = vadd.f32 %v399, %v9018
        %v9020 = vpop.f32.mrf.mxu0
        %9021 = vmatprep.mubr.bf16.mxu0 0
        %9022 = vmatmul.mubr.bf16.gmra.mxu0 %v8932
        %v9023 = vpop.f32.mrf.mxu0
        %v9024 = vadd.f32 %v399, %v9023
        %v9025 = vpop.f32.mrf.mxu0
        %v9026 = vpop.f32.mrf.mxu0
        %v9027 = vadd.f32 %v399, %v9026
        %v9028 = vpop.f32.mrf.mxu0
        %9029 = vdwg.mxu0
        %v9030 = vtanh.pop %v8968
        %v9031 = vtanh.pop %v8971
        %v9032 = vtanh.pop %v8976
        %v9033 = vtanh.pop %v8979
        %v9034 = vtanh.pop %v8984
        %v9035 = vtanh.pop %v8987
        %v9036 = vtanh.pop %v8992
        %v9037 = vtanh.pop %v8995
        %v9038 = vtanh.pop %v9000
        %v9039 = vtanh.pop %v9003
        %v9040 = vtanh.pop %v9008
        %v9041 = vtanh.pop %v9011
        %v9042 = vtanh.pop %v9016
        %v9043 = vtanh.pop %v9019
        %v9044 = vtanh.pop %v9024
        %v9045 = vtanh.pop %v9027
        %v9046 = vpack.c.bf16 %v9031, %v9030
        %v9047 = vpack.c.bf16 %v9033, %v9032
        %v9048 = vpack.c.bf16 %v9035, %v9034
        %v9049 = vpack.c.bf16 %v9037, %v9036
        %v9050 = vpack.c.bf16 %v9039, %v9038
        %v9051 = vpack.c.bf16 %v9041, %v9040
        %v9052 = vpack.c.bf16 %v9043, %v9042
        %v9053 = vpack.c.bf16 %v9045, %v9044
        %9054 = vmatprep.subr.bf16.mxu0 0
        %9055 = vmatpush1.bf16.msra.mxu0 %v8269
        %9056 = vmatprep.subr.bf16.mxu0 0
        %9057 = vmatpush1.bf16.msra.mxu0 %v8268
        %9058 = vmatprep.subr.bf16.mxu0 0
        %9059 = vmatpush1.bf16.msra.mxu0 %v8267
        %9060 = vmatprep.subr.bf16.mxu0 0
        %9061 = vmatpush1.bf16.msra.mxu0 %v8266
        %9062 = vmatprep.subr.bf16.mxu0 0
        %9063 = vmatpush1.bf16.msra.mxu0 %v8265
        %9064 = vmatprep.subr.bf16.mxu0 0
        %9065 = vmatpush1.bf16.msra.mxu0 %v8264
        %9066 = vmatprep.subr.bf16.mxu0 0
        %9067 = vmatpush1.bf16.msra.mxu0 %v8263
        %9068 = vmatprep.subr.bf16.mxu0 0
        %9069 = vmatpush1.bf16.msra.mxu0 %v8262
        %9070 = vmatprep.subr.bf16.mxu0 0
        %9071 = vmatpush2.bf16.msra.mxu0 0
        %9072 = vmatprep.subr.bf16.mxu0 0
        %9073 = vmatpush2.bf16.msra.mxu0 0
        %9074 = vmatprep.subr.bf16.mxu0 0
        %9075 = vmatpush2.bf16.msra.mxu0 0
        %9076 = vmatprep.subr.bf16.mxu0 0
        %9077 = vmatpush2.bf16.msra.mxu0 0
        %9078 = vmatprep.subr.bf16.mxu0 0
        %9079 = vmatpush2.bf16.msra.mxu0 0
        %9080 = vmatprep.subr.bf16.mxu0 0
        %9081 = vmatpush2.bf16.msra.mxu0 0
        %9082 = vmatprep.subr.bf16.mxu0 0
        %9083 = vmatpush2.bf16.msra.mxu0 0
        %9084 = vmatprep.subr.bf16.mxu0 0
        %9085 = vmatpush2.bf16.msra.mxu0 0
        %9086 = vmatprep.mubr.bf16.mxu0 0
        %9087 = vmatmul.mubr.bf16.gmra.mxu0 %v9046
        %v9088 = vpop.f32.mrf.mxu0
        %v9089 = vadd.f32 %v406, %v9088
        %v9090 = vpop.f32.mrf.mxu0
        %v9091 = vpop.f32.mrf.mxu0
        %v9092 = vadd.f32 %v406, %v9091
        %v9093 = vpop.f32.mrf.mxu0
        %9094 = vmatprep.mubr.bf16.mxu0 0
        %9095 = vmatmul.mubr.bf16.gmra.mxu0 %v9047
        %v9096 = vpop.f32.mrf.mxu0
        %v9097 = vadd.f32 %v406, %v9096
        %v9098 = vpop.f32.mrf.mxu0
        %v9099 = vpop.f32.mrf.mxu0
        %v9100 = vadd.f32 %v406, %v9099
        %v9101 = vpop.f32.mrf.mxu0
        %9102 = vmatprep.mubr.bf16.mxu0 0
        %9103 = vmatmul.mubr.bf16.gmra.mxu0 %v9048
        %v9104 = vpop.f32.mrf.mxu0
        %v9105 = vadd.f32 %v406, %v9104
        %v9106 = vpop.f32.mrf.mxu0
        %v9107 = vpop.f32.mrf.mxu0
        %v9108 = vadd.f32 %v406, %v9107
        %v9109 = vpop.f32.mrf.mxu0
        %9110 = vmatprep.mubr.bf16.mxu0 0
        %9111 = vmatmul.mubr.bf16.gmra.mxu0 %v9049
        %v9112 = vpop.f32.mrf.mxu0
        %v9113 = vadd.f32 %v406, %v9112
        %v9114 = vpop.f32.mrf.mxu0
        %v9115 = vpop.f32.mrf.mxu0
        %v9116 = vadd.f32 %v406, %v9115
        %v9117 = vpop.f32.mrf.mxu0
        %9118 = vmatprep.mubr.bf16.mxu0 0
        %9119 = vmatmul.mubr.bf16.gmra.mxu0 %v9050
        %v9120 = vpop.f32.mrf.mxu0
        %v9121 = vadd.f32 %v406, %v9120
        %v9122 = vpop.f32.mrf.mxu0
        %v9123 = vpop.f32.mrf.mxu0
        %v9124 = vadd.f32 %v406, %v9123
        %v9125 = vpop.f32.mrf.mxu0
        %9126 = vmatprep.mubr.bf16.mxu0 0
        %9127 = vmatmul.mubr.bf16.gmra.mxu0 %v9051
        %v9128 = vpop.f32.mrf.mxu0
        %v9129 = vadd.f32 %v406, %v9128
        %v9130 = vpop.f32.mrf.mxu0
        %v9131 = vpop.f32.mrf.mxu0
        %v9132 = vadd.f32 %v406, %v9131
        %v9133 = vpop.f32.mrf.mxu0
        %9134 = vmatprep.mubr.bf16.mxu0 0
        %9135 = vmatmul.mubr.bf16.gmra.mxu0 %v9052
        %v9136 = vpop.f32.mrf.mxu0
        %v9137 = vadd.f32 %v406, %v9136
        %v9138 = vpop.f32.mrf.mxu0
        %v9139 = vpop.f32.mrf.mxu0
        %v9140 = vadd.f32 %v406, %v9139
        %v9141 = vpop.f32.mrf.mxu0
        %9142 = vmatprep.mubr.bf16.mxu0 0
        %9143 = vmatmul.mubr.bf16.gmra.mxu0 %v9053
        %v9144 = vpop.f32.mrf.mxu0
        %v9145 = vadd.f32 %v406, %v9144
        %v9146 = vpop.f32.mrf.mxu0
        %v9147 = vpop.f32.mrf.mxu0
        %v9148 = vadd.f32 %v406, %v9147
        %v9149 = vpop.f32.mrf.mxu0
        %9150 = vdwg.mxu0
        %v9151 = vmul.f32 %v8572, 2.0
        %v9152 = vmul.f32 %v8575, 2.0
        %v9153 = vmul.f32 %v8580, 2.0
        %v9154 = vmul.f32 %v8583, 2.0
        %v9155 = vmul.f32 %v8588, 2.0
        %v9156 = vmul.f32 %v8591, 2.0
        %v9157 = vmul.f32 %v8596, 2.0
        %v9158 = vmul.f32 %v8599, 2.0
        %v9159 = vmul.f32 %v8604, 2.0
        %v9160 = vmul.f32 %v8607, 2.0
        %v9161 = vmul.f32 %v8612, 2.0
        %v9162 = vmul.f32 %v8615, 2.0
        %v9163 = vmul.f32 %v8620, 2.0
        %v9164 = vmul.f32 %v8623, 2.0
        %v9165 = vmul.f32 %v8628, 2.0
        %v9166 = vmul.f32 %v8631, 2.0
        %v9167 = vadd.f32 %v8313, %v9151
        %v9168 = vadd.f32 %v8316, %v9152
        %v9169 = vadd.f32 %v8321, %v9153
        %v9170 = vadd.f32 %v8324, %v9154
        %v9171 = vadd.f32 %v8329, %v9155
        %v9172 = vadd.f32 %v8332, %v9156
        %v9173 = vadd.f32 %v8337, %v9157
        %v9174 = vadd.f32 %v8340, %v9158
        %v9175 = vadd.f32 %v8345, %v9159
        %v9176 = vadd.f32 %v8348, %v9160
        %v9177 = vadd.f32 %v8353, %v9161
        %v9178 = vadd.f32 %v8356, %v9162
        %v9179 = vadd.f32 %v8361, %v9163
        %v9180 = vadd.f32 %v8364, %v9164
        %v9181 = vadd.f32 %v8369, %v9165
        %v9182 = vadd.f32 %v8372, %v9166
        %v9183 = vmul.f32 %v8830, 2.0
        %v9184 = vmul.f32 %v8833, 2.0
        %v9185 = vmul.f32 %v8838, 2.0
        %v9186 = vmul.f32 %v8841, 2.0
        %v9187 = vmul.f32 %v8846, 2.0
        %v9188 = vmul.f32 %v8849, 2.0
        %v9189 = vmul.f32 %v8854, 2.0
        %v9190 = vmul.f32 %v8857, 2.0
        %v9191 = vmul.f32 %v8862, 2.0
        %v9192 = vmul.f32 %v8865, 2.0
        %v9193 = vmul.f32 %v8870, 2.0
        %v9194 = vmul.f32 %v8873, 2.0
        %v9195 = vmul.f32 %v8878, 2.0
        %v9196 = vmul.f32 %v8881, 2.0
        %v9197 = vmul.f32 %v8886, 2.0
        %v9198 = vmul.f32 %v8889, 2.0
        %v9199 = vadd.f32 %v9167, %v9183
        %v9200 = vadd.f32 %v9168, %v9184
        %v9201 = vadd.f32 %v9169, %v9185
        %v9202 = vadd.f32 %v9170, %v9186
        %v9203 = vadd.f32 %v9171, %v9187
        %v9204 = vadd.f32 %v9172, %v9188
        %v9205 = vadd.f32 %v9173, %v9189
        %v9206 = vadd.f32 %v9174, %v9190
        %v9207 = vadd.f32 %v9175, %v9191
        %v9208 = vadd.f32 %v9176, %v9192
        %v9209 = vadd.f32 %v9177, %v9193
        %v9210 = vadd.f32 %v9178, %v9194
        %v9211 = vadd.f32 %v9179, %v9195
        %v9212 = vadd.f32 %v9180, %v9196
        %v9213 = vadd.f32 %v9181, %v9197
        %v9214 = vadd.f32 %v9182, %v9198
        %v9215 = vadd.f32 %v9199, %v9089
        %v9216 = vadd.f32 %v9200, %v9092
        %v9217 = vadd.f32 %v9201, %v9097
        %v9218 = vadd.f32 %v9202, %v9100
        %v9219 = vadd.f32 %v9203, %v9105
        %v9220 = vadd.f32 %v9204, %v9108
        %v9221 = vadd.f32 %v9205, %v9113
        %v9222 = vadd.f32 %v9206, %v9116
        %v9223 = vadd.f32 %v9207, %v9121
        %v9224 = vadd.f32 %v9208, %v9124
        %v9225 = vadd.f32 %v9209, %v9129
        %v9226 = vadd.f32 %v9210, %v9132
        %v9227 = vadd.f32 %v9211, %v9137
        %v9228 = vadd.f32 %v9212, %v9140
        %v9229 = vadd.f32 %v9213, %v9145
        %v9230 = vadd.f32 %v9214, %v9148
        %v9231 = vstv %s8020
        %v9232 = vmul.f32 %v9231, %v9215
        %v9233 = vmul.f32 %v9231, %v9216
        %v9234 = vmul.f32 %v9231, %v9217
        %v9235 = vmul.f32 %v9231, %v9218
        %v9236 = vmul.f32 %v9231, %v9219
        %v9237 = vmul.f32 %v9231, %v9220
        %v9238 = vmul.f32 %v9231, %v9221
        %v9239 = vmul.f32 %v9231, %v9222
        %v9240 = vmul.f32 %v9231, %v9223
        %v9241 = vmul.f32 %v9231, %v9224
        %v9242 = vmul.f32 %v9231, %v9225
        %v9243 = vmul.f32 %v9231, %v9226
        %v9244 = vmul.f32 %v9231, %v9227
        %v9245 = vmul.f32 %v9231, %v9228
        %v9246 = vmul.f32 %v9231, %v9229
        %v9247 = vmul.f32 %v9231, %v9230
        %v9248 = vadd.f32 %v7985, %v9232
        %v9249 = vadd.f32 %v7986, %v9233
        %v9250 = vadd.f32 %v7987, %v9234
        %v9251 = vadd.f32 %v7988, %v9235
        %v9252 = vadd.f32 %v7989, %v9236
        %v9253 = vadd.f32 %v7990, %v9237
        %v9254 = vadd.f32 %v7991, %v9238
        %v9255 = vadd.f32 %v7992, %v9239
        %v9256 = vadd.f32 %v7993, %v9240
        %v9257 = vadd.f32 %v7994, %v9241
        %v9258 = vadd.f32 %v7995, %v9242
        %v9259 = vadd.f32 %v7996, %v9243
        %v9260 = vadd.f32 %v7997, %v9244
        %v9261 = vadd.f32 %v7998, %v9245
        %v9262 = vadd.f32 %v7999, %v9246
        %v9263 = vadd.f32 %v8000, %v9247
        %s9264 = scalar_lea.vmem %s390, 896 [#allocation14]
        %9265 = vst [vmem:[%s9264] sm:$0xff] %v9248
        %9266 = vst [vmem:[%s9264 + $0x8] sm:$0xff] %v9249
        %9267 = vst [vmem:[%s9264 + $0x10] sm:$0xff] %v9250
        %9268 = vst [vmem:[%s9264 + $0x18] sm:$0xff] %v9251
        %9269 = vst [vmem:[%s9264 + $0x20] sm:$0xff] %v9252
        %9270 = vst [vmem:[%s9264 + $0x28] sm:$0xff] %v9253
        %9271 = vst [vmem:[%s9264 + $0x30] sm:$0xff] %v9254
        %9272 = vst [vmem:[%s9264 + $0x38] sm:$0xff] %v9255
        %9273 = vst [vmem:[%s9264 + $0x40] sm:$0xff] %v9256
        %9274 = vst [vmem:[%s9264 + $0x48] sm:$0xff] %v9257
        %9275 = vst [vmem:[%s9264 + $0x50] sm:$0xff] %v9258
        %9276 = vst [vmem:[%s9264 + $0x58] sm:$0xff] %v9259
        %9277 = vst [vmem:[%s9264 + $0x60] sm:$0xff] %v9260
        %9278 = vst [vmem:[%s9264 + $0x68] sm:$0xff] %v9261
        %9279 = vst [vmem:[%s9264 + $0x70] sm:$0xff] %v9262
        %9280 = vst [vmem:[%s9264 + $0x78] sm:$0xff] %v9263
        %s9281 = sand.u32 %s210, 1
        %s9282 = scalar_lea.sflag [#allocation4], %s9281
        %s9283 = sand.u32 %s210, 1
        %s9284 = smul.addr %s9283, 1024
        %s9285 = scalar_lea.vmem [#allocation14], %s9284
        // Predicated region
        $region77: #{tpu_custom_call.1} parent=51 // pred_check
          %p9286 = pneg %p220
        $region78: #{tpu_custom_call.1} parent=51 // pred_check_branch
          %9288 = sbr.rel (%p9286) target = $region80
        $region79: #{tpu_custom_call.1} parent=51 // pred_region
          #allocation16 [shape = 'u32[6]{0}', space=smem, size = 0x18, scoped, tag = 'DMA stride descriptor']
          %s9289 = smul.u32 16, %s29
          %s9291 = ssub.s32 16384, 16384
          %9292 = vsyncadd %s9282, %s9291
          %s9293 = smul.addr %s9289, 128
          %s9294 = scalar_lea.hbm %s8, %s9293
          %s9296 = sshll.u32 1, 14
          %s9297 = sxor.u32 4294967295, %s9296
          %s9300 = sshll.u32 7, 18
          %s9301 = sxor.u32 4294967295, %s9300
          %s9302 = sand.u32 0, %s9301
          %s9304 = sor.u32 %s9302, 0
          %s9305 = sshll.u32 %s9285, 4
          %s9306 = int_to_ptr.vmem [resolvable:$true] %s9305
          %9312 = sst [smem:[#allocation16]] 2048
          %s9313 = scalar_lea.smem [#allocation16], 1
          %9314 = sst [smem:[%s9313]] 4096
          %s9315 = scalar_lea.smem [#allocation16], 2
          %9316 = sst [smem:[%s9315]] 16
          %s9317 = scalar_lea.smem [#allocation16], 3
          %9318 = sst [smem:[%s9317]] 128
          %s9319 = scalar_lea.smem [#allocation16], 4
          %9320 = sst [smem:[%s9319]] 128
          %s9321 = scalar_lea.smem [#allocation16], 5
          %9322 = sst [smem:[%s9321]] 8
          %9324 = dma.general %s9306, 16384, %s9294, %s9282, 131072, [#allocation16], %s9304, 0
        $region80: #{tpu_custom_call.1} parent=51 // pred_fallthru
          _
      $region52: #{tpu_custom_call.1} parent=5 // pred_fallthru
        _
      %p9325 = scmp.le.s32.totalorder 2, %s24
      // Predicated region
      $region81: #{tpu_custom_call.1} parent=5 // pred_check
        %p9326 = pneg %p9325
      $region82: #{tpu_custom_call.1} parent=5 // pred_check_branch
        %9328 = sbr.rel (%p9326) target = $region84
      $region83: #{tpu_custom_call.1} parent=5 // pred_region
        %s9329 = ssub.s32 %s24, 2
        // Predicated region
        $region85: #{tpu_custom_call.1} parent=83 // pred_check
          %p9330 = pneg %p226
        $region86: #{tpu_custom_call.1} parent=83 // pred_check_branch
          %9332 = sbr.rel (%p9330) target = $region88
        $region87: #{tpu_custom_call.1} parent=83 // pred_region
          %s9333 = sand.u32 %s211, 1
          %s9334 = scalar_lea.sflag [#allocation4], %s9333
          %s9335 = sand.u32 %s211, 1
          %s9336 = smul.addr %s9335, 1024
          %s9337 = scalar_lea.vmem [#allocation14], %s9336
          %9338 = dma.done %s9334, 16384
        $region88: #{tpu_custom_call.1} parent=83 // pred_fallthru
          _
      $region84: #{tpu_custom_call.1} parent=5 // pred_fallthru
        _
    $region6: #{tpu_custom_call.1} parent=1 // loop_footer
      %s28 = sadd.s32 1, %s24
    $region7: #{tpu_custom_call.1} parent=1 // loop_footer_branch
      %23 = sbr.rel target = $region3
    $region8: #{tpu_custom_call.1} parent=1 // loop_exit
      _
    %9339 = vsyncpa [#allocation3], 1
    %s9340 = scalar_lea.sflag [#allocation3], 1
    %9341 = vsyncpa %s9340, 1
    %9342 = vsyncpa [#allocation12], 1
    %9343 = vsyncpa [#allocation4], 1
    %s9344 = scalar_lea.sflag [#allocation4], 1
    %9345 = vsyncpa %s9344, 1
    %9346 = vsyncpa [#allocation5], 1
    %s9347 = scalar_lea.sflag [#allocation5], 1
    %9348 = vsyncpa %s9347, 1
    %9349 = vsyncpa [#allocation6], 1
    %s9350 = scalar_lea.sflag [#allocation6], 1
    %9351 = vsyncpa %s9350, 1
    %9352 = vsyncpa [#allocation9], 1

</llo_original>
